<compile_context>
chip_gen: v6e
topology: v6e:2x2x1
jax: 0.10.0
libtpu: 0.0.40
codegen_flags: <defaults>
</compile_context>

<pallas_src>
import functools
import math

import jax
import jax.numpy as jnp
from jax import lax
from jax.experimental import pallas as pl
from jax.experimental.pallas import tpu as pltpu

_EPS = 1e-5
_VMEM_LIMIT = 32 * 1024 * 1024  # well below v7x's 64 MiB physical VMEM


def _derive_row_tile(n_rows, n_cols):
    """Pick a row tile from the device VMEM budget (v7x has half of v6e's)."""
    try:
        budget = pltpu.get_tpu_info().vmem_capacity_bytes
    except Exception:
        budget = 64 * 1024 * 1024
    # ~8 live (tile, n_cols) f32 buffers (double-buffered in/out) + headroom.
    tile = (budget // 4) // (8 * 4 * n_cols)
    tile = max(8, min(n_rows, (tile // 8) * 8))
    while n_rows % tile:
        tile -= 8
    return tile


# --------------------------------- kernels ----------------------------------

def _reduce_kernel(x_ref, w1_ref, t1_ref, ssum_ref, ssq_ref):
    # conv_reduce (1x1): bf16 MXU matmul, f32 accumulation, plus per-channel
    # sum / sum-of-squares for bn_reduce accumulated across the row-tile grid.
    @pl.when(pl.program_id(0) == 0)
    def _():
        ssum_ref[...] = jnp.zeros_like(ssum_ref)
        ssq_ref[...] = jnp.zeros_like(ssq_ref)

    t = jnp.dot(x_ref[...].astype(jnp.bfloat16), w1_ref[...],
                preferred_element_type=jnp.float32)
    t1_ref[...] = t
    ssum_ref[...] += jnp.sum(t, axis=0, keepdims=True)
    ssq_ref[...] += jnp.sum(t * t, axis=0, keepdims=True)


def _conv3x3_kernel(H, W, t1_ref, sc_ref, sh_ref, w2_ref,
                    t2_ref, ssum_ref, ssq_ref, pad_ref, col_ref):
    # bn_reduce apply + ReLU, grouped 3x3 conv (stride=1, pad=1) expressed as a
    # single im2col matmul with contraction depth 9*DC, plus stage-2 BN stats.
    # One image per grid step keeps the 3x3 halo inside the tile.
    DC = t1_ref.shape[-1]

    @pl.when(pl.program_id(0) == 0)
    def _():
        # Zero once: the halo ring stays zero across grid steps; only the
        # interior is rewritten each step (no per-step full-buffer zeroing).
        pad_ref[...] = jnp.zeros_like(pad_ref)
        ssum_ref[...] = jnp.zeros_like(ssum_ref)
        ssq_ref[...] = jnp.zeros_like(ssq_ref)

    y = jnp.maximum(t1_ref[...] * sc_ref[...] + sh_ref[...], 0.0)  # (H*W, DC) f32
    pad_ref[1:H + 1, 1:W + 1, :] = y.reshape(H, W, DC)

    # Build the im2col scratch once (bf16), then one big MXU matmul.
    for kh in range(3):
        for kw in range(3):
            tap = pad_ref[kh:kh + H, kw:kw + W, :].reshape(H * W, DC)
            c0 = (kh * 3 + kw) * DC
            col_ref[:, c0:c0 + DC] = tap.astype(jnp.bfloat16)

    t2 = jnp.dot(col_ref[...], w2_ref[...], preferred_element_type=jnp.float32)
    t2_ref[...] = t2
    ssum_ref[...] += jnp.sum(t2, axis=0, keepdims=True)
    ssq_ref[...] += jnp.sum(t2 * t2, axis=0, keepdims=True)


def _expand_kernel(t2_ref, sc_ref, sh_ref, w3_ref, t3_ref, ssum_ref, ssq_ref):
    # bn apply + ReLU + conv_expand (1x1) + bn_expand statistics.
    @pl.when(pl.program_id(0) == 0)
    def _():
        ssum_ref[...] = jnp.zeros_like(ssum_ref)
        ssq_ref[...] = jnp.zeros_like(ssq_ref)

    y = jnp.maximum(t2_ref[...] * sc_ref[...] + sh_ref[...], 0.0)
    t = jnp.dot(y.astype(jnp.bfloat16), w3_ref[...],
                preferred_element_type=jnp.float32)
    t3_ref[...] = t
    ssum_ref[...] += jnp.sum(t, axis=0, keepdims=True)
    ssq_ref[...] += jnp.sum(t * t, axis=0, keepdims=True)


def _residual_kernel(x_ref, t3_ref, sc_ref, sh_ref, out_ref):
    # bn_expand apply + residual add (re-reads x: short live range) + ReLU.
    out_ref[...] = jnp.maximum(
        x_ref[...] + t3_ref[...] * sc_ref[...] + sh_ref[...], 0.0
    ).astype(out_ref.dtype)


# --------------------------------- wrapper ----------------------------------

def _bn_affine(ssum, ssq, count, gamma, beta):
    # training-mode BN: biased variance over N*H*W, folded to scale/shift.
    mean = ssum[0] / count
    var = jnp.maximum(ssq[0] / count - mean * mean, 0.0)
    scale = gamma * lax.rsqrt(var + _EPS)
    shift = beta - mean * scale
    return scale.reshape(1, -1), shift.reshape(1, -1)


def resnext_bottleneck(x_nchw, kparams, *, row_tile=None):
    """x_nchw: (N, Cin, H, W) float32; kparams from pack_kernel_params."""
    w1, w2, w3, g1, b1, g2, b2, g3, b3 = kparams
    N, Cin, H, W = x_nchw.shape
    DC = w1.shape[1]
    Cout = w3.shape[1]
    assert Cin == Cout, "downsample is None => inplanes must equal planes*4"
    M, HW = N * H * W, H * W

    x2d = jnp.transpose(x_nchw, (0, 2, 3, 1)).reshape(M, Cin)  # NHWC rows

    tm = row_tile if row_tile is not None else _derive_row_tile(M, max(Cin, DC, Cout))
    assert M % tm == 0

    seq = pltpu.CompilerParams(dimension_semantics=("arbitrary",),
                               vmem_limit_bytes=_VMEM_LIMIT)
    par = pltpu.CompilerParams(dimension_semantics=("parallel",),
                               vmem_limit_bytes=_VMEM_LIMIT)

    def acc_spec(c):   # resident accumulator output (revisited every step)
        return pl.BlockSpec((1, c), lambda i: (0, 0))

    def vec_spec(c):   # broadcast per-channel vector input
        return pl.BlockSpec((1, c), lambda i: (0, 0))

    # -- pass 1: conv_reduce (1x1) + bn_reduce stats ---------------------------
    t1, s1, q1 = pl.pallas_call(
        _reduce_kernel,
        out_shape=(jax.ShapeDtypeStruct((M, DC), jnp.float32),
                   jax.ShapeDtypeStruct((1, DC), jnp.float32),
                   jax.ShapeDtypeStruct((1, DC), jnp.float32)),
        grid=(M // tm,),
        in_specs=[pl.BlockSpec((tm, Cin), lambda i: (i, 0)),
                  pl.BlockSpec((Cin, DC), lambda i: (0, 0))],
        out_specs=(pl.BlockSpec((tm, DC), lambda i: (i, 0)),
                   acc_spec(DC), acc_spec(DC)),
        compiler_params=seq,
    )(x2d, w1)
    sc1, sh1 = _bn_affine(s1, q1, M, g1, b1)

    # -- pass 2: bn_reduce apply + ReLU + grouped 3x3 (im2col) + bn stats ------
    t2, s2, q2 = pl.pallas_call(
        functools.partial(_conv3x3_kernel, H, W),
        out_shape=(jax.ShapeDtypeStruct((M, DC), jnp.float32),
                   jax.ShapeDtypeStruct((1, DC), jnp.float32),
                   jax.ShapeDtypeStruct((1, DC), jnp.float32)),
        grid=(N,),
        in_specs=[pl.BlockSpec((HW, DC), lambda i: (i, 0)),
                  vec_spec(DC), vec_spec(DC),
                  pl.BlockSpec((9 * DC, DC), lambda i: (0, 0))],
        out_specs=(pl.BlockSpec((HW, DC), lambda i: (i, 0)),
                   acc_spec(DC), acc_spec(DC)),
        scratch_shapes=[pltpu.VMEM((H + 2, W + 2, DC), jnp.float32),
                        pltpu.VMEM((HW, 9 * DC), jnp.bfloat16)],
        compiler_params=seq,
    )(t1, sc1, sh1, w2)
    sc2, sh2 = _bn_affine(s2, q2, M, g2, b2)

    # -- pass 3: bn apply + ReLU + conv_expand (1x1) + bn_expand stats ---------
    t3, s3, q3 = pl.pallas_call(
        _expand_kernel,
        out_shape=(jax.ShapeDtypeStruct((M, Cout), jnp.float32),
                   jax.ShapeDtypeStruct((1, Cout), jnp.float32),
                   jax.ShapeDtypeStruct((1, Cout), jnp.float32)),
        grid=(M // tm,),
        in_specs=[pl.BlockSpec((tm, DC), lambda i: (i, 0)),
                  vec_spec(DC), vec_spec(DC),
                  pl.BlockSpec((DC, Cout), lambda i: (0, 0))],
        out_specs=(pl.BlockSpec((tm, Cout), lambda i: (i, 0)),
                   acc_spec(Cout), acc_spec(Cout)),
        compiler_params=seq,
    )(t2, sc2, sh2, w3)
    sc3, sh3 = _bn_affine(s3, q3, M, g3, b3)

    # -- pass 4: bn_expand apply + residual + final ReLU -----------------------
    out2d = pl.pallas_call(
        _residual_kernel,
        out_shape=jax.ShapeDtypeStruct((M, Cout), jnp.float32),
        grid=(M // tm,),
        in_specs=[pl.BlockSpec((tm, Cin), lambda i: (i, 0)),
                  pl.BlockSpec((tm, Cout), lambda i: (i, 0)),
                  vec_spec(Cout), vec_spec(Cout)],
        out_specs=pl.BlockSpec((tm, Cout), lambda i: (i, 0)),
        compiler_params=par,
    )(x2d, t3, sc3, sh3)

    return jnp.transpose(out2d.reshape(N, H, W, Cout), (0, 3, 1, 2))  # NCHW


# ----------------------------- parameter setup ------------------------------

def init_torch_params(key, inplanes, planes, cardinality, base_width):
    """Deterministic parameters with the same shapes PyTorch's __init__ creates."""
    D = int(math.floor(planes * (base_width / 64.0)))
    C = cardinality
    DC = D * C
    Cout = planes * 4
    ks = jax.random.split(key, 9)
    w_reduce = jax.random.normal(ks[0], (DC, inplanes, 1, 1), jnp.float32) / math.sqrt(inplanes)
    w_conv = jax.random.normal(ks[1], (DC, D, 3, 3), jnp.float32) / math.sqrt(D * 9)
    w_expand = jax.random.normal(ks[2], (Cout, DC, 1, 1), jnp.float32) / math.sqrt(DC)
    g1 = 1.0 + 0.1 * jax.random.normal(ks[3], (DC,), jnp.float32)
    b1 = 0.1 * jax.random.normal(ks[4], (DC,), jnp.float32)
    g2 = 1.0 + 0.1 * jax.random.normal(ks[5], (DC,), jnp.float32)
    b2 = 0.1 * jax.random.normal(ks[6], (DC,), jnp.float32)
    g3 = 1.0 + 0.1 * jax.random.normal(ks[7], (Cout,), jnp.float32)
    b3 = 0.1 * jax.random.normal(ks[8], (Cout,), jnp.float32)
    return dict(w_reduce=w_reduce, w_conv=w_conv, w_expand=w_expand,
                g1=g1, b1=b1, g2=g2, b2=b2, g3=g3, b3=b3, D=D, C=C)


def pack_kernel_params(p):
    """Convert PyTorch-shaped weights into the kernel's matmul-friendly forms."""
    D, C = p["D"], p["C"]
    DC = D * C
    w1 = jnp.transpose(p["w_reduce"][:, :, 0, 0]).astype(jnp.bfloat16)   # (Cin, DC)
    w3 = jnp.transpose(p["w_expand"][:, :, 0, 0]).astype(jnp.bfloat16)   # (DC, Cout)
    # Grouped 3x3 -> 9 block-diagonal (DC,DC) taps stacked along K for im2col.
    # TODO(synk): block-diag inflation wastes a factor of `cardinality` in MXU
    # FLOPs / weight bytes; fine for small C (here C=4), a per-group path would
    # be needed for C=32 ResNeXt configs.
    w2 = jnp.zeros((9, DC, DC), jnp.float32)
    for kh in range(3):
        for kw in range(3):
            for g in range(C):
                blk = p["w_conv"][g * D:(g + 1) * D, :, kh, kw]          # (Dout, Din)
                w2 = w2.at[kh * 3 + kw,
                           g * D:(g + 1) * D,
                           g * D:(g + 1) * D].set(blk.T)                 # (in, out)
    w2 = w2.reshape(9 * DC, DC).astype(jnp.bfloat16)
    return (w1, w2, w3, p["g1"], p["b1"], p["g2"], p["b2"], p["g3"], p["b3"])


# ------------------------------ pure-JAX reference ---------------------------

def _bn_train_nchw(y, g, b):
    mean = jnp.mean(y, axis=(0, 2, 3), keepdims=True)
    var = jnp.mean((y - mean) ** 2, axis=(0, 2, 3), keepdims=True)
    return (y - mean) * lax.rsqrt(var + _EPS) * g.reshape(1, -1, 1, 1) + b.reshape(1, -1, 1, 1)


def ref_forward(x, p, conv_dtype=jnp.float32):
    dn = ('NCHW', 'OIHW', 'NCHW')
    cd = lambda a: a.astype(conv_dtype)

    def conv(a, w, groups=1, pad='VALID'):
        return lax.conv_general_dilated(cd(a), cd(w), (1, 1), pad,
                                        dimension_numbers=dn,
                                        feature_group_count=groups,
                                        preferred_element_type=jnp.float32)

    y = conv(x, p["w_reduce"])
    y = jnp.maximum(_bn_train_nchw(y, p["g1"], p["b1"]), 0.0)
    y = conv(y, p["w_conv"], groups=p["C"], pad=((1, 1), (1, 1)))
    y = jnp.maximum(_bn_train_nchw(y, p["g2"], p["b2"]), 0.0)
    y = conv(y, p["w_expand"])
    y = _bn_train_nchw(y, p["g3"], p["b3"])
    return jnp.maximum(x + y, 0.0)


# ----------------------------------- main ------------------------------------

if __name__ == "__main__":
    # ResNetXtBottleneck(inplanes=128, planes=32, cardinality=4, base_width=64)
    #  -> D=32, D*C=128, out channels = planes*4 = 128, stride=1, downsample=None.
    # 128-wide channels keep every lane of the vregs / MXU output dense.
    inplanes, planes, cardinality, base_width = 128, 32, 4, 64
    N, H, W = 2, 16, 16

    key = jax.random.PRNGKey(0)
    kx, kp = jax.random.split(key)
    x = jax.random.normal(kx, (N, inplanes, H, W), jnp.float32)

    torch_params = init_torch_params(kp, inplanes, planes, cardinality, base_width)
    kparams = pack_kernel_params(torch_params)

    # row_tile = H*W exercises the multi-step grid / cross-tile BN accumulation.
    fwd = jax.jit(functools.partial(resnext_bottleneck, row_tile=H * W))
    out = jax.block_until_ready(fwd(x, kparams))
    assert out.shape == (N, planes * 4, H, W)

    # Primary check: reference with the same bf16-input / f32-accumulate policy.
    ref_bf16 = jax.block_until_ready(ref_forward(x, torch_params, conv_dtype=jnp.bfloat16))
    err = float(jnp.max(jnp.abs(out - ref_bf16)))
    assert err < 5e-3, f"mismatch vs matched-precision reference: max abs err {err}"

    # Sanity check vs a full-f32 reference (bounds the bf16 MXU error).
    ref_f32 = jax.block_until_ready(ref_forward(x, torch_params, conv_dtype=jnp.float32))
    err32 = float(jnp.max(jnp.abs(out - ref_f32)))
    assert err32 < 2.5e-1, f"mismatch vs f32 reference: max abs err {err32}"

    print("KERNEL_OK")
</pallas_src>

<mosaic_0001>
module attributes {stable_mosaic.version = 11 : i64} {
  func.func @_expand_kernel(%arg0: i32, %arg1: memref<256x128xf32, #tpu.memory_space<vmem>>, %arg2: memref<1x128xf32, #tpu.memory_space<vmem>>, %arg3: memref<1x128xf32, #tpu.memory_space<vmem>>, %arg4: memref<128x128xbf16, #tpu.memory_space<vmem>>, %arg5: memref<256x128xf32, #tpu.memory_space<vmem>>, %arg6: memref<1x128xf32, #tpu.memory_space<vmem>>, %arg7: memref<1x128xf32, #tpu.memory_space<vmem>>) attributes {dimension_semantics = [#tpu.dimension_semantics<arbitrary>], iteration_bounds = array<i64: 2>, scalar_prefetch = 0 : i64, scratch_operands = 0 : i64, tpu.core_type = #tpu.core_type<tc>, window_params = [{transform_indices = @transform_0, window_bounds = array<i64: 256, 128>}, {pipeline_mode = #tpu.pipeline_mode<synchronous>, transform_indices = @transform_1, window_bounds = array<i64: 1, 128>}, {pipeline_mode = #tpu.pipeline_mode<synchronous>, transform_indices = @transform_2, window_bounds = array<i64: 1, 128>}, {pipeline_mode = #tpu.pipeline_mode<synchronous>, transform_indices = @transform_3, window_bounds = array<i64: 128, 128>}, {transform_indices = @transform_4, window_bounds = array<i64: 256, 128>}, {pipeline_mode = #tpu.pipeline_mode<synchronous>, transform_indices = @transform_5, window_bounds = array<i64: 1, 128>}, {pipeline_mode = #tpu.pipeline_mode<synchronous>, transform_indices = @transform_6, window_bounds = array<i64: 1, 128>}]} {
    %c0_i32 = arith.constant 0 : i32
    %0 = arith.cmpi eq, %arg0, %c0_i32 : i32
    %1 = arith.extui %0 : i1 to i32
    %c0_i32_0 = arith.constant 0 : i32
    %2 = arith.cmpi ne, %1, %c0_i32_0 : i32
    scf.if %2 {
      %cst_21 = arith.constant 0.000000e+00 : f32
      %27 = vector.broadcast %cst_21 : f32 to vector<1x128xf32>
      %c0_22 = arith.constant 0 : index
      %c0_23 = arith.constant 0 : index
      %28 = vector.load %arg6[%c0_22, %c0_23] : memref<1x128xf32, #tpu.memory_space<vmem>>, vector<1x128xf32>
      tpu.vector_store %arg6[%c0_22, %c0_23], %27 {strides = array<i32>} : memref<1x128xf32, #tpu.memory_space<vmem>>, vector<1x128xf32>,
      %cst_24 = arith.constant 0.000000e+00 : f32
      %29 = vector.broadcast %cst_24 : f32 to vector<1x128xf32>
      %c0_25 = arith.constant 0 : index
      %c0_26 = arith.constant 0 : index
      %30 = vector.load %arg7[%c0_25, %c0_26] : memref<1x128xf32, #tpu.memory_space<vmem>>, vector<1x128xf32>
      tpu.vector_store %arg7[%c0_25, %c0_26], %29 {strides = array<i32>} : memref<1x128xf32, #tpu.memory_space<vmem>>, vector<1x128xf32>,
    } else {
    }
    %c0 = arith.constant 0 : index
    %c0_1 = arith.constant 0 : index
    %3 = vector.load %arg1[%c0, %c0_1] : memref<256x128xf32, #tpu.memory_space<vmem>>, vector<256x128xf32>
    %c0_2 = arith.constant 0 : index
    %c0_3 = arith.constant 0 : index
    %4 = vector.load %arg2[%c0_2, %c0_3] : memref<1x128xf32, #tpu.memory_space<vmem>>, vector<1x128xf32>
    %5 = vector.broadcast %4 : vector<1x128xf32> to vector<256x128xf32>
    %6 = arith.mulf %3, %5 : vector<256x128xf32>
    %c0_4 = arith.constant 0 : index
    %c0_5 = arith.constant 0 : index
    %7 = vector.load %arg3[%c0_4, %c0_5] : memref<1x128xf32, #tpu.memory_space<vmem>>, vector<1x128xf32>
    %8 = vector.broadcast %7 : vector<1x128xf32> to vector<256x128xf32>
    %9 = arith.addf %6, %8 : vector<256x128xf32>
    %cst = arith.constant 0.000000e+00 : f32
    %10 = vector.broadcast %cst : f32 to vector<256x128xf32>
    %11 = arith.maximumf %9, %10 : vector<256x128xf32>
    %12 = arith.truncf %11 : vector<256x128xf32> to vector<256x128xbf16>
    %c0_6 = arith.constant 0 : index
    %c0_7 = arith.constant 0 : index
    %13 = vector.load %arg4[%c0_6, %c0_7] : memref<128x128xbf16, #tpu.memory_space<vmem>>, vector<128x128xbf16>
    %cst_8 = arith.constant dense<0.000000e+00> : vector<256x128xf32>
    %14 = tpu.matmul %12, %13, %cst_8 {dimension_numbers = #tpu.dot_dimension_numbers<[1], [0], [0], [1], [0, 0, 1, 1], [], []>} : vector<256x128xbf16>, vector<128x128xbf16>, vector<256x128xf32> -> vector<256x128xf32>
    %c0_9 = arith.constant 0 : index
    %c0_10 = arith.constant 0 : index
    %15 = vector.load %arg5[%c0_9, %c0_10] : memref<256x128xf32, #tpu.memory_space<vmem>>, vector<256x128xf32>
    tpu.vector_store %arg5[%c0_9, %c0_10], %14 {strides = array<i32>} : memref<256x128xf32, #tpu.memory_space<vmem>>, vector<256x128xf32>,
    %c0_11 = arith.constant 0 : index
    %c0_12 = arith.constant 0 : index
    %16 = vector.load %arg6[%c0_11, %c0_12] : memref<1x128xf32, #tpu.memory_space<vmem>>, vector<1x128xf32>
    %cst_13 = arith.constant dense<0.000000e+00> : vector<128xf32>
    %17 = vector.multi_reduction <add>, %14, %cst_13 [0] : vector<256x128xf32> to vector<128xf32>
    %18 = vector.shape_cast %17 : vector<128xf32> to vector<1x128xf32>
    %19 = arith.addf %16, %18 : vector<1x128xf32>
    %c0_14 = arith.constant 0 : index
    %c0_15 = arith.constant 0 : index
    %20 = vector.load %arg6[%c0_14, %c0_15] : memref<1x128xf32, #tpu.memory_space<vmem>>, vector<1x128xf32>
    tpu.vector_store %arg6[%c0_14, %c0_15], %19 {strides = array<i32>} : memref<1x128xf32, #tpu.memory_space<vmem>>, vector<1x128xf32>,
    %c0_16 = arith.constant 0 : index
    %c0_17 = arith.constant 0 : index
    %21 = vector.load %arg7[%c0_16, %c0_17] : memref<1x128xf32, #tpu.memory_space<vmem>>, vector<1x128xf32>
    %22 = arith.mulf %14, %14 : vector<256x128xf32>
    %cst_18 = arith.constant dense<0.000000e+00> : vector<128xf32>
    %23 = vector.multi_reduction <add>, %22, %cst_18 [0] : vector<256x128xf32> to vector<128xf32>
    %24 = vector.shape_cast %23 : vector<128xf32> to vector<1x128xf32>
    %25 = arith.addf %21, %24 : vector<1x128xf32>
    %c0_19 = arith.constant 0 : index
    %c0_20 = arith.constant 0 : index
    %26 = vector.load %arg7[%c0_19, %c0_20] : memref<1x128xf32, #tpu.memory_space<vmem>>, vector<1x128xf32>
    tpu.vector_store %arg7[%c0_19, %c0_20], %25 {strides = array<i32>} : memref<1x128xf32, #tpu.memory_space<vmem>>, vector<1x128xf32>,
    return
  }
  func.func @transform_0(%arg0: i32) -> (i32, i32) {
    %c0_i32 = arith.constant 0 : i32
    %c0_i32_0 = arith.constant 0 : i32
    return %arg0, %c0_i32 : i32, i32
  }
  func.func @transform_1(%arg0: i32) -> (i32, i32) {
    %c0_i32 = arith.constant 0 : i32
    %c0_i32_0 = arith.constant 0 : i32
    %c0_i32_1 = arith.constant 0 : i32
    return %c0_i32, %c0_i32_0 : i32, i32
  }
  func.func @transform_2(%arg0: i32) -> (i32, i32) {
    %c0_i32 = arith.constant 0 : i32
    %c0_i32_0 = arith.constant 0 : i32
    %c0_i32_1 = arith.constant 0 : i32
    return %c0_i32, %c0_i32_0 : i32, i32
  }
  func.func @transform_3(%arg0: i32) -> (i32, i32) {
    %c0_i32 = arith.constant 0 : i32
    %c0_i32_0 = arith.constant 0 : i32
    %c0_i32_1 = arith.constant 0 : i32
    return %c0_i32, %c0_i32_0 : i32, i32
  }
  func.func @transform_4(%arg0: i32) -> (i32, i32) {
    %c0_i32 = arith.constant 0 : i32
    %c0_i32_0 = arith.constant 0 : i32
    return %arg0, %c0_i32 : i32, i32
  }
  func.func @transform_5(%arg0: i32) -> (i32, i32) {
    %c0_i32 = arith.constant 0 : i32
    %c0_i32_0 = arith.constant 0 : i32
    %c0_i32_1 = arith.constant 0 : i32
    return %c0_i32, %c0_i32_0 : i32, i32
  }
  func.func @transform_6(%arg0: i32) -> (i32, i32) {
    %c0_i32 = arith.constant 0 : i32
    %c0_i32_0 = arith.constant 0 : i32
    %c0_i32_1 = arith.constant 0 : i32
    return %c0_i32, %c0_i32_0 : i32, i32
  }
}

module attributes {stable_mosaic.version = 11 : i64} {
  func.func @_reduce_kernel(%arg0: i32, %arg1: memref<256x128xf32, #tpu.memory_space<vmem>>, %arg2: memref<128x128xbf16, #tpu.memory_space<vmem>>, %arg3: memref<256x128xf32, #tpu.memory_space<vmem>>, %arg4: memref<1x128xf32, #tpu.memory_space<vmem>>, %arg5: memref<1x128xf32, #tpu.memory_space<vmem>>) attributes {dimension_semantics = [#tpu.dimension_semantics<arbitrary>], iteration_bounds = array<i64: 2>, scalar_prefetch = 0 : i64, scratch_operands = 0 : i64, tpu.core_type = #tpu.core_type<tc>, window_params = [{transform_indices = @transform_0, window_bounds = array<i64: 256, 128>}, {pipeline_mode = #tpu.pipeline_mode<synchronous>, transform_indices = @transform_1, window_bounds = array<i64: 128, 128>}, {transform_indices = @transform_2, window_bounds = array<i64: 256, 128>}, {pipeline_mode = #tpu.pipeline_mode<synchronous>, transform_indices = @transform_3, window_bounds = array<i64: 1, 128>}, {pipeline_mode = #tpu.pipeline_mode<synchronous>, transform_indices = @transform_4, window_bounds = array<i64: 1, 128>}]} {
    %c0_i32 = arith.constant 0 : i32
    %0 = arith.cmpi eq, %arg0, %c0_i32 : i32
    %1 = arith.extui %0 : i1 to i32
    %c0_i32_0 = arith.constant 0 : i32
    %2 = arith.cmpi ne, %1, %c0_i32_0 : i32
    scf.if %2 {
      %cst_16 = arith.constant 0.000000e+00 : f32
      %19 = vector.broadcast %cst_16 : f32 to vector<1x128xf32>
      %c0_17 = arith.constant 0 : index
      %c0_18 = arith.constant 0 : index
      %20 = vector.load %arg4[%c0_17, %c0_18] : memref<1x128xf32, #tpu.memory_space<vmem>>, vector<1x128xf32>
      tpu.vector_store %arg4[%c0_17, %c0_18], %19 {strides = array<i32>} : memref<1x128xf32, #tpu.memory_space<vmem>>, vector<1x128xf32>,
      %cst_19 = arith.constant 0.000000e+00 : f32
      %21 = vector.broadcast %cst_19 : f32 to vector<1x128xf32>
      %c0_20 = arith.constant 0 : index
      %c0_21 = arith.constant 0 : index
      %22 = vector.load %arg5[%c0_20, %c0_21] : memref<1x128xf32, #tpu.memory_space<vmem>>, vector<1x128xf32>
      tpu.vector_store %arg5[%c0_20, %c0_21], %21 {strides = array<i32>} : memref<1x128xf32, #tpu.memory_space<vmem>>, vector<1x128xf32>,
    } else {
    }
    %c0 = arith.constant 0 : index
    %c0_1 = arith.constant 0 : index
    %3 = vector.load %arg1[%c0, %c0_1] : memref<256x128xf32, #tpu.memory_space<vmem>>, vector<256x128xf32>
    %4 = arith.truncf %3 : vector<256x128xf32> to vector<256x128xbf16>
    %c0_2 = arith.constant 0 : index
    %c0_3 = arith.constant 0 : index
    %5 = vector.load %arg2[%c0_2, %c0_3] : memref<128x128xbf16, #tpu.memory_space<vmem>>, vector<128x128xbf16>
    %cst = arith.constant dense<0.000000e+00> : vector<256x128xf32>
    %6 = tpu.matmul %4, %5, %cst {dimension_numbers = #tpu.dot_dimension_numbers<[1], [0], [0], [1], [0, 0, 1, 1], [], []>} : vector<256x128xbf16>, vector<128x128xbf16>, vector<256x128xf32> -> vector<256x128xf32>
    %c0_4 = arith.constant 0 : index
    %c0_5 = arith.constant 0 : index
    %7 = vector.load %arg3[%c0_4, %c0_5] : memref<256x128xf32, #tpu.memory_space<vmem>>, vector<256x128xf32>
    tpu.vector_store %arg3[%c0_4, %c0_5], %6 {strides = array<i32>} : memref<256x128xf32, #tpu.memory_space<vmem>>, vector<256x128xf32>,
    %c0_6 = arith.constant 0 : index
    %c0_7 = arith.constant 0 : index
    %8 = vector.load %arg4[%c0_6, %c0_7] : memref<1x128xf32, #tpu.memory_space<vmem>>, vector<1x128xf32>
    %cst_8 = arith.constant dense<0.000000e+00> : vector<128xf32>
    %9 = vector.multi_reduction <add>, %6, %cst_8 [0] : vector<256x128xf32> to vector<128xf32>
    %10 = vector.shape_cast %9 : vector<128xf32> to vector<1x128xf32>
    %11 = arith.addf %8, %10 : vector<1x128xf32>
    %c0_9 = arith.constant 0 : index
    %c0_10 = arith.constant 0 : index
    %12 = vector.load %arg4[%c0_9, %c0_10] : memref<1x128xf32, #tpu.memory_space<vmem>>, vector<1x128xf32>
    tpu.vector_store %arg4[%c0_9, %c0_10], %11 {strides = array<i32>} : memref<1x128xf32, #tpu.memory_space<vmem>>, vector<1x128xf32>,
    %c0_11 = arith.constant 0 : index
    %c0_12 = arith.constant 0 : index
    %13 = vector.load %arg5[%c0_11, %c0_12] : memref<1x128xf32, #tpu.memory_space<vmem>>, vector<1x128xf32>
    %14 = arith.mulf %6, %6 : vector<256x128xf32>
    %cst_13 = arith.constant dense<0.000000e+00> : vector<128xf32>
    %15 = vector.multi_reduction <add>, %14, %cst_13 [0] : vector<256x128xf32> to vector<128xf32>
    %16 = vector.shape_cast %15 : vector<128xf32> to vector<1x128xf32>
    %17 = arith.addf %13, %16 : vector<1x128xf32>
    %c0_14 = arith.constant 0 : index
    %c0_15 = arith.constant 0 : index
    %18 = vector.load %arg5[%c0_14, %c0_15] : memref<1x128xf32, #tpu.memory_space<vmem>>, vector<1x128xf32>
    tpu.vector_store %arg5[%c0_14, %c0_15], %17 {strides = array<i32>} : memref<1x128xf32, #tpu.memory_space<vmem>>, vector<1x128xf32>,
    return
  }
  func.func @transform_0(%arg0: i32) -> (i32, i32) {
    %c0_i32 = arith.constant 0 : i32
    %c0_i32_0 = arith.constant 0 : i32
    return %arg0, %c0_i32 : i32, i32
  }
  func.func @transform_1(%arg0: i32) -> (i32, i32) {
    %c0_i32 = arith.constant 0 : i32
    %c0_i32_0 = arith.constant 0 : i32
    %c0_i32_1 = arith.constant 0 : i32
    return %c0_i32, %c0_i32_0 : i32, i32
  }
  func.func @transform_2(%arg0: i32) -> (i32, i32) {
    %c0_i32 = arith.constant 0 : i32
    %c0_i32_0 = arith.constant 0 : i32
    return %arg0, %c0_i32 : i32, i32
  }
  func.func @transform_3(%arg0: i32) -> (i32, i32) {
    %c0_i32 = arith.constant 0 : i32
    %c0_i32_0 = arith.constant 0 : i32
    %c0_i32_1 = arith.constant 0 : i32
    return %c0_i32, %c0_i32_0 : i32, i32
  }
  func.func @transform_4(%arg0: i32) -> (i32, i32) {
    %c0_i32 = arith.constant 0 : i32
    %c0_i32_0 = arith.constant 0 : i32
    %c0_i32_1 = arith.constant 0 : i32
    return %c0_i32, %c0_i32_0 : i32, i32
  }
}

module attributes {stable_mosaic.version = 11 : i64} {
  func.func @_conv3x3_kernel(%arg0: i32, %arg1: memref<256x128xf32, #tpu.memory_space<vmem>>, %arg2: memref<1x128xf32, #tpu.memory_space<vmem>>, %arg3: memref<1x128xf32, #tpu.memory_space<vmem>>, %arg4: memref<1152x128xbf16, #tpu.memory_space<vmem>>, %arg5: memref<256x128xf32, #tpu.memory_space<vmem>>, %arg6: memref<1x128xf32, #tpu.memory_space<vmem>>, %arg7: memref<1x128xf32, #tpu.memory_space<vmem>>, %arg8: memref<18x18x128xf32, #tpu.memory_space<vmem>>, %arg9: memref<256x1152xbf16, #tpu.memory_space<vmem>>) attributes {dimension_semantics = [#tpu.dimension_semantics<arbitrary>], iteration_bounds = array<i64: 2>, scalar_prefetch = 0 : i64, scratch_operands = 2 : i64, tpu.core_type = #tpu.core_type<tc>, window_params = [{transform_indices = @transform_0, window_bounds = array<i64: 256, 128>}, {pipeline_mode = #tpu.pipeline_mode<synchronous>, transform_indices = @transform_1, window_bounds = array<i64: 1, 128>}, {pipeline_mode = #tpu.pipeline_mode<synchronous>, transform_indices = @transform_2, window_bounds = array<i64: 1, 128>}, {pipeline_mode = #tpu.pipeline_mode<synchronous>, transform_indices = @transform_3, window_bounds = array<i64: 1152, 128>}, {transform_indices = @transform_4, window_bounds = array<i64: 256, 128>}, {pipeline_mode = #tpu.pipeline_mode<synchronous>, transform_indices = @transform_5, window_bounds = array<i64: 1, 128>}, {pipeline_mode = #tpu.pipeline_mode<synchronous>, transform_indices = @transform_6, window_bounds = array<i64: 1, 128>}]} {
    %c0_i32 = arith.constant 0 : i32
    %0 = arith.cmpi eq, %arg0, %c0_i32 : i32
    %1 = arith.extui %0 : i1 to i32
    %c0_i32_0 = arith.constant 0 : i32
    %2 = arith.cmpi ne, %1, %c0_i32_0 : i32
    scf.if %2 {
      %cst_61 = arith.constant 0.000000e+00 : f32
      %65 = vector.broadcast %cst_61 : f32 to vector<18x18x128xf32>
      %c0_62 = arith.constant 0 : index
      %c0_63 = arith.constant 0 : index
      %c0_64 = arith.constant 0 : index
      %66 = vector.load %arg8[%c0_62, %c0_63, %c0_64] : memref<18x18x128xf32, #tpu.memory_space<vmem>>, vector<18x18x128xf32>
      tpu.vector_store %arg8[%c0_62, %c0_63, %c0_64], %65 {strides = array<i32>} : memref<18x18x128xf32, #tpu.memory_space<vmem>>, vector<18x18x128xf32>,
      %cst_65 = arith.constant 0.000000e+00 : f32
      %67 = vector.broadcast %cst_65 : f32 to vector<1x128xf32>
      %c0_66 = arith.constant 0 : index
      %c0_67 = arith.constant 0 : index
      %68 = vector.load %arg6[%c0_66, %c0_67] : memref<1x128xf32, #tpu.memory_space<vmem>>, vector<1x128xf32>
      tpu.vector_store %arg6[%c0_66, %c0_67], %67 {strides = array<i32>} : memref<1x128xf32, #tpu.memory_space<vmem>>, vector<1x128xf32>,
      %cst_68 = arith.constant 0.000000e+00 : f32
      %69 = vector.broadcast %cst_68 : f32 to vector<1x128xf32>
      %c0_69 = arith.constant 0 : index
      %c0_70 = arith.constant 0 : index
      %70 = vector.load %arg7[%c0_69, %c0_70] : memref<1x128xf32, #tpu.memory_space<vmem>>, vector<1x128xf32>
      tpu.vector_store %arg7[%c0_69, %c0_70], %69 {strides = array<i32>} : memref<1x128xf32, #tpu.memory_space<vmem>>, vector<1x128xf32>,
    } else {
    }
    %c0 = arith.constant 0 : index
    %c0_1 = arith.constant 0 : index
    %3 = vector.load %arg1[%c0, %c0_1] : memref<256x128xf32, #tpu.memory_space<vmem>>, vector<256x128xf32>
    %c0_2 = arith.constant 0 : index
    %c0_3 = arith.constant 0 : index
    %4 = vector.load %arg2[%c0_2, %c0_3] : memref<1x128xf32, #tpu.memory_space<vmem>>, vector<1x128xf32>
    %5 = vector.broadcast %4 : vector<1x128xf32> to vector<256x128xf32>
    %6 = arith.mulf %3, %5 : vector<256x128xf32>
    %c0_4 = arith.constant 0 : index
    %c0_5 = arith.constant 0 : index
    %7 = vector.load %arg3[%c0_4, %c0_5] : memref<1x128xf32, #tpu.memory_space<vmem>>, vector<1x128xf32>
    %8 = vector.broadcast %7 : vector<1x128xf32> to vector<256x128xf32>
    %9 = arith.addf %6, %8 : vector<256x128xf32>
    %cst = arith.constant 0.000000e+00 : f32
    %10 = vector.broadcast %cst : f32 to vector<256x128xf32>
    %11 = arith.maximumf %9, %10 : vector<256x128xf32>
    %12 = vector.shape_cast %11 : vector<256x128xf32> to vector<16x16x128xf32>
    %c1 = arith.constant 1 : index
    %c1_6 = arith.constant 1 : index
    %c0_7 = arith.constant 0 : index
    %13 = vector.load %arg8[%c1, %c1_6, %c0_7] : memref<18x18x128xf32, #tpu.memory_space<vmem>>, vector<16x16x128xf32>
    tpu.vector_store %arg8[%c1, %c1_6, %c0_7], %12 {strides = array<i32>} : memref<18x18x128xf32, #tpu.memory_space<vmem>>, vector<16x16x128xf32>,
    %c0_8 = arith.constant 0 : index
    %c0_9 = arith.constant 0 : index
    %c0_10 = arith.constant 0 : index
    %14 = vector.load %arg8[%c0_8, %c0_9, %c0_10] : memref<18x18x128xf32, #tpu.memory_space<vmem>>, vector<16x16x128xf32>
    %15 = vector.shape_cast %14 : vector<16x16x128xf32> to vector<256x128xf32>
    %16 = arith.truncf %15 : vector<256x128xf32> to vector<256x128xbf16>
    %c0_11 = arith.constant 0 : index
    %c0_12 = arith.constant 0 : index
    %17 = vector.load %arg9[%c0_11, %c0_12] : memref<256x1152xbf16, #tpu.memory_space<vmem>>, vector<256x128xbf16>
    tpu.vector_store %arg9[%c0_11, %c0_12], %16 {strides = array<i32>} : memref<256x1152xbf16, #tpu.memory_space<vmem>>, vector<256x128xbf16>,
    %c0_13 = arith.constant 0 : index
    %c1_14 = arith.constant 1 : index
    %c0_15 = arith.constant 0 : index
    %18 = vector.load %arg8[%c0_13, %c1_14, %c0_15] : memref<18x18x128xf32, #tpu.memory_space<vmem>>, vector<16x16x128xf32>
    %19 = vector.shape_cast %18 : vector<16x16x128xf32> to vector<256x128xf32>
    %20 = arith.truncf %19 : vector<256x128xf32> to vector<256x128xbf16>
    %c0_16 = arith.constant 0 : index
    %c128 = arith.constant 128 : index
    %21 = vector.load %arg9[%c0_16, %c128] : memref<256x1152xbf16, #tpu.memory_space<vmem>>, vector<256x128xbf16>
    tpu.vector_store %arg9[%c0_16, %c128], %20 {strides = array<i32>} : memref<256x1152xbf16, #tpu.memory_space<vmem>>, vector<256x128xbf16>,
    %c0_17 = arith.constant 0 : index
    %c2 = arith.constant 2 : index
    %c0_18 = arith.constant 0 : index
    %22 = vector.load %arg8[%c0_17, %c2, %c0_18] : memref<18x18x128xf32, #tpu.memory_space<vmem>>, vector<16x16x128xf32>
    %23 = vector.shape_cast %22 : vector<16x16x128xf32> to vector<256x128xf32>
    %24 = arith.truncf %23 : vector<256x128xf32> to vector<256x128xbf16>
    %c0_19 = arith.constant 0 : index
    %c256 = arith.constant 256 : index
    %25 = vector.load %arg9[%c0_19, %c256] : memref<256x1152xbf16, #tpu.memory_space<vmem>>, vector<256x128xbf16>
    tpu.vector_store %arg9[%c0_19, %c256], %24 {strides = array<i32>} : memref<256x1152xbf16, #tpu.memory_space<vmem>>, vector<256x128xbf16>,
    %c1_20 = arith.constant 1 : index
    %c0_21 = arith.constant 0 : index
    %c0_22 = arith.constant 0 : index
    %26 = vector.load %arg8[%c1_20, %c0_21, %c0_22] : memref<18x18x128xf32, #tpu.memory_space<vmem>>, vector<16x16x128xf32>
    %27 = vector.shape_cast %26 : vector<16x16x128xf32> to vector<256x128xf32>
    %28 = arith.truncf %27 : vector<256x128xf32> to vector<256x128xbf16>
    %c0_23 = arith.constant 0 : index
    %c384 = arith.constant 384 : index
    %29 = vector.load %arg9[%c0_23, %c384] : memref<256x1152xbf16, #tpu.memory_space<vmem>>, vector<256x128xbf16>
    tpu.vector_store %arg9[%c0_23, %c384], %28 {strides = array<i32>} : memref<256x1152xbf16, #tpu.memory_space<vmem>>, vector<256x128xbf16>,
    %c1_24 = arith.constant 1 : index
    %c1_25 = arith.constant 1 : index
    %c0_26 = arith.constant 0 : index
    %30 = vector.load %arg8[%c1_24, %c1_25, %c0_26] : memref<18x18x128xf32, #tpu.memory_space<vmem>>, vector<16x16x128xf32>
    %31 = vector.shape_cast %30 : vector<16x16x128xf32> to vector<256x128xf32>
    %32 = arith.truncf %31 : vector<256x128xf32> to vector<256x128xbf16>
    %c0_27 = arith.constant 0 : index
    %c512 = arith.constant 512 : index
    %33 = vector.load %arg9[%c0_27, %c512] : memref<256x1152xbf16, #tpu.memory_space<vmem>>, vector<256x128xbf16>
    tpu.vector_store %arg9[%c0_27, %c512], %32 {strides = array<i32>} : memref<256x1152xbf16, #tpu.memory_space<vmem>>, vector<256x128xbf16>,
    %c1_28 = arith.constant 1 : index
    %c2_29 = arith.constant 2 : index
    %c0_30 = arith.constant 0 : index
    %34 = vector.load %arg8[%c1_28, %c2_29, %c0_30] : memref<18x18x128xf32, #tpu.memory_space<vmem>>, vector<16x16x128xf32>
    %35 = vector.shape_cast %34 : vector<16x16x128xf32> to vector<256x128xf32>
    %36 = arith.truncf %35 : vector<256x128xf32> to vector<256x128xbf16>
    %c0_31 = arith.constant 0 : index
    %c640 = arith.constant 640 : index
    %37 = vector.load %arg9[%c0_31, %c640] : memref<256x1152xbf16, #tpu.memory_space<vmem>>, vector<256x128xbf16>
    tpu.vector_store %arg9[%c0_31, %c640], %36 {strides = array<i32>} : memref<256x1152xbf16, #tpu.memory_space<vmem>>, vector<256x128xbf16>,
    %c2_32 = arith.constant 2 : index
    %c0_33 = arith.constant 0 : index
    %c0_34 = arith.constant 0 : index
    %38 = vector.load %arg8[%c2_32, %c0_33, %c0_34] : memref<18x18x128xf32, #tpu.memory_space<vmem>>, vector<16x16x128xf32>
    %39 = vector.shape_cast %38 : vector<16x16x128xf32> to vector<256x128xf32>
    %40 = arith.truncf %39 : vector<256x128xf32> to vector<256x128xbf16>
    %c0_35 = arith.constant 0 : index
    %c768 = arith.constant 768 : index
    %41 = vector.load %arg9[%c0_35, %c768] : memref<256x1152xbf16, #tpu.memory_space<vmem>>, vector<256x128xbf16>
    tpu.vector_store %arg9[%c0_35, %c768], %40 {strides = array<i32>} : memref<256x1152xbf16, #tpu.memory_space<vmem>>, vector<256x128xbf16>,
    %c2_36 = arith.constant 2 : index
    %c1_37 = arith.constant 1 : index
    %c0_38 = arith.constant 0 : index
    %42 = vector.load %arg8[%c2_36, %c1_37, %c0_38] : memref<18x18x128xf32, #tpu.memory_space<vmem>>, vector<16x16x128xf32>
    %43 = vector.shape_cast %42 : vector<16x16x128xf32> to vector<256x128xf32>
    %44 = arith.truncf %43 : vector<256x128xf32> to vector<256x128xbf16>
    %c0_39 = arith.constant 0 : index
    %c896 = arith.constant 896 : index
    %45 = vector.load %arg9[%c0_39, %c896] : memref<256x1152xbf16, #tpu.memory_space<vmem>>, vector<256x128xbf16>
    tpu.vector_store %arg9[%c0_39, %c896], %44 {strides = array<i32>} : memref<256x1152xbf16, #tpu.memory_space<vmem>>, vector<256x128xbf16>,
    %c2_40 = arith.constant 2 : index
    %c2_41 = arith.constant 2 : index
    %c0_42 = arith.constant 0 : index
    %46 = vector.load %arg8[%c2_40, %c2_41, %c0_42] : memref<18x18x128xf32, #tpu.memory_space<vmem>>, vector<16x16x128xf32>
    %47 = vector.shape_cast %46 : vector<16x16x128xf32> to vector<256x128xf32>
    %48 = arith.truncf %47 : vector<256x128xf32> to vector<256x128xbf16>
    %c0_43 = arith.constant 0 : index
    %c1024 = arith.constant 1024 : index
    %49 = vector.load %arg9[%c0_43, %c1024] : memref<256x1152xbf16, #tpu.memory_space<vmem>>, vector<256x128xbf16>
    tpu.vector_store %arg9[%c0_43, %c1024], %48 {strides = array<i32>} : memref<256x1152xbf16, #tpu.memory_space<vmem>>, vector<256x128xbf16>,
    %c0_44 = arith.constant 0 : index
    %c0_45 = arith.constant 0 : index
    %50 = vector.load %arg9[%c0_44, %c0_45] : memref<256x1152xbf16, #tpu.memory_space<vmem>>, vector<256x1152xbf16>
    %c0_46 = arith.constant 0 : index
    %c0_47 = arith.constant 0 : index
    %51 = vector.load %arg4[%c0_46, %c0_47] : memref<1152x128xbf16, #tpu.memory_space<vmem>>, vector<1152x128xbf16>
    %cst_48 = arith.constant dense<0.000000e+00> : vector<256x128xf32>
    %52 = tpu.matmul %50, %51, %cst_48 {dimension_numbers = #tpu.dot_dimension_numbers<[1], [0], [0], [1], [0, 0, 1, 1], [], []>} : vector<256x1152xbf16>, vector<1152x128xbf16>, vector<256x128xf32> -> vector<256x128xf32>
    %c0_49 = arith.constant 0 : index
    %c0_50 = arith.constant 0 : index
    %53 = vector.load %arg5[%c0_49, %c0_50] : memref<256x128xf32, #tpu.memory_space<vmem>>, vector<256x128xf32>
    tpu.vector_store %arg5[%c0_49, %c0_50], %52 {strides = array<i32>} : memref<256x128xf32, #tpu.memory_space<vmem>>, vector<256x128xf32>,
    %c0_51 = arith.constant 0 : index
    %c0_52 = arith.constant 0 : index
    %54 = vector.load %arg6[%c0_51, %c0_52] : memref<1x128xf32, #tpu.memory_space<vmem>>, vector<1x128xf32>
    %cst_53 = arith.constant dense<0.000000e+00> : vector<128xf32>
    %55 = vector.multi_reduction <add>, %52, %cst_53 [0] : vector<256x128xf32> to vector<128xf32>
    %56 = vector.shape_cast %55 : vector<128xf32> to vector<1x128xf32>
    %57 = arith.addf %54, %56 : vector<1x128xf32>
    %c0_54 = arith.constant 0 : index
    %c0_55 = arith.constant 0 : index
    %58 = vector.load %arg6[%c0_54, %c0_55] : memref<1x128xf32, #tpu.memory_space<vmem>>, vector<1x128xf32>
    tpu.vector_store %arg6[%c0_54, %c0_55], %57 {strides = array<i32>} : memref<1x128xf32, #tpu.memory_space<vmem>>, vector<1x128xf32>,
    %c0_56 = arith.constant 0 : index
    %c0_57 = arith.constant 0 : index
    %59 = vector.load %arg7[%c0_56, %c0_57] : memref<1x128xf32, #tpu.memory_space<vmem>>, vector<1x128xf32>
    %60 = arith.mulf %52, %52 : vector<256x128xf32>
    %cst_58 = arith.constant dense<0.000000e+00> : vector<128xf32>
    %61 = vector.multi_reduction <add>, %60, %cst_58 [0] : vector<256x128xf32> to vector<128xf32>
    %62 = vector.shape_cast %61 : vector<128xf32> to vector<1x128xf32>
    %63 = arith.addf %59, %62 : vector<1x128xf32>
    %c0_59 = arith.constant 0 : index
    %c0_60 = arith.constant 0 : index
    %64 = vector.load %arg7[%c0_59, %c0_60] : memref<1x128xf32, #tpu.memory_space<vmem>>, vector<1x128xf32>
    tpu.vector_store %arg7[%c0_59, %c0_60], %63 {strides = array<i32>} : memref<1x128xf32, #tpu.memory_space<vmem>>, vector<1x128xf32>,
    return
  }
  func.func @transform_0(%arg0: i32) -> (i32, i32) {
    %c0_i32 = arith.constant 0 : i32
    %c0_i32_0 = arith.constant 0 : i32
    return %arg0, %c0_i32 : i32, i32
  }
  func.func @transform_1(%arg0: i32) -> (i32, i32) {
    %c0_i32 = arith.constant 0 : i32
    %c0_i32_0 = arith.constant 0 : i32
    %c0_i32_1 = arith.constant 0 : i32
    return %c0_i32, %c0_i32_0 : i32, i32
  }
  func.func @transform_2(%arg0: i32) -> (i32, i32) {
    %c0_i32 = arith.constant 0 : i32
    %c0_i32_0 = arith.constant 0 : i32
    %c0_i32_1 = arith.constant 0 : i32
    return %c0_i32, %c0_i32_0 : i32, i32
  }
  func.func @transform_3(%arg0: i32) -> (i32, i32) {
    %c0_i32 = arith.constant 0 : i32
    %c0_i32_0 = arith.constant 0 : i32
    %c0_i32_1 = arith.constant 0 : i32
    return %c0_i32, %c0_i32_0 : i32, i32
  }
  func.func @transform_4(%arg0: i32) -> (i32, i32) {
    %c0_i32 = arith.constant 0 : i32
    %c0_i32_0 = arith.constant 0 : i32
    return %arg0, %c0_i32 : i32, i32
  }
  func.func @transform_5(%arg0: i32) -> (i32, i32) {
    %c0_i32 = arith.constant 0 : i32
    %c0_i32_0 = arith.constant 0 : i32
    %c0_i32_1 = arith.constant 0 : i32
    return %c0_i32, %c0_i32_0 : i32, i32
  }
  func.func @transform_6(%arg0: i32) -> (i32, i32) {
    %c0_i32 = arith.constant 0 : i32
    %c0_i32_0 = arith.constant 0 : i32
    %c0_i32_1 = arith.constant 0 : i32
    return %c0_i32, %c0_i32_0 : i32, i32
  }
}

module attributes {stable_mosaic.version = 11 : i64} {
  func.func @_residual_kernel(%arg0: i32, %arg1: memref<256x128xf32, #tpu.memory_space<vmem>>, %arg2: memref<256x128xf32, #tpu.memory_space<vmem>>, %arg3: memref<1x128xf32, #tpu.memory_space<vmem>>, %arg4: memref<1x128xf32, #tpu.memory_space<vmem>>, %arg5: memref<256x128xf32, #tpu.memory_space<vmem>>) attributes {dimension_semantics = [#tpu.dimension_semantics<parallel>], iteration_bounds = array<i64: 2>, scalar_prefetch = 0 : i64, scratch_operands = 0 : i64, tpu.core_type = #tpu.core_type<tc>, window_params = [{transform_indices = @transform_0, window_bounds = array<i64: 256, 128>}, {transform_indices = @transform_1, window_bounds = array<i64: 256, 128>}, {pipeline_mode = #tpu.pipeline_mode<synchronous>, transform_indices = @transform_2, window_bounds = array<i64: 1, 128>}, {pipeline_mode = #tpu.pipeline_mode<synchronous>, transform_indices = @transform_3, window_bounds = array<i64: 1, 128>}, {transform_indices = @transform_4, window_bounds = array<i64: 256, 128>}]} {
    %c0 = arith.constant 0 : index
    %c0_0 = arith.constant 0 : index
    %0 = vector.load %arg1[%c0, %c0_0] : memref<256x128xf32, #tpu.memory_space<vmem>>, vector<256x128xf32>
    %c0_1 = arith.constant 0 : index
    %c0_2 = arith.constant 0 : index
    %1 = vector.load %arg2[%c0_1, %c0_2] : memref<256x128xf32, #tpu.memory_space<vmem>>, vector<256x128xf32>
    %c0_3 = arith.constant 0 : index
    %c0_4 = arith.constant 0 : index
    %2 = vector.load %arg3[%c0_3, %c0_4] : memref<1x128xf32, #tpu.memory_space<vmem>>, vector<1x128xf32>
    %3 = vector.broadcast %2 : vector<1x128xf32> to vector<256x128xf32>
    %4 = arith.mulf %1, %3 : vector<256x128xf32>
    %5 = arith.addf %0, %4 : vector<256x128xf32>
    %c0_5 = arith.constant 0 : index
    %c0_6 = arith.constant 0 : index
    %6 = vector.load %arg4[%c0_5, %c0_6] : memref<1x128xf32, #tpu.memory_space<vmem>>, vector<1x128xf32>
    %7 = vector.broadcast %6 : vector<1x128xf32> to vector<256x128xf32>
    %8 = arith.addf %5, %7 : vector<256x128xf32>
    %cst = arith.constant 0.000000e+00 : f32
    %9 = vector.broadcast %cst : f32 to vector<256x128xf32>
    %10 = arith.maximumf %8, %9 : vector<256x128xf32>
    %c0_7 = arith.constant 0 : index
    %c0_8 = arith.constant 0 : index
    %11 = vector.load %arg5[%c0_7, %c0_8] : memref<256x128xf32, #tpu.memory_space<vmem>>, vector<256x128xf32>
    tpu.vector_store %arg5[%c0_7, %c0_8], %10 {strides = array<i32>} : memref<256x128xf32, #tpu.memory_space<vmem>>, vector<256x128xf32>,
    return
  }
  func.func @transform_0(%arg0: i32) -> (i32, i32) {
    %c0_i32 = arith.constant 0 : i32
    %c0_i32_0 = arith.constant 0 : i32
    return %arg0, %c0_i32 : i32, i32
  }
  func.func @transform_1(%arg0: i32) -> (i32, i32) {
    %c0_i32 = arith.constant 0 : i32
    %c0_i32_0 = arith.constant 0 : i32
    return %arg0, %c0_i32 : i32, i32
  }
  func.func @transform_2(%arg0: i32) -> (i32, i32) {
    %c0_i32 = arith.constant 0 : i32
    %c0_i32_0 = arith.constant 0 : i32
    %c0_i32_1 = arith.constant 0 : i32
    return %c0_i32, %c0_i32_0 : i32, i32
  }
  func.func @transform_3(%arg0: i32) -> (i32, i32) {
    %c0_i32 = arith.constant 0 : i32
    %c0_i32_0 = arith.constant 0 : i32
    %c0_i32_1 = arith.constant 0 : i32
    return %c0_i32, %c0_i32_0 : i32, i32
  }
  func.func @transform_4(%arg0: i32) -> (i32, i32) {
    %c0_i32 = arith.constant 0 : i32
    %c0_i32_0 = arith.constant 0 : i32
    return %arg0, %c0_i32 : i32, i32
  }
}

</mosaic_0001>

<llo_original>
// kernel: resnext_bottleneck.6
$region0: #{resnext_bottleneck.6}
  #allocation0 [shape = 'u32[]', space=smem, size = 0x4, offset = 0x4, fixed_abs, tag = 'smem constant byte address 0x4 - core index']
  #allocation1 [shape = 'u32[144,128]{1,0:T(1,128)}', space=vmem, size = 0x12000, scoped, tag = 'internal scratch']
  %s0 = inlined_call_operand.vmem [shape: f32[512,128], index: 0, kind: input, shape index: {}]
  %s1 = inlined_call_operand.vmem [shape: f32[1,128], index: 1, kind: input, shape index: {}]
  %s2 = inlined_call_operand.vmem [shape: f32[1,128], index: 2, kind: input, shape index: {}]
  %s3 = inlined_call_operand.vmem [shape: bf16[128,128], index: 3, kind: input, shape index: {}]
  %s4 = inlined_call_operand.vmem [shape: f32[512,128], index: 4, kind: output, shape index: {0}]
  %s5 = inlined_call_operand.vmem [shape: f32[1,128], index: 5, kind: output, shape index: {1}]
  %s6 = inlined_call_operand.vmem [shape: f32[1,128], index: 6, kind: output, shape index: {2}]
  %7 = xla_tuple %s4, %s5, %s6
  %s8 = sld [smem:[#allocation0]]
  $region69: #{resnext_bottleneck.6} parent=0
    _
  %s10 = ssub.s32 1, %s8
  %s11 = scalar_select 0, %s10, %s8
  loop: start=0, step=1, limit=4
  $region2: #{resnext_bottleneck.6} parent=0 // loop_pre_header
    _
  $region3: #{resnext_bottleneck.6} parent=0 // loop_header
    %s13 = sphi 0, %s17
    %p14 = scmp.ge.s32.totalorder %s13, 4
    %s23 = sphi 0, %s25
    %s26 = sphi 0, %s23
    %s27 = sphi 0, %s26
    %s43 = sphi 0, %s27
    %s47 = sphi 0, %s47
    %s49 = sphi 0, %s47
    %s50 = sphi 0, %s49
    %s64 = sphi 0, %s50
    %s68 = sphi 0, %s68
    %s70 = sphi 0, %s68
    %s71 = sphi 0, %s70
    %s85 = sphi 0, %s71
    %s89 = sphi 0, %s89
    %s91 = sphi 0, %s89
    %s92 = sphi 0, %s91
    %s106 = sphi 0, %s92
    %s112 = sphi 0, %s114
    %s115 = sphi 0, %s112
    %s116 = sphi 0, %s115
    %s132 = sphi 0, %s116
    %s136 = sphi 0, %s136
    %s138 = sphi 0, %s136
    %s139 = sphi 0, %s138
    %s153 = sphi 0, %s139
    %s157 = sphi 0, %s157
    %s159 = sphi 0, %s157
    %s160 = sphi 0, %s159
    %s174 = sphi 0, %s160
  $region4: #{resnext_bottleneck.6} parent=0 // loop_header_branch
    %16 = sbr.rel (%p14) target = $region8
  $region5: #{resnext_bottleneck.6} parent=0 // loop_body
    %s18 = ssub.s32 %s13, 1
    %s19 = ssub.s32 %s13, 2
    %s20 = sadd.s32 %s13, 1
    %s21 = ssub.s32 %s13, %s20
    %p22 = scmp.eq.s32.totalorder %s21, 0
    %s24 = sadd.s32 %s23, 1
    %s25 = scalar_select %p22, %s23, %s24
    %p28 = pneg %p22
    %p29 = scmp.eq.s32.totalorder %s13, 1
    %p30 = por %p28, %p29
    %p31 = scmp.ne.s32.totalorder %s23, %s26
    %p32 = scmp.eq.s32.totalorder %s13, 0
    %p33 = por %p31, %p32
    %p34 = scmp.ne.s32.totalorder %s23, %s26
    %p35 = scmp.eq.s32.totalorder %s18, 1
    %p36 = por %p34, %p35
    %p37 = scmp.ne.s32.totalorder %s26, %s27
    %p38 = scmp.eq.s32.totalorder %s18, 0
    %p39 = por %p37, %p38
    %p40 = scmp.ne.s32.totalorder %s26, %s27
    %p41 = scmp.eq.s32.totalorder %s19, 1
    %p42 = por %p40, %p41
    %p44 = scmp.ne.s32.totalorder %s27, %s43
    %p45 = scmp.eq.s32.totalorder %s19, 0
    %p46 = por %p44, %p45
    %s48 = sadd.s32 %s47, 1
    %p51 = scmp.eq.s32.totalorder %s13, 1
    %p52 = scmp.ne.s32.totalorder %s47, %s49
    %p53 = scmp.eq.s32.totalorder %s13, 0
    %p54 = por %p52, %p53
    %p55 = scmp.ne.s32.totalorder %s47, %s49
    %p56 = scmp.eq.s32.totalorder %s18, 1
    %p57 = por %p55, %p56
    %p58 = scmp.ne.s32.totalorder %s49, %s50
    %p59 = scmp.eq.s32.totalorder %s18, 0
    %p60 = por %p58, %p59
    %p61 = scmp.ne.s32.totalorder %s49, %s50
    %p62 = scmp.eq.s32.totalorder %s19, 1
    %p63 = por %p61, %p62
    %p65 = scmp.ne.s32.totalorder %s50, %s64
    %p66 = scmp.eq.s32.totalorder %s19, 0
    %p67 = por %p65, %p66
    %s69 = sadd.s32 %s68, 1
    %p72 = scmp.eq.s32.totalorder %s13, 1
    %p73 = scmp.ne.s32.totalorder %s68, %s70
    %p74 = scmp.eq.s32.totalorder %s13, 0
    %p75 = por %p73, %p74
    %p76 = scmp.ne.s32.totalorder %s68, %s70
    %p77 = scmp.eq.s32.totalorder %s18, 1
    %p78 = por %p76, %p77
    %p79 = scmp.ne.s32.totalorder %s70, %s71
    %p80 = scmp.eq.s32.totalorder %s18, 0
    %p81 = por %p79, %p80
    %p82 = scmp.ne.s32.totalorder %s70, %s71
    %p83 = scmp.eq.s32.totalorder %s19, 1
    %p84 = por %p82, %p83
    %p86 = scmp.ne.s32.totalorder %s71, %s85
    %p87 = scmp.eq.s32.totalorder %s19, 0
    %p88 = por %p86, %p87
    %s90 = sadd.s32 %s89, 1
    %p93 = scmp.eq.s32.totalorder %s13, 1
    %p94 = scmp.ne.s32.totalorder %s89, %s91
    %p95 = scmp.eq.s32.totalorder %s13, 0
    %p96 = por %p94, %p95
    %p97 = scmp.ne.s32.totalorder %s89, %s91
    %p98 = scmp.eq.s32.totalorder %s18, 1
    %p99 = por %p97, %p98
    %p100 = scmp.ne.s32.totalorder %s91, %s92
    %p101 = scmp.eq.s32.totalorder %s18, 0
    %p102 = por %p100, %p101
    %p103 = scmp.ne.s32.totalorder %s91, %s92
    %p104 = scmp.eq.s32.totalorder %s19, 1
    %p105 = por %p103, %p104
    %p107 = scmp.ne.s32.totalorder %s92, %s106
    %p108 = scmp.eq.s32.totalorder %s19, 0
    %p109 = por %p107, %p108
    %s110 = ssub.s32 %s13, %s20
    %p111 = scmp.eq.s32.totalorder %s110, 0
    %s113 = sadd.s32 %s112, 1
    %s114 = scalar_select %p111, %s112, %s113
    %p117 = pneg %p111
    %p118 = scmp.eq.s32.totalorder %s13, 1
    %p119 = por %p117, %p118
    %p120 = scmp.ne.s32.totalorder %s112, %s115
    %p121 = scmp.eq.s32.totalorder %s13, 0
    %p122 = por %p120, %p121
    %p123 = scmp.ne.s32.totalorder %s112, %s115
    %p124 = scmp.eq.s32.totalorder %s18, 1
    %p125 = por %p123, %p124
    %p126 = scmp.ne.s32.totalorder %s115, %s116
    %p127 = scmp.eq.s32.totalorder %s18, 0
    %p128 = por %p126, %p127
    %p129 = scmp.ne.s32.totalorder %s115, %s116
    %p130 = scmp.eq.s32.totalorder %s19, 1
    %p131 = por %p129, %p130
    %p133 = scmp.ne.s32.totalorder %s116, %s132
    %p134 = scmp.eq.s32.totalorder %s19, 0
    %p135 = por %p133, %p134
    %s137 = sadd.s32 %s136, 1
    %p140 = scmp.eq.s32.totalorder %s13, 1
    %p141 = scmp.ne.s32.totalorder %s136, %s138
    %p142 = scmp.eq.s32.totalorder %s13, 0
    %p143 = por %p141, %p142
    %p144 = scmp.ne.s32.totalorder %s136, %s138
    %p145 = scmp.eq.s32.totalorder %s18, 1
    %p146 = por %p144, %p145
    %p147 = scmp.ne.s32.totalorder %s138, %s139
    %p148 = scmp.eq.s32.totalorder %s18, 0
    %p149 = por %p147, %p148
    %p150 = scmp.ne.s32.totalorder %s138, %s139
    %p151 = scmp.eq.s32.totalorder %s19, 1
    %p152 = por %p150, %p151
    %p154 = scmp.ne.s32.totalorder %s139, %s153
    %p155 = scmp.eq.s32.totalorder %s19, 0
    %p156 = por %p154, %p155
    %s158 = sadd.s32 %s157, 1
    %p161 = scmp.eq.s32.totalorder %s13, 1
    %p162 = scmp.ne.s32.totalorder %s157, %s159
    %p163 = scmp.eq.s32.totalorder %s13, 0
    %p164 = por %p162, %p163
    %p165 = scmp.ne.s32.totalorder %s157, %s159
    %p166 = scmp.eq.s32.totalorder %s18, 1
    %p167 = por %p165, %p166
    %p168 = scmp.ne.s32.totalorder %s159, %s160
    %p169 = scmp.eq.s32.totalorder %s18, 0
    %p170 = por %p168, %p169
    %p171 = scmp.ne.s32.totalorder %s159, %s160
    %p172 = scmp.eq.s32.totalorder %s19, 1
    %p173 = por %p171, %p172
    %p175 = scmp.ne.s32.totalorder %s160, %s174
    %p176 = scmp.eq.s32.totalorder %s19, 0
    %p177 = por %p175, %p176
    %p178 = scmp.le.s32.totalorder 1, %s13
    %p179 = scmp.lt.s32.totalorder %s13, 3
    %p180 = pnand %p178, %p179
    %p181 = pneg %p180
    // Predicated region
    $region9: #{resnext_bottleneck.6} parent=5 // pred_check
      _
    $region10: #{resnext_bottleneck.6} parent=5 // pred_check_branch
      %183 = sbr.rel (%p180) target = $region12
    $region11: #{resnext_bottleneck.6} parent=5 // pred_region
      %s184 = ssub.s32 %s13, 1
      // Predicated region
      $region13: #{resnext_bottleneck.6} parent=11 // pred_check
        %p185 = pneg %p60
      $region14: #{resnext_bottleneck.6} parent=11 // pred_check_branch
        %187 = sbr.rel (%p185) target = $region16
      $region15: #{resnext_bottleneck.6} parent=11 // pred_region
        _
      $region16: #{resnext_bottleneck.6} parent=11 // pred_fallthru
        _
      // Predicated region
      $region17: #{resnext_bottleneck.6} parent=11 // pred_check
        %p188 = pneg %p81
      $region18: #{resnext_bottleneck.6} parent=11 // pred_check_branch
        %190 = sbr.rel (%p188) target = $region20
      $region19: #{resnext_bottleneck.6} parent=11 // pred_region
        _
      $region20: #{resnext_bottleneck.6} parent=11 // pred_fallthru
        _
      // Predicated region
      $region21: #{resnext_bottleneck.6} parent=11 // pred_check
        %p191 = pneg %p102
      $region22: #{resnext_bottleneck.6} parent=11 // pred_check_branch
        %193 = sbr.rel (%p191) target = $region24
      $region23: #{resnext_bottleneck.6} parent=11 // pred_region
        _
      $region24: #{resnext_bottleneck.6} parent=11 // pred_fallthru
        _
    $region12: #{resnext_bottleneck.6} parent=5 // pred_fallthru
      _
    %p194 = scmp.lt.s32.totalorder %s13, 2
    // Predicated region
    $region25: #{resnext_bottleneck.6} parent=5 // pred_check
      %p195 = pneg %p194
    $region26: #{resnext_bottleneck.6} parent=5 // pred_check_branch
      %197 = sbr.rel (%p195) target = $region28
    $region27: #{resnext_bottleneck.6} parent=5 // pred_region
      // Predicated region
      $region29: #{resnext_bottleneck.6} parent=27 // pred_check
        %p198 = pneg %p33
      $region30: #{resnext_bottleneck.6} parent=27 // pred_check_branch
        %200 = sbr.rel (%p198) target = $region32
      $region31: #{resnext_bottleneck.6} parent=27 // pred_region
        %s201 = smul.u32 32, %s13
        %p202 = scmp.lt.s32.totalorder %s201, 63
        %s203 = scalar_select %p202, %s201, 63
        %s204 = smul.addr %s203, 8
        %s205 = scalar_lea.vmem %s0, %s204
        %s206 = smul.u32 32, %s13
      $region32: #{resnext_bottleneck.6} parent=27 // pred_fallthru
        _
    $region28: #{resnext_bottleneck.6} parent=5 // pred_fallthru
      _
    %p207 = scmp.le.s32.totalorder 1, %s13
    %p208 = scmp.lt.s32.totalorder %s13, 3
    %p209 = pnand %p207, %p208
    %p210 = pneg %p209
    // Predicated region
    $region33: #{resnext_bottleneck.6} parent=5 // pred_check
      _
    $region34: #{resnext_bottleneck.6} parent=5 // pred_check_branch
      %212 = sbr.rel (%p209) target = $region36
    $region35: #{resnext_bottleneck.6} parent=5 // pred_region
      %s213 = ssub.s32 %s13, 1
      %s214 = smul.u32 32, %s18
      %p215 = scmp.lt.s32.totalorder %s214, 63
      %s216 = scalar_select %p215, %s214, 63
      %s217 = smul.addr %s216, 8
      %s218 = scalar_lea.vmem %s0, %s217
      %p219 = pneg %p39
      %p220 = pneg %p36
      %p221 = pneg %p60
      %p222 = pneg %p57
      %p223 = pneg %p81
      %p224 = pneg %p78
      %p225 = pneg %p102
      %p226 = pneg %p99
      %p227 = pneg %p128
      %p228 = pneg %p125
      %s229 = smul.u32 32, %s18
      %p230 = scmp.lt.s32.totalorder %s229, 63
      %s231 = scalar_select %p230, %s229, 63
      %s232 = smul.addr %s231, 8
      %s233 = scalar_lea.vmem %s4, %s232
      %p234 = pneg %p149
      %p235 = pneg %p146
      %p236 = pneg %p170
      %p237 = pneg %p167
      %s238 = smul.u32 32, %s18
      %p239 = scmp.lt.s32.totalorder %s238, 63
      %s240 = scalar_select %p239, %s238, 63
      %s241 = smul.addr %s240, 8
      %s242 = scalar_lea.vmem %s0, %s241
      %s243 = smul.u32 32, %s18
      %s244 = smul.u32 32, %s18
      %p245 = scmp.lt.s32.totalorder %s244, 63
      %s246 = scalar_select %p245, %s244, 63
      %s247 = smul.addr %s246, 8
      %s248 = scalar_lea.vmem %s4, %s247
      %s249 = smul.u32 32, %s18
      %p251 = scmp.eq.s32.totalorder %s18, 0
      // Predicated region
      $region37: #{resnext_bottleneck.6} parent=35 // pred_check
        %p252 = pneg %p251
      $region38: #{resnext_bottleneck.6} parent=35 // pred_check_branch
        %254 = sbr.rel (%p252) target = $region40
      $region39: #{resnext_bottleneck.6} parent=35 // pred_region
        %255 = vst [vmem:[%s5] sm:$0x1] 0.0
        %256 = vst [vmem:[%s6] sm:$0x1] 0.0
      $region40: #{resnext_bottleneck.6} parent=35 // pred_fallthru
        _
      %v257 = vld [vmem:[%s242] sm:$0xff]
      %v258 = vld [vmem:[%s242 + $0x8] sm:$0xff]
      %v259 = vld [vmem:[%s242 + $0x10] sm:$0xff]
      %v260 = vld [vmem:[%s242 + $0x18] sm:$0xff]
      %v261 = vld [vmem:[%s242 + $0x20] sm:$0xff]
      %v262 = vld [vmem:[%s242 + $0x28] sm:$0xff]
      %v263 = vld [vmem:[%s242 + $0x30] sm:$0xff]
      %v264 = vld [vmem:[%s242 + $0x38] sm:$0xff]
      %v265 = vld [vmem:[%s242 + $0x40] sm:$0xff]
      %v266 = vld [vmem:[%s242 + $0x48] sm:$0xff]
      %v267 = vld [vmem:[%s242 + $0x50] sm:$0xff]
      %v268 = vld [vmem:[%s242 + $0x58] sm:$0xff]
      %v269 = vld [vmem:[%s242 + $0x60] sm:$0xff]
      %v270 = vld [vmem:[%s242 + $0x68] sm:$0xff]
      %v271 = vld [vmem:[%s242 + $0x70] sm:$0xff]
      %v272 = vld [vmem:[%s242 + $0x78] sm:$0xff]
      %v273 = vld [vmem:[%s242 + $0x80] sm:$0xff]
      %v274 = vld [vmem:[%s242 + $0x88] sm:$0xff]
      %v275 = vld [vmem:[%s242 + $0x90] sm:$0xff]
      %v276 = vld [vmem:[%s242 + $0x98] sm:$0xff]
      %v277 = vld [vmem:[%s242 + $0xa0] sm:$0xff]
      %v278 = vld [vmem:[%s242 + $0xa8] sm:$0xff]
      %v279 = vld [vmem:[%s242 + $0xb0] sm:$0xff]
      %v280 = vld [vmem:[%s242 + $0xb8] sm:$0xff]
      %v281 = vld [vmem:[%s242 + $0xc0] sm:$0xff]
      %v282 = vld [vmem:[%s242 + $0xc8] sm:$0xff]
      %v283 = vld [vmem:[%s242 + $0xd0] sm:$0xff]
      %v284 = vld [vmem:[%s242 + $0xd8] sm:$0xff]
      %v285 = vld [vmem:[%s242 + $0xe0] sm:$0xff]
      %v286 = vld [vmem:[%s242 + $0xe8] sm:$0xff]
      %v287 = vld [vmem:[%s242 + $0xf0] sm:$0xff]
      %v288 = vld [vmem:[%s242 + $0xf8] sm:$0xff]
      %v289 = vld [vmem:[%s1] sm:$0x1]
      %v291 = vlaneseq
      %v292 = vshrl.u32 %v291, 7
      %v293 = vsub.s32 0, %v292
      %v294 = vrot.slane %v289, %v293
      %v296 = vmul.f32 %v257, %v294
      %v297 = vmul.f32 %v258, %v294
      %v298 = vmul.f32 %v259, %v294
      %v299 = vmul.f32 %v260, %v294
      %v300 = vmul.f32 %v261, %v294
      %v301 = vmul.f32 %v262, %v294
      %v302 = vmul.f32 %v263, %v294
      %v303 = vmul.f32 %v264, %v294
      %v304 = vmul.f32 %v265, %v294
      %v305 = vmul.f32 %v266, %v294
      %v306 = vmul.f32 %v267, %v294
      %v307 = vmul.f32 %v268, %v294
      %v308 = vmul.f32 %v269, %v294
      %v309 = vmul.f32 %v270, %v294
      %v310 = vmul.f32 %v271, %v294
      %v311 = vmul.f32 %v272, %v294
      %v312 = vmul.f32 %v273, %v294
      %v313 = vmul.f32 %v274, %v294
      %v314 = vmul.f32 %v275, %v294
      %v315 = vmul.f32 %v276, %v294
      %v316 = vmul.f32 %v277, %v294
      %v317 = vmul.f32 %v278, %v294
      %v318 = vmul.f32 %v279, %v294
      %v319 = vmul.f32 %v280, %v294
      %v320 = vmul.f32 %v281, %v294
      %v321 = vmul.f32 %v282, %v294
      %v322 = vmul.f32 %v283, %v294
      %v323 = vmul.f32 %v284, %v294
      %v324 = vmul.f32 %v285, %v294
      %v325 = vmul.f32 %v286, %v294
      %v326 = vmul.f32 %v287, %v294
      %v327 = vmul.f32 %v288, %v294
      %v328 = vld [vmem:[%s2] sm:$0x1]
      %v330 = vlaneseq
      %v331 = vshrl.u32 %v330, 7
      %v332 = vsub.s32 0, %v331
      %v333 = vrot.slane %v328, %v332
      %v335 = vadd.f32 %v296, %v333
      %v336 = vadd.f32 %v297, %v333
      %v337 = vadd.f32 %v298, %v333
      %v338 = vadd.f32 %v299, %v333
      %v339 = vadd.f32 %v300, %v333
      %v340 = vadd.f32 %v301, %v333
      %v341 = vadd.f32 %v302, %v333
      %v342 = vadd.f32 %v303, %v333
      %v343 = vadd.f32 %v304, %v333
      %v344 = vadd.f32 %v305, %v333
      %v345 = vadd.f32 %v306, %v333
      %v346 = vadd.f32 %v307, %v333
      %v347 = vadd.f32 %v308, %v333
      %v348 = vadd.f32 %v309, %v333
      %v349 = vadd.f32 %v310, %v333
      %v350 = vadd.f32 %v311, %v333
      %v351 = vadd.f32 %v312, %v333
      %v352 = vadd.f32 %v313, %v333
      %v353 = vadd.f32 %v314, %v333
      %v354 = vadd.f32 %v315, %v333
      %v355 = vadd.f32 %v316, %v333
      %v356 = vadd.f32 %v317, %v333
      %v357 = vadd.f32 %v318, %v333
      %v358 = vadd.f32 %v319, %v333
      %v359 = vadd.f32 %v320, %v333
      %v360 = vadd.f32 %v321, %v333
      %v361 = vadd.f32 %v322, %v333
      %v362 = vadd.f32 %v323, %v333
      %v363 = vadd.f32 %v324, %v333
      %v364 = vadd.f32 %v325, %v333
      %v365 = vadd.f32 %v326, %v333
      %v366 = vadd.f32 %v327, %v333
      %v367 = vmax.f32 %v335, 0.0
      %v368 = vmax.f32 %v336, 0.0
      %v369 = vmax.f32 %v337, 0.0
      %v370 = vmax.f32 %v338, 0.0
      %v371 = vmax.f32 %v339, 0.0
      %v372 = vmax.f32 %v340, 0.0
      %v373 = vmax.f32 %v341, 0.0
      %v374 = vmax.f32 %v342, 0.0
      %v375 = vmax.f32 %v343, 0.0
      %v376 = vmax.f32 %v344, 0.0
      %v377 = vmax.f32 %v345, 0.0
      %v378 = vmax.f32 %v346, 0.0
      %v379 = vmax.f32 %v347, 0.0
      %v380 = vmax.f32 %v348, 0.0
      %v381 = vmax.f32 %v349, 0.0
      %v382 = vmax.f32 %v350, 0.0
      %v383 = vmax.f32 %v351, 0.0
      %v384 = vmax.f32 %v352, 0.0
      %v385 = vmax.f32 %v353, 0.0
      %v386 = vmax.f32 %v354, 0.0
      %v387 = vmax.f32 %v355, 0.0
      %v388 = vmax.f32 %v356, 0.0
      %v389 = vmax.f32 %v357, 0.0
      %v390 = vmax.f32 %v358, 0.0
      %v391 = vmax.f32 %v359, 0.0
      %v392 = vmax.f32 %v360, 0.0
      %v393 = vmax.f32 %v361, 0.0
      %v394 = vmax.f32 %v362, 0.0
      %v395 = vmax.f32 %v363, 0.0
      %v396 = vmax.f32 %v364, 0.0
      %v397 = vmax.f32 %v365, 0.0
      %v398 = vmax.f32 %v366, 0.0
      %v399 = vpack.c.bf16 %v368, %v367
      %v400 = vpack.c.bf16 %v370, %v369
      %v401 = vpack.c.bf16 %v372, %v371
      %v402 = vpack.c.bf16 %v374, %v373
      %v403 = vpack.c.bf16 %v376, %v375
      %v404 = vpack.c.bf16 %v378, %v377
      %v405 = vpack.c.bf16 %v380, %v379
      %v406 = vpack.c.bf16 %v382, %v381
      %v407 = vpack.c.bf16 %v384, %v383
      %v408 = vpack.c.bf16 %v386, %v385
      %v409 = vpack.c.bf16 %v388, %v387
      %v410 = vpack.c.bf16 %v390, %v389
      %v411 = vpack.c.bf16 %v392, %v391
      %v412 = vpack.c.bf16 %v394, %v393
      %v413 = vpack.c.bf16 %v396, %v395
      %v414 = vpack.c.bf16 %v398, %v397
      %v415 = vld [vmem:[%s3] sm:$0xf]
      %v416 = vld [vmem:[%s3 + $0x4] sm:$0xf]
      %v417 = vld [vmem:[%s3 + $0x8] sm:$0xf]
      %v418 = vld [vmem:[%s3 + $0xc] sm:$0xf]
      %v419 = vld [vmem:[%s3 + $0x10] sm:$0xf]
      %v420 = vld [vmem:[%s3 + $0x14] sm:$0xf]
      %v421 = vld [vmem:[%s3 + $0x18] sm:$0xf]
      %v422 = vld [vmem:[%s3 + $0x1c] sm:$0xf]
      %v423 = vld [vmem:[%s3 + $0x20] sm:$0xf]
      %v424 = vld [vmem:[%s3 + $0x24] sm:$0xf]
      %v425 = vld [vmem:[%s3 + $0x28] sm:$0xf]
      %v426 = vld [vmem:[%s3 + $0x2c] sm:$0xf]
      %v427 = vld [vmem:[%s3 + $0x30] sm:$0xf]
      %v428 = vld [vmem:[%s3 + $0x34] sm:$0xf]
      %v429 = vld [vmem:[%s3 + $0x38] sm:$0xf]
      %v430 = vld [vmem:[%s3 + $0x3c] sm:$0xf]
      %v447 = vunpack.c.l.b16 %v415
      %v448 = vunpack.c.l.b16 %v416
      %v449 = vunpack.c.l.b16 %v417
      %v450 = vunpack.c.l.b16 %v418
      %v451 = vunpack.c.l.b16 %v419
      %v452 = vunpack.c.l.b16 %v420
      %v453 = vunpack.c.l.b16 %v421
      %v454 = vunpack.c.l.b16 %v422
      %v455 = vunpack.c.l.b16 %v423
      %v456 = vunpack.c.l.b16 %v424
      %v457 = vunpack.c.l.b16 %v425
      %v458 = vunpack.c.l.b16 %v426
      %v459 = vunpack.c.l.b16 %v427
      %v460 = vunpack.c.l.b16 %v428
      %v461 = vunpack.c.l.b16 %v429
      %v462 = vunpack.c.l.b16 %v430
      %v463 = vpack.c.b16 %v448, %v447
      %v464 = vpack.c.b16 %v450, %v449
      %v465 = vpack.c.b16 %v452, %v451
      %v466 = vpack.c.b16 %v454, %v453
      %v467 = vpack.c.b16 %v456, %v455
      %v468 = vpack.c.b16 %v458, %v457
      %v469 = vpack.c.b16 %v460, %v459
      %v470 = vpack.c.b16 %v462, %v461
      %479 = vmatprep.subr.bf16.mxu0 0
      %480 = vmatpush1.bf16.msra.mxu0 %v470
      %481 = vmatprep.subr.bf16.mxu0 0
      %482 = vmatpush1.bf16.msra.mxu0 %v469
      %483 = vmatprep.subr.bf16.mxu0 0
      %484 = vmatpush1.bf16.msra.mxu0 %v468
      %485 = vmatprep.subr.bf16.mxu0 0
      %486 = vmatpush1.bf16.msra.mxu0 %v467
      %487 = vmatprep.subr.bf16.mxu0 0
      %488 = vmatpush1.bf16.msra.mxu0 %v466
      %489 = vmatprep.subr.bf16.mxu0 0
      %490 = vmatpush1.bf16.msra.mxu0 %v465
      %491 = vmatprep.subr.bf16.mxu0 0
      %492 = vmatpush1.bf16.msra.mxu0 %v464
      %493 = vmatprep.subr.bf16.mxu0 0
      %494 = vmatpush1.bf16.msra.mxu0 %v463
      %495 = vmatprep.subr.bf16.mxu0 0
      %496 = vmatpush2.bf16.msra.mxu0 0
      %497 = vmatprep.subr.bf16.mxu0 0
      %498 = vmatpush2.bf16.msra.mxu0 0
      %499 = vmatprep.subr.bf16.mxu0 0
      %500 = vmatpush2.bf16.msra.mxu0 0
      %501 = vmatprep.subr.bf16.mxu0 0
      %502 = vmatpush2.bf16.msra.mxu0 0
      %503 = vmatprep.subr.bf16.mxu0 0
      %504 = vmatpush2.bf16.msra.mxu0 0
      %505 = vmatprep.subr.bf16.mxu0 0
      %506 = vmatpush2.bf16.msra.mxu0 0
      %507 = vmatprep.subr.bf16.mxu0 0
      %508 = vmatpush2.bf16.msra.mxu0 0
      %509 = vmatprep.subr.bf16.mxu0 0
      %510 = vmatpush2.bf16.msra.mxu0 0
      %511 = vmatprep.mubr.bf16.mxu0 0
      %512 = vmatmul.mubr.bf16.gmra.mxu0 %v399
      %v513 = vpop.f32.mrf.mxu0
      %v514 = vadd.f32 0.0, %v513
      %v515 = vpop.f32.mrf.mxu0
      %v516 = vpop.f32.mrf.mxu0
      %v517 = vadd.f32 0.0, %v516
      %v518 = vpop.f32.mrf.mxu0
      %519 = vmatprep.mubr.bf16.mxu0 0
      %520 = vmatmul.mubr.bf16.gmra.mxu0 %v400
      %v521 = vpop.f32.mrf.mxu0
      %v522 = vadd.f32 0.0, %v521
      %v523 = vpop.f32.mrf.mxu0
      %v524 = vpop.f32.mrf.mxu0
      %v525 = vadd.f32 0.0, %v524
      %v526 = vpop.f32.mrf.mxu0
      %527 = vmatprep.mubr.bf16.mxu0 0
      %528 = vmatmul.mubr.bf16.gmra.mxu0 %v401
      %v529 = vpop.f32.mrf.mxu0
      %v530 = vadd.f32 0.0, %v529
      %v531 = vpop.f32.mrf.mxu0
      %v532 = vpop.f32.mrf.mxu0
      %v533 = vadd.f32 0.0, %v532
      %v534 = vpop.f32.mrf.mxu0
      %535 = vmatprep.mubr.bf16.mxu0 0
      %536 = vmatmul.mubr.bf16.gmra.mxu0 %v402
      %v537 = vpop.f32.mrf.mxu0
      %v538 = vadd.f32 0.0, %v537
      %v539 = vpop.f32.mrf.mxu0
      %v540 = vpop.f32.mrf.mxu0
      %v541 = vadd.f32 0.0, %v540
      %v542 = vpop.f32.mrf.mxu0
      %543 = vmatprep.mubr.bf16.mxu0 0
      %544 = vmatmul.mubr.bf16.gmra.mxu0 %v403
      %v545 = vpop.f32.mrf.mxu0
      %v546 = vadd.f32 0.0, %v545
      %v547 = vpop.f32.mrf.mxu0
      %v548 = vpop.f32.mrf.mxu0
      %v549 = vadd.f32 0.0, %v548
      %v550 = vpop.f32.mrf.mxu0
      %551 = vmatprep.mubr.bf16.mxu0 0
      %552 = vmatmul.mubr.bf16.gmra.mxu0 %v404
      %v553 = vpop.f32.mrf.mxu0
      %v554 = vadd.f32 0.0, %v553
      %v555 = vpop.f32.mrf.mxu0
      %v556 = vpop.f32.mrf.mxu0
      %v557 = vadd.f32 0.0, %v556
      %v558 = vpop.f32.mrf.mxu0
      %559 = vmatprep.mubr.bf16.mxu0 0
      %560 = vmatmul.mubr.bf16.gmra.mxu0 %v405
      %v561 = vpop.f32.mrf.mxu0
      %v562 = vadd.f32 0.0, %v561
      %v563 = vpop.f32.mrf.mxu0
      %v564 = vpop.f32.mrf.mxu0
      %v565 = vadd.f32 0.0, %v564
      %v566 = vpop.f32.mrf.mxu0
      %567 = vmatprep.mubr.bf16.mxu0 0
      %568 = vmatmul.mubr.bf16.gmra.mxu0 %v406
      %v569 = vpop.f32.mrf.mxu0
      %v570 = vadd.f32 0.0, %v569
      %v571 = vpop.f32.mrf.mxu0
      %v572 = vpop.f32.mrf.mxu0
      %v573 = vadd.f32 0.0, %v572
      %v574 = vpop.f32.mrf.mxu0
      %575 = vmatprep.mubr.bf16.mxu0 0
      %576 = vmatmul.mubr.bf16.gmra.mxu0 %v407
      %v577 = vpop.f32.mrf.mxu0
      %v578 = vadd.f32 0.0, %v577
      %v579 = vpop.f32.mrf.mxu0
      %v580 = vpop.f32.mrf.mxu0
      %v581 = vadd.f32 0.0, %v580
      %v582 = vpop.f32.mrf.mxu0
      %583 = vmatprep.mubr.bf16.mxu0 0
      %584 = vmatmul.mubr.bf16.gmra.mxu0 %v408
      %v585 = vpop.f32.mrf.mxu0
      %v586 = vadd.f32 0.0, %v585
      %v587 = vpop.f32.mrf.mxu0
      %v588 = vpop.f32.mrf.mxu0
      %v589 = vadd.f32 0.0, %v588
      %v590 = vpop.f32.mrf.mxu0
      %591 = vmatprep.mubr.bf16.mxu0 0
      %592 = vmatmul.mubr.bf16.gmra.mxu0 %v409
      %v593 = vpop.f32.mrf.mxu0
      %v594 = vadd.f32 0.0, %v593
      %v595 = vpop.f32.mrf.mxu0
      %v596 = vpop.f32.mrf.mxu0
      %v597 = vadd.f32 0.0, %v596
      %v598 = vpop.f32.mrf.mxu0
      %599 = vmatprep.mubr.bf16.mxu0 0
      %600 = vmatmul.mubr.bf16.gmra.mxu0 %v410
      %v601 = vpop.f32.mrf.mxu0
      %v602 = vadd.f32 0.0, %v601
      %v603 = vpop.f32.mrf.mxu0
      %v604 = vpop.f32.mrf.mxu0
      %v605 = vadd.f32 0.0, %v604
      %v606 = vpop.f32.mrf.mxu0
      %607 = vmatprep.mubr.bf16.mxu0 0
      %608 = vmatmul.mubr.bf16.gmra.mxu0 %v411
      %v609 = vpop.f32.mrf.mxu0
      %v610 = vadd.f32 0.0, %v609
      %v611 = vpop.f32.mrf.mxu0
      %v612 = vpop.f32.mrf.mxu0
      %v613 = vadd.f32 0.0, %v612
      %v614 = vpop.f32.mrf.mxu0
      %615 = vmatprep.mubr.bf16.mxu0 0
      %616 = vmatmul.mubr.bf16.gmra.mxu0 %v412
      %v617 = vpop.f32.mrf.mxu0
      %v618 = vadd.f32 0.0, %v617
      %v619 = vpop.f32.mrf.mxu0
      %v620 = vpop.f32.mrf.mxu0
      %v621 = vadd.f32 0.0, %v620
      %v622 = vpop.f32.mrf.mxu0
      %623 = vmatprep.mubr.bf16.mxu0 0
      %624 = vmatmul.mubr.bf16.gmra.mxu0 %v413
      %v625 = vpop.f32.mrf.mxu0
      %v626 = vadd.f32 0.0, %v625
      %v627 = vpop.f32.mrf.mxu0
      %v628 = vpop.f32.mrf.mxu0
      %v629 = vadd.f32 0.0, %v628
      %v630 = vpop.f32.mrf.mxu0
      %631 = vmatprep.mubr.bf16.mxu0 0
      %632 = vmatmul.mubr.bf16.gmra.mxu0 %v414
      %v633 = vpop.f32.mrf.mxu0
      %v634 = vadd.f32 0.0, %v633
      %v635 = vpop.f32.mrf.mxu0
      %v636 = vpop.f32.mrf.mxu0
      %v637 = vadd.f32 0.0, %v636
      %v638 = vpop.f32.mrf.mxu0
      %639 = vdwg.mxu0
      %640 = vst [vmem:[%s248] sm:$0xff] %v514
      %641 = vst [vmem:[%s248 + $0x8] sm:$0xff] %v517
      %642 = vst [vmem:[%s248 + $0x10] sm:$0xff] %v522
      %643 = vst [vmem:[%s248 + $0x18] sm:$0xff] %v525
      %644 = vst [vmem:[%s248 + $0x20] sm:$0xff] %v530
      %645 = vst [vmem:[%s248 + $0x28] sm:$0xff] %v533
      %646 = vst [vmem:[%s248 + $0x30] sm:$0xff] %v538
      %647 = vst [vmem:[%s248 + $0x38] sm:$0xff] %v541
      %648 = vst [vmem:[%s248 + $0x40] sm:$0xff] %v546
      %649 = vst [vmem:[%s248 + $0x48] sm:$0xff] %v549
      %650 = vst [vmem:[%s248 + $0x50] sm:$0xff] %v554
      %651 = vst [vmem:[%s248 + $0x58] sm:$0xff] %v557
      %652 = vst [vmem:[%s248 + $0x60] sm:$0xff] %v562
      %653 = vst [vmem:[%s248 + $0x68] sm:$0xff] %v565
      %654 = vst [vmem:[%s248 + $0x70] sm:$0xff] %v570
      %655 = vst [vmem:[%s248 + $0x78] sm:$0xff] %v573
      %656 = vst [vmem:[%s248 + $0x80] sm:$0xff] %v578
      %657 = vst [vmem:[%s248 + $0x88] sm:$0xff] %v581
      %658 = vst [vmem:[%s248 + $0x90] sm:$0xff] %v586
      %659 = vst [vmem:[%s248 + $0x98] sm:$0xff] %v589
      %660 = vst [vmem:[%s248 + $0xa0] sm:$0xff] %v594
      %661 = vst [vmem:[%s248 + $0xa8] sm:$0xff] %v597
      %662 = vst [vmem:[%s248 + $0xb0] sm:$0xff] %v602
      %663 = vst [vmem:[%s248 + $0xb8] sm:$0xff] %v605
      %664 = vst [vmem:[%s248 + $0xc0] sm:$0xff] %v610
      %665 = vst [vmem:[%s248 + $0xc8] sm:$0xff] %v613
      %666 = vst [vmem:[%s248 + $0xd0] sm:$0xff] %v618
      %667 = vst [vmem:[%s248 + $0xd8] sm:$0xff] %v621
      %668 = vst [vmem:[%s248 + $0xe0] sm:$0xff] %v626
      %669 = vst [vmem:[%s248 + $0xe8] sm:$0xff] %v629
      %670 = vst [vmem:[%s248 + $0xf0] sm:$0xff] %v634
      %671 = vst [vmem:[%s248 + $0xf8] sm:$0xff] %v637
      %v672 = vld [vmem:[%s5] sm:$0x1]
      %v673 = vadd.f32 %v514, %v517
      %v674 = vadd.f32 %v673, %v522
      %v675 = vadd.f32 %v674, %v525
      %v676 = vadd.f32 %v675, %v530
      %v677 = vadd.f32 %v676, %v533
      %v678 = vadd.f32 %v677, %v538
      %v679 = vadd.f32 %v678, %v541
      %v680 = vadd.f32 %v679, %v546
      %v681 = vadd.f32 %v680, %v549
      %v682 = vadd.f32 %v681, %v554
      %v683 = vadd.f32 %v682, %v557
      %v684 = vadd.f32 %v683, %v562
      %v685 = vadd.f32 %v684, %v565
      %v686 = vadd.f32 %v685, %v570
      %v687 = vadd.f32 %v686, %v573
      %v688 = vadd.f32 %v687, %v578
      %v689 = vadd.f32 %v688, %v581
      %v690 = vadd.f32 %v689, %v586
      %v691 = vadd.f32 %v690, %v589
      %v692 = vadd.f32 %v691, %v594
      %v693 = vadd.f32 %v692, %v597
      %v694 = vadd.f32 %v693, %v602
      %v695 = vadd.f32 %v694, %v605
      %v696 = vadd.f32 %v695, %v610
      %v697 = vadd.f32 %v696, %v613
      %v698 = vadd.f32 %v697, %v618
      %v699 = vadd.f32 %v698, %v621
      %v700 = vadd.f32 %v699, %v626
      %v701 = vadd.f32 %v700, %v629
      %v702 = vadd.f32 %v701, %v634
      %v703 = vadd.f32 %v702, %v637
      %v704 = vrot.slane %v703, 4
      %v705 = vadd.f32 %v703, %v704
      %v706 = vrot.slane %v705, 2
      %v707 = vadd.f32 %v705, %v706
      %v708 = vrot.slane %v707, 1
      %v709 = vadd.f32 %v707, %v708
      %v710 = vadd.f32 %v672, %v709
      %711 = vst [vmem:[%s5] sm:$0x1] %v710
      %v712 = vld [vmem:[%s6] sm:$0x1]
      %v713 = vmul.f32 %v514, %v514
      %v714 = vmul.f32 %v517, %v517
      %v715 = vmul.f32 %v522, %v522
      %v716 = vmul.f32 %v525, %v525
      %v717 = vmul.f32 %v530, %v530
      %v718 = vmul.f32 %v533, %v533
      %v719 = vmul.f32 %v538, %v538
      %v720 = vmul.f32 %v541, %v541
      %v721 = vmul.f32 %v546, %v546
      %v722 = vmul.f32 %v549, %v549
      %v723 = vmul.f32 %v554, %v554
      %v724 = vmul.f32 %v557, %v557
      %v725 = vmul.f32 %v562, %v562
      %v726 = vmul.f32 %v565, %v565
      %v727 = vmul.f32 %v570, %v570
      %v728 = vmul.f32 %v573, %v573
      %v729 = vmul.f32 %v578, %v578
      %v730 = vmul.f32 %v581, %v581
      %v731 = vmul.f32 %v586, %v586
      %v732 = vmul.f32 %v589, %v589
      %v733 = vmul.f32 %v594, %v594
      %v734 = vmul.f32 %v597, %v597
      %v735 = vmul.f32 %v602, %v602
      %v736 = vmul.f32 %v605, %v605
      %v737 = vmul.f32 %v610, %v610
      %v738 = vmul.f32 %v613, %v613
      %v739 = vmul.f32 %v618, %v618
      %v740 = vmul.f32 %v621, %v621
      %v741 = vmul.f32 %v626, %v626
      %v742 = vmul.f32 %v629, %v629
      %v743 = vmul.f32 %v634, %v634
      %v744 = vmul.f32 %v637, %v637
      %v745 = vadd.f32 %v713, %v714
      %v746 = vadd.f32 %v745, %v715
      %v747 = vadd.f32 %v746, %v716
      %v748 = vadd.f32 %v747, %v717
      %v749 = vadd.f32 %v748, %v718
      %v750 = vadd.f32 %v749, %v719
      %v751 = vadd.f32 %v750, %v720
      %v752 = vadd.f32 %v751, %v721
      %v753 = vadd.f32 %v752, %v722
      %v754 = vadd.f32 %v753, %v723
      %v755 = vadd.f32 %v754, %v724
      %v756 = vadd.f32 %v755, %v725
      %v757 = vadd.f32 %v756, %v726
      %v758 = vadd.f32 %v757, %v727
      %v759 = vadd.f32 %v758, %v728
      %v760 = vadd.f32 %v759, %v729
      %v761 = vadd.f32 %v760, %v730
      %v762 = vadd.f32 %v761, %v731
      %v763 = vadd.f32 %v762, %v732
      %v764 = vadd.f32 %v763, %v733
      %v765 = vadd.f32 %v764, %v734
      %v766 = vadd.f32 %v765, %v735
      %v767 = vadd.f32 %v766, %v736
      %v768 = vadd.f32 %v767, %v737
      %v769 = vadd.f32 %v768, %v738
      %v770 = vadd.f32 %v769, %v739
      %v771 = vadd.f32 %v770, %v740
      %v772 = vadd.f32 %v771, %v741
      %v773 = vadd.f32 %v772, %v742
      %v774 = vadd.f32 %v773, %v743
      %v775 = vadd.f32 %v774, %v744
      %v776 = vrot.slane %v775, 4
      %v777 = vadd.f32 %v775, %v776
      %v778 = vrot.slane %v777, 2
      %v779 = vadd.f32 %v777, %v778
      %v780 = vrot.slane %v779, 1
      %v781 = vadd.f32 %v779, %v780
      %v782 = vadd.f32 %v712, %v781
      %783 = vst [vmem:[%s6] sm:$0x1] %v782
      %s784 = smul.u32 32, %s18
      %p785 = scmp.lt.s32.totalorder %s784, 63
      %s786 = scalar_select %p785, %s784, 63
      %s787 = smul.addr %s786, 8
      %s788 = scalar_lea.vmem %s4, %s787
      // Predicated region
      $region41: #{resnext_bottleneck.6} parent=35 // pred_check
        %p789 = pneg %p125
      $region42: #{resnext_bottleneck.6} parent=35 // pred_check_branch
        %791 = sbr.rel (%p789) target = $region44
      $region43: #{resnext_bottleneck.6} parent=35 // pred_region
        %s792 = smul.u32 32, %s18
      $region44: #{resnext_bottleneck.6} parent=35 // pred_fallthru
        _
      // Predicated region
      $region45: #{resnext_bottleneck.6} parent=35 // pred_check
        %p793 = pneg %p146
      $region46: #{resnext_bottleneck.6} parent=35 // pred_check_branch
        %795 = sbr.rel (%p793) target = $region48
      $region47: #{resnext_bottleneck.6} parent=35 // pred_region
        _
      $region48: #{resnext_bottleneck.6} parent=35 // pred_fallthru
        _
      // Predicated region
      $region49: #{resnext_bottleneck.6} parent=35 // pred_check
        %p796 = pneg %p167
      $region50: #{resnext_bottleneck.6} parent=35 // pred_check_branch
        %798 = sbr.rel (%p796) target = $region52
      $region51: #{resnext_bottleneck.6} parent=35 // pred_region
        _
      $region52: #{resnext_bottleneck.6} parent=35 // pred_fallthru
        _
      // Predicated region
      $region53: #{resnext_bottleneck.6} parent=35 // pred_check
        %p799 = pneg %p146
      $region54: #{resnext_bottleneck.6} parent=35 // pred_check_branch
        %801 = sbr.rel (%p799) target = $region56
      $region55: #{resnext_bottleneck.6} parent=35 // pred_region
        _
      $region56: #{resnext_bottleneck.6} parent=35 // pred_fallthru
        _
      // Predicated region
      $region57: #{resnext_bottleneck.6} parent=35 // pred_check
        %p802 = pneg %p167
      $region58: #{resnext_bottleneck.6} parent=35 // pred_check_branch
        %804 = sbr.rel (%p802) target = $region60
      $region59: #{resnext_bottleneck.6} parent=35 // pred_region
        _
      $region60: #{resnext_bottleneck.6} parent=35 // pred_fallthru
        _
    $region36: #{resnext_bottleneck.6} parent=5 // pred_fallthru
      _
    %p805 = scmp.le.s32.totalorder 2, %s13
    // Predicated region
    $region61: #{resnext_bottleneck.6} parent=5 // pred_check
      %p806 = pneg %p805
    $region62: #{resnext_bottleneck.6} parent=5 // pred_check_branch
      %808 = sbr.rel (%p806) target = $region64
    $region63: #{resnext_bottleneck.6} parent=5 // pred_region
      %s809 = ssub.s32 %s13, 2
      // Predicated region
      $region65: #{resnext_bottleneck.6} parent=63 // pred_check
        %p810 = pneg %p131
      $region66: #{resnext_bottleneck.6} parent=63 // pred_check_branch
        %812 = sbr.rel (%p810) target = $region68
      $region67: #{resnext_bottleneck.6} parent=63 // pred_region
        %s813 = smul.u32 32, %s19
        %p814 = scmp.lt.s32.totalorder %s813, 63
        %s815 = scalar_select %p814, %s813, 63
        %s816 = smul.addr %s815, 8
        %s817 = scalar_lea.vmem %s4, %s816
      $region68: #{resnext_bottleneck.6} parent=63 // pred_fallthru
        _
    $region64: #{resnext_bottleneck.6} parent=5 // pred_fallthru
      _
  $region6: #{resnext_bottleneck.6} parent=0 // loop_footer
    %s17 = sadd.s32 1, %s13
  $region7: #{resnext_bottleneck.6} parent=0 // loop_footer_branch
    %12 = sbr.rel target = $region3
  $region8: #{resnext_bottleneck.6} parent=0 // loop_exit
    _

// kernel: resnext_bottleneck.4
$region0: #{resnext_bottleneck.4}
  #allocation0 [shape = 'u32[]', space=smem, size = 0x4, offset = 0x4, fixed_abs, tag = 'smem constant byte address 0x4 - core index']
  #allocation1 [shape = 'u32[144,128]{1,0:T(1,128)}', space=vmem, size = 0x12000, scoped, tag = 'internal scratch']
  %s0 = inlined_call_operand.hbm [shape: f32[512,128], index: 0, kind: input, shape index: {}]
  %s1 = inlined_call_operand.hbm [shape: bf16[128,128], index: 1, kind: input, shape index: {}]
  %s2 = inlined_call_operand.vmem [shape: f32[512,128], index: 2, kind: output, shape index: {0}]
  %s3 = inlined_call_operand.vmem [shape: f32[1,128], index: 3, kind: output, shape index: {1}]
  %s4 = inlined_call_operand.vmem [shape: f32[1,128], index: 4, kind: output, shape index: {2}]
  %5 = xla_tuple %s2, %s3, %s4
  %s6 = sld [smem:[#allocation0]]
  $region69: #{resnext_bottleneck.4} parent=0
    _
  %s8 = ssub.s32 1, %s6
  %s9 = scalar_select 0, %s8, %s6
  $region1: #{resnext_bottleneck.4} parent=0
    #allocation2 [shape = 'u8[262144]{0}', space=vmem, size = 0x40000, scoped, tag = 'input window, operand 0']
    #allocation3 [shape = 's32[2]{0}', space=sflag, size = 0x8, scoped, tag = 'scoped memory for resnext_bottleneck.4']
    #allocation4 [shape = 'u8[32768]{0}', space=vmem, size = 0x8000, scoped, tag = 'input window, operand 1, single buffered']
    #allocation5 [shape = 's32[1]{0}', space=sflag, size = 0x4, scoped, tag = 'scoped memory for resnext_bottleneck.4']
    %10 = vsyncpa [#allocation3], 0
    %s11 = scalar_lea.sflag [#allocation3], 1
    %12 = vsyncpa %s11, 0
    %13 = vsyncpa [#allocation5], 0
    loop: start=0, step=1, limit=4
    $region2: #{resnext_bottleneck.4} parent=1 // loop_pre_header
      _
    $region3: #{resnext_bottleneck.4} parent=1 // loop_header
      %s15 = sphi 0, %s19
      %p16 = scmp.ge.s32.totalorder %s15, 4
      %s25 = sphi 0, %s27
      %s28 = sphi 0, %s25
      %s29 = sphi 0, %s28
      %s45 = sphi 0, %s29
      %s49 = sphi 0, %s49
      %s51 = sphi 0, %s49
      %s52 = sphi 0, %s51
      %s66 = sphi 0, %s52
      %s72 = sphi 0, %s74
      %s75 = sphi 0, %s72
      %s76 = sphi 0, %s75
      %s92 = sphi 0, %s76
      %s96 = sphi 0, %s96
      %s98 = sphi 0, %s96
      %s99 = sphi 0, %s98
      %s113 = sphi 0, %s99
      %s117 = sphi 0, %s117
      %s119 = sphi 0, %s117
      %s120 = sphi 0, %s119
      %s134 = sphi 0, %s120
    $region4: #{resnext_bottleneck.4} parent=1 // loop_header_branch
      %18 = sbr.rel (%p16) target = $region8
    $region5: #{resnext_bottleneck.4} parent=1 // loop_body
      %s20 = ssub.s32 %s15, 1
      %s21 = ssub.s32 %s15, 2
      %s22 = sadd.s32 %s15, 1
      %s23 = ssub.s32 %s15, %s22
      %p24 = scmp.eq.s32.totalorder %s23, 0
      %s26 = sadd.s32 %s25, 1
      %s27 = scalar_select %p24, %s25, %s26
      %p30 = pneg %p24
      %p31 = scmp.eq.s32.totalorder %s15, 1
      %p32 = por %p30, %p31
      %p33 = scmp.ne.s32.totalorder %s25, %s28
      %p34 = scmp.eq.s32.totalorder %s15, 0
      %p35 = por %p33, %p34
      %p36 = scmp.ne.s32.totalorder %s25, %s28
      %p37 = scmp.eq.s32.totalorder %s20, 1
      %p38 = por %p36, %p37
      %p39 = scmp.ne.s32.totalorder %s28, %s29
      %p40 = scmp.eq.s32.totalorder %s20, 0
      %p41 = por %p39, %p40
      %p42 = scmp.ne.s32.totalorder %s28, %s29
      %p43 = scmp.eq.s32.totalorder %s21, 1
      %p44 = por %p42, %p43
      %p46 = scmp.ne.s32.totalorder %s29, %s45
      %p47 = scmp.eq.s32.totalorder %s21, 0
      %p48 = por %p46, %p47
      %s50 = sadd.s32 %s49, 1
      %p53 = scmp.eq.s32.totalorder %s15, 1
      %p54 = scmp.ne.s32.totalorder %s49, %s51
      %p55 = scmp.eq.s32.totalorder %s15, 0
      %p56 = por %p54, %p55
      %p57 = scmp.ne.s32.totalorder %s49, %s51
      %p58 = scmp.eq.s32.totalorder %s20, 1
      %p59 = por %p57, %p58
      %p60 = scmp.ne.s32.totalorder %s51, %s52
      %p61 = scmp.eq.s32.totalorder %s20, 0
      %p62 = por %p60, %p61
      %p63 = scmp.ne.s32.totalorder %s51, %s52
      %p64 = scmp.eq.s32.totalorder %s21, 1
      %p65 = por %p63, %p64
      %p67 = scmp.ne.s32.totalorder %s52, %s66
      %p68 = scmp.eq.s32.totalorder %s21, 0
      %p69 = por %p67, %p68
      %s70 = ssub.s32 %s15, %s22
      %p71 = scmp.eq.s32.totalorder %s70, 0
      %s73 = sadd.s32 %s72, 1
      %s74 = scalar_select %p71, %s72, %s73
      %p77 = pneg %p71
      %p78 = scmp.eq.s32.totalorder %s15, 1
      %p79 = por %p77, %p78
      %p80 = scmp.ne.s32.totalorder %s72, %s75
      %p81 = scmp.eq.s32.totalorder %s15, 0
      %p82 = por %p80, %p81
      %p83 = scmp.ne.s32.totalorder %s72, %s75
      %p84 = scmp.eq.s32.totalorder %s20, 1
      %p85 = por %p83, %p84
      %p86 = scmp.ne.s32.totalorder %s75, %s76
      %p87 = scmp.eq.s32.totalorder %s20, 0
      %p88 = por %p86, %p87
      %p89 = scmp.ne.s32.totalorder %s75, %s76
      %p90 = scmp.eq.s32.totalorder %s21, 1
      %p91 = por %p89, %p90
      %p93 = scmp.ne.s32.totalorder %s76, %s92
      %p94 = scmp.eq.s32.totalorder %s21, 0
      %p95 = por %p93, %p94
      %s97 = sadd.s32 %s96, 1
      %p100 = scmp.eq.s32.totalorder %s15, 1
      %p101 = scmp.ne.s32.totalorder %s96, %s98
      %p102 = scmp.eq.s32.totalorder %s15, 0
      %p103 = por %p101, %p102
      %p104 = scmp.ne.s32.totalorder %s96, %s98
      %p105 = scmp.eq.s32.totalorder %s20, 1
      %p106 = por %p104, %p105
      %p107 = scmp.ne.s32.totalorder %s98, %s99
      %p108 = scmp.eq.s32.totalorder %s20, 0
      %p109 = por %p107, %p108
      %p110 = scmp.ne.s32.totalorder %s98, %s99
      %p111 = scmp.eq.s32.totalorder %s21, 1
      %p112 = por %p110, %p111
      %p114 = scmp.ne.s32.totalorder %s99, %s113
      %p115 = scmp.eq.s32.totalorder %s21, 0
      %p116 = por %p114, %p115
      %s118 = sadd.s32 %s117, 1
      %p121 = scmp.eq.s32.totalorder %s15, 1
      %p122 = scmp.ne.s32.totalorder %s117, %s119
      %p123 = scmp.eq.s32.totalorder %s15, 0
      %p124 = por %p122, %p123
      %p125 = scmp.ne.s32.totalorder %s117, %s119
      %p126 = scmp.eq.s32.totalorder %s20, 1
      %p127 = por %p125, %p126
      %p128 = scmp.ne.s32.totalorder %s119, %s120
      %p129 = scmp.eq.s32.totalorder %s20, 0
      %p130 = por %p128, %p129
      %p131 = scmp.ne.s32.totalorder %s119, %s120
      %p132 = scmp.eq.s32.totalorder %s21, 1
      %p133 = por %p131, %p132
      %p135 = scmp.ne.s32.totalorder %s120, %s134
      %p136 = scmp.eq.s32.totalorder %s21, 0
      %p137 = por %p135, %p136
      %p138 = scmp.le.s32.totalorder 1, %s15
      %p139 = scmp.lt.s32.totalorder %s15, 3
      %p140 = pnand %p138, %p139
      %p141 = pneg %p140
      // Predicated region
      $region9: #{resnext_bottleneck.4} parent=5 // pred_check
        _
      $region10: #{resnext_bottleneck.4} parent=5 // pred_check_branch
        %143 = sbr.rel (%p140) target = $region12
      $region11: #{resnext_bottleneck.4} parent=5 // pred_region
        %s144 = ssub.s32 %s15, 1
        // Predicated region
        $region13: #{resnext_bottleneck.4} parent=11 // pred_check
          %p145 = pneg %p62
        $region14: #{resnext_bottleneck.4} parent=11 // pred_check_branch
          %147 = sbr.rel (%p145) target = $region16
        $region15: #{resnext_bottleneck.4} parent=11 // pred_region
          %s149 = ssub.s32 1024, 1024
          %150 = vsyncadd [#allocation5], %s149
          %s151 = sshll.u32 [#allocation4], 4
          %s152 = int_to_ptr.vmem [resolvable:$true] %s151
          %157 = dma.hbm_to_vmem [thread:$0]  %s1, 1024, %s152, [#allocation5], 64, 64, 4
        $region16: #{resnext_bottleneck.4} parent=11 // pred_fallthru
          _
      $region12: #{resnext_bottleneck.4} parent=5 // pred_fallthru
        _
      %p158 = scmp.lt.s32.totalorder %s15, 2
      // Predicated region
      $region17: #{resnext_bottleneck.4} parent=5 // pred_check
        %p159 = pneg %p158
      $region18: #{resnext_bottleneck.4} parent=5 // pred_check_branch
        %161 = sbr.rel (%p159) target = $region20
      $region19: #{resnext_bottleneck.4} parent=5 // pred_region
        // Predicated region
        $region21: #{resnext_bottleneck.4} parent=19 // pred_check
          %p162 = pneg %p35
        $region22: #{resnext_bottleneck.4} parent=19 // pred_check_branch
          %164 = sbr.rel (%p162) target = $region24
        $region23: #{resnext_bottleneck.4} parent=19 // pred_region
          %s165 = sand.u32 %s25, 1
          %s166 = scalar_lea.sflag [#allocation3], %s165
          %s167 = sand.u32 %s25, 1
          %s168 = smul.addr %s167, 256
          %s169 = scalar_lea.vmem [#allocation2], %s168
          %s170 = smul.u32 32, %s15
          %s172 = ssub.s32 4096, 4096
          %173 = vsyncadd %s166, %s172
          %s174 = smul.addr %s170, 128
          %s175 = scalar_lea.hbm %s0, %s174
          %s176 = sshll.u32 %s169, 4
          %s177 = int_to_ptr.vmem [resolvable:$true] %s176
          %182 = dma.hbm_to_vmem [thread:$0]  %s175, 4096, %s177, %s166, 128, 128, 8
        $region24: #{resnext_bottleneck.4} parent=19 // pred_fallthru
          _
      $region20: #{resnext_bottleneck.4} parent=5 // pred_fallthru
        _
      %p183 = scmp.le.s32.totalorder 1, %s15
      %p184 = scmp.lt.s32.totalorder %s15, 3
      %p185 = pnand %p183, %p184
      %p186 = pneg %p185
      // Predicated region
      $region25: #{resnext_bottleneck.4} parent=5 // pred_check
        _
      $region26: #{resnext_bottleneck.4} parent=5 // pred_check_branch
        %188 = sbr.rel (%p185) target = $region28
      $region27: #{resnext_bottleneck.4} parent=5 // pred_region
        %s189 = ssub.s32 %s15, 1
        %s190 = sand.u32 %s28, 1
        %s191 = scalar_lea.sflag [#allocation3], %s190
        %s192 = sand.u32 %s28, 1
        %s193 = smul.addr %s192, 256
        %s194 = scalar_lea.vmem [#allocation2], %s193
        // Predicated region
        $region29: #{resnext_bottleneck.4} parent=27 // pred_check
          %p195 = pneg %p41
        $region30: #{resnext_bottleneck.4} parent=27 // pred_check_branch
          %197 = sbr.rel (%p195) target = $region32
        $region31: #{resnext_bottleneck.4} parent=27 // pred_region
          %198 = dma.done %s191, 4096
        $region32: #{resnext_bottleneck.4} parent=27 // pred_fallthru
          _
        // Predicated region
        $region33: #{resnext_bottleneck.4} parent=27 // pred_check
          %p199 = pneg %p62
        $region34: #{resnext_bottleneck.4} parent=27 // pred_check_branch
          %201 = sbr.rel (%p199) target = $region36
        $region35: #{resnext_bottleneck.4} parent=27 // pred_region
          %202 = dma.done [#allocation5], 1024
        $region36: #{resnext_bottleneck.4} parent=27 // pred_fallthru
          _
        %s203 = sand.u32 %s28, 1
        %s204 = scalar_lea.sflag [#allocation3], %s203
        %s205 = sand.u32 %s28, 1
        %s206 = smul.addr %s205, 256
        %s207 = scalar_lea.vmem [#allocation2], %s206
        %p208 = pneg %p41
        %p209 = pneg %p38
        %p210 = pneg %p62
        %p211 = pneg %p59
        %p212 = pneg %p88
        %p213 = pneg %p85
        %s214 = smul.u32 32, %s20
        %p215 = scmp.lt.s32.totalorder %s214, 63
        %s216 = scalar_select %p215, %s214, 63
        %s217 = smul.addr %s216, 8
        %s218 = scalar_lea.vmem %s2, %s217
        %p219 = pneg %p109
        %p220 = pneg %p106
        %p221 = pneg %p130
        %p222 = pneg %p127
        %s223 = smul.u32 32, %s20
        %s224 = smul.u32 32, %s20
        %p225 = scmp.lt.s32.totalorder %s224, 63
        %s226 = scalar_select %p225, %s224, 63
        %s227 = smul.addr %s226, 8
        %s228 = scalar_lea.vmem %s2, %s227
        %s229 = smul.u32 32, %s20
        %p231 = scmp.eq.s32.totalorder %s20, 0
        // Predicated region
        $region37: #{resnext_bottleneck.4} parent=27 // pred_check
          %p232 = pneg %p231
        $region38: #{resnext_bottleneck.4} parent=27 // pred_check_branch
          %234 = sbr.rel (%p232) target = $region40
        $region39: #{resnext_bottleneck.4} parent=27 // pred_region
          %235 = vst [vmem:[%s3] sm:$0x1] 0.0
          %236 = vst [vmem:[%s4] sm:$0x1] 0.0
        $region40: #{resnext_bottleneck.4} parent=27 // pred_fallthru
          _
        %v237 = vld [vmem:[%s194] sm:$0xff]
        %v238 = vld [vmem:[%s194 + $0x8] sm:$0xff]
        %v239 = vld [vmem:[%s194 + $0x10] sm:$0xff]
        %v240 = vld [vmem:[%s194 + $0x18] sm:$0xff]
        %v241 = vld [vmem:[%s194 + $0x20] sm:$0xff]
        %v242 = vld [vmem:[%s194 + $0x28] sm:$0xff]
        %v243 = vld [vmem:[%s194 + $0x30] sm:$0xff]
        %v244 = vld [vmem:[%s194 + $0x38] sm:$0xff]
        %v245 = vld [vmem:[%s194 + $0x40] sm:$0xff]
        %v246 = vld [vmem:[%s194 + $0x48] sm:$0xff]
        %v247 = vld [vmem:[%s194 + $0x50] sm:$0xff]
        %v248 = vld [vmem:[%s194 + $0x58] sm:$0xff]
        %v249 = vld [vmem:[%s194 + $0x60] sm:$0xff]
        %v250 = vld [vmem:[%s194 + $0x68] sm:$0xff]
        %v251 = vld [vmem:[%s194 + $0x70] sm:$0xff]
        %v252 = vld [vmem:[%s194 + $0x78] sm:$0xff]
        %v253 = vld [vmem:[%s194 + $0x80] sm:$0xff]
        %v254 = vld [vmem:[%s194 + $0x88] sm:$0xff]
        %v255 = vld [vmem:[%s194 + $0x90] sm:$0xff]
        %v256 = vld [vmem:[%s194 + $0x98] sm:$0xff]
        %v257 = vld [vmem:[%s194 + $0xa0] sm:$0xff]
        %v258 = vld [vmem:[%s194 + $0xa8] sm:$0xff]
        %v259 = vld [vmem:[%s194 + $0xb0] sm:$0xff]
        %v260 = vld [vmem:[%s194 + $0xb8] sm:$0xff]
        %v261 = vld [vmem:[%s194 + $0xc0] sm:$0xff]
        %v262 = vld [vmem:[%s194 + $0xc8] sm:$0xff]
        %v263 = vld [vmem:[%s194 + $0xd0] sm:$0xff]
        %v264 = vld [vmem:[%s194 + $0xd8] sm:$0xff]
        %v265 = vld [vmem:[%s194 + $0xe0] sm:$0xff]
        %v266 = vld [vmem:[%s194 + $0xe8] sm:$0xff]
        %v267 = vld [vmem:[%s194 + $0xf0] sm:$0xff]
        %v268 = vld [vmem:[%s194 + $0xf8] sm:$0xff]
        %v269 = vpack.c.bf16 %v238, %v237
        %v270 = vpack.c.bf16 %v240, %v239
        %v271 = vpack.c.bf16 %v242, %v241
        %v272 = vpack.c.bf16 %v244, %v243
        %v273 = vpack.c.bf16 %v246, %v245
        %v274 = vpack.c.bf16 %v248, %v247
        %v275 = vpack.c.bf16 %v250, %v249
        %v276 = vpack.c.bf16 %v252, %v251
        %v277 = vpack.c.bf16 %v254, %v253
        %v278 = vpack.c.bf16 %v256, %v255
        %v279 = vpack.c.bf16 %v258, %v257
        %v280 = vpack.c.bf16 %v260, %v259
        %v281 = vpack.c.bf16 %v262, %v261
        %v282 = vpack.c.bf16 %v264, %v263
        %v283 = vpack.c.bf16 %v266, %v265
        %v284 = vpack.c.bf16 %v268, %v267
        %v285 = vld [vmem:[#allocation4] sm:$0xf]
        %v286 = vld [vmem:[#allocation4 + $0x4] sm:$0xf]
        %v287 = vld [vmem:[#allocation4 + $0x8] sm:$0xf]
        %v288 = vld [vmem:[#allocation4 + $0xc] sm:$0xf]
        %v289 = vld [vmem:[#allocation4 + $0x10] sm:$0xf]
        %v290 = vld [vmem:[#allocation4 + $0x14] sm:$0xf]
        %v291 = vld [vmem:[#allocation4 + $0x18] sm:$0xf]
        %v292 = vld [vmem:[#allocation4 + $0x1c] sm:$0xf]
        %v293 = vld [vmem:[#allocation4 + $0x20] sm:$0xf]
        %v294 = vld [vmem:[#allocation4 + $0x24] sm:$0xf]
        %v295 = vld [vmem:[#allocation4 + $0x28] sm:$0xf]
        %v296 = vld [vmem:[#allocation4 + $0x2c] sm:$0xf]
        %v297 = vld [vmem:[#allocation4 + $0x30] sm:$0xf]
        %v298 = vld [vmem:[#allocation4 + $0x34] sm:$0xf]
        %v299 = vld [vmem:[#allocation4 + $0x38] sm:$0xf]
        %v300 = vld [vmem:[#allocation4 + $0x3c] sm:$0xf]
        %v317 = vunpack.c.l.b16 %v285
        %v318 = vunpack.c.l.b16 %v286
        %v319 = vunpack.c.l.b16 %v287
        %v320 = vunpack.c.l.b16 %v288
        %v321 = vunpack.c.l.b16 %v289
        %v322 = vunpack.c.l.b16 %v290
        %v323 = vunpack.c.l.b16 %v291
        %v324 = vunpack.c.l.b16 %v292
        %v325 = vunpack.c.l.b16 %v293
        %v326 = vunpack.c.l.b16 %v294
        %v327 = vunpack.c.l.b16 %v295
        %v328 = vunpack.c.l.b16 %v296
        %v329 = vunpack.c.l.b16 %v297
        %v330 = vunpack.c.l.b16 %v298
        %v331 = vunpack.c.l.b16 %v299
        %v332 = vunpack.c.l.b16 %v300
        %v333 = vpack.c.b16 %v318, %v317
        %v334 = vpack.c.b16 %v320, %v319
        %v335 = vpack.c.b16 %v322, %v321
        %v336 = vpack.c.b16 %v324, %v323
        %v337 = vpack.c.b16 %v326, %v325
        %v338 = vpack.c.b16 %v328, %v327
        %v339 = vpack.c.b16 %v330, %v329
        %v340 = vpack.c.b16 %v332, %v331
        %349 = vmatprep.subr.bf16.mxu0 0
        %350 = vmatpush1.bf16.msra.mxu0 %v340
        %351 = vmatprep.subr.bf16.mxu0 0
        %352 = vmatpush1.bf16.msra.mxu0 %v339
        %353 = vmatprep.subr.bf16.mxu0 0
        %354 = vmatpush1.bf16.msra.mxu0 %v338
        %355 = vmatprep.subr.bf16.mxu0 0
        %356 = vmatpush1.bf16.msra.mxu0 %v337
        %357 = vmatprep.subr.bf16.mxu0 0
        %358 = vmatpush1.bf16.msra.mxu0 %v336
        %359 = vmatprep.subr.bf16.mxu0 0
        %360 = vmatpush1.bf16.msra.mxu0 %v335
        %361 = vmatprep.subr.bf16.mxu0 0
        %362 = vmatpush1.bf16.msra.mxu0 %v334
        %363 = vmatprep.subr.bf16.mxu0 0
        %364 = vmatpush1.bf16.msra.mxu0 %v333
        %365 = vmatprep.subr.bf16.mxu0 0
        %366 = vmatpush2.bf16.msra.mxu0 0
        %367 = vmatprep.subr.bf16.mxu0 0
        %368 = vmatpush2.bf16.msra.mxu0 0
        %369 = vmatprep.subr.bf16.mxu0 0
        %370 = vmatpush2.bf16.msra.mxu0 0
        %371 = vmatprep.subr.bf16.mxu0 0
        %372 = vmatpush2.bf16.msra.mxu0 0
        %373 = vmatprep.subr.bf16.mxu0 0
        %374 = vmatpush2.bf16.msra.mxu0 0
        %375 = vmatprep.subr.bf16.mxu0 0
        %376 = vmatpush2.bf16.msra.mxu0 0
        %377 = vmatprep.subr.bf16.mxu0 0
        %378 = vmatpush2.bf16.msra.mxu0 0
        %379 = vmatprep.subr.bf16.mxu0 0
        %380 = vmatpush2.bf16.msra.mxu0 0
        %381 = vmatprep.mubr.bf16.mxu0 0
        %382 = vmatmul.mubr.bf16.gmra.mxu0 %v269
        %v383 = vpop.f32.mrf.mxu0
        %v384 = vadd.f32 0.0, %v383
        %v385 = vpop.f32.mrf.mxu0
        %v386 = vpop.f32.mrf.mxu0
        %v387 = vadd.f32 0.0, %v386
        %v388 = vpop.f32.mrf.mxu0
        %389 = vmatprep.mubr.bf16.mxu0 0
        %390 = vmatmul.mubr.bf16.gmra.mxu0 %v270
        %v391 = vpop.f32.mrf.mxu0
        %v392 = vadd.f32 0.0, %v391
        %v393 = vpop.f32.mrf.mxu0
        %v394 = vpop.f32.mrf.mxu0
        %v395 = vadd.f32 0.0, %v394
        %v396 = vpop.f32.mrf.mxu0
        %397 = vmatprep.mubr.bf16.mxu0 0
        %398 = vmatmul.mubr.bf16.gmra.mxu0 %v271
        %v399 = vpop.f32.mrf.mxu0
        %v400 = vadd.f32 0.0, %v399
        %v401 = vpop.f32.mrf.mxu0
        %v402 = vpop.f32.mrf.mxu0
        %v403 = vadd.f32 0.0, %v402
        %v404 = vpop.f32.mrf.mxu0
        %405 = vmatprep.mubr.bf16.mxu0 0
        %406 = vmatmul.mubr.bf16.gmra.mxu0 %v272
        %v407 = vpop.f32.mrf.mxu0
        %v408 = vadd.f32 0.0, %v407
        %v409 = vpop.f32.mrf.mxu0
        %v410 = vpop.f32.mrf.mxu0
        %v411 = vadd.f32 0.0, %v410
        %v412 = vpop.f32.mrf.mxu0
        %413 = vmatprep.mubr.bf16.mxu0 0
        %414 = vmatmul.mubr.bf16.gmra.mxu0 %v273
        %v415 = vpop.f32.mrf.mxu0
        %v416 = vadd.f32 0.0, %v415
        %v417 = vpop.f32.mrf.mxu0
        %v418 = vpop.f32.mrf.mxu0
        %v419 = vadd.f32 0.0, %v418
        %v420 = vpop.f32.mrf.mxu0
        %421 = vmatprep.mubr.bf16.mxu0 0
        %422 = vmatmul.mubr.bf16.gmra.mxu0 %v274
        %v423 = vpop.f32.mrf.mxu0
        %v424 = vadd.f32 0.0, %v423
        %v425 = vpop.f32.mrf.mxu0
        %v426 = vpop.f32.mrf.mxu0
        %v427 = vadd.f32 0.0, %v426
        %v428 = vpop.f32.mrf.mxu0
        %429 = vmatprep.mubr.bf16.mxu0 0
        %430 = vmatmul.mubr.bf16.gmra.mxu0 %v275
        %v431 = vpop.f32.mrf.mxu0
        %v432 = vadd.f32 0.0, %v431
        %v433 = vpop.f32.mrf.mxu0
        %v434 = vpop.f32.mrf.mxu0
        %v435 = vadd.f32 0.0, %v434
        %v436 = vpop.f32.mrf.mxu0
        %437 = vmatprep.mubr.bf16.mxu0 0
        %438 = vmatmul.mubr.bf16.gmra.mxu0 %v276
        %v439 = vpop.f32.mrf.mxu0
        %v440 = vadd.f32 0.0, %v439
        %v441 = vpop.f32.mrf.mxu0
        %v442 = vpop.f32.mrf.mxu0
        %v443 = vadd.f32 0.0, %v442
        %v444 = vpop.f32.mrf.mxu0
        %445 = vmatprep.mubr.bf16.mxu0 0
        %446 = vmatmul.mubr.bf16.gmra.mxu0 %v277
        %v447 = vpop.f32.mrf.mxu0
        %v448 = vadd.f32 0.0, %v447
        %v449 = vpop.f32.mrf.mxu0
        %v450 = vpop.f32.mrf.mxu0
        %v451 = vadd.f32 0.0, %v450
        %v452 = vpop.f32.mrf.mxu0
        %453 = vmatprep.mubr.bf16.mxu0 0
        %454 = vmatmul.mubr.bf16.gmra.mxu0 %v278
        %v455 = vpop.f32.mrf.mxu0
        %v456 = vadd.f32 0.0, %v455
        %v457 = vpop.f32.mrf.mxu0
        %v458 = vpop.f32.mrf.mxu0
        %v459 = vadd.f32 0.0, %v458
        %v460 = vpop.f32.mrf.mxu0
        %461 = vmatprep.mubr.bf16.mxu0 0
        %462 = vmatmul.mubr.bf16.gmra.mxu0 %v279
        %v463 = vpop.f32.mrf.mxu0
        %v464 = vadd.f32 0.0, %v463
        %v465 = vpop.f32.mrf.mxu0
        %v466 = vpop.f32.mrf.mxu0
        %v467 = vadd.f32 0.0, %v466
        %v468 = vpop.f32.mrf.mxu0
        %469 = vmatprep.mubr.bf16.mxu0 0
        %470 = vmatmul.mubr.bf16.gmra.mxu0 %v280
        %v471 = vpop.f32.mrf.mxu0
        %v472 = vadd.f32 0.0, %v471
        %v473 = vpop.f32.mrf.mxu0
        %v474 = vpop.f32.mrf.mxu0
        %v475 = vadd.f32 0.0, %v474
        %v476 = vpop.f32.mrf.mxu0
        %477 = vmatprep.mubr.bf16.mxu0 0
        %478 = vmatmul.mubr.bf16.gmra.mxu0 %v281
        %v479 = vpop.f32.mrf.mxu0
        %v480 = vadd.f32 0.0, %v479
        %v481 = vpop.f32.mrf.mxu0
        %v482 = vpop.f32.mrf.mxu0
        %v483 = vadd.f32 0.0, %v482
        %v484 = vpop.f32.mrf.mxu0
        %485 = vmatprep.mubr.bf16.mxu0 0
        %486 = vmatmul.mubr.bf16.gmra.mxu0 %v282
        %v487 = vpop.f32.mrf.mxu0
        %v488 = vadd.f32 0.0, %v487
        %v489 = vpop.f32.mrf.mxu0
        %v490 = vpop.f32.mrf.mxu0
        %v491 = vadd.f32 0.0, %v490
        %v492 = vpop.f32.mrf.mxu0
        %493 = vmatprep.mubr.bf16.mxu0 0
        %494 = vmatmul.mubr.bf16.gmra.mxu0 %v283
        %v495 = vpop.f32.mrf.mxu0
        %v496 = vadd.f32 0.0, %v495
        %v497 = vpop.f32.mrf.mxu0
        %v498 = vpop.f32.mrf.mxu0
        %v499 = vadd.f32 0.0, %v498
        %v500 = vpop.f32.mrf.mxu0
        %501 = vmatprep.mubr.bf16.mxu0 0
        %502 = vmatmul.mubr.bf16.gmra.mxu0 %v284
        %v503 = vpop.f32.mrf.mxu0
        %v504 = vadd.f32 0.0, %v503
        %v505 = vpop.f32.mrf.mxu0
        %v506 = vpop.f32.mrf.mxu0
        %v507 = vadd.f32 0.0, %v506
        %v508 = vpop.f32.mrf.mxu0
        %509 = vdwg.mxu0
        %510 = vst [vmem:[%s228] sm:$0xff] %v384
        %511 = vst [vmem:[%s228 + $0x8] sm:$0xff] %v387
        %512 = vst [vmem:[%s228 + $0x10] sm:$0xff] %v392
        %513 = vst [vmem:[%s228 + $0x18] sm:$0xff] %v395
        %514 = vst [vmem:[%s228 + $0x20] sm:$0xff] %v400
        %515 = vst [vmem:[%s228 + $0x28] sm:$0xff] %v403
        %516 = vst [vmem:[%s228 + $0x30] sm:$0xff] %v408
        %517 = vst [vmem:[%s228 + $0x38] sm:$0xff] %v411
        %518 = vst [vmem:[%s228 + $0x40] sm:$0xff] %v416
        %519 = vst [vmem:[%s228 + $0x48] sm:$0xff] %v419
        %520 = vst [vmem:[%s228 + $0x50] sm:$0xff] %v424
        %521 = vst [vmem:[%s228 + $0x58] sm:$0xff] %v427
        %522 = vst [vmem:[%s228 + $0x60] sm:$0xff] %v432
        %523 = vst [vmem:[%s228 + $0x68] sm:$0xff] %v435
        %524 = vst [vmem:[%s228 + $0x70] sm:$0xff] %v440
        %525 = vst [vmem:[%s228 + $0x78] sm:$0xff] %v443
        %526 = vst [vmem:[%s228 + $0x80] sm:$0xff] %v448
        %527 = vst [vmem:[%s228 + $0x88] sm:$0xff] %v451
        %528 = vst [vmem:[%s228 + $0x90] sm:$0xff] %v456
        %529 = vst [vmem:[%s228 + $0x98] sm:$0xff] %v459
        %530 = vst [vmem:[%s228 + $0xa0] sm:$0xff] %v464
        %531 = vst [vmem:[%s228 + $0xa8] sm:$0xff] %v467
        %532 = vst [vmem:[%s228 + $0xb0] sm:$0xff] %v472
        %533 = vst [vmem:[%s228 + $0xb8] sm:$0xff] %v475
        %534 = vst [vmem:[%s228 + $0xc0] sm:$0xff] %v480
        %535 = vst [vmem:[%s228 + $0xc8] sm:$0xff] %v483
        %536 = vst [vmem:[%s228 + $0xd0] sm:$0xff] %v488
        %537 = vst [vmem:[%s228 + $0xd8] sm:$0xff] %v491
        %538 = vst [vmem:[%s228 + $0xe0] sm:$0xff] %v496
        %539 = vst [vmem:[%s228 + $0xe8] sm:$0xff] %v499
        %540 = vst [vmem:[%s228 + $0xf0] sm:$0xff] %v504
        %541 = vst [vmem:[%s228 + $0xf8] sm:$0xff] %v507
        %v542 = vld [vmem:[%s3] sm:$0x1]
        %v543 = vadd.f32 %v384, %v387
        %v544 = vadd.f32 %v543, %v392
        %v545 = vadd.f32 %v544, %v395
        %v546 = vadd.f32 %v545, %v400
        %v547 = vadd.f32 %v546, %v403
        %v548 = vadd.f32 %v547, %v408
        %v549 = vadd.f32 %v548, %v411
        %v550 = vadd.f32 %v549, %v416
        %v551 = vadd.f32 %v550, %v419
        %v552 = vadd.f32 %v551, %v424
        %v553 = vadd.f32 %v552, %v427
        %v554 = vadd.f32 %v553, %v432
        %v555 = vadd.f32 %v554, %v435
        %v556 = vadd.f32 %v555, %v440
        %v557 = vadd.f32 %v556, %v443
        %v558 = vadd.f32 %v557, %v448
        %v559 = vadd.f32 %v558, %v451
        %v560 = vadd.f32 %v559, %v456
        %v561 = vadd.f32 %v560, %v459
        %v562 = vadd.f32 %v561, %v464
        %v563 = vadd.f32 %v562, %v467
        %v564 = vadd.f32 %v563, %v472
        %v565 = vadd.f32 %v564, %v475
        %v566 = vadd.f32 %v565, %v480
        %v567 = vadd.f32 %v566, %v483
        %v568 = vadd.f32 %v567, %v488
        %v569 = vadd.f32 %v568, %v491
        %v570 = vadd.f32 %v569, %v496
        %v571 = vadd.f32 %v570, %v499
        %v572 = vadd.f32 %v571, %v504
        %v573 = vadd.f32 %v572, %v507
        %v574 = vrot.slane %v573, 4
        %v575 = vadd.f32 %v573, %v574
        %v576 = vrot.slane %v575, 2
        %v577 = vadd.f32 %v575, %v576
        %v578 = vrot.slane %v577, 1
        %v579 = vadd.f32 %v577, %v578
        %v580 = vadd.f32 %v542, %v579
        %581 = vst [vmem:[%s3] sm:$0x1] %v580
        %v582 = vld [vmem:[%s4] sm:$0x1]
        %v583 = vmul.f32 %v384, %v384
        %v584 = vmul.f32 %v387, %v387
        %v585 = vmul.f32 %v392, %v392
        %v586 = vmul.f32 %v395, %v395
        %v587 = vmul.f32 %v400, %v400
        %v588 = vmul.f32 %v403, %v403
        %v589 = vmul.f32 %v408, %v408
        %v590 = vmul.f32 %v411, %v411
        %v591 = vmul.f32 %v416, %v416
        %v592 = vmul.f32 %v419, %v419
        %v593 = vmul.f32 %v424, %v424
        %v594 = vmul.f32 %v427, %v427
        %v595 = vmul.f32 %v432, %v432
        %v596 = vmul.f32 %v435, %v435
        %v597 = vmul.f32 %v440, %v440
        %v598 = vmul.f32 %v443, %v443
        %v599 = vmul.f32 %v448, %v448
        %v600 = vmul.f32 %v451, %v451
        %v601 = vmul.f32 %v456, %v456
        %v602 = vmul.f32 %v459, %v459
        %v603 = vmul.f32 %v464, %v464
        %v604 = vmul.f32 %v467, %v467
        %v605 = vmul.f32 %v472, %v472
        %v606 = vmul.f32 %v475, %v475
        %v607 = vmul.f32 %v480, %v480
        %v608 = vmul.f32 %v483, %v483
        %v609 = vmul.f32 %v488, %v488
        %v610 = vmul.f32 %v491, %v491
        %v611 = vmul.f32 %v496, %v496
        %v612 = vmul.f32 %v499, %v499
        %v613 = vmul.f32 %v504, %v504
        %v614 = vmul.f32 %v507, %v507
        %v615 = vadd.f32 %v583, %v584
        %v616 = vadd.f32 %v615, %v585
        %v617 = vadd.f32 %v616, %v586
        %v618 = vadd.f32 %v617, %v587
        %v619 = vadd.f32 %v618, %v588
        %v620 = vadd.f32 %v619, %v589
        %v621 = vadd.f32 %v620, %v590
        %v622 = vadd.f32 %v621, %v591
        %v623 = vadd.f32 %v622, %v592
        %v624 = vadd.f32 %v623, %v593
        %v625 = vadd.f32 %v624, %v594
        %v626 = vadd.f32 %v625, %v595
        %v627 = vadd.f32 %v626, %v596
        %v628 = vadd.f32 %v627, %v597
        %v629 = vadd.f32 %v628, %v598
        %v630 = vadd.f32 %v629, %v599
        %v631 = vadd.f32 %v630, %v600
        %v632 = vadd.f32 %v631, %v601
        %v633 = vadd.f32 %v632, %v602
        %v634 = vadd.f32 %v633, %v603
        %v635 = vadd.f32 %v634, %v604
        %v636 = vadd.f32 %v635, %v605
        %v637 = vadd.f32 %v636, %v606
        %v638 = vadd.f32 %v637, %v607
        %v639 = vadd.f32 %v638, %v608
        %v640 = vadd.f32 %v639, %v609
        %v641 = vadd.f32 %v640, %v610
        %v642 = vadd.f32 %v641, %v611
        %v643 = vadd.f32 %v642, %v612
        %v644 = vadd.f32 %v643, %v613
        %v645 = vadd.f32 %v644, %v614
        %v646 = vrot.slane %v645, 4
        %v647 = vadd.f32 %v645, %v646
        %v648 = vrot.slane %v647, 2
        %v649 = vadd.f32 %v647, %v648
        %v650 = vrot.slane %v649, 1
        %v651 = vadd.f32 %v649, %v650
        %v652 = vadd.f32 %v582, %v651
        %653 = vst [vmem:[%s4] sm:$0x1] %v652
        %s654 = smul.u32 32, %s20
        %p655 = scmp.lt.s32.totalorder %s654, 63
        %s656 = scalar_select %p655, %s654, 63
        %s657 = smul.addr %s656, 8
        %s658 = scalar_lea.vmem %s2, %s657
        // Predicated region
        $region41: #{resnext_bottleneck.4} parent=27 // pred_check
          %p659 = pneg %p85
        $region42: #{resnext_bottleneck.4} parent=27 // pred_check_branch
          %661 = sbr.rel (%p659) target = $region44
        $region43: #{resnext_bottleneck.4} parent=27 // pred_region
          %s662 = smul.u32 32, %s20
        $region44: #{resnext_bottleneck.4} parent=27 // pred_fallthru
          _
        // Predicated region
        $region45: #{resnext_bottleneck.4} parent=27 // pred_check
          %p663 = pneg %p106
        $region46: #{resnext_bottleneck.4} parent=27 // pred_check_branch
          %665 = sbr.rel (%p663) target = $region48
        $region47: #{resnext_bottleneck.4} parent=27 // pred_region
          _
        $region48: #{resnext_bottleneck.4} parent=27 // pred_fallthru
          _
        // Predicated region
        $region49: #{resnext_bottleneck.4} parent=27 // pred_check
          %p666 = pneg %p127
        $region50: #{resnext_bottleneck.4} parent=27 // pred_check_branch
          %668 = sbr.rel (%p666) target = $region52
        $region51: #{resnext_bottleneck.4} parent=27 // pred_region
          _
        $region52: #{resnext_bottleneck.4} parent=27 // pred_fallthru
          _
        // Predicated region
        $region53: #{resnext_bottleneck.4} parent=27 // pred_check
          %p669 = pneg %p106
        $region54: #{resnext_bottleneck.4} parent=27 // pred_check_branch
          %671 = sbr.rel (%p669) target = $region56
        $region55: #{resnext_bottleneck.4} parent=27 // pred_region
          _
        $region56: #{resnext_bottleneck.4} parent=27 // pred_fallthru
          _
        // Predicated region
        $region57: #{resnext_bottleneck.4} parent=27 // pred_check
          %p672 = pneg %p127
        $region58: #{resnext_bottleneck.4} parent=27 // pred_check_branch
          %674 = sbr.rel (%p672) target = $region60
        $region59: #{resnext_bottleneck.4} parent=27 // pred_region
          _
        $region60: #{resnext_bottleneck.4} parent=27 // pred_fallthru
          _
      $region28: #{resnext_bottleneck.4} parent=5 // pred_fallthru
        _
      %p675 = scmp.le.s32.totalorder 2, %s15
      // Predicated region
      $region61: #{resnext_bottleneck.4} parent=5 // pred_check
        %p676 = pneg %p675
      $region62: #{resnext_bottleneck.4} parent=5 // pred_check_branch
        %678 = sbr.rel (%p676) target = $region64
      $region63: #{resnext_bottleneck.4} parent=5 // pred_region
        %s679 = ssub.s32 %s15, 2
        // Predicated region
        $region65: #{resnext_bottleneck.4} parent=63 // pred_check
          %p680 = pneg %p91
        $region66: #{resnext_bottleneck.4} parent=63 // pred_check_branch
          %682 = sbr.rel (%p680) target = $region68
        $region67: #{resnext_bottleneck.4} parent=63 // pred_region
          %s683 = smul.u32 32, %s21
          %p684 = scmp.lt.s32.totalorder %s683, 63
          %s685 = scalar_select %p684, %s683, 63
          %s686 = smul.addr %s685, 8
          %s687 = scalar_lea.vmem %s2, %s686
        $region68: #{resnext_bottleneck.4} parent=63 // pred_fallthru
          _
      $region64: #{resnext_bottleneck.4} parent=5 // pred_fallthru
        _
    $region6: #{resnext_bottleneck.4} parent=1 // loop_footer
      %s19 = sadd.s32 1, %s15
    $region7: #{resnext_bottleneck.4} parent=1 // loop_footer_branch
      %14 = sbr.rel target = $region3
    $region8: #{resnext_bottleneck.4} parent=1 // loop_exit
      _
    %688 = vsyncpa [#allocation3], 1
    %s689 = scalar_lea.sflag [#allocation3], 1
    %690 = vsyncpa %s689, 1
    %691 = vsyncpa [#allocation5], 1

// kernel: resnext_bottleneck.7
$region0: #{resnext_bottleneck.7}
  #allocation0 [shape = 'u32[]', space=smem, size = 0x4, offset = 0x4, fixed_abs, tag = 'smem constant byte address 0x4 - core index']
  #allocation1 [shape = 'u32[144,128]{1,0:T(1,128)}', space=vmem, size = 0x12000, scoped, tag = 'internal scratch']
  %s0 = inlined_call_operand.vmem [shape: f32[512,128], index: 0, kind: input, shape index: {}]
  %s1 = inlined_call_operand.vmem [shape: f32[512,128], index: 1, kind: input, shape index: {}]
  %s2 = inlined_call_operand.vmem [shape: f32[1,128], index: 2, kind: input, shape index: {}]
  %s3 = inlined_call_operand.vmem [shape: f32[1,128], index: 3, kind: input, shape index: {}]
  %s4 = inlined_call_operand.hbm [shape: f32[512,128], index: 4, kind: output, shape index: {}]
  %s5 = sld [smem:[#allocation0]]
  $region49: #{resnext_bottleneck.7} parent=0
    _
  %s7 = ssub.s32 1, %s5
  %s8 = scalar_select 0, %s7, %s5
  $region1: #{resnext_bottleneck.7} parent=0
    #allocation2 [shape = 'u8[262144]{0}', space=vmem, size = 0x40000, scoped, tag = 'output window, operand 0']
    #allocation3 [shape = 's32[2]{0}', space=sflag, size = 0x8, scoped, tag = 'scoped memory for resnext_bottleneck.7']
    %9 = vsyncpa [#allocation3], 0
    %s10 = scalar_lea.sflag [#allocation3], 1
    %11 = vsyncpa %s10, 0
    loop: start=0, step=1, limit=4
    $region2: #{resnext_bottleneck.7} parent=1 // loop_pre_header
      _
    $region3: #{resnext_bottleneck.7} parent=1 // loop_header
      %s13 = sphi 0, %s17
      %p14 = scmp.ge.s32.totalorder %s13, 4
      %s23 = sphi 0, %s25
      %s26 = sphi 0, %s23
      %s27 = sphi 0, %s26
      %s43 = sphi 0, %s27
      %s49 = sphi 0, %s51
      %s52 = sphi 0, %s49
      %s53 = sphi 0, %s52
      %s69 = sphi 0, %s53
      %s73 = sphi 0, %s73
      %s75 = sphi 0, %s73
      %s76 = sphi 0, %s75
      %s90 = sphi 0, %s76
      %s94 = sphi 0, %s94
      %s96 = sphi 0, %s94
      %s97 = sphi 0, %s96
      %s111 = sphi 0, %s97
      %s117 = sphi 0, %s119
      %s120 = sphi 0, %s117
      %s121 = sphi 0, %s120
      %s137 = sphi 0, %s121
    $region4: #{resnext_bottleneck.7} parent=1 // loop_header_branch
      %16 = sbr.rel (%p14) target = $region8
    $region5: #{resnext_bottleneck.7} parent=1 // loop_body
      %s18 = ssub.s32 %s13, 1
      %s19 = ssub.s32 %s13, 2
      %s20 = sadd.s32 %s13, 1
      %s21 = ssub.s32 %s13, %s20
      %p22 = scmp.eq.s32.totalorder %s21, 0
      %s24 = sadd.s32 %s23, 1
      %s25 = scalar_select %p22, %s23, %s24
      %p28 = pneg %p22
      %p29 = scmp.eq.s32.totalorder %s13, 1
      %p30 = por %p28, %p29
      %p31 = scmp.ne.s32.totalorder %s23, %s26
      %p32 = scmp.eq.s32.totalorder %s13, 0
      %p33 = por %p31, %p32
      %p34 = scmp.ne.s32.totalorder %s23, %s26
      %p35 = scmp.eq.s32.totalorder %s18, 1
      %p36 = por %p34, %p35
      %p37 = scmp.ne.s32.totalorder %s26, %s27
      %p38 = scmp.eq.s32.totalorder %s18, 0
      %p39 = por %p37, %p38
      %p40 = scmp.ne.s32.totalorder %s26, %s27
      %p41 = scmp.eq.s32.totalorder %s19, 1
      %p42 = por %p40, %p41
      %p44 = scmp.ne.s32.totalorder %s27, %s43
      %p45 = scmp.eq.s32.totalorder %s19, 0
      %p46 = por %p44, %p45
      %s47 = ssub.s32 %s13, %s20
      %p48 = scmp.eq.s32.totalorder %s47, 0
      %s50 = sadd.s32 %s49, 1
      %s51 = scalar_select %p48, %s49, %s50
      %p54 = pneg %p48
      %p55 = scmp.eq.s32.totalorder %s13, 1
      %p56 = por %p54, %p55
      %p57 = scmp.ne.s32.totalorder %s49, %s52
      %p58 = scmp.eq.s32.totalorder %s13, 0
      %p59 = por %p57, %p58
      %p60 = scmp.ne.s32.totalorder %s49, %s52
      %p61 = scmp.eq.s32.totalorder %s18, 1
      %p62 = por %p60, %p61
      %p63 = scmp.ne.s32.totalorder %s52, %s53
      %p64 = scmp.eq.s32.totalorder %s18, 0
      %p65 = por %p63, %p64
      %p66 = scmp.ne.s32.totalorder %s52, %s53
      %p67 = scmp.eq.s32.totalorder %s19, 1
      %p68 = por %p66, %p67
      %p70 = scmp.ne.s32.totalorder %s53, %s69
      %p71 = scmp.eq.s32.totalorder %s19, 0
      %p72 = por %p70, %p71
      %s74 = sadd.s32 %s73, 1
      %p77 = scmp.eq.s32.totalorder %s13, 1
      %p78 = scmp.ne.s32.totalorder %s73, %s75
      %p79 = scmp.eq.s32.totalorder %s13, 0
      %p80 = por %p78, %p79
      %p81 = scmp.ne.s32.totalorder %s73, %s75
      %p82 = scmp.eq.s32.totalorder %s18, 1
      %p83 = por %p81, %p82
      %p84 = scmp.ne.s32.totalorder %s75, %s76
      %p85 = scmp.eq.s32.totalorder %s18, 0
      %p86 = por %p84, %p85
      %p87 = scmp.ne.s32.totalorder %s75, %s76
      %p88 = scmp.eq.s32.totalorder %s19, 1
      %p89 = por %p87, %p88
      %p91 = scmp.ne.s32.totalorder %s76, %s90
      %p92 = scmp.eq.s32.totalorder %s19, 0
      %p93 = por %p91, %p92
      %s95 = sadd.s32 %s94, 1
      %p98 = scmp.eq.s32.totalorder %s13, 1
      %p99 = scmp.ne.s32.totalorder %s94, %s96
      %p100 = scmp.eq.s32.totalorder %s13, 0
      %p101 = por %p99, %p100
      %p102 = scmp.ne.s32.totalorder %s94, %s96
      %p103 = scmp.eq.s32.totalorder %s18, 1
      %p104 = por %p102, %p103
      %p105 = scmp.ne.s32.totalorder %s96, %s97
      %p106 = scmp.eq.s32.totalorder %s18, 0
      %p107 = por %p105, %p106
      %p108 = scmp.ne.s32.totalorder %s96, %s97
      %p109 = scmp.eq.s32.totalorder %s19, 1
      %p110 = por %p108, %p109
      %p112 = scmp.ne.s32.totalorder %s97, %s111
      %p113 = scmp.eq.s32.totalorder %s19, 0
      %p114 = por %p112, %p113
      %s115 = ssub.s32 %s13, %s20
      %p116 = scmp.eq.s32.totalorder %s115, 0
      %s118 = sadd.s32 %s117, 1
      %s119 = scalar_select %p116, %s117, %s118
      %p122 = pneg %p116
      %p123 = scmp.eq.s32.totalorder %s13, 1
      %p124 = por %p122, %p123
      %p125 = scmp.ne.s32.totalorder %s117, %s120
      %p126 = scmp.eq.s32.totalorder %s13, 0
      %p127 = por %p125, %p126
      %p128 = scmp.ne.s32.totalorder %s117, %s120
      %p129 = scmp.eq.s32.totalorder %s18, 1
      %p130 = por %p128, %p129
      %p131 = scmp.ne.s32.totalorder %s120, %s121
      %p132 = scmp.eq.s32.totalorder %s18, 0
      %p133 = por %p131, %p132
      %p134 = scmp.ne.s32.totalorder %s120, %s121
      %p135 = scmp.eq.s32.totalorder %s19, 1
      %p136 = por %p134, %p135
      %p138 = scmp.ne.s32.totalorder %s121, %s137
      %p139 = scmp.eq.s32.totalorder %s19, 0
      %p140 = por %p138, %p139
      %p141 = scmp.le.s32.totalorder 1, %s13
      %p142 = scmp.lt.s32.totalorder %s13, 3
      %p143 = pnand %p141, %p142
      %p144 = pneg %p143
      // Predicated region
      $region9: #{resnext_bottleneck.7} parent=5 // pred_check
        _
      $region10: #{resnext_bottleneck.7} parent=5 // pred_check_branch
        %146 = sbr.rel (%p143) target = $region12
      $region11: #{resnext_bottleneck.7} parent=5 // pred_region
        %s147 = ssub.s32 %s13, 1
        // Predicated region
        $region13: #{resnext_bottleneck.7} parent=11 // pred_check
          %p148 = pneg %p86
        $region14: #{resnext_bottleneck.7} parent=11 // pred_check_branch
          %150 = sbr.rel (%p148) target = $region16
        $region15: #{resnext_bottleneck.7} parent=11 // pred_region
          _
        $region16: #{resnext_bottleneck.7} parent=11 // pred_fallthru
          _
        // Predicated region
        $region17: #{resnext_bottleneck.7} parent=11 // pred_check
          %p151 = pneg %p107
        $region18: #{resnext_bottleneck.7} parent=11 // pred_check_branch
          %153 = sbr.rel (%p151) target = $region20
        $region19: #{resnext_bottleneck.7} parent=11 // pred_region
          _
        $region20: #{resnext_bottleneck.7} parent=11 // pred_fallthru
          _
      $region12: #{resnext_bottleneck.7} parent=5 // pred_fallthru
        _
      %p154 = scmp.lt.s32.totalorder %s13, 2
      // Predicated region
      $region21: #{resnext_bottleneck.7} parent=5 // pred_check
        %p155 = pneg %p154
      $region22: #{resnext_bottleneck.7} parent=5 // pred_check_branch
        %157 = sbr.rel (%p155) target = $region24
      $region23: #{resnext_bottleneck.7} parent=5 // pred_region
        // Predicated region
        $region25: #{resnext_bottleneck.7} parent=23 // pred_check
          %p158 = pneg %p33
        $region26: #{resnext_bottleneck.7} parent=23 // pred_check_branch
          %160 = sbr.rel (%p158) target = $region28
        $region27: #{resnext_bottleneck.7} parent=23 // pred_region
          %s161 = smul.u32 32, %s13
          %p162 = scmp.lt.s32.totalorder %s161, 63
          %s163 = scalar_select %p162, %s161, 63
          %s164 = smul.addr %s163, 8
          %s165 = scalar_lea.vmem %s0, %s164
          %s166 = smul.u32 32, %s13
        $region28: #{resnext_bottleneck.7} parent=23 // pred_fallthru
          _
        // Predicated region
        $region29: #{resnext_bottleneck.7} parent=23 // pred_check
          %p167 = pneg %p59
        $region30: #{resnext_bottleneck.7} parent=23 // pred_check_branch
          %169 = sbr.rel (%p167) target = $region32
        $region31: #{resnext_bottleneck.7} parent=23 // pred_region
          %s170 = smul.u32 32, %s13
          %p171 = scmp.lt.s32.totalorder %s170, 63
          %s172 = scalar_select %p171, %s170, 63
          %s173 = smul.addr %s172, 8
          %s174 = scalar_lea.vmem %s1, %s173
          %s175 = smul.u32 32, %s13
        $region32: #{resnext_bottleneck.7} parent=23 // pred_fallthru
          _
      $region24: #{resnext_bottleneck.7} parent=5 // pred_fallthru
        _
      %p176 = scmp.le.s32.totalorder 1, %s13
      %p177 = scmp.lt.s32.totalorder %s13, 3
      %p178 = pnand %p176, %p177
      %p179 = pneg %p178
      // Predicated region
      $region33: #{resnext_bottleneck.7} parent=5 // pred_check
        _
      $region34: #{resnext_bottleneck.7} parent=5 // pred_check_branch
        %181 = sbr.rel (%p178) target = $region36
      $region35: #{resnext_bottleneck.7} parent=5 // pred_region
        %s182 = ssub.s32 %s13, 1
        %s183 = smul.u32 32, %s18
        %p184 = scmp.lt.s32.totalorder %s183, 63
        %s185 = scalar_select %p184, %s183, 63
        %s186 = smul.addr %s185, 8
        %s187 = scalar_lea.vmem %s0, %s186
        %p188 = pneg %p39
        %p189 = pneg %p36
        %s190 = smul.u32 32, %s18
        %p191 = scmp.lt.s32.totalorder %s190, 63
        %s192 = scalar_select %p191, %s190, 63
        %s193 = smul.addr %s192, 8
        %s194 = scalar_lea.vmem %s1, %s193
        %p195 = pneg %p65
        %p196 = pneg %p62
        %p197 = pneg %p86
        %p198 = pneg %p83
        %p199 = pneg %p107
        %p200 = pneg %p104
        %p201 = pneg %p133
        %p202 = pneg %p130
        %s203 = sand.u32 %s120, 1
        %s204 = scalar_lea.sflag [#allocation3], %s203
        %s205 = sand.u32 %s120, 1
        %s206 = smul.addr %s205, 256
        %s207 = scalar_lea.vmem [#allocation2], %s206
        %s208 = smul.u32 32, %s18
        %p209 = scmp.lt.s32.totalorder %s208, 63
        %s210 = scalar_select %p209, %s208, 63
        %s211 = smul.addr %s210, 8
        %s212 = scalar_lea.vmem %s0, %s211
        %s213 = smul.u32 32, %s18
        %s214 = smul.u32 32, %s18
        %p215 = scmp.lt.s32.totalorder %s214, 63
        %s216 = scalar_select %p215, %s214, 63
        %s217 = smul.addr %s216, 8
        %s218 = scalar_lea.vmem %s1, %s217
        %s219 = smul.u32 32, %s18
        %s220 = smul.u32 32, %s18
        %v221 = vld [vmem:[%s212] sm:$0xff]
        %v222 = vld [vmem:[%s212 + $0x8] sm:$0xff]
        %v223 = vld [vmem:[%s212 + $0x10] sm:$0xff]
        %v224 = vld [vmem:[%s212 + $0x18] sm:$0xff]
        %v225 = vld [vmem:[%s212 + $0x20] sm:$0xff]
        %v226 = vld [vmem:[%s212 + $0x28] sm:$0xff]
        %v227 = vld [vmem:[%s212 + $0x30] sm:$0xff]
        %v228 = vld [vmem:[%s212 + $0x38] sm:$0xff]
        %v229 = vld [vmem:[%s212 + $0x40] sm:$0xff]
        %v230 = vld [vmem:[%s212 + $0x48] sm:$0xff]
        %v231 = vld [vmem:[%s212 + $0x50] sm:$0xff]
        %v232 = vld [vmem:[%s212 + $0x58] sm:$0xff]
        %v233 = vld [vmem:[%s212 + $0x60] sm:$0xff]
        %v234 = vld [vmem:[%s212 + $0x68] sm:$0xff]
        %v235 = vld [vmem:[%s212 + $0x70] sm:$0xff]
        %v236 = vld [vmem:[%s212 + $0x78] sm:$0xff]
        %v237 = vld [vmem:[%s212 + $0x80] sm:$0xff]
        %v238 = vld [vmem:[%s212 + $0x88] sm:$0xff]
        %v239 = vld [vmem:[%s212 + $0x90] sm:$0xff]
        %v240 = vld [vmem:[%s212 + $0x98] sm:$0xff]
        %v241 = vld [vmem:[%s212 + $0xa0] sm:$0xff]
        %v242 = vld [vmem:[%s212 + $0xa8] sm:$0xff]
        %v243 = vld [vmem:[%s212 + $0xb0] sm:$0xff]
        %v244 = vld [vmem:[%s212 + $0xb8] sm:$0xff]
        %v245 = vld [vmem:[%s212 + $0xc0] sm:$0xff]
        %v246 = vld [vmem:[%s212 + $0xc8] sm:$0xff]
        %v247 = vld [vmem:[%s212 + $0xd0] sm:$0xff]
        %v248 = vld [vmem:[%s212 + $0xd8] sm:$0xff]
        %v249 = vld [vmem:[%s212 + $0xe0] sm:$0xff]
        %v250 = vld [vmem:[%s212 + $0xe8] sm:$0xff]
        %v251 = vld [vmem:[%s212 + $0xf0] sm:$0xff]
        %v252 = vld [vmem:[%s212 + $0xf8] sm:$0xff]
        %v253 = vld [vmem:[%s218] sm:$0xff]
        %v254 = vld [vmem:[%s218 + $0x8] sm:$0xff]
        %v255 = vld [vmem:[%s218 + $0x10] sm:$0xff]
        %v256 = vld [vmem:[%s218 + $0x18] sm:$0xff]
        %v257 = vld [vmem:[%s218 + $0x20] sm:$0xff]
        %v258 = vld [vmem:[%s218 + $0x28] sm:$0xff]
        %v259 = vld [vmem:[%s218 + $0x30] sm:$0xff]
        %v260 = vld [vmem:[%s218 + $0x38] sm:$0xff]
        %v261 = vld [vmem:[%s218 + $0x40] sm:$0xff]
        %v262 = vld [vmem:[%s218 + $0x48] sm:$0xff]
        %v263 = vld [vmem:[%s218 + $0x50] sm:$0xff]
        %v264 = vld [vmem:[%s218 + $0x58] sm:$0xff]
        %v265 = vld [vmem:[%s218 + $0x60] sm:$0xff]
        %v266 = vld [vmem:[%s218 + $0x68] sm:$0xff]
        %v267 = vld [vmem:[%s218 + $0x70] sm:$0xff]
        %v268 = vld [vmem:[%s218 + $0x78] sm:$0xff]
        %v269 = vld [vmem:[%s218 + $0x80] sm:$0xff]
        %v270 = vld [vmem:[%s218 + $0x88] sm:$0xff]
        %v271 = vld [vmem:[%s218 + $0x90] sm:$0xff]
        %v272 = vld [vmem:[%s218 + $0x98] sm:$0xff]
        %v273 = vld [vmem:[%s218 + $0xa0] sm:$0xff]
        %v274 = vld [vmem:[%s218 + $0xa8] sm:$0xff]
        %v275 = vld [vmem:[%s218 + $0xb0] sm:$0xff]
        %v276 = vld [vmem:[%s218 + $0xb8] sm:$0xff]
        %v277 = vld [vmem:[%s218 + $0xc0] sm:$0xff]
        %v278 = vld [vmem:[%s218 + $0xc8] sm:$0xff]
        %v279 = vld [vmem:[%s218 + $0xd0] sm:$0xff]
        %v280 = vld [vmem:[%s218 + $0xd8] sm:$0xff]
        %v281 = vld [vmem:[%s218 + $0xe0] sm:$0xff]
        %v282 = vld [vmem:[%s218 + $0xe8] sm:$0xff]
        %v283 = vld [vmem:[%s218 + $0xf0] sm:$0xff]
        %v284 = vld [vmem:[%s218 + $0xf8] sm:$0xff]
        %v285 = vld [vmem:[%s2] sm:$0x1]
        %v287 = vlaneseq
        %v288 = vshrl.u32 %v287, 7
        %v289 = vsub.s32 0, %v288
        %v290 = vrot.slane %v285, %v289
        %v292 = vmul.f32 %v253, %v290
        %v293 = vmul.f32 %v254, %v290
        %v294 = vmul.f32 %v255, %v290
        %v295 = vmul.f32 %v256, %v290
        %v296 = vmul.f32 %v257, %v290
        %v297 = vmul.f32 %v258, %v290
        %v298 = vmul.f32 %v259, %v290
        %v299 = vmul.f32 %v260, %v290
        %v300 = vmul.f32 %v261, %v290
        %v301 = vmul.f32 %v262, %v290
        %v302 = vmul.f32 %v263, %v290
        %v303 = vmul.f32 %v264, %v290
        %v304 = vmul.f32 %v265, %v290
        %v305 = vmul.f32 %v266, %v290
        %v306 = vmul.f32 %v267, %v290
        %v307 = vmul.f32 %v268, %v290
        %v308 = vmul.f32 %v269, %v290
        %v309 = vmul.f32 %v270, %v290
        %v310 = vmul.f32 %v271, %v290
        %v311 = vmul.f32 %v272, %v290
        %v312 = vmul.f32 %v273, %v290
        %v313 = vmul.f32 %v274, %v290
        %v314 = vmul.f32 %v275, %v290
        %v315 = vmul.f32 %v276, %v290
        %v316 = vmul.f32 %v277, %v290
        %v317 = vmul.f32 %v278, %v290
        %v318 = vmul.f32 %v279, %v290
        %v319 = vmul.f32 %v280, %v290
        %v320 = vmul.f32 %v281, %v290
        %v321 = vmul.f32 %v282, %v290
        %v322 = vmul.f32 %v283, %v290
        %v323 = vmul.f32 %v284, %v290
        %v324 = vadd.f32 %v221, %v292
        %v325 = vadd.f32 %v222, %v293
        %v326 = vadd.f32 %v223, %v294
        %v327 = vadd.f32 %v224, %v295
        %v328 = vadd.f32 %v225, %v296
        %v329 = vadd.f32 %v226, %v297
        %v330 = vadd.f32 %v227, %v298
        %v331 = vadd.f32 %v228, %v299
        %v332 = vadd.f32 %v229, %v300
        %v333 = vadd.f32 %v230, %v301
        %v334 = vadd.f32 %v231, %v302
        %v335 = vadd.f32 %v232, %v303
        %v336 = vadd.f32 %v233, %v304
        %v337 = vadd.f32 %v234, %v305
        %v338 = vadd.f32 %v235, %v306
        %v339 = vadd.f32 %v236, %v307
        %v340 = vadd.f32 %v237, %v308
        %v341 = vadd.f32 %v238, %v309
        %v342 = vadd.f32 %v239, %v310
        %v343 = vadd.f32 %v240, %v311
        %v344 = vadd.f32 %v241, %v312
        %v345 = vadd.f32 %v242, %v313
        %v346 = vadd.f32 %v243, %v314
        %v347 = vadd.f32 %v244, %v315
        %v348 = vadd.f32 %v245, %v316
        %v349 = vadd.f32 %v246, %v317
        %v350 = vadd.f32 %v247, %v318
        %v351 = vadd.f32 %v248, %v319
        %v352 = vadd.f32 %v249, %v320
        %v353 = vadd.f32 %v250, %v321
        %v354 = vadd.f32 %v251, %v322
        %v355 = vadd.f32 %v252, %v323
        %v356 = vld [vmem:[%s3] sm:$0x1]
        %v358 = vlaneseq
        %v359 = vshrl.u32 %v358, 7
        %v360 = vsub.s32 0, %v359
        %v361 = vrot.slane %v356, %v360
        %v363 = vadd.f32 %v324, %v361
        %v364 = vadd.f32 %v325, %v361
        %v365 = vadd.f32 %v326, %v361
        %v366 = vadd.f32 %v327, %v361
        %v367 = vadd.f32 %v328, %v361
        %v368 = vadd.f32 %v329, %v361
        %v369 = vadd.f32 %v330, %v361
        %v370 = vadd.f32 %v331, %v361
        %v371 = vadd.f32 %v332, %v361
        %v372 = vadd.f32 %v333, %v361
        %v373 = vadd.f32 %v334, %v361
        %v374 = vadd.f32 %v335, %v361
        %v375 = vadd.f32 %v336, %v361
        %v376 = vadd.f32 %v337, %v361
        %v377 = vadd.f32 %v338, %v361
        %v378 = vadd.f32 %v339, %v361
        %v379 = vadd.f32 %v340, %v361
        %v380 = vadd.f32 %v341, %v361
        %v381 = vadd.f32 %v342, %v361
        %v382 = vadd.f32 %v343, %v361
        %v383 = vadd.f32 %v344, %v361
        %v384 = vadd.f32 %v345, %v361
        %v385 = vadd.f32 %v346, %v361
        %v386 = vadd.f32 %v347, %v361
        %v387 = vadd.f32 %v348, %v361
        %v388 = vadd.f32 %v349, %v361
        %v389 = vadd.f32 %v350, %v361
        %v390 = vadd.f32 %v351, %v361
        %v391 = vadd.f32 %v352, %v361
        %v392 = vadd.f32 %v353, %v361
        %v393 = vadd.f32 %v354, %v361
        %v394 = vadd.f32 %v355, %v361
        %v395 = vmax.f32 %v363, 0.0
        %v396 = vmax.f32 %v364, 0.0
        %v397 = vmax.f32 %v365, 0.0
        %v398 = vmax.f32 %v366, 0.0
        %v399 = vmax.f32 %v367, 0.0
        %v400 = vmax.f32 %v368, 0.0
        %v401 = vmax.f32 %v369, 0.0
        %v402 = vmax.f32 %v370, 0.0
        %v403 = vmax.f32 %v371, 0.0
        %v404 = vmax.f32 %v372, 0.0
        %v405 = vmax.f32 %v373, 0.0
        %v406 = vmax.f32 %v374, 0.0
        %v407 = vmax.f32 %v375, 0.0
        %v408 = vmax.f32 %v376, 0.0
        %v409 = vmax.f32 %v377, 0.0
        %v410 = vmax.f32 %v378, 0.0
        %v411 = vmax.f32 %v379, 0.0
        %v412 = vmax.f32 %v380, 0.0
        %v413 = vmax.f32 %v381, 0.0
        %v414 = vmax.f32 %v382, 0.0
        %v415 = vmax.f32 %v383, 0.0
        %v416 = vmax.f32 %v384, 0.0
        %v417 = vmax.f32 %v385, 0.0
        %v418 = vmax.f32 %v386, 0.0
        %v419 = vmax.f32 %v387, 0.0
        %v420 = vmax.f32 %v388, 0.0
        %v421 = vmax.f32 %v389, 0.0
        %v422 = vmax.f32 %v390, 0.0
        %v423 = vmax.f32 %v391, 0.0
        %v424 = vmax.f32 %v392, 0.0
        %v425 = vmax.f32 %v393, 0.0
        %v426 = vmax.f32 %v394, 0.0
        %427 = vst [vmem:[%s207] sm:$0xff] %v395
        %428 = vst [vmem:[%s207 + $0x8] sm:$0xff] %v396
        %429 = vst [vmem:[%s207 + $0x10] sm:$0xff] %v397
        %430 = vst [vmem:[%s207 + $0x18] sm:$0xff] %v398
        %431 = vst [vmem:[%s207 + $0x20] sm:$0xff] %v399
        %432 = vst [vmem:[%s207 + $0x28] sm:$0xff] %v400
        %433 = vst [vmem:[%s207 + $0x30] sm:$0xff] %v401
        %434 = vst [vmem:[%s207 + $0x38] sm:$0xff] %v402
        %435 = vst [vmem:[%s207 + $0x40] sm:$0xff] %v403
        %436 = vst [vmem:[%s207 + $0x48] sm:$0xff] %v404
        %437 = vst [vmem:[%s207 + $0x50] sm:$0xff] %v405
        %438 = vst [vmem:[%s207 + $0x58] sm:$0xff] %v406
        %439 = vst [vmem:[%s207 + $0x60] sm:$0xff] %v407
        %440 = vst [vmem:[%s207 + $0x68] sm:$0xff] %v408
        %441 = vst [vmem:[%s207 + $0x70] sm:$0xff] %v409
        %442 = vst [vmem:[%s207 + $0x78] sm:$0xff] %v410
        %443 = vst [vmem:[%s207 + $0x80] sm:$0xff] %v411
        %444 = vst [vmem:[%s207 + $0x88] sm:$0xff] %v412
        %445 = vst [vmem:[%s207 + $0x90] sm:$0xff] %v413
        %446 = vst [vmem:[%s207 + $0x98] sm:$0xff] %v414
        %447 = vst [vmem:[%s207 + $0xa0] sm:$0xff] %v415
        %448 = vst [vmem:[%s207 + $0xa8] sm:$0xff] %v416
        %449 = vst [vmem:[%s207 + $0xb0] sm:$0xff] %v417
        %450 = vst [vmem:[%s207 + $0xb8] sm:$0xff] %v418
        %451 = vst [vmem:[%s207 + $0xc0] sm:$0xff] %v419
        %452 = vst [vmem:[%s207 + $0xc8] sm:$0xff] %v420
        %453 = vst [vmem:[%s207 + $0xd0] sm:$0xff] %v421
        %454 = vst [vmem:[%s207 + $0xd8] sm:$0xff] %v422
        %455 = vst [vmem:[%s207 + $0xe0] sm:$0xff] %v423
        %456 = vst [vmem:[%s207 + $0xe8] sm:$0xff] %v424
        %457 = vst [vmem:[%s207 + $0xf0] sm:$0xff] %v425
        %458 = vst [vmem:[%s207 + $0xf8] sm:$0xff] %v426
        %s459 = sand.u32 %s120, 1
        %s460 = scalar_lea.sflag [#allocation3], %s459
        %s461 = sand.u32 %s120, 1
        %s462 = smul.addr %s461, 256
        %s463 = scalar_lea.vmem [#allocation2], %s462
        // Predicated region
        $region37: #{resnext_bottleneck.7} parent=35 // pred_check
          %p464 = pneg %p130
        $region38: #{resnext_bottleneck.7} parent=35 // pred_check_branch
          %466 = sbr.rel (%p464) target = $region40
        $region39: #{resnext_bottleneck.7} parent=35 // pred_region
          %s467 = smul.u32 32, %s18
          %s469 = ssub.s32 4096, 4096
          %470 = vsyncadd %s460, %s469
          %s471 = smul.addr %s467, 128
          %s472 = scalar_lea.hbm %s4, %s471
          %s473 = sshll.u32 %s463, 4
          %s474 = int_to_ptr.vmem [resolvable:$true] %s473
          %479 = dma.vmem_to_hbm [thread:$0]  %s474, 4096, %s472, %s460, 128, 128, 8
        $region40: #{resnext_bottleneck.7} parent=35 // pred_fallthru
          _
      $region36: #{resnext_bottleneck.7} parent=5 // pred_fallthru
        _
      %p480 = scmp.le.s32.totalorder 2, %s13
      // Predicated region
      $region41: #{resnext_bottleneck.7} parent=5 // pred_check
        %p481 = pneg %p480
      $region42: #{resnext_bottleneck.7} parent=5 // pred_check_branch
        %483 = sbr.rel (%p481) target = $region44
      $region43: #{resnext_bottleneck.7} parent=5 // pred_region
        %s484 = ssub.s32 %s13, 2
        // Predicated region
        $region45: #{resnext_bottleneck.7} parent=43 // pred_check
          %p485 = pneg %p136
        $region46: #{resnext_bottleneck.7} parent=43 // pred_check_branch
          %487 = sbr.rel (%p485) target = $region48
        $region47: #{resnext_bottleneck.7} parent=43 // pred_region
          %s488 = sand.u32 %s121, 1
          %s489 = scalar_lea.sflag [#allocation3], %s488
          %s490 = sand.u32 %s121, 1
          %s491 = smul.addr %s490, 256
          %s492 = scalar_lea.vmem [#allocation2], %s491
          %493 = dma.done %s489, 4096
        $region48: #{resnext_bottleneck.7} parent=43 // pred_fallthru
          _
      $region44: #{resnext_bottleneck.7} parent=5 // pred_fallthru
        _
    $region6: #{resnext_bottleneck.7} parent=1 // loop_footer
      %s17 = sadd.s32 1, %s13
    $region7: #{resnext_bottleneck.7} parent=1 // loop_footer_branch
      %12 = sbr.rel target = $region3
    $region8: #{resnext_bottleneck.7} parent=1 // loop_exit
      _
    %494 = vsyncpa [#allocation3], 1
    %s495 = scalar_lea.sflag [#allocation3], 1
    %496 = vsyncpa %s495, 1

// kernel: resnext_bottleneck.5
$region0: #{resnext_bottleneck.5}
  #allocation0 [shape = 'u32[]', space=smem, size = 0x4, offset = 0x4, fixed_abs, tag = 'smem constant byte address 0x4 - core index']
  #allocation1 [shape = 'u32[144,128]{1,0:T(1,128)}', space=vmem, size = 0x12000, scoped, tag = 'internal scratch']
  #allocation2 [shape = 'f32[18,18,128]{2,1,0:T(8,128)}', space=vmem, size = 0x36000, scoped, tag = 'scratch operand']
  #allocation3 [shape = 'bf16[256,1152]{1,0:T(8,128)(2,1)}', space=vmem, size = 0x90000, scoped, tag = 'scratch operand']
  %s0 = inlined_call_operand.vmem [shape: f32[512,128], index: 0, kind: input, shape index: {}]
  %s1 = inlined_call_operand.vmem [shape: f32[1,128], index: 1, kind: input, shape index: {}]
  %s2 = inlined_call_operand.vmem [shape: f32[1,128], index: 2, kind: input, shape index: {}]
  %s3 = inlined_call_operand.vmem [shape: bf16[1152,128], index: 3, kind: input, shape index: {}]
  %s4 = inlined_call_operand.vmem [shape: f32[512,128], index: 4, kind: output, shape index: {0}]
  %s5 = inlined_call_operand.vmem [shape: f32[1,128], index: 5, kind: output, shape index: {1}]
  %s6 = inlined_call_operand.vmem [shape: f32[1,128], index: 6, kind: output, shape index: {2}]
  %7 = xla_tuple %s4, %s5, %s6
  %s8 = sld [smem:[#allocation0]]
  $region69: #{resnext_bottleneck.5} parent=0
    _
  %s10 = ssub.s32 1, %s8
  %s11 = scalar_select 0, %s10, %s8
  loop: start=0, step=1, limit=4
  $region2: #{resnext_bottleneck.5} parent=0 // loop_pre_header
    _
  $region3: #{resnext_bottleneck.5} parent=0 // loop_header
    %s13 = sphi 0, %s17
    %p14 = scmp.ge.s32.totalorder %s13, 4
    %s23 = sphi 0, %s25
    %s26 = sphi 0, %s23
    %s27 = sphi 0, %s26
    %s43 = sphi 0, %s27
    %s47 = sphi 0, %s47
    %s49 = sphi 0, %s47
    %s50 = sphi 0, %s49
    %s64 = sphi 0, %s50
    %s68 = sphi 0, %s68
    %s70 = sphi 0, %s68
    %s71 = sphi 0, %s70
    %s85 = sphi 0, %s71
    %s89 = sphi 0, %s89
    %s91 = sphi 0, %s89
    %s92 = sphi 0, %s91
    %s106 = sphi 0, %s92
    %s112 = sphi 0, %s114
    %s115 = sphi 0, %s112
    %s116 = sphi 0, %s115
    %s132 = sphi 0, %s116
    %s136 = sphi 0, %s136
    %s138 = sphi 0, %s136
    %s139 = sphi 0, %s138
    %s153 = sphi 0, %s139
    %s157 = sphi 0, %s157
    %s159 = sphi 0, %s157
    %s160 = sphi 0, %s159
    %s174 = sphi 0, %s160
  $region4: #{resnext_bottleneck.5} parent=0 // loop_header_branch
    %16 = sbr.rel (%p14) target = $region8
  $region5: #{resnext_bottleneck.5} parent=0 // loop_body
    %s18 = ssub.s32 %s13, 1
    %s19 = ssub.s32 %s13, 2
    %s20 = sadd.s32 %s13, 1
    %s21 = ssub.s32 %s13, %s20
    %p22 = scmp.eq.s32.totalorder %s21, 0
    %s24 = sadd.s32 %s23, 1
    %s25 = scalar_select %p22, %s23, %s24
    %p28 = pneg %p22
    %p29 = scmp.eq.s32.totalorder %s13, 1
    %p30 = por %p28, %p29
    %p31 = scmp.ne.s32.totalorder %s23, %s26
    %p32 = scmp.eq.s32.totalorder %s13, 0
    %p33 = por %p31, %p32
    %p34 = scmp.ne.s32.totalorder %s23, %s26
    %p35 = scmp.eq.s32.totalorder %s18, 1
    %p36 = por %p34, %p35
    %p37 = scmp.ne.s32.totalorder %s26, %s27
    %p38 = scmp.eq.s32.totalorder %s18, 0
    %p39 = por %p37, %p38
    %p40 = scmp.ne.s32.totalorder %s26, %s27
    %p41 = scmp.eq.s32.totalorder %s19, 1
    %p42 = por %p40, %p41
    %p44 = scmp.ne.s32.totalorder %s27, %s43
    %p45 = scmp.eq.s32.totalorder %s19, 0
    %p46 = por %p44, %p45
    %s48 = sadd.s32 %s47, 1
    %p51 = scmp.eq.s32.totalorder %s13, 1
    %p52 = scmp.ne.s32.totalorder %s47, %s49
    %p53 = scmp.eq.s32.totalorder %s13, 0
    %p54 = por %p52, %p53
    %p55 = scmp.ne.s32.totalorder %s47, %s49
    %p56 = scmp.eq.s32.totalorder %s18, 1
    %p57 = por %p55, %p56
    %p58 = scmp.ne.s32.totalorder %s49, %s50
    %p59 = scmp.eq.s32.totalorder %s18, 0
    %p60 = por %p58, %p59
    %p61 = scmp.ne.s32.totalorder %s49, %s50
    %p62 = scmp.eq.s32.totalorder %s19, 1
    %p63 = por %p61, %p62
    %p65 = scmp.ne.s32.totalorder %s50, %s64
    %p66 = scmp.eq.s32.totalorder %s19, 0
    %p67 = por %p65, %p66
    %s69 = sadd.s32 %s68, 1
    %p72 = scmp.eq.s32.totalorder %s13, 1
    %p73 = scmp.ne.s32.totalorder %s68, %s70
    %p74 = scmp.eq.s32.totalorder %s13, 0
    %p75 = por %p73, %p74
    %p76 = scmp.ne.s32.totalorder %s68, %s70
    %p77 = scmp.eq.s32.totalorder %s18, 1
    %p78 = por %p76, %p77
    %p79 = scmp.ne.s32.totalorder %s70, %s71
    %p80 = scmp.eq.s32.totalorder %s18, 0
    %p81 = por %p79, %p80
    %p82 = scmp.ne.s32.totalorder %s70, %s71
    %p83 = scmp.eq.s32.totalorder %s19, 1
    %p84 = por %p82, %p83
    %p86 = scmp.ne.s32.totalorder %s71, %s85
    %p87 = scmp.eq.s32.totalorder %s19, 0
    %p88 = por %p86, %p87
    %s90 = sadd.s32 %s89, 1
    %p93 = scmp.eq.s32.totalorder %s13, 1
    %p94 = scmp.ne.s32.totalorder %s89, %s91
    %p95 = scmp.eq.s32.totalorder %s13, 0
    %p96 = por %p94, %p95
    %p97 = scmp.ne.s32.totalorder %s89, %s91
    %p98 = scmp.eq.s32.totalorder %s18, 1
    %p99 = por %p97, %p98
    %p100 = scmp.ne.s32.totalorder %s91, %s92
    %p101 = scmp.eq.s32.totalorder %s18, 0
    %p102 = por %p100, %p101
    %p103 = scmp.ne.s32.totalorder %s91, %s92
    %p104 = scmp.eq.s32.totalorder %s19, 1
    %p105 = por %p103, %p104
    %p107 = scmp.ne.s32.totalorder %s92, %s106
    %p108 = scmp.eq.s32.totalorder %s19, 0
    %p109 = por %p107, %p108
    %s110 = ssub.s32 %s13, %s20
    %p111 = scmp.eq.s32.totalorder %s110, 0
    %s113 = sadd.s32 %s112, 1
    %s114 = scalar_select %p111, %s112, %s113
    %p117 = pneg %p111
    %p118 = scmp.eq.s32.totalorder %s13, 1
    %p119 = por %p117, %p118
    %p120 = scmp.ne.s32.totalorder %s112, %s115
    %p121 = scmp.eq.s32.totalorder %s13, 0
    %p122 = por %p120, %p121
    %p123 = scmp.ne.s32.totalorder %s112, %s115
    %p124 = scmp.eq.s32.totalorder %s18, 1
    %p125 = por %p123, %p124
    %p126 = scmp.ne.s32.totalorder %s115, %s116
    %p127 = scmp.eq.s32.totalorder %s18, 0
    %p128 = por %p126, %p127
    %p129 = scmp.ne.s32.totalorder %s115, %s116
    %p130 = scmp.eq.s32.totalorder %s19, 1
    %p131 = por %p129, %p130
    %p133 = scmp.ne.s32.totalorder %s116, %s132
    %p134 = scmp.eq.s32.totalorder %s19, 0
    %p135 = por %p133, %p134
    %s137 = sadd.s32 %s136, 1
    %p140 = scmp.eq.s32.totalorder %s13, 1
    %p141 = scmp.ne.s32.totalorder %s136, %s138
    %p142 = scmp.eq.s32.totalorder %s13, 0
    %p143 = por %p141, %p142
    %p144 = scmp.ne.s32.totalorder %s136, %s138
    %p145 = scmp.eq.s32.totalorder %s18, 1
    %p146 = por %p144, %p145
    %p147 = scmp.ne.s32.totalorder %s138, %s139
    %p148 = scmp.eq.s32.totalorder %s18, 0
    %p149 = por %p147, %p148
    %p150 = scmp.ne.s32.totalorder %s138, %s139
    %p151 = scmp.eq.s32.totalorder %s19, 1
    %p152 = por %p150, %p151
    %p154 = scmp.ne.s32.totalorder %s139, %s153
    %p155 = scmp.eq.s32.totalorder %s19, 0
    %p156 = por %p154, %p155
    %s158 = sadd.s32 %s157, 1
    %p161 = scmp.eq.s32.totalorder %s13, 1
    %p162 = scmp.ne.s32.totalorder %s157, %s159
    %p163 = scmp.eq.s32.totalorder %s13, 0
    %p164 = por %p162, %p163
    %p165 = scmp.ne.s32.totalorder %s157, %s159
    %p166 = scmp.eq.s32.totalorder %s18, 1
    %p167 = por %p165, %p166
    %p168 = scmp.ne.s32.totalorder %s159, %s160
    %p169 = scmp.eq.s32.totalorder %s18, 0
    %p170 = por %p168, %p169
    %p171 = scmp.ne.s32.totalorder %s159, %s160
    %p172 = scmp.eq.s32.totalorder %s19, 1
    %p173 = por %p171, %p172
    %p175 = scmp.ne.s32.totalorder %s160, %s174
    %p176 = scmp.eq.s32.totalorder %s19, 0
    %p177 = por %p175, %p176
    %p178 = scmp.le.s32.totalorder 1, %s13
    %p179 = scmp.lt.s32.totalorder %s13, 3
    %p180 = pnand %p178, %p179
    %p181 = pneg %p180
    // Predicated region
    $region9: #{resnext_bottleneck.5} parent=5 // pred_check
      _
    $region10: #{resnext_bottleneck.5} parent=5 // pred_check_branch
      %183 = sbr.rel (%p180) target = $region12
    $region11: #{resnext_bottleneck.5} parent=5 // pred_region
      %s184 = ssub.s32 %s13, 1
      // Predicated region
      $region13: #{resnext_bottleneck.5} parent=11 // pred_check
        %p185 = pneg %p60
      $region14: #{resnext_bottleneck.5} parent=11 // pred_check_branch
        %187 = sbr.rel (%p185) target = $region16
      $region15: #{resnext_bottleneck.5} parent=11 // pred_region
        _
      $region16: #{resnext_bottleneck.5} parent=11 // pred_fallthru
        _
      // Predicated region
      $region17: #{resnext_bottleneck.5} parent=11 // pred_check
        %p188 = pneg %p81
      $region18: #{resnext_bottleneck.5} parent=11 // pred_check_branch
        %190 = sbr.rel (%p188) target = $region20
      $region19: #{resnext_bottleneck.5} parent=11 // pred_region
        _
      $region20: #{resnext_bottleneck.5} parent=11 // pred_fallthru
        _
      // Predicated region
      $region21: #{resnext_bottleneck.5} parent=11 // pred_check
        %p191 = pneg %p102
      $region22: #{resnext_bottleneck.5} parent=11 // pred_check_branch
        %193 = sbr.rel (%p191) target = $region24
      $region23: #{resnext_bottleneck.5} parent=11 // pred_region
        _
      $region24: #{resnext_bottleneck.5} parent=11 // pred_fallthru
        _
    $region12: #{resnext_bottleneck.5} parent=5 // pred_fallthru
      _
    %p194 = scmp.lt.s32.totalorder %s13, 2
    // Predicated region
    $region25: #{resnext_bottleneck.5} parent=5 // pred_check
      %p195 = pneg %p194
    $region26: #{resnext_bottleneck.5} parent=5 // pred_check_branch
      %197 = sbr.rel (%p195) target = $region28
    $region27: #{resnext_bottleneck.5} parent=5 // pred_region
      // Predicated region
      $region29: #{resnext_bottleneck.5} parent=27 // pred_check
        %p198 = pneg %p33
      $region30: #{resnext_bottleneck.5} parent=27 // pred_check_branch
        %200 = sbr.rel (%p198) target = $region32
      $region31: #{resnext_bottleneck.5} parent=27 // pred_region
        %s201 = smul.u32 32, %s13
        %p202 = scmp.lt.s32.totalorder %s201, 63
        %s203 = scalar_select %p202, %s201, 63
        %s204 = smul.addr %s203, 8
        %s205 = scalar_lea.vmem %s0, %s204
        %s206 = smul.u32 32, %s13
      $region32: #{resnext_bottleneck.5} parent=27 // pred_fallthru
        _
    $region28: #{resnext_bottleneck.5} parent=5 // pred_fallthru
      _
    %p207 = scmp.le.s32.totalorder 1, %s13
    %p208 = scmp.lt.s32.totalorder %s13, 3
    %p209 = pnand %p207, %p208
    %p210 = pneg %p209
    // Predicated region
    $region33: #{resnext_bottleneck.5} parent=5 // pred_check
      _
    $region34: #{resnext_bottleneck.5} parent=5 // pred_check_branch
      %212 = sbr.rel (%p209) target = $region36
    $region35: #{resnext_bottleneck.5} parent=5 // pred_region
      %s213 = ssub.s32 %s13, 1
      %s214 = smul.u32 32, %s18
      %p215 = scmp.lt.s32.totalorder %s214, 63
      %s216 = scalar_select %p215, %s214, 63
      %s217 = smul.addr %s216, 8
      %s218 = scalar_lea.vmem %s0, %s217
      %p219 = pneg %p39
      %p220 = pneg %p36
      %p221 = pneg %p60
      %p222 = pneg %p57
      %p223 = pneg %p81
      %p224 = pneg %p78
      %p225 = pneg %p102
      %p226 = pneg %p99
      %p227 = pneg %p128
      %p228 = pneg %p125
      %s229 = smul.u32 32, %s18
      %p230 = scmp.lt.s32.totalorder %s229, 63
      %s231 = scalar_select %p230, %s229, 63
      %s232 = smul.addr %s231, 8
      %s233 = scalar_lea.vmem %s4, %s232
      %p234 = pneg %p149
      %p235 = pneg %p146
      %p236 = pneg %p170
      %p237 = pneg %p167
      %s238 = smul.u32 32, %s18
      %p239 = scmp.lt.s32.totalorder %s238, 63
      %s240 = scalar_select %p239, %s238, 63
      %s241 = smul.addr %s240, 8
      %s242 = scalar_lea.vmem %s0, %s241
      %s243 = smul.u32 32, %s18
      %s244 = smul.u32 32, %s18
      %p245 = scmp.lt.s32.totalorder %s244, 63
      %s246 = scalar_select %p245, %s244, 63
      %s247 = smul.addr %s246, 8
      %s248 = scalar_lea.vmem %s4, %s247
      %s249 = smul.u32 32, %s18
      %p251 = scmp.eq.s32.totalorder %s18, 0
      // Predicated region
      $region37: #{resnext_bottleneck.5} parent=35 // pred_check
        %p252 = pneg %p251
      $region38: #{resnext_bottleneck.5} parent=35 // pred_check_branch
        %254 = sbr.rel (%p252) target = $region40
      $region39: #{resnext_bottleneck.5} parent=35 // pred_region
        %255 = vst [vmem:[#allocation2] sm:$0xff] 0.0
        %256 = vst [vmem:[#allocation2 + $0x8] sm:$0xff] 0.0
        %257 = vst [vmem:[#allocation2 + $0x10] sm:$0x3] 0.0
        %258 = vst [vmem:[#allocation2 + $0x18] sm:$0xff] 0.0
        %259 = vst [vmem:[#allocation2 + $0x20] sm:$0xff] 0.0
        %260 = vst [vmem:[#allocation2 + $0x28] sm:$0x3] 0.0
        %261 = vst [vmem:[#allocation2 + $0x30] sm:$0xff] 0.0
        %262 = vst [vmem:[#allocation2 + $0x38] sm:$0xff] 0.0
        %263 = vst [vmem:[#allocation2 + $0x40] sm:$0x3] 0.0
        %264 = vst [vmem:[#allocation2 + $0x48] sm:$0xff] 0.0
        %265 = vst [vmem:[#allocation2 + $0x50] sm:$0xff] 0.0
        %266 = vst [vmem:[#allocation2 + $0x58] sm:$0x3] 0.0
        %267 = vst [vmem:[#allocation2 + $0x60] sm:$0xff] 0.0
        %268 = vst [vmem:[#allocation2 + $0x68] sm:$0xff] 0.0
        %269 = vst [vmem:[#allocation2 + $0x70] sm:$0x3] 0.0
        %270 = vst [vmem:[#allocation2 + $0x78] sm:$0xff] 0.0
        %271 = vst [vmem:[#allocation2 + $0x80] sm:$0xff] 0.0
        %272 = vst [vmem:[#allocation2 + $0x88] sm:$0x3] 0.0
        %273 = vst [vmem:[#allocation2 + $0x90] sm:$0xff] 0.0
        %274 = vst [vmem:[#allocation2 + $0x98] sm:$0xff] 0.0
        %275 = vst [vmem:[#allocation2 + $0xa0] sm:$0x3] 0.0
        %276 = vst [vmem:[#allocation2 + $0xa8] sm:$0xff] 0.0
        %277 = vst [vmem:[#allocation2 + $0xb0] sm:$0xff] 0.0
        %278 = vst [vmem:[#allocation2 + $0xb8] sm:$0x3] 0.0
        %279 = vst [vmem:[#allocation2 + $0xc0] sm:$0xff] 0.0
        %280 = vst [vmem:[#allocation2 + $0xc8] sm:$0xff] 0.0
        %281 = vst [vmem:[#allocation2 + $0xd0] sm:$0x3] 0.0
        %282 = vst [vmem:[#allocation2 + $0xd8] sm:$0xff] 0.0
        %283 = vst [vmem:[#allocation2 + $0xe0] sm:$0xff] 0.0
        %284 = vst [vmem:[#allocation2 + $0xe8] sm:$0x3] 0.0
        %285 = vst [vmem:[#allocation2 + $0xf0] sm:$0xff] 0.0
        %286 = vst [vmem:[#allocation2 + $0xf8] sm:$0xff] 0.0
        %287 = vst [vmem:[#allocation2 + $0x100] sm:$0x3] 0.0
        %288 = vst [vmem:[#allocation2 + $0x108] sm:$0xff] 0.0
        %289 = vst [vmem:[#allocation2 + $0x110] sm:$0xff] 0.0
        %290 = vst [vmem:[#allocation2 + $0x118] sm:$0x3] 0.0
        %291 = vst [vmem:[#allocation2 + $0x120] sm:$0xff] 0.0
        %292 = vst [vmem:[#allocation2 + $0x128] sm:$0xff] 0.0
        %293 = vst [vmem:[#allocation2 + $0x130] sm:$0x3] 0.0
        %294 = vst [vmem:[#allocation2 + $0x138] sm:$0xff] 0.0
        %295 = vst [vmem:[#allocation2 + $0x140] sm:$0xff] 0.0
        %296 = vst [vmem:[#allocation2 + $0x148] sm:$0x3] 0.0
        %297 = vst [vmem:[#allocation2 + $0x150] sm:$0xff] 0.0
        %298 = vst [vmem:[#allocation2 + $0x158] sm:$0xff] 0.0
        %299 = vst [vmem:[#allocation2 + $0x160] sm:$0x3] 0.0
        %300 = vst [vmem:[#allocation2 + $0x168] sm:$0xff] 0.0
        %301 = vst [vmem:[#allocation2 + $0x170] sm:$0xff] 0.0
        %302 = vst [vmem:[#allocation2 + $0x178] sm:$0x3] 0.0
        %303 = vst [vmem:[#allocation2 + $0x180] sm:$0xff] 0.0
        %304 = vst [vmem:[#allocation2 + $0x188] sm:$0xff] 0.0
        %305 = vst [vmem:[#allocation2 + $0x190] sm:$0x3] 0.0
        %306 = vst [vmem:[#allocation2 + $0x198] sm:$0xff] 0.0
        %307 = vst [vmem:[#allocation2 + $0x1a0] sm:$0xff] 0.0
        %308 = vst [vmem:[#allocation2 + $0x1a8] sm:$0x3] 0.0
        %309 = vst [vmem:[%s5] sm:$0x1] 0.0
        %310 = vst [vmem:[%s6] sm:$0x1] 0.0
      $region40: #{resnext_bottleneck.5} parent=35 // pred_fallthru
        _
      %v311 = vld [vmem:[%s242] sm:$0xff]
      %v312 = vld [vmem:[%s242 + $0x8] sm:$0xff]
      %v313 = vld [vmem:[%s242 + $0x10] sm:$0xff]
      %v314 = vld [vmem:[%s242 + $0x18] sm:$0xff]
      %v315 = vld [vmem:[%s242 + $0x20] sm:$0xff]
      %v316 = vld [vmem:[%s242 + $0x28] sm:$0xff]
      %v317 = vld [vmem:[%s242 + $0x30] sm:$0xff]
      %v318 = vld [vmem:[%s242 + $0x38] sm:$0xff]
      %v319 = vld [vmem:[%s242 + $0x40] sm:$0xff]
      %v320 = vld [vmem:[%s242 + $0x48] sm:$0xff]
      %v321 = vld [vmem:[%s242 + $0x50] sm:$0xff]
      %v322 = vld [vmem:[%s242 + $0x58] sm:$0xff]
      %v323 = vld [vmem:[%s242 + $0x60] sm:$0xff]
      %v324 = vld [vmem:[%s242 + $0x68] sm:$0xff]
      %v325 = vld [vmem:[%s242 + $0x70] sm:$0xff]
      %v326 = vld [vmem:[%s242 + $0x78] sm:$0xff]
      %v327 = vld [vmem:[%s242 + $0x80] sm:$0xff]
      %v328 = vld [vmem:[%s242 + $0x88] sm:$0xff]
      %v329 = vld [vmem:[%s242 + $0x90] sm:$0xff]
      %v330 = vld [vmem:[%s242 + $0x98] sm:$0xff]
      %v331 = vld [vmem:[%s242 + $0xa0] sm:$0xff]
      %v332 = vld [vmem:[%s242 + $0xa8] sm:$0xff]
      %v333 = vld [vmem:[%s242 + $0xb0] sm:$0xff]
      %v334 = vld [vmem:[%s242 + $0xb8] sm:$0xff]
      %v335 = vld [vmem:[%s242 + $0xc0] sm:$0xff]
      %v336 = vld [vmem:[%s242 + $0xc8] sm:$0xff]
      %v337 = vld [vmem:[%s242 + $0xd0] sm:$0xff]
      %v338 = vld [vmem:[%s242 + $0xd8] sm:$0xff]
      %v339 = vld [vmem:[%s242 + $0xe0] sm:$0xff]
      %v340 = vld [vmem:[%s242 + $0xe8] sm:$0xff]
      %v341 = vld [vmem:[%s242 + $0xf0] sm:$0xff]
      %v342 = vld [vmem:[%s242 + $0xf8] sm:$0xff]
      %v343 = vld [vmem:[%s1] sm:$0x1]
      %v345 = vlaneseq
      %v346 = vshrl.u32 %v345, 7
      %v347 = vsub.s32 0, %v346
      %v348 = vrot.slane %v343, %v347
      %v350 = vmul.f32 %v311, %v348
      %v351 = vmul.f32 %v312, %v348
      %v352 = vmul.f32 %v313, %v348
      %v353 = vmul.f32 %v314, %v348
      %v354 = vmul.f32 %v315, %v348
      %v355 = vmul.f32 %v316, %v348
      %v356 = vmul.f32 %v317, %v348
      %v357 = vmul.f32 %v318, %v348
      %v358 = vmul.f32 %v319, %v348
      %v359 = vmul.f32 %v320, %v348
      %v360 = vmul.f32 %v321, %v348
      %v361 = vmul.f32 %v322, %v348
      %v362 = vmul.f32 %v323, %v348
      %v363 = vmul.f32 %v324, %v348
      %v364 = vmul.f32 %v325, %v348
      %v365 = vmul.f32 %v326, %v348
      %v366 = vmul.f32 %v327, %v348
      %v367 = vmul.f32 %v328, %v348
      %v368 = vmul.f32 %v329, %v348
      %v369 = vmul.f32 %v330, %v348
      %v370 = vmul.f32 %v331, %v348
      %v371 = vmul.f32 %v332, %v348
      %v372 = vmul.f32 %v333, %v348
      %v373 = vmul.f32 %v334, %v348
      %v374 = vmul.f32 %v335, %v348
      %v375 = vmul.f32 %v336, %v348
      %v376 = vmul.f32 %v337, %v348
      %v377 = vmul.f32 %v338, %v348
      %v378 = vmul.f32 %v339, %v348
      %v379 = vmul.f32 %v340, %v348
      %v380 = vmul.f32 %v341, %v348
      %v381 = vmul.f32 %v342, %v348
      %v382 = vld [vmem:[%s2] sm:$0x1]
      %v384 = vlaneseq
      %v385 = vshrl.u32 %v384, 7
      %v386 = vsub.s32 0, %v385
      %v387 = vrot.slane %v382, %v386
      %v389 = vadd.f32 %v350, %v387
      %v390 = vadd.f32 %v351, %v387
      %v391 = vadd.f32 %v352, %v387
      %v392 = vadd.f32 %v353, %v387
      %v393 = vadd.f32 %v354, %v387
      %v394 = vadd.f32 %v355, %v387
      %v395 = vadd.f32 %v356, %v387
      %v396 = vadd.f32 %v357, %v387
      %v397 = vadd.f32 %v358, %v387
      %v398 = vadd.f32 %v359, %v387
      %v399 = vadd.f32 %v360, %v387
      %v400 = vadd.f32 %v361, %v387
      %v401 = vadd.f32 %v362, %v387
      %v402 = vadd.f32 %v363, %v387
      %v403 = vadd.f32 %v364, %v387
      %v404 = vadd.f32 %v365, %v387
      %v405 = vadd.f32 %v366, %v387
      %v406 = vadd.f32 %v367, %v387
      %v407 = vadd.f32 %v368, %v387
      %v408 = vadd.f32 %v369, %v387
      %v409 = vadd.f32 %v370, %v387
      %v410 = vadd.f32 %v371, %v387
      %v411 = vadd.f32 %v372, %v387
      %v412 = vadd.f32 %v373, %v387
      %v413 = vadd.f32 %v374, %v387
      %v414 = vadd.f32 %v375, %v387
      %v415 = vadd.f32 %v376, %v387
      %v416 = vadd.f32 %v377, %v387
      %v417 = vadd.f32 %v378, %v387
      %v418 = vadd.f32 %v379, %v387
      %v419 = vadd.f32 %v380, %v387
      %v420 = vadd.f32 %v381, %v387
      %v421 = vmax.f32 %v389, 0.0
      %v422 = vmax.f32 %v390, 0.0
      %v423 = vmax.f32 %v391, 0.0
      %v424 = vmax.f32 %v392, 0.0
      %v425 = vmax.f32 %v393, 0.0
      %v426 = vmax.f32 %v394, 0.0
      %v427 = vmax.f32 %v395, 0.0
      %v428 = vmax.f32 %v396, 0.0
      %v429 = vmax.f32 %v397, 0.0
      %v430 = vmax.f32 %v398, 0.0
      %v431 = vmax.f32 %v399, 0.0
      %v432 = vmax.f32 %v400, 0.0
      %v433 = vmax.f32 %v401, 0.0
      %v434 = vmax.f32 %v402, 0.0
      %v435 = vmax.f32 %v403, 0.0
      %v436 = vmax.f32 %v404, 0.0
      %v437 = vmax.f32 %v405, 0.0
      %v438 = vmax.f32 %v406, 0.0
      %v439 = vmax.f32 %v407, 0.0
      %v440 = vmax.f32 %v408, 0.0
      %v441 = vmax.f32 %v409, 0.0
      %v442 = vmax.f32 %v410, 0.0
      %v443 = vmax.f32 %v411, 0.0
      %v444 = vmax.f32 %v412, 0.0
      %v445 = vmax.f32 %v413, 0.0
      %v446 = vmax.f32 %v414, 0.0
      %v447 = vmax.f32 %v415, 0.0
      %v448 = vmax.f32 %v416, 0.0
      %v449 = vmax.f32 %v417, 0.0
      %v450 = vmax.f32 %v418, 0.0
      %v451 = vmax.f32 %v419, 0.0
      %v452 = vmax.f32 %v420, 0.0
      %s453 = scalar_lea.vmem [#allocation2], 24
      %454 = vst [vmem:[%s453 + $0x1] sm:$0xff] %v421
      %455 = vst [vmem:[%s453 + $0x9] sm:$0xff] %v422
      %456 = vst [vmem:[%s453 + $0x19] sm:$0xff] %v423
      %457 = vst [vmem:[%s453 + $0x21] sm:$0xff] %v424
      %458 = vst [vmem:[%s453 + $0x31] sm:$0xff] %v425
      %459 = vst [vmem:[%s453 + $0x39] sm:$0xff] %v426
      %460 = vst [vmem:[%s453 + $0x49] sm:$0xff] %v427
      %461 = vst [vmem:[%s453 + $0x51] sm:$0xff] %v428
      %462 = vst [vmem:[%s453 + $0x61] sm:$0xff] %v429
      %463 = vst [vmem:[%s453 + $0x69] sm:$0xff] %v430
      %464 = vst [vmem:[%s453 + $0x79] sm:$0xff] %v431
      %465 = vst [vmem:[%s453 + $0x81] sm:$0xff] %v432
      %466 = vst [vmem:[%s453 + $0x91] sm:$0xff] %v433
      %467 = vst [vmem:[%s453 + $0x99] sm:$0xff] %v434
      %468 = vst [vmem:[%s453 + $0xa9] sm:$0xff] %v435
      %469 = vst [vmem:[%s453 + $0xb1] sm:$0xff] %v436
      %470 = vst [vmem:[%s453 + $0xc1] sm:$0xff] %v437
      %471 = vst [vmem:[%s453 + $0xc9] sm:$0xff] %v438
      %472 = vst [vmem:[%s453 + $0xd9] sm:$0xff] %v439
      %473 = vst [vmem:[%s453 + $0xe1] sm:$0xff] %v440
      %474 = vst [vmem:[%s453 + $0xf1] sm:$0xff] %v441
      %475 = vst [vmem:[%s453 + $0xf9] sm:$0xff] %v442
      %476 = vst [vmem:[%s453 + $0x109] sm:$0xff] %v443
      %477 = vst [vmem:[%s453 + $0x111] sm:$0xff] %v444
      %478 = vst [vmem:[%s453 + $0x121] sm:$0xff] %v445
      %479 = vst [vmem:[%s453 + $0x129] sm:$0xff] %v446
      %480 = vst [vmem:[%s453 + $0x139] sm:$0xff] %v447
      %481 = vst [vmem:[%s453 + $0x141] sm:$0xff] %v448
      %482 = vst [vmem:[%s453 + $0x151] sm:$0xff] %v449
      %483 = vst [vmem:[%s453 + $0x159] sm:$0xff] %v450
      %484 = vst [vmem:[%s453 + $0x169] sm:$0xff] %v451
      %485 = vst [vmem:[%s453 + $0x171] sm:$0xff] %v452
      %v486 = vld [vmem:[#allocation2] sm:$0xff]
      %v487 = vld [vmem:[#allocation2 + $0x8] sm:$0xff]
      %v488 = vld [vmem:[#allocation2 + $0x18] sm:$0xff]
      %v489 = vld [vmem:[#allocation2 + $0x20] sm:$0xff]
      %v490 = vld [vmem:[#allocation2 + $0x30] sm:$0xff]
      %v491 = vld [vmem:[#allocation2 + $0x38] sm:$0xff]
      %v492 = vld [vmem:[#allocation2 + $0x48] sm:$0xff]
      %v493 = vld [vmem:[#allocation2 + $0x50] sm:$0xff]
      %v494 = vld [vmem:[#allocation2 + $0x60] sm:$0xff]
      %v495 = vld [vmem:[#allocation2 + $0x68] sm:$0xff]
      %v496 = vld [vmem:[#allocation2 + $0x78] sm:$0xff]
      %v497 = vld [vmem:[#allocation2 + $0x80] sm:$0xff]
      %v498 = vld [vmem:[#allocation2 + $0x90] sm:$0xff]
      %v499 = vld [vmem:[#allocation2 + $0x98] sm:$0xff]
      %v500 = vld [vmem:[#allocation2 + $0xa8] sm:$0xff]
      %v501 = vld [vmem:[#allocation2 + $0xb0] sm:$0xff]
      %v502 = vld [vmem:[#allocation2 + $0xc0] sm:$0xff]
      %v503 = vld [vmem:[#allocation2 + $0xc8] sm:$0xff]
      %v504 = vld [vmem:[#allocation2 + $0xd8] sm:$0xff]
      %v505 = vld [vmem:[#allocation2 + $0xe0] sm:$0xff]
      %v506 = vld [vmem:[#allocation2 + $0xf0] sm:$0xff]
      %v507 = vld [vmem:[#allocation2 + $0xf8] sm:$0xff]
      %v508 = vld [vmem:[#allocation2 + $0x108] sm:$0xff]
      %v509 = vld [vmem:[#allocation2 + $0x110] sm:$0xff]
      %v510 = vld [vmem:[#allocation2 + $0x120] sm:$0xff]
      %v511 = vld [vmem:[#allocation2 + $0x128] sm:$0xff]
      %v512 = vld [vmem:[#allocation2 + $0x138] sm:$0xff]
      %v513 = vld [vmem:[#allocation2 + $0x140] sm:$0xff]
      %v514 = vld [vmem:[#allocation2 + $0x150] sm:$0xff]
      %v515 = vld [vmem:[#allocation2 + $0x158] sm:$0xff]
      %v516 = vld [vmem:[#allocation2 + $0x168] sm:$0xff]
      %v517 = vld [vmem:[#allocation2 + $0x170] sm:$0xff]
      %v518 = vpack.c.bf16 %v487, %v486
      %v519 = vpack.c.bf16 %v489, %v488
      %v520 = vpack.c.bf16 %v491, %v490
      %v521 = vpack.c.bf16 %v493, %v492
      %v522 = vpack.c.bf16 %v495, %v494
      %v523 = vpack.c.bf16 %v497, %v496
      %v524 = vpack.c.bf16 %v499, %v498
      %v525 = vpack.c.bf16 %v501, %v500
      %v526 = vpack.c.bf16 %v503, %v502
      %v527 = vpack.c.bf16 %v505, %v504
      %v528 = vpack.c.bf16 %v507, %v506
      %v529 = vpack.c.bf16 %v509, %v508
      %v530 = vpack.c.bf16 %v511, %v510
      %v531 = vpack.c.bf16 %v513, %v512
      %v532 = vpack.c.bf16 %v515, %v514
      %v533 = vpack.c.bf16 %v517, %v516
      %v550 = vunpack.c.l.b16 %v518
      %v551 = vunpack.c.h.b16 %v518
      %v552 = vunpack.c.l.b16 %v519
      %v553 = vunpack.c.h.b16 %v519
      %v554 = vunpack.c.l.b16 %v520
      %v555 = vunpack.c.h.b16 %v520
      %v556 = vunpack.c.l.b16 %v521
      %v557 = vunpack.c.h.b16 %v521
      %v558 = vunpack.c.l.b16 %v522
      %v559 = vunpack.c.h.b16 %v522
      %v560 = vunpack.c.l.b16 %v523
      %v561 = vunpack.c.h.b16 %v523
      %v562 = vunpack.c.l.b16 %v524
      %v563 = vunpack.c.h.b16 %v524
      %v564 = vunpack.c.l.b16 %v525
      %v565 = vunpack.c.h.b16 %v525
      %v566 = vunpack.c.l.b16 %v526
      %v567 = vunpack.c.h.b16 %v526
      %v568 = vunpack.c.l.b16 %v527
      %v569 = vunpack.c.h.b16 %v527
      %v570 = vunpack.c.l.b16 %v528
      %v571 = vunpack.c.h.b16 %v528
      %v572 = vunpack.c.l.b16 %v529
      %v573 = vunpack.c.h.b16 %v529
      %v574 = vunpack.c.l.b16 %v530
      %v575 = vunpack.c.h.b16 %v530
      %v576 = vunpack.c.l.b16 %v531
      %v577 = vunpack.c.h.b16 %v531
      %v578 = vunpack.c.l.b16 %v532
      %v579 = vunpack.c.h.b16 %v532
      %v580 = vunpack.c.l.b16 %v533
      %v581 = vunpack.c.h.b16 %v533
      %v582 = vpack.c.b16 %v550, %v550
      %v583 = vpack.c.b16 %v551, %v551
      %v584 = vpack.c.b16 %v552, %v552
      %v585 = vpack.c.b16 %v553, %v553
      %v586 = vpack.c.b16 %v554, %v554
      %v587 = vpack.c.b16 %v555, %v555
      %v588 = vpack.c.b16 %v556, %v556
      %v589 = vpack.c.b16 %v557, %v557
      %v590 = vpack.c.b16 %v558, %v558
      %v591 = vpack.c.b16 %v559, %v559
      %v592 = vpack.c.b16 %v560, %v560
      %v593 = vpack.c.b16 %v561, %v561
      %v594 = vpack.c.b16 %v562, %v562
      %v595 = vpack.c.b16 %v563, %v563
      %v596 = vpack.c.b16 %v564, %v564
      %v597 = vpack.c.b16 %v565, %v565
      %v598 = vpack.c.b16 %v566, %v566
      %v599 = vpack.c.b16 %v567, %v567
      %v600 = vpack.c.b16 %v568, %v568
      %v601 = vpack.c.b16 %v569, %v569
      %v602 = vpack.c.b16 %v570, %v570
      %v603 = vpack.c.b16 %v571, %v571
      %v604 = vpack.c.b16 %v572, %v572
      %v605 = vpack.c.b16 %v573, %v573
      %v606 = vpack.c.b16 %v574, %v574
      %v607 = vpack.c.b16 %v575, %v575
      %v608 = vpack.c.b16 %v576, %v576
      %v609 = vpack.c.b16 %v577, %v577
      %v610 = vpack.c.b16 %v578, %v578
      %v611 = vpack.c.b16 %v579, %v579
      %v612 = vpack.c.b16 %v580, %v580
      %v613 = vpack.c.b16 %v581, %v581
      %646 = vst [vmem:[#allocation3] sm:$0xf] %v582
      %647 = vst [vmem:[#allocation3 + $0x24] sm:$0xf] %v583
      %648 = vst [vmem:[#allocation3 + $0x48] sm:$0xf] %v584
      %649 = vst [vmem:[#allocation3 + $0x6c] sm:$0xf] %v585
      %650 = vst [vmem:[#allocation3 + $0x90] sm:$0xf] %v586
      %651 = vst [vmem:[#allocation3 + $0xb4] sm:$0xf] %v587
      %652 = vst [vmem:[#allocation3 + $0xd8] sm:$0xf] %v588
      %653 = vst [vmem:[#allocation3 + $0xfc] sm:$0xf] %v589
      %654 = vst [vmem:[#allocation3 + $0x120] sm:$0xf] %v590
      %655 = vst [vmem:[#allocation3 + $0x144] sm:$0xf] %v591
      %656 = vst [vmem:[#allocation3 + $0x168] sm:$0xf] %v592
      %657 = vst [vmem:[#allocation3 + $0x18c] sm:$0xf] %v593
      %658 = vst [vmem:[#allocation3 + $0x1b0] sm:$0xf] %v594
      %659 = vst [vmem:[#allocation3 + $0x1d4] sm:$0xf] %v595
      %660 = vst [vmem:[#allocation3 + $0x1f8] sm:$0xf] %v596
      %661 = vst [vmem:[#allocation3 + $0x21c] sm:$0xf] %v597
      %662 = vst [vmem:[#allocation3 + $0x240] sm:$0xf] %v598
      %663 = vst [vmem:[#allocation3 + $0x264] sm:$0xf] %v599
      %664 = vst [vmem:[#allocation3 + $0x288] sm:$0xf] %v600
      %665 = vst [vmem:[#allocation3 + $0x2ac] sm:$0xf] %v601
      %666 = vst [vmem:[#allocation3 + $0x2d0] sm:$0xf] %v602
      %667 = vst [vmem:[#allocation3 + $0x2f4] sm:$0xf] %v603
      %668 = vst [vmem:[#allocation3 + $0x318] sm:$0xf] %v604
      %669 = vst [vmem:[#allocation3 + $0x33c] sm:$0xf] %v605
      %670 = vst [vmem:[#allocation3 + $0x360] sm:$0xf] %v606
      %671 = vst [vmem:[#allocation3 + $0x384] sm:$0xf] %v607
      %672 = vst [vmem:[#allocation3 + $0x3a8] sm:$0xf] %v608
      %673 = vst [vmem:[#allocation3 + $0x3cc] sm:$0xf] %v609
      %674 = vst [vmem:[#allocation3 + $0x3f0] sm:$0xf] %v610
      %675 = vst [vmem:[#allocation3 + $0x414] sm:$0xf] %v611
      %676 = vst [vmem:[#allocation3 + $0x438] sm:$0xf] %v612
      %677 = vst [vmem:[#allocation3 + $0x45c] sm:$0xf] %v613
      %v678 = vld [vmem:[#allocation2 + $0x1] sm:$0xff]
      %v679 = vld [vmem:[#allocation2 + $0x9] sm:$0xff]
      %v680 = vld [vmem:[#allocation2 + $0x19] sm:$0xff]
      %v681 = vld [vmem:[#allocation2 + $0x21] sm:$0xff]
      %v682 = vld [vmem:[#allocation2 + $0x31] sm:$0xff]
      %v683 = vld [vmem:[#allocation2 + $0x39] sm:$0xff]
      %v684 = vld [vmem:[#allocation2 + $0x49] sm:$0xff]
      %v685 = vld [vmem:[#allocation2 + $0x51] sm:$0xff]
      %v686 = vld [vmem:[#allocation2 + $0x61] sm:$0xff]
      %v687 = vld [vmem:[#allocation2 + $0x69] sm:$0xff]
      %v688 = vld [vmem:[#allocation2 + $0x79] sm:$0xff]
      %v689 = vld [vmem:[#allocation2 + $0x81] sm:$0xff]
      %v690 = vld [vmem:[#allocation2 + $0x91] sm:$0xff]
      %v691 = vld [vmem:[#allocation2 + $0x99] sm:$0xff]
      %v692 = vld [vmem:[#allocation2 + $0xa9] sm:$0xff]
      %v693 = vld [vmem:[#allocation2 + $0xb1] sm:$0xff]
      %v694 = vld [vmem:[#allocation2 + $0xc1] sm:$0xff]
      %v695 = vld [vmem:[#allocation2 + $0xc9] sm:$0xff]
      %v696 = vld [vmem:[#allocation2 + $0xd9] sm:$0xff]
      %v697 = vld [vmem:[#allocation2 + $0xe1] sm:$0xff]
      %v698 = vld [vmem:[#allocation2 + $0xf1] sm:$0xff]
      %v699 = vld [vmem:[#allocation2 + $0xf9] sm:$0xff]
      %v700 = vld [vmem:[#allocation2 + $0x109] sm:$0xff]
      %v701 = vld [vmem:[#allocation2 + $0x111] sm:$0xff]
      %v702 = vld [vmem:[#allocation2 + $0x121] sm:$0xff]
      %v703 = vld [vmem:[#allocation2 + $0x129] sm:$0xff]
      %v704 = vld [vmem:[#allocation2 + $0x139] sm:$0xff]
      %v705 = vld [vmem:[#allocation2 + $0x141] sm:$0xff]
      %v706 = vld [vmem:[#allocation2 + $0x151] sm:$0xff]
      %v707 = vld [vmem:[#allocation2 + $0x159] sm:$0xff]
      %v708 = vld [vmem:[#allocation2 + $0x169] sm:$0xff]
      %v709 = vld [vmem:[#allocation2 + $0x171] sm:$0xff]
      %v710 = vpack.c.bf16 %v679, %v678
      %v711 = vpack.c.bf16 %v681, %v680
      %v712 = vpack.c.bf16 %v683, %v682
      %v713 = vpack.c.bf16 %v685, %v684
      %v714 = vpack.c.bf16 %v687, %v686
      %v715 = vpack.c.bf16 %v689, %v688
      %v716 = vpack.c.bf16 %v691, %v690
      %v717 = vpack.c.bf16 %v693, %v692
      %v718 = vpack.c.bf16 %v695, %v694
      %v719 = vpack.c.bf16 %v697, %v696
      %v720 = vpack.c.bf16 %v699, %v698
      %v721 = vpack.c.bf16 %v701, %v700
      %v722 = vpack.c.bf16 %v703, %v702
      %v723 = vpack.c.bf16 %v705, %v704
      %v724 = vpack.c.bf16 %v707, %v706
      %v725 = vpack.c.bf16 %v709, %v708
      %v742 = vunpack.c.l.b16 %v710
      %v743 = vunpack.c.h.b16 %v710
      %v744 = vunpack.c.l.b16 %v711
      %v745 = vunpack.c.h.b16 %v711
      %v746 = vunpack.c.l.b16 %v712
      %v747 = vunpack.c.h.b16 %v712
      %v748 = vunpack.c.l.b16 %v713
      %v749 = vunpack.c.h.b16 %v713
      %v750 = vunpack.c.l.b16 %v714
      %v751 = vunpack.c.h.b16 %v714
      %v752 = vunpack.c.l.b16 %v715
      %v753 = vunpack.c.h.b16 %v715
      %v754 = vunpack.c.l.b16 %v716
      %v755 = vunpack.c.h.b16 %v716
      %v756 = vunpack.c.l.b16 %v717
      %v757 = vunpack.c.h.b16 %v717
      %v758 = vunpack.c.l.b16 %v718
      %v759 = vunpack.c.h.b16 %v718
      %v760 = vunpack.c.l.b16 %v719
      %v761 = vunpack.c.h.b16 %v719
      %v762 = vunpack.c.l.b16 %v720
      %v763 = vunpack.c.h.b16 %v720
      %v764 = vunpack.c.l.b16 %v721
      %v765 = vunpack.c.h.b16 %v721
      %v766 = vunpack.c.l.b16 %v722
      %v767 = vunpack.c.h.b16 %v722
      %v768 = vunpack.c.l.b16 %v723
      %v769 = vunpack.c.h.b16 %v723
      %v770 = vunpack.c.l.b16 %v724
      %v771 = vunpack.c.h.b16 %v724
      %v772 = vunpack.c.l.b16 %v725
      %v773 = vunpack.c.h.b16 %v725
      %v774 = vpack.c.b16 %v742, %v742
      %v775 = vpack.c.b16 %v743, %v743
      %v776 = vpack.c.b16 %v744, %v744
      %v777 = vpack.c.b16 %v745, %v745
      %v778 = vpack.c.b16 %v746, %v746
      %v779 = vpack.c.b16 %v747, %v747
      %v780 = vpack.c.b16 %v748, %v748
      %v781 = vpack.c.b16 %v749, %v749
      %v782 = vpack.c.b16 %v750, %v750
      %v783 = vpack.c.b16 %v751, %v751
      %v784 = vpack.c.b16 %v752, %v752
      %v785 = vpack.c.b16 %v753, %v753
      %v786 = vpack.c.b16 %v754, %v754
      %v787 = vpack.c.b16 %v755, %v755
      %v788 = vpack.c.b16 %v756, %v756
      %v789 = vpack.c.b16 %v757, %v757
      %v790 = vpack.c.b16 %v758, %v758
      %v791 = vpack.c.b16 %v759, %v759
      %v792 = vpack.c.b16 %v760, %v760
      %v793 = vpack.c.b16 %v761, %v761
      %v794 = vpack.c.b16 %v762, %v762
      %v795 = vpack.c.b16 %v763, %v763
      %v796 = vpack.c.b16 %v764, %v764
      %v797 = vpack.c.b16 %v765, %v765
      %v798 = vpack.c.b16 %v766, %v766
      %v799 = vpack.c.b16 %v767, %v767
      %v800 = vpack.c.b16 %v768, %v768
      %v801 = vpack.c.b16 %v769, %v769
      %v802 = vpack.c.b16 %v770, %v770
      %v803 = vpack.c.b16 %v771, %v771
      %v804 = vpack.c.b16 %v772, %v772
      %v805 = vpack.c.b16 %v773, %v773
      %838 = vst [vmem:[#allocation3 + $0x4] sm:$0xf] %v774
      %839 = vst [vmem:[#allocation3 + $0x28] sm:$0xf] %v775
      %840 = vst [vmem:[#allocation3 + $0x4c] sm:$0xf] %v776
      %841 = vst [vmem:[#allocation3 + $0x70] sm:$0xf] %v777
      %842 = vst [vmem:[#allocation3 + $0x94] sm:$0xf] %v778
      %843 = vst [vmem:[#allocation3 + $0xb8] sm:$0xf] %v779
      %844 = vst [vmem:[#allocation3 + $0xdc] sm:$0xf] %v780
      %845 = vst [vmem:[#allocation3 + $0x100] sm:$0xf] %v781
      %846 = vst [vmem:[#allocation3 + $0x124] sm:$0xf] %v782
      %847 = vst [vmem:[#allocation3 + $0x148] sm:$0xf] %v783
      %848 = vst [vmem:[#allocation3 + $0x16c] sm:$0xf] %v784
      %849 = vst [vmem:[#allocation3 + $0x190] sm:$0xf] %v785
      %850 = vst [vmem:[#allocation3 + $0x1b4] sm:$0xf] %v786
      %851 = vst [vmem:[#allocation3 + $0x1d8] sm:$0xf] %v787
      %852 = vst [vmem:[#allocation3 + $0x1fc] sm:$0xf] %v788
      %853 = vst [vmem:[#allocation3 + $0x220] sm:$0xf] %v789
      %854 = vst [vmem:[#allocation3 + $0x244] sm:$0xf] %v790
      %855 = vst [vmem:[#allocation3 + $0x268] sm:$0xf] %v791
      %856 = vst [vmem:[#allocation3 + $0x28c] sm:$0xf] %v792
      %857 = vst [vmem:[#allocation3 + $0x2b0] sm:$0xf] %v793
      %858 = vst [vmem:[#allocation3 + $0x2d4] sm:$0xf] %v794
      %859 = vst [vmem:[#allocation3 + $0x2f8] sm:$0xf] %v795
      %860 = vst [vmem:[#allocation3 + $0x31c] sm:$0xf] %v796
      %861 = vst [vmem:[#allocation3 + $0x340] sm:$0xf] %v797
      %862 = vst [vmem:[#allocation3 + $0x364] sm:$0xf] %v798
      %863 = vst [vmem:[#allocation3 + $0x388] sm:$0xf] %v799
      %864 = vst [vmem:[#allocation3 + $0x3ac] sm:$0xf] %v800
      %865 = vst [vmem:[#allocation3 + $0x3d0] sm:$0xf] %v801
      %866 = vst [vmem:[#allocation3 + $0x3f4] sm:$0xf] %v802
      %867 = vst [vmem:[#allocation3 + $0x418] sm:$0xf] %v803
      %868 = vst [vmem:[#allocation3 + $0x43c] sm:$0xf] %v804
      %869 = vst [vmem:[#allocation3 + $0x460] sm:$0xf] %v805
      %v870 = vld [vmem:[#allocation2 + $0x2] sm:$0xff]
      %v871 = vld [vmem:[#allocation2 + $0xa] sm:$0xff]
      %v872 = vld [vmem:[#allocation2 + $0x1a] sm:$0xff]
      %v873 = vld [vmem:[#allocation2 + $0x22] sm:$0xff]
      %v874 = vld [vmem:[#allocation2 + $0x32] sm:$0xff]
      %v875 = vld [vmem:[#allocation2 + $0x3a] sm:$0xff]
      %v876 = vld [vmem:[#allocation2 + $0x4a] sm:$0xff]
      %v877 = vld [vmem:[#allocation2 + $0x52] sm:$0xff]
      %v878 = vld [vmem:[#allocation2 + $0x62] sm:$0xff]
      %v879 = vld [vmem:[#allocation2 + $0x6a] sm:$0xff]
      %v880 = vld [vmem:[#allocation2 + $0x7a] sm:$0xff]
      %v881 = vld [vmem:[#allocation2 + $0x82] sm:$0xff]
      %v882 = vld [vmem:[#allocation2 + $0x92] sm:$0xff]
      %v883 = vld [vmem:[#allocation2 + $0x9a] sm:$0xff]
      %v884 = vld [vmem:[#allocation2 + $0xaa] sm:$0xff]
      %v885 = vld [vmem:[#allocation2 + $0xb2] sm:$0xff]
      %v886 = vld [vmem:[#allocation2 + $0xc2] sm:$0xff]
      %v887 = vld [vmem:[#allocation2 + $0xca] sm:$0xff]
      %v888 = vld [vmem:[#allocation2 + $0xda] sm:$0xff]
      %v889 = vld [vmem:[#allocation2 + $0xe2] sm:$0xff]
      %v890 = vld [vmem:[#allocation2 + $0xf2] sm:$0xff]
      %v891 = vld [vmem:[#allocation2 + $0xfa] sm:$0xff]
      %v892 = vld [vmem:[#allocation2 + $0x10a] sm:$0xff]
      %v893 = vld [vmem:[#allocation2 + $0x112] sm:$0xff]
      %v894 = vld [vmem:[#allocation2 + $0x122] sm:$0xff]
      %v895 = vld [vmem:[#allocation2 + $0x12a] sm:$0xff]
      %v896 = vld [vmem:[#allocation2 + $0x13a] sm:$0xff]
      %v897 = vld [vmem:[#allocation2 + $0x142] sm:$0xff]
      %v898 = vld [vmem:[#allocation2 + $0x152] sm:$0xff]
      %v899 = vld [vmem:[#allocation2 + $0x15a] sm:$0xff]
      %v900 = vld [vmem:[#allocation2 + $0x16a] sm:$0xff]
      %v901 = vld [vmem:[#allocation2 + $0x172] sm:$0xff]
      %v902 = vpack.c.bf16 %v871, %v870
      %v903 = vpack.c.bf16 %v873, %v872
      %v904 = vpack.c.bf16 %v875, %v874
      %v905 = vpack.c.bf16 %v877, %v876
      %v906 = vpack.c.bf16 %v879, %v878
      %v907 = vpack.c.bf16 %v881, %v880
      %v908 = vpack.c.bf16 %v883, %v882
      %v909 = vpack.c.bf16 %v885, %v884
      %v910 = vpack.c.bf16 %v887, %v886
      %v911 = vpack.c.bf16 %v889, %v888
      %v912 = vpack.c.bf16 %v891, %v890
      %v913 = vpack.c.bf16 %v893, %v892
      %v914 = vpack.c.bf16 %v895, %v894
      %v915 = vpack.c.bf16 %v897, %v896
      %v916 = vpack.c.bf16 %v899, %v898
      %v917 = vpack.c.bf16 %v901, %v900
      %v934 = vunpack.c.l.b16 %v902
      %v935 = vunpack.c.h.b16 %v902
      %v936 = vunpack.c.l.b16 %v903
      %v937 = vunpack.c.h.b16 %v903
      %v938 = vunpack.c.l.b16 %v904
      %v939 = vunpack.c.h.b16 %v904
      %v940 = vunpack.c.l.b16 %v905
      %v941 = vunpack.c.h.b16 %v905
      %v942 = vunpack.c.l.b16 %v906
      %v943 = vunpack.c.h.b16 %v906
      %v944 = vunpack.c.l.b16 %v907
      %v945 = vunpack.c.h.b16 %v907
      %v946 = vunpack.c.l.b16 %v908
      %v947 = vunpack.c.h.b16 %v908
      %v948 = vunpack.c.l.b16 %v909
      %v949 = vunpack.c.h.b16 %v909
      %v950 = vunpack.c.l.b16 %v910
      %v951 = vunpack.c.h.b16 %v910
      %v952 = vunpack.c.l.b16 %v911
      %v953 = vunpack.c.h.b16 %v911
      %v954 = vunpack.c.l.b16 %v912
      %v955 = vunpack.c.h.b16 %v912
      %v956 = vunpack.c.l.b16 %v913
      %v957 = vunpack.c.h.b16 %v913
      %v958 = vunpack.c.l.b16 %v914
      %v959 = vunpack.c.h.b16 %v914
      %v960 = vunpack.c.l.b16 %v915
      %v961 = vunpack.c.h.b16 %v915
      %v962 = vunpack.c.l.b16 %v916
      %v963 = vunpack.c.h.b16 %v916
      %v964 = vunpack.c.l.b16 %v917
      %v965 = vunpack.c.h.b16 %v917
      %v966 = vpack.c.b16 %v934, %v934
      %v967 = vpack.c.b16 %v935, %v935
      %v968 = vpack.c.b16 %v936, %v936
      %v969 = vpack.c.b16 %v937, %v937
      %v970 = vpack.c.b16 %v938, %v938
      %v971 = vpack.c.b16 %v939, %v939
      %v972 = vpack.c.b16 %v940, %v940
      %v973 = vpack.c.b16 %v941, %v941
      %v974 = vpack.c.b16 %v942, %v942
      %v975 = vpack.c.b16 %v943, %v943
      %v976 = vpack.c.b16 %v944, %v944
      %v977 = vpack.c.b16 %v945, %v945
      %v978 = vpack.c.b16 %v946, %v946
      %v979 = vpack.c.b16 %v947, %v947
      %v980 = vpack.c.b16 %v948, %v948
      %v981 = vpack.c.b16 %v949, %v949
      %v982 = vpack.c.b16 %v950, %v950
      %v983 = vpack.c.b16 %v951, %v951
      %v984 = vpack.c.b16 %v952, %v952
      %v985 = vpack.c.b16 %v953, %v953
      %v986 = vpack.c.b16 %v954, %v954
      %v987 = vpack.c.b16 %v955, %v955
      %v988 = vpack.c.b16 %v956, %v956
      %v989 = vpack.c.b16 %v957, %v957
      %v990 = vpack.c.b16 %v958, %v958
      %v991 = vpack.c.b16 %v959, %v959
      %v992 = vpack.c.b16 %v960, %v960
      %v993 = vpack.c.b16 %v961, %v961
      %v994 = vpack.c.b16 %v962, %v962
      %v995 = vpack.c.b16 %v963, %v963
      %v996 = vpack.c.b16 %v964, %v964
      %v997 = vpack.c.b16 %v965, %v965
      %1030 = vst [vmem:[#allocation3 + $0x8] sm:$0xf] %v966
      %1031 = vst [vmem:[#allocation3 + $0x2c] sm:$0xf] %v967
      %1032 = vst [vmem:[#allocation3 + $0x50] sm:$0xf] %v968
      %1033 = vst [vmem:[#allocation3 + $0x74] sm:$0xf] %v969
      %1034 = vst [vmem:[#allocation3 + $0x98] sm:$0xf] %v970
      %1035 = vst [vmem:[#allocation3 + $0xbc] sm:$0xf] %v971
      %1036 = vst [vmem:[#allocation3 + $0xe0] sm:$0xf] %v972
      %1037 = vst [vmem:[#allocation3 + $0x104] sm:$0xf] %v973
      %1038 = vst [vmem:[#allocation3 + $0x128] sm:$0xf] %v974
      %1039 = vst [vmem:[#allocation3 + $0x14c] sm:$0xf] %v975
      %1040 = vst [vmem:[#allocation3 + $0x170] sm:$0xf] %v976
      %1041 = vst [vmem:[#allocation3 + $0x194] sm:$0xf] %v977
      %1042 = vst [vmem:[#allocation3 + $0x1b8] sm:$0xf] %v978
      %1043 = vst [vmem:[#allocation3 + $0x1dc] sm:$0xf] %v979
      %1044 = vst [vmem:[#allocation3 + $0x200] sm:$0xf] %v980
      %1045 = vst [vmem:[#allocation3 + $0x224] sm:$0xf] %v981
      %1046 = vst [vmem:[#allocation3 + $0x248] sm:$0xf] %v982
      %1047 = vst [vmem:[#allocation3 + $0x26c] sm:$0xf] %v983
      %1048 = vst [vmem:[#allocation3 + $0x290] sm:$0xf] %v984
      %1049 = vst [vmem:[#allocation3 + $0x2b4] sm:$0xf] %v985
      %1050 = vst [vmem:[#allocation3 + $0x2d8] sm:$0xf] %v986
      %1051 = vst [vmem:[#allocation3 + $0x2fc] sm:$0xf] %v987
      %1052 = vst [vmem:[#allocation3 + $0x320] sm:$0xf] %v988
      %1053 = vst [vmem:[#allocation3 + $0x344] sm:$0xf] %v989
      %1054 = vst [vmem:[#allocation3 + $0x368] sm:$0xf] %v990
      %1055 = vst [vmem:[#allocation3 + $0x38c] sm:$0xf] %v991
      %1056 = vst [vmem:[#allocation3 + $0x3b0] sm:$0xf] %v992
      %1057 = vst [vmem:[#allocation3 + $0x3d4] sm:$0xf] %v993
      %1058 = vst [vmem:[#allocation3 + $0x3f8] sm:$0xf] %v994
      %1059 = vst [vmem:[#allocation3 + $0x41c] sm:$0xf] %v995
      %1060 = vst [vmem:[#allocation3 + $0x440] sm:$0xf] %v996
      %1061 = vst [vmem:[#allocation3 + $0x464] sm:$0xf] %v997
      %v1062 = vld [vmem:[%s453] sm:$0xff]
      %v1063 = vld [vmem:[%s453 + $0x8] sm:$0xff]
      %v1064 = vld [vmem:[%s453 + $0x18] sm:$0xff]
      %v1065 = vld [vmem:[%s453 + $0x20] sm:$0xff]
      %v1066 = vld [vmem:[%s453 + $0x30] sm:$0xff]
      %v1067 = vld [vmem:[%s453 + $0x38] sm:$0xff]
      %v1068 = vld [vmem:[%s453 + $0x48] sm:$0xff]
      %v1069 = vld [vmem:[%s453 + $0x50] sm:$0xff]
      %v1070 = vld [vmem:[%s453 + $0x60] sm:$0xff]
      %v1071 = vld [vmem:[%s453 + $0x68] sm:$0xff]
      %v1072 = vld [vmem:[%s453 + $0x78] sm:$0xff]
      %v1073 = vld [vmem:[%s453 + $0x80] sm:$0xff]
      %v1074 = vld [vmem:[%s453 + $0x90] sm:$0xff]
      %v1075 = vld [vmem:[%s453 + $0x98] sm:$0xff]
      %v1076 = vld [vmem:[%s453 + $0xa8] sm:$0xff]
      %v1077 = vld [vmem:[%s453 + $0xb0] sm:$0xff]
      %v1078 = vld [vmem:[%s453 + $0xc0] sm:$0xff]
      %v1079 = vld [vmem:[%s453 + $0xc8] sm:$0xff]
      %v1080 = vld [vmem:[%s453 + $0xd8] sm:$0xff]
      %v1081 = vld [vmem:[%s453 + $0xe0] sm:$0xff]
      %v1082 = vld [vmem:[%s453 + $0xf0] sm:$0xff]
      %v1083 = vld [vmem:[%s453 + $0xf8] sm:$0xff]
      %v1084 = vld [vmem:[%s453 + $0x108] sm:$0xff]
      %v1085 = vld [vmem:[%s453 + $0x110] sm:$0xff]
      %v1086 = vld [vmem:[%s453 + $0x120] sm:$0xff]
      %v1087 = vld [vmem:[%s453 + $0x128] sm:$0xff]
      %v1088 = vld [vmem:[%s453 + $0x138] sm:$0xff]
      %v1089 = vld [vmem:[%s453 + $0x140] sm:$0xff]
      %v1090 = vld [vmem:[%s453 + $0x150] sm:$0xff]
      %v1091 = vld [vmem:[%s453 + $0x158] sm:$0xff]
      %v1092 = vld [vmem:[%s453 + $0x168] sm:$0xff]
      %v1093 = vld [vmem:[%s453 + $0x170] sm:$0xff]
      %v1094 = vpack.c.bf16 %v1063, %v1062
      %v1095 = vpack.c.bf16 %v1065, %v1064
      %v1096 = vpack.c.bf16 %v1067, %v1066
      %v1097 = vpack.c.bf16 %v1069, %v1068
      %v1098 = vpack.c.bf16 %v1071, %v1070
      %v1099 = vpack.c.bf16 %v1073, %v1072
      %v1100 = vpack.c.bf16 %v1075, %v1074
      %v1101 = vpack.c.bf16 %v1077, %v1076
      %v1102 = vpack.c.bf16 %v1079, %v1078
      %v1103 = vpack.c.bf16 %v1081, %v1080
      %v1104 = vpack.c.bf16 %v1083, %v1082
      %v1105 = vpack.c.bf16 %v1085, %v1084
      %v1106 = vpack.c.bf16 %v1087, %v1086
      %v1107 = vpack.c.bf16 %v1089, %v1088
      %v1108 = vpack.c.bf16 %v1091, %v1090
      %v1109 = vpack.c.bf16 %v1093, %v1092
      %v1126 = vunpack.c.l.b16 %v1094
      %v1127 = vunpack.c.h.b16 %v1094
      %v1128 = vunpack.c.l.b16 %v1095
      %v1129 = vunpack.c.h.b16 %v1095
      %v1130 = vunpack.c.l.b16 %v1096
      %v1131 = vunpack.c.h.b16 %v1096
      %v1132 = vunpack.c.l.b16 %v1097
      %v1133 = vunpack.c.h.b16 %v1097
      %v1134 = vunpack.c.l.b16 %v1098
      %v1135 = vunpack.c.h.b16 %v1098
      %v1136 = vunpack.c.l.b16 %v1099
      %v1137 = vunpack.c.h.b16 %v1099
      %v1138 = vunpack.c.l.b16 %v1100
      %v1139 = vunpack.c.h.b16 %v1100
      %v1140 = vunpack.c.l.b16 %v1101
      %v1141 = vunpack.c.h.b16 %v1101
      %v1142 = vunpack.c.l.b16 %v1102
      %v1143 = vunpack.c.h.b16 %v1102
      %v1144 = vunpack.c.l.b16 %v1103
      %v1145 = vunpack.c.h.b16 %v1103
      %v1146 = vunpack.c.l.b16 %v1104
      %v1147 = vunpack.c.h.b16 %v1104
      %v1148 = vunpack.c.l.b16 %v1105
      %v1149 = vunpack.c.h.b16 %v1105
      %v1150 = vunpack.c.l.b16 %v1106
      %v1151 = vunpack.c.h.b16 %v1106
      %v1152 = vunpack.c.l.b16 %v1107
      %v1153 = vunpack.c.h.b16 %v1107
      %v1154 = vunpack.c.l.b16 %v1108
      %v1155 = vunpack.c.h.b16 %v1108
      %v1156 = vunpack.c.l.b16 %v1109
      %v1157 = vunpack.c.h.b16 %v1109
      %v1158 = vpack.c.b16 %v1126, %v1126
      %v1159 = vpack.c.b16 %v1127, %v1127
      %v1160 = vpack.c.b16 %v1128, %v1128
      %v1161 = vpack.c.b16 %v1129, %v1129
      %v1162 = vpack.c.b16 %v1130, %v1130
      %v1163 = vpack.c.b16 %v1131, %v1131
      %v1164 = vpack.c.b16 %v1132, %v1132
      %v1165 = vpack.c.b16 %v1133, %v1133
      %v1166 = vpack.c.b16 %v1134, %v1134
      %v1167 = vpack.c.b16 %v1135, %v1135
      %v1168 = vpack.c.b16 %v1136, %v1136
      %v1169 = vpack.c.b16 %v1137, %v1137
      %v1170 = vpack.c.b16 %v1138, %v1138
      %v1171 = vpack.c.b16 %v1139, %v1139
      %v1172 = vpack.c.b16 %v1140, %v1140
      %v1173 = vpack.c.b16 %v1141, %v1141
      %v1174 = vpack.c.b16 %v1142, %v1142
      %v1175 = vpack.c.b16 %v1143, %v1143
      %v1176 = vpack.c.b16 %v1144, %v1144
      %v1177 = vpack.c.b16 %v1145, %v1145
      %v1178 = vpack.c.b16 %v1146, %v1146
      %v1179 = vpack.c.b16 %v1147, %v1147
      %v1180 = vpack.c.b16 %v1148, %v1148
      %v1181 = vpack.c.b16 %v1149, %v1149
      %v1182 = vpack.c.b16 %v1150, %v1150
      %v1183 = vpack.c.b16 %v1151, %v1151
      %v1184 = vpack.c.b16 %v1152, %v1152
      %v1185 = vpack.c.b16 %v1153, %v1153
      %v1186 = vpack.c.b16 %v1154, %v1154
      %v1187 = vpack.c.b16 %v1155, %v1155
      %v1188 = vpack.c.b16 %v1156, %v1156
      %v1189 = vpack.c.b16 %v1157, %v1157
      %1222 = vst [vmem:[#allocation3 + $0xc] sm:$0xf] %v1158
      %1223 = vst [vmem:[#allocation3 + $0x30] sm:$0xf] %v1159
      %1224 = vst [vmem:[#allocation3 + $0x54] sm:$0xf] %v1160
      %1225 = vst [vmem:[#allocation3 + $0x78] sm:$0xf] %v1161
      %1226 = vst [vmem:[#allocation3 + $0x9c] sm:$0xf] %v1162
      %1227 = vst [vmem:[#allocation3 + $0xc0] sm:$0xf] %v1163
      %1228 = vst [vmem:[#allocation3 + $0xe4] sm:$0xf] %v1164
      %1229 = vst [vmem:[#allocation3 + $0x108] sm:$0xf] %v1165
      %1230 = vst [vmem:[#allocation3 + $0x12c] sm:$0xf] %v1166
      %1231 = vst [vmem:[#allocation3 + $0x150] sm:$0xf] %v1167
      %1232 = vst [vmem:[#allocation3 + $0x174] sm:$0xf] %v1168
      %1233 = vst [vmem:[#allocation3 + $0x198] sm:$0xf] %v1169
      %1234 = vst [vmem:[#allocation3 + $0x1bc] sm:$0xf] %v1170
      %1235 = vst [vmem:[#allocation3 + $0x1e0] sm:$0xf] %v1171
      %1236 = vst [vmem:[#allocation3 + $0x204] sm:$0xf] %v1172
      %1237 = vst [vmem:[#allocation3 + $0x228] sm:$0xf] %v1173
      %1238 = vst [vmem:[#allocation3 + $0x24c] sm:$0xf] %v1174
      %1239 = vst [vmem:[#allocation3 + $0x270] sm:$0xf] %v1175
      %1240 = vst [vmem:[#allocation3 + $0x294] sm:$0xf] %v1176
      %1241 = vst [vmem:[#allocation3 + $0x2b8] sm:$0xf] %v1177
      %1242 = vst [vmem:[#allocation3 + $0x2dc] sm:$0xf] %v1178
      %1243 = vst [vmem:[#allocation3 + $0x300] sm:$0xf] %v1179
      %1244 = vst [vmem:[#allocation3 + $0x324] sm:$0xf] %v1180
      %1245 = vst [vmem:[#allocation3 + $0x348] sm:$0xf] %v1181
      %1246 = vst [vmem:[#allocation3 + $0x36c] sm:$0xf] %v1182
      %1247 = vst [vmem:[#allocation3 + $0x390] sm:$0xf] %v1183
      %1248 = vst [vmem:[#allocation3 + $0x3b4] sm:$0xf] %v1184
      %1249 = vst [vmem:[#allocation3 + $0x3d8] sm:$0xf] %v1185
      %1250 = vst [vmem:[#allocation3 + $0x3fc] sm:$0xf] %v1186
      %1251 = vst [vmem:[#allocation3 + $0x420] sm:$0xf] %v1187
      %1252 = vst [vmem:[#allocation3 + $0x444] sm:$0xf] %v1188
      %1253 = vst [vmem:[#allocation3 + $0x468] sm:$0xf] %v1189
      %v1254 = vld [vmem:[%s453 + $0x1] sm:$0xff]
      %v1255 = vld [vmem:[%s453 + $0x9] sm:$0xff]
      %v1256 = vld [vmem:[%s453 + $0x19] sm:$0xff]
      %v1257 = vld [vmem:[%s453 + $0x21] sm:$0xff]
      %v1258 = vld [vmem:[%s453 + $0x31] sm:$0xff]
      %v1259 = vld [vmem:[%s453 + $0x39] sm:$0xff]
      %v1260 = vld [vmem:[%s453 + $0x49] sm:$0xff]
      %v1261 = vld [vmem:[%s453 + $0x51] sm:$0xff]
      %v1262 = vld [vmem:[%s453 + $0x61] sm:$0xff]
      %v1263 = vld [vmem:[%s453 + $0x69] sm:$0xff]
      %v1264 = vld [vmem:[%s453 + $0x79] sm:$0xff]
      %v1265 = vld [vmem:[%s453 + $0x81] sm:$0xff]
      %v1266 = vld [vmem:[%s453 + $0x91] sm:$0xff]
      %v1267 = vld [vmem:[%s453 + $0x99] sm:$0xff]
      %v1268 = vld [vmem:[%s453 + $0xa9] sm:$0xff]
      %v1269 = vld [vmem:[%s453 + $0xb1] sm:$0xff]
      %v1270 = vld [vmem:[%s453 + $0xc1] sm:$0xff]
      %v1271 = vld [vmem:[%s453 + $0xc9] sm:$0xff]
      %v1272 = vld [vmem:[%s453 + $0xd9] sm:$0xff]
      %v1273 = vld [vmem:[%s453 + $0xe1] sm:$0xff]
      %v1274 = vld [vmem:[%s453 + $0xf1] sm:$0xff]
      %v1275 = vld [vmem:[%s453 + $0xf9] sm:$0xff]
      %v1276 = vld [vmem:[%s453 + $0x109] sm:$0xff]
      %v1277 = vld [vmem:[%s453 + $0x111] sm:$0xff]
      %v1278 = vld [vmem:[%s453 + $0x121] sm:$0xff]
      %v1279 = vld [vmem:[%s453 + $0x129] sm:$0xff]
      %v1280 = vld [vmem:[%s453 + $0x139] sm:$0xff]
      %v1281 = vld [vmem:[%s453 + $0x141] sm:$0xff]
      %v1282 = vld [vmem:[%s453 + $0x151] sm:$0xff]
      %v1283 = vld [vmem:[%s453 + $0x159] sm:$0xff]
      %v1284 = vld [vmem:[%s453 + $0x169] sm:$0xff]
      %v1285 = vld [vmem:[%s453 + $0x171] sm:$0xff]
      %v1286 = vpack.c.bf16 %v1255, %v1254
      %v1287 = vpack.c.bf16 %v1257, %v1256
      %v1288 = vpack.c.bf16 %v1259, %v1258
      %v1289 = vpack.c.bf16 %v1261, %v1260
      %v1290 = vpack.c.bf16 %v1263, %v1262
      %v1291 = vpack.c.bf16 %v1265, %v1264
      %v1292 = vpack.c.bf16 %v1267, %v1266
      %v1293 = vpack.c.bf16 %v1269, %v1268
      %v1294 = vpack.c.bf16 %v1271, %v1270
      %v1295 = vpack.c.bf16 %v1273, %v1272
      %v1296 = vpack.c.bf16 %v1275, %v1274
      %v1297 = vpack.c.bf16 %v1277, %v1276
      %v1298 = vpack.c.bf16 %v1279, %v1278
      %v1299 = vpack.c.bf16 %v1281, %v1280
      %v1300 = vpack.c.bf16 %v1283, %v1282
      %v1301 = vpack.c.bf16 %v1285, %v1284
      %v1318 = vunpack.c.l.b16 %v1286
      %v1319 = vunpack.c.h.b16 %v1286
      %v1320 = vunpack.c.l.b16 %v1287
      %v1321 = vunpack.c.h.b16 %v1287
      %v1322 = vunpack.c.l.b16 %v1288
      %v1323 = vunpack.c.h.b16 %v1288
      %v1324 = vunpack.c.l.b16 %v1289
      %v1325 = vunpack.c.h.b16 %v1289
      %v1326 = vunpack.c.l.b16 %v1290
      %v1327 = vunpack.c.h.b16 %v1290
      %v1328 = vunpack.c.l.b16 %v1291
      %v1329 = vunpack.c.h.b16 %v1291
      %v1330 = vunpack.c.l.b16 %v1292
      %v1331 = vunpack.c.h.b16 %v1292
      %v1332 = vunpack.c.l.b16 %v1293
      %v1333 = vunpack.c.h.b16 %v1293
      %v1334 = vunpack.c.l.b16 %v1294
      %v1335 = vunpack.c.h.b16 %v1294
      %v1336 = vunpack.c.l.b16 %v1295
      %v1337 = vunpack.c.h.b16 %v1295
      %v1338 = vunpack.c.l.b16 %v1296
      %v1339 = vunpack.c.h.b16 %v1296
      %v1340 = vunpack.c.l.b16 %v1297
      %v1341 = vunpack.c.h.b16 %v1297
      %v1342 = vunpack.c.l.b16 %v1298
      %v1343 = vunpack.c.h.b16 %v1298
      %v1344 = vunpack.c.l.b16 %v1299
      %v1345 = vunpack.c.h.b16 %v1299
      %v1346 = vunpack.c.l.b16 %v1300
      %v1347 = vunpack.c.h.b16 %v1300
      %v1348 = vunpack.c.l.b16 %v1301
      %v1349 = vunpack.c.h.b16 %v1301
      %v1350 = vpack.c.b16 %v1318, %v1318
      %v1351 = vpack.c.b16 %v1319, %v1319
      %v1352 = vpack.c.b16 %v1320, %v1320
      %v1353 = vpack.c.b16 %v1321, %v1321
      %v1354 = vpack.c.b16 %v1322, %v1322
      %v1355 = vpack.c.b16 %v1323, %v1323
      %v1356 = vpack.c.b16 %v1324, %v1324
      %v1357 = vpack.c.b16 %v1325, %v1325
      %v1358 = vpack.c.b16 %v1326, %v1326
      %v1359 = vpack.c.b16 %v1327, %v1327
      %v1360 = vpack.c.b16 %v1328, %v1328
      %v1361 = vpack.c.b16 %v1329, %v1329
      %v1362 = vpack.c.b16 %v1330, %v1330
      %v1363 = vpack.c.b16 %v1331, %v1331
      %v1364 = vpack.c.b16 %v1332, %v1332
      %v1365 = vpack.c.b16 %v1333, %v1333
      %v1366 = vpack.c.b16 %v1334, %v1334
      %v1367 = vpack.c.b16 %v1335, %v1335
      %v1368 = vpack.c.b16 %v1336, %v1336
      %v1369 = vpack.c.b16 %v1337, %v1337
      %v1370 = vpack.c.b16 %v1338, %v1338
      %v1371 = vpack.c.b16 %v1339, %v1339
      %v1372 = vpack.c.b16 %v1340, %v1340
      %v1373 = vpack.c.b16 %v1341, %v1341
      %v1374 = vpack.c.b16 %v1342, %v1342
      %v1375 = vpack.c.b16 %v1343, %v1343
      %v1376 = vpack.c.b16 %v1344, %v1344
      %v1377 = vpack.c.b16 %v1345, %v1345
      %v1378 = vpack.c.b16 %v1346, %v1346
      %v1379 = vpack.c.b16 %v1347, %v1347
      %v1380 = vpack.c.b16 %v1348, %v1348
      %v1381 = vpack.c.b16 %v1349, %v1349
      %1414 = vst [vmem:[#allocation3 + $0x10] sm:$0xf] %v1350
      %1415 = vst [vmem:[#allocation3 + $0x34] sm:$0xf] %v1351
      %1416 = vst [vmem:[#allocation3 + $0x58] sm:$0xf] %v1352
      %1417 = vst [vmem:[#allocation3 + $0x7c] sm:$0xf] %v1353
      %1418 = vst [vmem:[#allocation3 + $0xa0] sm:$0xf] %v1354
      %1419 = vst [vmem:[#allocation3 + $0xc4] sm:$0xf] %v1355
      %1420 = vst [vmem:[#allocation3 + $0xe8] sm:$0xf] %v1356
      %1421 = vst [vmem:[#allocation3 + $0x10c] sm:$0xf] %v1357
      %1422 = vst [vmem:[#allocation3 + $0x130] sm:$0xf] %v1358
      %1423 = vst [vmem:[#allocation3 + $0x154] sm:$0xf] %v1359
      %1424 = vst [vmem:[#allocation3 + $0x178] sm:$0xf] %v1360
      %1425 = vst [vmem:[#allocation3 + $0x19c] sm:$0xf] %v1361
      %1426 = vst [vmem:[#allocation3 + $0x1c0] sm:$0xf] %v1362
      %1427 = vst [vmem:[#allocation3 + $0x1e4] sm:$0xf] %v1363
      %1428 = vst [vmem:[#allocation3 + $0x208] sm:$0xf] %v1364
      %1429 = vst [vmem:[#allocation3 + $0x22c] sm:$0xf] %v1365
      %1430 = vst [vmem:[#allocation3 + $0x250] sm:$0xf] %v1366
      %1431 = vst [vmem:[#allocation3 + $0x274] sm:$0xf] %v1367
      %1432 = vst [vmem:[#allocation3 + $0x298] sm:$0xf] %v1368
      %1433 = vst [vmem:[#allocation3 + $0x2bc] sm:$0xf] %v1369
      %1434 = vst [vmem:[#allocation3 + $0x2e0] sm:$0xf] %v1370
      %1435 = vst [vmem:[#allocation3 + $0x304] sm:$0xf] %v1371
      %1436 = vst [vmem:[#allocation3 + $0x328] sm:$0xf] %v1372
      %1437 = vst [vmem:[#allocation3 + $0x34c] sm:$0xf] %v1373
      %1438 = vst [vmem:[#allocation3 + $0x370] sm:$0xf] %v1374
      %1439 = vst [vmem:[#allocation3 + $0x394] sm:$0xf] %v1375
      %1440 = vst [vmem:[#allocation3 + $0x3b8] sm:$0xf] %v1376
      %1441 = vst [vmem:[#allocation3 + $0x3dc] sm:$0xf] %v1377
      %1442 = vst [vmem:[#allocation3 + $0x400] sm:$0xf] %v1378
      %1443 = vst [vmem:[#allocation3 + $0x424] sm:$0xf] %v1379
      %1444 = vst [vmem:[#allocation3 + $0x448] sm:$0xf] %v1380
      %1445 = vst [vmem:[#allocation3 + $0x46c] sm:$0xf] %v1381
      %v1446 = vld [vmem:[%s453 + $0x2] sm:$0xff]
      %v1447 = vld [vmem:[%s453 + $0xa] sm:$0xff]
      %v1448 = vld [vmem:[%s453 + $0x1a] sm:$0xff]
      %v1449 = vld [vmem:[%s453 + $0x22] sm:$0xff]
      %v1450 = vld [vmem:[%s453 + $0x32] sm:$0xff]
      %v1451 = vld [vmem:[%s453 + $0x3a] sm:$0xff]
      %v1452 = vld [vmem:[%s453 + $0x4a] sm:$0xff]
      %v1453 = vld [vmem:[%s453 + $0x52] sm:$0xff]
      %v1454 = vld [vmem:[%s453 + $0x62] sm:$0xff]
      %v1455 = vld [vmem:[%s453 + $0x6a] sm:$0xff]
      %v1456 = vld [vmem:[%s453 + $0x7a] sm:$0xff]
      %v1457 = vld [vmem:[%s453 + $0x82] sm:$0xff]
      %v1458 = vld [vmem:[%s453 + $0x92] sm:$0xff]
      %v1459 = vld [vmem:[%s453 + $0x9a] sm:$0xff]
      %v1460 = vld [vmem:[%s453 + $0xaa] sm:$0xff]
      %v1461 = vld [vmem:[%s453 + $0xb2] sm:$0xff]
      %v1462 = vld [vmem:[%s453 + $0xc2] sm:$0xff]
      %v1463 = vld [vmem:[%s453 + $0xca] sm:$0xff]
      %v1464 = vld [vmem:[%s453 + $0xda] sm:$0xff]
      %v1465 = vld [vmem:[%s453 + $0xe2] sm:$0xff]
      %v1466 = vld [vmem:[%s453 + $0xf2] sm:$0xff]
      %v1467 = vld [vmem:[%s453 + $0xfa] sm:$0xff]
      %v1468 = vld [vmem:[%s453 + $0x10a] sm:$0xff]
      %v1469 = vld [vmem:[%s453 + $0x112] sm:$0xff]
      %v1470 = vld [vmem:[%s453 + $0x122] sm:$0xff]
      %v1471 = vld [vmem:[%s453 + $0x12a] sm:$0xff]
      %v1472 = vld [vmem:[%s453 + $0x13a] sm:$0xff]
      %v1473 = vld [vmem:[%s453 + $0x142] sm:$0xff]
      %v1474 = vld [vmem:[%s453 + $0x152] sm:$0xff]
      %v1475 = vld [vmem:[%s453 + $0x15a] sm:$0xff]
      %v1476 = vld [vmem:[%s453 + $0x16a] sm:$0xff]
      %v1477 = vld [vmem:[%s453 + $0x172] sm:$0xff]
      %v1478 = vpack.c.bf16 %v1447, %v1446
      %v1479 = vpack.c.bf16 %v1449, %v1448
      %v1480 = vpack.c.bf16 %v1451, %v1450
      %v1481 = vpack.c.bf16 %v1453, %v1452
      %v1482 = vpack.c.bf16 %v1455, %v1454
      %v1483 = vpack.c.bf16 %v1457, %v1456
      %v1484 = vpack.c.bf16 %v1459, %v1458
      %v1485 = vpack.c.bf16 %v1461, %v1460
      %v1486 = vpack.c.bf16 %v1463, %v1462
      %v1487 = vpack.c.bf16 %v1465, %v1464
      %v1488 = vpack.c.bf16 %v1467, %v1466
      %v1489 = vpack.c.bf16 %v1469, %v1468
      %v1490 = vpack.c.bf16 %v1471, %v1470
      %v1491 = vpack.c.bf16 %v1473, %v1472
      %v1492 = vpack.c.bf16 %v1475, %v1474
      %v1493 = vpack.c.bf16 %v1477, %v1476
      %v1510 = vunpack.c.l.b16 %v1478
      %v1511 = vunpack.c.h.b16 %v1478
      %v1512 = vunpack.c.l.b16 %v1479
      %v1513 = vunpack.c.h.b16 %v1479
      %v1514 = vunpack.c.l.b16 %v1480
      %v1515 = vunpack.c.h.b16 %v1480
      %v1516 = vunpack.c.l.b16 %v1481
      %v1517 = vunpack.c.h.b16 %v1481
      %v1518 = vunpack.c.l.b16 %v1482
      %v1519 = vunpack.c.h.b16 %v1482
      %v1520 = vunpack.c.l.b16 %v1483
      %v1521 = vunpack.c.h.b16 %v1483
      %v1522 = vunpack.c.l.b16 %v1484
      %v1523 = vunpack.c.h.b16 %v1484
      %v1524 = vunpack.c.l.b16 %v1485
      %v1525 = vunpack.c.h.b16 %v1485
      %v1526 = vunpack.c.l.b16 %v1486
      %v1527 = vunpack.c.h.b16 %v1486
      %v1528 = vunpack.c.l.b16 %v1487
      %v1529 = vunpack.c.h.b16 %v1487
      %v1530 = vunpack.c.l.b16 %v1488
      %v1531 = vunpack.c.h.b16 %v1488
      %v1532 = vunpack.c.l.b16 %v1489
      %v1533 = vunpack.c.h.b16 %v1489
      %v1534 = vunpack.c.l.b16 %v1490
      %v1535 = vunpack.c.h.b16 %v1490
      %v1536 = vunpack.c.l.b16 %v1491
      %v1537 = vunpack.c.h.b16 %v1491
      %v1538 = vunpack.c.l.b16 %v1492
      %v1539 = vunpack.c.h.b16 %v1492
      %v1540 = vunpack.c.l.b16 %v1493
      %v1541 = vunpack.c.h.b16 %v1493
      %v1542 = vpack.c.b16 %v1510, %v1510
      %v1543 = vpack.c.b16 %v1511, %v1511
      %v1544 = vpack.c.b16 %v1512, %v1512
      %v1545 = vpack.c.b16 %v1513, %v1513
      %v1546 = vpack.c.b16 %v1514, %v1514
      %v1547 = vpack.c.b16 %v1515, %v1515
      %v1548 = vpack.c.b16 %v1516, %v1516
      %v1549 = vpack.c.b16 %v1517, %v1517
      %v1550 = vpack.c.b16 %v1518, %v1518
      %v1551 = vpack.c.b16 %v1519, %v1519
      %v1552 = vpack.c.b16 %v1520, %v1520
      %v1553 = vpack.c.b16 %v1521, %v1521
      %v1554 = vpack.c.b16 %v1522, %v1522
      %v1555 = vpack.c.b16 %v1523, %v1523
      %v1556 = vpack.c.b16 %v1524, %v1524
      %v1557 = vpack.c.b16 %v1525, %v1525
      %v1558 = vpack.c.b16 %v1526, %v1526
      %v1559 = vpack.c.b16 %v1527, %v1527
      %v1560 = vpack.c.b16 %v1528, %v1528
      %v1561 = vpack.c.b16 %v1529, %v1529
      %v1562 = vpack.c.b16 %v1530, %v1530
      %v1563 = vpack.c.b16 %v1531, %v1531
      %v1564 = vpack.c.b16 %v1532, %v1532
      %v1565 = vpack.c.b16 %v1533, %v1533
      %v1566 = vpack.c.b16 %v1534, %v1534
      %v1567 = vpack.c.b16 %v1535, %v1535
      %v1568 = vpack.c.b16 %v1536, %v1536
      %v1569 = vpack.c.b16 %v1537, %v1537
      %v1570 = vpack.c.b16 %v1538, %v1538
      %v1571 = vpack.c.b16 %v1539, %v1539
      %v1572 = vpack.c.b16 %v1540, %v1540
      %v1573 = vpack.c.b16 %v1541, %v1541
      %1606 = vst [vmem:[#allocation3 + $0x14] sm:$0xf] %v1542
      %1607 = vst [vmem:[#allocation3 + $0x38] sm:$0xf] %v1543
      %1608 = vst [vmem:[#allocation3 + $0x5c] sm:$0xf] %v1544
      %1609 = vst [vmem:[#allocation3 + $0x80] sm:$0xf] %v1545
      %1610 = vst [vmem:[#allocation3 + $0xa4] sm:$0xf] %v1546
      %1611 = vst [vmem:[#allocation3 + $0xc8] sm:$0xf] %v1547
      %1612 = vst [vmem:[#allocation3 + $0xec] sm:$0xf] %v1548
      %1613 = vst [vmem:[#allocation3 + $0x110] sm:$0xf] %v1549
      %1614 = vst [vmem:[#allocation3 + $0x134] sm:$0xf] %v1550
      %1615 = vst [vmem:[#allocation3 + $0x158] sm:$0xf] %v1551
      %1616 = vst [vmem:[#allocation3 + $0x17c] sm:$0xf] %v1552
      %1617 = vst [vmem:[#allocation3 + $0x1a0] sm:$0xf] %v1553
      %1618 = vst [vmem:[#allocation3 + $0x1c4] sm:$0xf] %v1554
      %1619 = vst [vmem:[#allocation3 + $0x1e8] sm:$0xf] %v1555
      %1620 = vst [vmem:[#allocation3 + $0x20c] sm:$0xf] %v1556
      %1621 = vst [vmem:[#allocation3 + $0x230] sm:$0xf] %v1557
      %1622 = vst [vmem:[#allocation3 + $0x254] sm:$0xf] %v1558
      %1623 = vst [vmem:[#allocation3 + $0x278] sm:$0xf] %v1559
      %1624 = vst [vmem:[#allocation3 + $0x29c] sm:$0xf] %v1560
      %1625 = vst [vmem:[#allocation3 + $0x2c0] sm:$0xf] %v1561
      %1626 = vst [vmem:[#allocation3 + $0x2e4] sm:$0xf] %v1562
      %1627 = vst [vmem:[#allocation3 + $0x308] sm:$0xf] %v1563
      %1628 = vst [vmem:[#allocation3 + $0x32c] sm:$0xf] %v1564
      %1629 = vst [vmem:[#allocation3 + $0x350] sm:$0xf] %v1565
      %1630 = vst [vmem:[#allocation3 + $0x374] sm:$0xf] %v1566
      %1631 = vst [vmem:[#allocation3 + $0x398] sm:$0xf] %v1567
      %1632 = vst [vmem:[#allocation3 + $0x3bc] sm:$0xf] %v1568
      %1633 = vst [vmem:[#allocation3 + $0x3e0] sm:$0xf] %v1569
      %1634 = vst [vmem:[#allocation3 + $0x404] sm:$0xf] %v1570
      %1635 = vst [vmem:[#allocation3 + $0x428] sm:$0xf] %v1571
      %1636 = vst [vmem:[#allocation3 + $0x44c] sm:$0xf] %v1572
      %1637 = vst [vmem:[#allocation3 + $0x470] sm:$0xf] %v1573
      %s1638 = scalar_lea.vmem [#allocation2], 48
      %v1639 = vld [vmem:[%s1638] sm:$0xff]
      %v1640 = vld [vmem:[%s1638 + $0x8] sm:$0xff]
      %v1641 = vld [vmem:[%s1638 + $0x18] sm:$0xff]
      %v1642 = vld [vmem:[%s1638 + $0x20] sm:$0xff]
      %v1643 = vld [vmem:[%s1638 + $0x30] sm:$0xff]
      %v1644 = vld [vmem:[%s1638 + $0x38] sm:$0xff]
      %v1645 = vld [vmem:[%s1638 + $0x48] sm:$0xff]
      %v1646 = vld [vmem:[%s1638 + $0x50] sm:$0xff]
      %v1647 = vld [vmem:[%s1638 + $0x60] sm:$0xff]
      %v1648 = vld [vmem:[%s1638 + $0x68] sm:$0xff]
      %v1649 = vld [vmem:[%s1638 + $0x78] sm:$0xff]
      %v1650 = vld [vmem:[%s1638 + $0x80] sm:$0xff]
      %v1651 = vld [vmem:[%s1638 + $0x90] sm:$0xff]
      %v1652 = vld [vmem:[%s1638 + $0x98] sm:$0xff]
      %v1653 = vld [vmem:[%s1638 + $0xa8] sm:$0xff]
      %v1654 = vld [vmem:[%s1638 + $0xb0] sm:$0xff]
      %v1655 = vld [vmem:[%s1638 + $0xc0] sm:$0xff]
      %v1656 = vld [vmem:[%s1638 + $0xc8] sm:$0xff]
      %v1657 = vld [vmem:[%s1638 + $0xd8] sm:$0xff]
      %v1658 = vld [vmem:[%s1638 + $0xe0] sm:$0xff]
      %v1659 = vld [vmem:[%s1638 + $0xf0] sm:$0xff]
      %v1660 = vld [vmem:[%s1638 + $0xf8] sm:$0xff]
      %v1661 = vld [vmem:[%s1638 + $0x108] sm:$0xff]
      %v1662 = vld [vmem:[%s1638 + $0x110] sm:$0xff]
      %v1663 = vld [vmem:[%s1638 + $0x120] sm:$0xff]
      %v1664 = vld [vmem:[%s1638 + $0x128] sm:$0xff]
      %v1665 = vld [vmem:[%s1638 + $0x138] sm:$0xff]
      %v1666 = vld [vmem:[%s1638 + $0x140] sm:$0xff]
      %v1667 = vld [vmem:[%s1638 + $0x150] sm:$0xff]
      %v1668 = vld [vmem:[%s1638 + $0x158] sm:$0xff]
      %v1669 = vld [vmem:[%s1638 + $0x168] sm:$0xff]
      %v1670 = vld [vmem:[%s1638 + $0x170] sm:$0xff]
      %v1671 = vpack.c.bf16 %v1640, %v1639
      %v1672 = vpack.c.bf16 %v1642, %v1641
      %v1673 = vpack.c.bf16 %v1644, %v1643
      %v1674 = vpack.c.bf16 %v1646, %v1645
      %v1675 = vpack.c.bf16 %v1648, %v1647
      %v1676 = vpack.c.bf16 %v1650, %v1649
      %v1677 = vpack.c.bf16 %v1652, %v1651
      %v1678 = vpack.c.bf16 %v1654, %v1653
      %v1679 = vpack.c.bf16 %v1656, %v1655
      %v1680 = vpack.c.bf16 %v1658, %v1657
      %v1681 = vpack.c.bf16 %v1660, %v1659
      %v1682 = vpack.c.bf16 %v1662, %v1661
      %v1683 = vpack.c.bf16 %v1664, %v1663
      %v1684 = vpack.c.bf16 %v1666, %v1665
      %v1685 = vpack.c.bf16 %v1668, %v1667
      %v1686 = vpack.c.bf16 %v1670, %v1669
      %v1703 = vunpack.c.l.b16 %v1671
      %v1704 = vunpack.c.h.b16 %v1671
      %v1705 = vunpack.c.l.b16 %v1672
      %v1706 = vunpack.c.h.b16 %v1672
      %v1707 = vunpack.c.l.b16 %v1673
      %v1708 = vunpack.c.h.b16 %v1673
      %v1709 = vunpack.c.l.b16 %v1674
      %v1710 = vunpack.c.h.b16 %v1674
      %v1711 = vunpack.c.l.b16 %v1675
      %v1712 = vunpack.c.h.b16 %v1675
      %v1713 = vunpack.c.l.b16 %v1676
      %v1714 = vunpack.c.h.b16 %v1676
      %v1715 = vunpack.c.l.b16 %v1677
      %v1716 = vunpack.c.h.b16 %v1677
      %v1717 = vunpack.c.l.b16 %v1678
      %v1718 = vunpack.c.h.b16 %v1678
      %v1719 = vunpack.c.l.b16 %v1679
      %v1720 = vunpack.c.h.b16 %v1679
      %v1721 = vunpack.c.l.b16 %v1680
      %v1722 = vunpack.c.h.b16 %v1680
      %v1723 = vunpack.c.l.b16 %v1681
      %v1724 = vunpack.c.h.b16 %v1681
      %v1725 = vunpack.c.l.b16 %v1682
      %v1726 = vunpack.c.h.b16 %v1682
      %v1727 = vunpack.c.l.b16 %v1683
      %v1728 = vunpack.c.h.b16 %v1683
      %v1729 = vunpack.c.l.b16 %v1684
      %v1730 = vunpack.c.h.b16 %v1684
      %v1731 = vunpack.c.l.b16 %v1685
      %v1732 = vunpack.c.h.b16 %v1685
      %v1733 = vunpack.c.l.b16 %v1686
      %v1734 = vunpack.c.h.b16 %v1686
      %v1735 = vpack.c.b16 %v1703, %v1703
      %v1736 = vpack.c.b16 %v1704, %v1704
      %v1737 = vpack.c.b16 %v1705, %v1705
      %v1738 = vpack.c.b16 %v1706, %v1706
      %v1739 = vpack.c.b16 %v1707, %v1707
      %v1740 = vpack.c.b16 %v1708, %v1708
      %v1741 = vpack.c.b16 %v1709, %v1709
      %v1742 = vpack.c.b16 %v1710, %v1710
      %v1743 = vpack.c.b16 %v1711, %v1711
      %v1744 = vpack.c.b16 %v1712, %v1712
      %v1745 = vpack.c.b16 %v1713, %v1713
      %v1746 = vpack.c.b16 %v1714, %v1714
      %v1747 = vpack.c.b16 %v1715, %v1715
      %v1748 = vpack.c.b16 %v1716, %v1716
      %v1749 = vpack.c.b16 %v1717, %v1717
      %v1750 = vpack.c.b16 %v1718, %v1718
      %v1751 = vpack.c.b16 %v1719, %v1719
      %v1752 = vpack.c.b16 %v1720, %v1720
      %v1753 = vpack.c.b16 %v1721, %v1721
      %v1754 = vpack.c.b16 %v1722, %v1722
      %v1755 = vpack.c.b16 %v1723, %v1723
      %v1756 = vpack.c.b16 %v1724, %v1724
      %v1757 = vpack.c.b16 %v1725, %v1725
      %v1758 = vpack.c.b16 %v1726, %v1726
      %v1759 = vpack.c.b16 %v1727, %v1727
      %v1760 = vpack.c.b16 %v1728, %v1728
      %v1761 = vpack.c.b16 %v1729, %v1729
      %v1762 = vpack.c.b16 %v1730, %v1730
      %v1763 = vpack.c.b16 %v1731, %v1731
      %v1764 = vpack.c.b16 %v1732, %v1732
      %v1765 = vpack.c.b16 %v1733, %v1733
      %v1766 = vpack.c.b16 %v1734, %v1734
      %1799 = vst [vmem:[#allocation3 + $0x18] sm:$0xf] %v1735
      %1800 = vst [vmem:[#allocation3 + $0x3c] sm:$0xf] %v1736
      %1801 = vst [vmem:[#allocation3 + $0x60] sm:$0xf] %v1737
      %1802 = vst [vmem:[#allocation3 + $0x84] sm:$0xf] %v1738
      %1803 = vst [vmem:[#allocation3 + $0xa8] sm:$0xf] %v1739
      %1804 = vst [vmem:[#allocation3 + $0xcc] sm:$0xf] %v1740
      %1805 = vst [vmem:[#allocation3 + $0xf0] sm:$0xf] %v1741
      %1806 = vst [vmem:[#allocation3 + $0x114] sm:$0xf] %v1742
      %1807 = vst [vmem:[#allocation3 + $0x138] sm:$0xf] %v1743
      %1808 = vst [vmem:[#allocation3 + $0x15c] sm:$0xf] %v1744
      %1809 = vst [vmem:[#allocation3 + $0x180] sm:$0xf] %v1745
      %1810 = vst [vmem:[#allocation3 + $0x1a4] sm:$0xf] %v1746
      %1811 = vst [vmem:[#allocation3 + $0x1c8] sm:$0xf] %v1747
      %1812 = vst [vmem:[#allocation3 + $0x1ec] sm:$0xf] %v1748
      %1813 = vst [vmem:[#allocation3 + $0x210] sm:$0xf] %v1749
      %1814 = vst [vmem:[#allocation3 + $0x234] sm:$0xf] %v1750
      %1815 = vst [vmem:[#allocation3 + $0x258] sm:$0xf] %v1751
      %1816 = vst [vmem:[#allocation3 + $0x27c] sm:$0xf] %v1752
      %1817 = vst [vmem:[#allocation3 + $0x2a0] sm:$0xf] %v1753
      %1818 = vst [vmem:[#allocation3 + $0x2c4] sm:$0xf] %v1754
      %1819 = vst [vmem:[#allocation3 + $0x2e8] sm:$0xf] %v1755
      %1820 = vst [vmem:[#allocation3 + $0x30c] sm:$0xf] %v1756
      %1821 = vst [vmem:[#allocation3 + $0x330] sm:$0xf] %v1757
      %1822 = vst [vmem:[#allocation3 + $0x354] sm:$0xf] %v1758
      %1823 = vst [vmem:[#allocation3 + $0x378] sm:$0xf] %v1759
      %1824 = vst [vmem:[#allocation3 + $0x39c] sm:$0xf] %v1760
      %1825 = vst [vmem:[#allocation3 + $0x3c0] sm:$0xf] %v1761
      %1826 = vst [vmem:[#allocation3 + $0x3e4] sm:$0xf] %v1762
      %1827 = vst [vmem:[#allocation3 + $0x408] sm:$0xf] %v1763
      %1828 = vst [vmem:[#allocation3 + $0x42c] sm:$0xf] %v1764
      %1829 = vst [vmem:[#allocation3 + $0x450] sm:$0xf] %v1765
      %1830 = vst [vmem:[#allocation3 + $0x474] sm:$0xf] %v1766
      %v1831 = vld [vmem:[%s1638 + $0x1] sm:$0xff]
      %v1832 = vld [vmem:[%s1638 + $0x9] sm:$0xff]
      %v1833 = vld [vmem:[%s1638 + $0x19] sm:$0xff]
      %v1834 = vld [vmem:[%s1638 + $0x21] sm:$0xff]
      %v1835 = vld [vmem:[%s1638 + $0x31] sm:$0xff]
      %v1836 = vld [vmem:[%s1638 + $0x39] sm:$0xff]
      %v1837 = vld [vmem:[%s1638 + $0x49] sm:$0xff]
      %v1838 = vld [vmem:[%s1638 + $0x51] sm:$0xff]
      %v1839 = vld [vmem:[%s1638 + $0x61] sm:$0xff]
      %v1840 = vld [vmem:[%s1638 + $0x69] sm:$0xff]
      %v1841 = vld [vmem:[%s1638 + $0x79] sm:$0xff]
      %v1842 = vld [vmem:[%s1638 + $0x81] sm:$0xff]
      %v1843 = vld [vmem:[%s1638 + $0x91] sm:$0xff]
      %v1844 = vld [vmem:[%s1638 + $0x99] sm:$0xff]
      %v1845 = vld [vmem:[%s1638 + $0xa9] sm:$0xff]
      %v1846 = vld [vmem:[%s1638 + $0xb1] sm:$0xff]
      %v1847 = vld [vmem:[%s1638 + $0xc1] sm:$0xff]
      %v1848 = vld [vmem:[%s1638 + $0xc9] sm:$0xff]
      %v1849 = vld [vmem:[%s1638 + $0xd9] sm:$0xff]
      %v1850 = vld [vmem:[%s1638 + $0xe1] sm:$0xff]
      %v1851 = vld [vmem:[%s1638 + $0xf1] sm:$0xff]
      %v1852 = vld [vmem:[%s1638 + $0xf9] sm:$0xff]
      %v1853 = vld [vmem:[%s1638 + $0x109] sm:$0xff]
      %v1854 = vld [vmem:[%s1638 + $0x111] sm:$0xff]
      %v1855 = vld [vmem:[%s1638 + $0x121] sm:$0xff]
      %v1856 = vld [vmem:[%s1638 + $0x129] sm:$0xff]
      %v1857 = vld [vmem:[%s1638 + $0x139] sm:$0xff]
      %v1858 = vld [vmem:[%s1638 + $0x141] sm:$0xff]
      %v1859 = vld [vmem:[%s1638 + $0x151] sm:$0xff]
      %v1860 = vld [vmem:[%s1638 + $0x159] sm:$0xff]
      %v1861 = vld [vmem:[%s1638 + $0x169] sm:$0xff]
      %v1862 = vld [vmem:[%s1638 + $0x171] sm:$0xff]
      %v1863 = vpack.c.bf16 %v1832, %v1831
      %v1864 = vpack.c.bf16 %v1834, %v1833
      %v1865 = vpack.c.bf16 %v1836, %v1835
      %v1866 = vpack.c.bf16 %v1838, %v1837
      %v1867 = vpack.c.bf16 %v1840, %v1839
      %v1868 = vpack.c.bf16 %v1842, %v1841
      %v1869 = vpack.c.bf16 %v1844, %v1843
      %v1870 = vpack.c.bf16 %v1846, %v1845
      %v1871 = vpack.c.bf16 %v1848, %v1847
      %v1872 = vpack.c.bf16 %v1850, %v1849
      %v1873 = vpack.c.bf16 %v1852, %v1851
      %v1874 = vpack.c.bf16 %v1854, %v1853
      %v1875 = vpack.c.bf16 %v1856, %v1855
      %v1876 = vpack.c.bf16 %v1858, %v1857
      %v1877 = vpack.c.bf16 %v1860, %v1859
      %v1878 = vpack.c.bf16 %v1862, %v1861
      %v1895 = vunpack.c.l.b16 %v1863
      %v1896 = vunpack.c.h.b16 %v1863
      %v1897 = vunpack.c.l.b16 %v1864
      %v1898 = vunpack.c.h.b16 %v1864
      %v1899 = vunpack.c.l.b16 %v1865
      %v1900 = vunpack.c.h.b16 %v1865
      %v1901 = vunpack.c.l.b16 %v1866
      %v1902 = vunpack.c.h.b16 %v1866
      %v1903 = vunpack.c.l.b16 %v1867
      %v1904 = vunpack.c.h.b16 %v1867
      %v1905 = vunpack.c.l.b16 %v1868
      %v1906 = vunpack.c.h.b16 %v1868
      %v1907 = vunpack.c.l.b16 %v1869
      %v1908 = vunpack.c.h.b16 %v1869
      %v1909 = vunpack.c.l.b16 %v1870
      %v1910 = vunpack.c.h.b16 %v1870
      %v1911 = vunpack.c.l.b16 %v1871
      %v1912 = vunpack.c.h.b16 %v1871
      %v1913 = vunpack.c.l.b16 %v1872
      %v1914 = vunpack.c.h.b16 %v1872
      %v1915 = vunpack.c.l.b16 %v1873
      %v1916 = vunpack.c.h.b16 %v1873
      %v1917 = vunpack.c.l.b16 %v1874
      %v1918 = vunpack.c.h.b16 %v1874
      %v1919 = vunpack.c.l.b16 %v1875
      %v1920 = vunpack.c.h.b16 %v1875
      %v1921 = vunpack.c.l.b16 %v1876
      %v1922 = vunpack.c.h.b16 %v1876
      %v1923 = vunpack.c.l.b16 %v1877
      %v1924 = vunpack.c.h.b16 %v1877
      %v1925 = vunpack.c.l.b16 %v1878
      %v1926 = vunpack.c.h.b16 %v1878
      %v1927 = vpack.c.b16 %v1895, %v1895
      %v1928 = vpack.c.b16 %v1896, %v1896
      %v1929 = vpack.c.b16 %v1897, %v1897
      %v1930 = vpack.c.b16 %v1898, %v1898
      %v1931 = vpack.c.b16 %v1899, %v1899
      %v1932 = vpack.c.b16 %v1900, %v1900
      %v1933 = vpack.c.b16 %v1901, %v1901
      %v1934 = vpack.c.b16 %v1902, %v1902
      %v1935 = vpack.c.b16 %v1903, %v1903
      %v1936 = vpack.c.b16 %v1904, %v1904
      %v1937 = vpack.c.b16 %v1905, %v1905
      %v1938 = vpack.c.b16 %v1906, %v1906
      %v1939 = vpack.c.b16 %v1907, %v1907
      %v1940 = vpack.c.b16 %v1908, %v1908
      %v1941 = vpack.c.b16 %v1909, %v1909
      %v1942 = vpack.c.b16 %v1910, %v1910
      %v1943 = vpack.c.b16 %v1911, %v1911
      %v1944 = vpack.c.b16 %v1912, %v1912
      %v1945 = vpack.c.b16 %v1913, %v1913
      %v1946 = vpack.c.b16 %v1914, %v1914
      %v1947 = vpack.c.b16 %v1915, %v1915
      %v1948 = vpack.c.b16 %v1916, %v1916
      %v1949 = vpack.c.b16 %v1917, %v1917
      %v1950 = vpack.c.b16 %v1918, %v1918
      %v1951 = vpack.c.b16 %v1919, %v1919
      %v1952 = vpack.c.b16 %v1920, %v1920
      %v1953 = vpack.c.b16 %v1921, %v1921
      %v1954 = vpack.c.b16 %v1922, %v1922
      %v1955 = vpack.c.b16 %v1923, %v1923
      %v1956 = vpack.c.b16 %v1924, %v1924
      %v1957 = vpack.c.b16 %v1925, %v1925
      %v1958 = vpack.c.b16 %v1926, %v1926
      %1991 = vst [vmem:[#allocation3 + $0x1c] sm:$0xf] %v1927
      %1992 = vst [vmem:[#allocation3 + $0x40] sm:$0xf] %v1928
      %1993 = vst [vmem:[#allocation3 + $0x64] sm:$0xf] %v1929
      %1994 = vst [vmem:[#allocation3 + $0x88] sm:$0xf] %v1930
      %1995 = vst [vmem:[#allocation3 + $0xac] sm:$0xf] %v1931
      %1996 = vst [vmem:[#allocation3 + $0xd0] sm:$0xf] %v1932
      %1997 = vst [vmem:[#allocation3 + $0xf4] sm:$0xf] %v1933
      %1998 = vst [vmem:[#allocation3 + $0x118] sm:$0xf] %v1934
      %1999 = vst [vmem:[#allocation3 + $0x13c] sm:$0xf] %v1935
      %2000 = vst [vmem:[#allocation3 + $0x160] sm:$0xf] %v1936
      %2001 = vst [vmem:[#allocation3 + $0x184] sm:$0xf] %v1937
      %2002 = vst [vmem:[#allocation3 + $0x1a8] sm:$0xf] %v1938
      %2003 = vst [vmem:[#allocation3 + $0x1cc] sm:$0xf] %v1939
      %2004 = vst [vmem:[#allocation3 + $0x1f0] sm:$0xf] %v1940
      %2005 = vst [vmem:[#allocation3 + $0x214] sm:$0xf] %v1941
      %2006 = vst [vmem:[#allocation3 + $0x238] sm:$0xf] %v1942
      %2007 = vst [vmem:[#allocation3 + $0x25c] sm:$0xf] %v1943
      %2008 = vst [vmem:[#allocation3 + $0x280] sm:$0xf] %v1944
      %2009 = vst [vmem:[#allocation3 + $0x2a4] sm:$0xf] %v1945
      %2010 = vst [vmem:[#allocation3 + $0x2c8] sm:$0xf] %v1946
      %2011 = vst [vmem:[#allocation3 + $0x2ec] sm:$0xf] %v1947
      %2012 = vst [vmem:[#allocation3 + $0x310] sm:$0xf] %v1948
      %2013 = vst [vmem:[#allocation3 + $0x334] sm:$0xf] %v1949
      %2014 = vst [vmem:[#allocation3 + $0x358] sm:$0xf] %v1950
      %2015 = vst [vmem:[#allocation3 + $0x37c] sm:$0xf] %v1951
      %2016 = vst [vmem:[#allocation3 + $0x3a0] sm:$0xf] %v1952
      %2017 = vst [vmem:[#allocation3 + $0x3c4] sm:$0xf] %v1953
      %2018 = vst [vmem:[#allocation3 + $0x3e8] sm:$0xf] %v1954
      %2019 = vst [vmem:[#allocation3 + $0x40c] sm:$0xf] %v1955
      %2020 = vst [vmem:[#allocation3 + $0x430] sm:$0xf] %v1956
      %2021 = vst [vmem:[#allocation3 + $0x454] sm:$0xf] %v1957
      %2022 = vst [vmem:[#allocation3 + $0x478] sm:$0xf] %v1958
      %v2023 = vld [vmem:[%s1638 + $0x2] sm:$0xff]
      %v2024 = vld [vmem:[%s1638 + $0xa] sm:$0xff]
      %v2025 = vld [vmem:[%s1638 + $0x1a] sm:$0xff]
      %v2026 = vld [vmem:[%s1638 + $0x22] sm:$0xff]
      %v2027 = vld [vmem:[%s1638 + $0x32] sm:$0xff]
      %v2028 = vld [vmem:[%s1638 + $0x3a] sm:$0xff]
      %v2029 = vld [vmem:[%s1638 + $0x4a] sm:$0xff]
      %v2030 = vld [vmem:[%s1638 + $0x52] sm:$0xff]
      %v2031 = vld [vmem:[%s1638 + $0x62] sm:$0xff]
      %v2032 = vld [vmem:[%s1638 + $0x6a] sm:$0xff]
      %v2033 = vld [vmem:[%s1638 + $0x7a] sm:$0xff]
      %v2034 = vld [vmem:[%s1638 + $0x82] sm:$0xff]
      %v2035 = vld [vmem:[%s1638 + $0x92] sm:$0xff]
      %v2036 = vld [vmem:[%s1638 + $0x9a] sm:$0xff]
      %v2037 = vld [vmem:[%s1638 + $0xaa] sm:$0xff]
      %v2038 = vld [vmem:[%s1638 + $0xb2] sm:$0xff]
      %v2039 = vld [vmem:[%s1638 + $0xc2] sm:$0xff]
      %v2040 = vld [vmem:[%s1638 + $0xca] sm:$0xff]
      %v2041 = vld [vmem:[%s1638 + $0xda] sm:$0xff]
      %v2042 = vld [vmem:[%s1638 + $0xe2] sm:$0xff]
      %v2043 = vld [vmem:[%s1638 + $0xf2] sm:$0xff]
      %v2044 = vld [vmem:[%s1638 + $0xfa] sm:$0xff]
      %v2045 = vld [vmem:[%s1638 + $0x10a] sm:$0xff]
      %v2046 = vld [vmem:[%s1638 + $0x112] sm:$0xff]
      %v2047 = vld [vmem:[%s1638 + $0x122] sm:$0xff]
      %v2048 = vld [vmem:[%s1638 + $0x12a] sm:$0xff]
      %v2049 = vld [vmem:[%s1638 + $0x13a] sm:$0xff]
      %v2050 = vld [vmem:[%s1638 + $0x142] sm:$0xff]
      %v2051 = vld [vmem:[%s1638 + $0x152] sm:$0xff]
      %v2052 = vld [vmem:[%s1638 + $0x15a] sm:$0xff]
      %v2053 = vld [vmem:[%s1638 + $0x16a] sm:$0xff]
      %v2054 = vld [vmem:[%s1638 + $0x172] sm:$0xff]
      %v2055 = vpack.c.bf16 %v2024, %v2023
      %v2056 = vpack.c.bf16 %v2026, %v2025
      %v2057 = vpack.c.bf16 %v2028, %v2027
      %v2058 = vpack.c.bf16 %v2030, %v2029
      %v2059 = vpack.c.bf16 %v2032, %v2031
      %v2060 = vpack.c.bf16 %v2034, %v2033
      %v2061 = vpack.c.bf16 %v2036, %v2035
      %v2062 = vpack.c.bf16 %v2038, %v2037
      %v2063 = vpack.c.bf16 %v2040, %v2039
      %v2064 = vpack.c.bf16 %v2042, %v2041
      %v2065 = vpack.c.bf16 %v2044, %v2043
      %v2066 = vpack.c.bf16 %v2046, %v2045
      %v2067 = vpack.c.bf16 %v2048, %v2047
      %v2068 = vpack.c.bf16 %v2050, %v2049
      %v2069 = vpack.c.bf16 %v2052, %v2051
      %v2070 = vpack.c.bf16 %v2054, %v2053
      %v2087 = vunpack.c.l.b16 %v2055
      %v2088 = vunpack.c.h.b16 %v2055
      %v2089 = vunpack.c.l.b16 %v2056
      %v2090 = vunpack.c.h.b16 %v2056
      %v2091 = vunpack.c.l.b16 %v2057
      %v2092 = vunpack.c.h.b16 %v2057
      %v2093 = vunpack.c.l.b16 %v2058
      %v2094 = vunpack.c.h.b16 %v2058
      %v2095 = vunpack.c.l.b16 %v2059
      %v2096 = vunpack.c.h.b16 %v2059
      %v2097 = vunpack.c.l.b16 %v2060
      %v2098 = vunpack.c.h.b16 %v2060
      %v2099 = vunpack.c.l.b16 %v2061
      %v2100 = vunpack.c.h.b16 %v2061
      %v2101 = vunpack.c.l.b16 %v2062
      %v2102 = vunpack.c.h.b16 %v2062
      %v2103 = vunpack.c.l.b16 %v2063
      %v2104 = vunpack.c.h.b16 %v2063
      %v2105 = vunpack.c.l.b16 %v2064
      %v2106 = vunpack.c.h.b16 %v2064
      %v2107 = vunpack.c.l.b16 %v2065
      %v2108 = vunpack.c.h.b16 %v2065
      %v2109 = vunpack.c.l.b16 %v2066
      %v2110 = vunpack.c.h.b16 %v2066
      %v2111 = vunpack.c.l.b16 %v2067
      %v2112 = vunpack.c.h.b16 %v2067
      %v2113 = vunpack.c.l.b16 %v2068
      %v2114 = vunpack.c.h.b16 %v2068
      %v2115 = vunpack.c.l.b16 %v2069
      %v2116 = vunpack.c.h.b16 %v2069
      %v2117 = vunpack.c.l.b16 %v2070
      %v2118 = vunpack.c.h.b16 %v2070
      %v2119 = vpack.c.b16 %v2087, %v2087
      %v2120 = vpack.c.b16 %v2088, %v2088
      %v2121 = vpack.c.b16 %v2089, %v2089
      %v2122 = vpack.c.b16 %v2090, %v2090
      %v2123 = vpack.c.b16 %v2091, %v2091
      %v2124 = vpack.c.b16 %v2092, %v2092
      %v2125 = vpack.c.b16 %v2093, %v2093
      %v2126 = vpack.c.b16 %v2094, %v2094
      %v2127 = vpack.c.b16 %v2095, %v2095
      %v2128 = vpack.c.b16 %v2096, %v2096
      %v2129 = vpack.c.b16 %v2097, %v2097
      %v2130 = vpack.c.b16 %v2098, %v2098
      %v2131 = vpack.c.b16 %v2099, %v2099
      %v2132 = vpack.c.b16 %v2100, %v2100
      %v2133 = vpack.c.b16 %v2101, %v2101
      %v2134 = vpack.c.b16 %v2102, %v2102
      %v2135 = vpack.c.b16 %v2103, %v2103
      %v2136 = vpack.c.b16 %v2104, %v2104
      %v2137 = vpack.c.b16 %v2105, %v2105
      %v2138 = vpack.c.b16 %v2106, %v2106
      %v2139 = vpack.c.b16 %v2107, %v2107
      %v2140 = vpack.c.b16 %v2108, %v2108
      %v2141 = vpack.c.b16 %v2109, %v2109
      %v2142 = vpack.c.b16 %v2110, %v2110
      %v2143 = vpack.c.b16 %v2111, %v2111
      %v2144 = vpack.c.b16 %v2112, %v2112
      %v2145 = vpack.c.b16 %v2113, %v2113
      %v2146 = vpack.c.b16 %v2114, %v2114
      %v2147 = vpack.c.b16 %v2115, %v2115
      %v2148 = vpack.c.b16 %v2116, %v2116
      %v2149 = vpack.c.b16 %v2117, %v2117
      %v2150 = vpack.c.b16 %v2118, %v2118
      %2183 = vst [vmem:[#allocation3 + $0x20] sm:$0xf] %v2119
      %2184 = vst [vmem:[#allocation3 + $0x44] sm:$0xf] %v2120
      %2185 = vst [vmem:[#allocation3 + $0x68] sm:$0xf] %v2121
      %2186 = vst [vmem:[#allocation3 + $0x8c] sm:$0xf] %v2122
      %2187 = vst [vmem:[#allocation3 + $0xb0] sm:$0xf] %v2123
      %2188 = vst [vmem:[#allocation3 + $0xd4] sm:$0xf] %v2124
      %2189 = vst [vmem:[#allocation3 + $0xf8] sm:$0xf] %v2125
      %2190 = vst [vmem:[#allocation3 + $0x11c] sm:$0xf] %v2126
      %2191 = vst [vmem:[#allocation3 + $0x140] sm:$0xf] %v2127
      %2192 = vst [vmem:[#allocation3 + $0x164] sm:$0xf] %v2128
      %2193 = vst [vmem:[#allocation3 + $0x188] sm:$0xf] %v2129
      %2194 = vst [vmem:[#allocation3 + $0x1ac] sm:$0xf] %v2130
      %2195 = vst [vmem:[#allocation3 + $0x1d0] sm:$0xf] %v2131
      %2196 = vst [vmem:[#allocation3 + $0x1f4] sm:$0xf] %v2132
      %2197 = vst [vmem:[#allocation3 + $0x218] sm:$0xf] %v2133
      %2198 = vst [vmem:[#allocation3 + $0x23c] sm:$0xf] %v2134
      %2199 = vst [vmem:[#allocation3 + $0x260] sm:$0xf] %v2135
      %2200 = vst [vmem:[#allocation3 + $0x284] sm:$0xf] %v2136
      %2201 = vst [vmem:[#allocation3 + $0x2a8] sm:$0xf] %v2137
      %2202 = vst [vmem:[#allocation3 + $0x2cc] sm:$0xf] %v2138
      %2203 = vst [vmem:[#allocation3 + $0x2f0] sm:$0xf] %v2139
      %2204 = vst [vmem:[#allocation3 + $0x314] sm:$0xf] %v2140
      %2205 = vst [vmem:[#allocation3 + $0x338] sm:$0xf] %v2141
      %2206 = vst [vmem:[#allocation3 + $0x35c] sm:$0xf] %v2142
      %2207 = vst [vmem:[#allocation3 + $0x380] sm:$0xf] %v2143
      %2208 = vst [vmem:[#allocation3 + $0x3a4] sm:$0xf] %v2144
      %2209 = vst [vmem:[#allocation3 + $0x3c8] sm:$0xf] %v2145
      %2210 = vst [vmem:[#allocation3 + $0x3ec] sm:$0xf] %v2146
      %2211 = vst [vmem:[#allocation3 + $0x410] sm:$0xf] %v2147
      %2212 = vst [vmem:[#allocation3 + $0x434] sm:$0xf] %v2148
      %2213 = vst [vmem:[#allocation3 + $0x458] sm:$0xf] %v2149
      %2214 = vst [vmem:[#allocation3 + $0x47c] sm:$0xf] %v2150
      %v2215 = vld [vmem:[#allocation3] sm:$0xff]
      %v2216 = vld [vmem:[#allocation3 + $0x8] sm:$0xff]
      %v2217 = vld [vmem:[#allocation3 + $0x10] sm:$0xff]
      %v2218 = vld [vmem:[#allocation3 + $0x18] sm:$0xff]
      %v2219 = vld [vmem:[#allocation3 + $0x20] sm:$0xf]
      %v2220 = vld [vmem:[#allocation3 + $0x24] sm:$0xff]
      %v2221 = vld [vmem:[#allocation3 + $0x2c] sm:$0xff]
      %v2222 = vld [vmem:[#allocation3 + $0x34] sm:$0xff]
      %v2223 = vld [vmem:[#allocation3 + $0x3c] sm:$0xff]
      %v2224 = vld [vmem:[#allocation3 + $0x44] sm:$0xf]
      %v2225 = vld [vmem:[#allocation3 + $0x48] sm:$0xff]
      %v2226 = vld [vmem:[#allocation3 + $0x50] sm:$0xff]
      %v2227 = vld [vmem:[#allocation3 + $0x58] sm:$0xff]
      %v2228 = vld [vmem:[#allocation3 + $0x60] sm:$0xff]
      %v2229 = vld [vmem:[#allocation3 + $0x68] sm:$0xf]
      %v2230 = vld [vmem:[#allocation3 + $0x6c] sm:$0xff]
      %v2231 = vld [vmem:[#allocation3 + $0x74] sm:$0xff]
      %v2232 = vld [vmem:[#allocation3 + $0x7c] sm:$0xff]
      %v2233 = vld [vmem:[#allocation3 + $0x84] sm:$0xff]
      %v2234 = vld [vmem:[#allocation3 + $0x8c] sm:$0xf]
      %v2235 = vld [vmem:[#allocation3 + $0x90] sm:$0xff]
      %v2236 = vld [vmem:[#allocation3 + $0x98] sm:$0xff]
      %v2237 = vld [vmem:[#allocation3 + $0xa0] sm:$0xff]
      %v2238 = vld [vmem:[#allocation3 + $0xa8] sm:$0xff]
      %v2239 = vld [vmem:[#allocation3 + $0xb0] sm:$0xf]
      %v2240 = vld [vmem:[#allocation3 + $0xb4] sm:$0xff]
      %v2241 = vld [vmem:[#allocation3 + $0xbc] sm:$0xff]
      %v2242 = vld [vmem:[#allocation3 + $0xc4] sm:$0xff]
      %v2243 = vld [vmem:[#allocation3 + $0xcc] sm:$0xff]
      %v2244 = vld [vmem:[#allocation3 + $0xd4] sm:$0xf]
      %v2245 = vld [vmem:[#allocation3 + $0xd8] sm:$0xff]
      %v2246 = vld [vmem:[#allocation3 + $0xe0] sm:$0xff]
      %v2247 = vld [vmem:[#allocation3 + $0xe8] sm:$0xff]
      %v2248 = vld [vmem:[#allocation3 + $0xf0] sm:$0xff]
      %v2249 = vld [vmem:[#allocation3 + $0xf8] sm:$0xf]
      %v2250 = vld [vmem:[#allocation3 + $0xfc] sm:$0xff]
      %v2251 = vld [vmem:[#allocation3 + $0x104] sm:$0xff]
      %v2252 = vld [vmem:[#allocation3 + $0x10c] sm:$0xff]
      %v2253 = vld [vmem:[#allocation3 + $0x114] sm:$0xff]
      %v2254 = vld [vmem:[#allocation3 + $0x11c] sm:$0xf]
      %v2255 = vld [vmem:[#allocation3 + $0x120] sm:$0xff]
      %v2256 = vld [vmem:[#allocation3 + $0x128] sm:$0xff]
      %v2257 = vld [vmem:[#allocation3 + $0x130] sm:$0xff]
      %v2258 = vld [vmem:[#allocation3 + $0x138] sm:$0xff]
      %v2259 = vld [vmem:[#allocation3 + $0x140] sm:$0xf]
      %v2260 = vld [vmem:[#allocation3 + $0x144] sm:$0xff]
      %v2261 = vld [vmem:[#allocation3 + $0x14c] sm:$0xff]
      %v2262 = vld [vmem:[#allocation3 + $0x154] sm:$0xff]
      %v2263 = vld [vmem:[#allocation3 + $0x15c] sm:$0xff]
      %v2264 = vld [vmem:[#allocation3 + $0x164] sm:$0xf]
      %v2265 = vld [vmem:[#allocation3 + $0x168] sm:$0xff]
      %v2266 = vld [vmem:[#allocation3 + $0x170] sm:$0xff]
      %v2267 = vld [vmem:[#allocation3 + $0x178] sm:$0xff]
      %v2268 = vld [vmem:[#allocation3 + $0x180] sm:$0xff]
      %v2269 = vld [vmem:[#allocation3 + $0x188] sm:$0xf]
      %v2270 = vld [vmem:[#allocation3 + $0x18c] sm:$0xff]
      %v2271 = vld [vmem:[#allocation3 + $0x194] sm:$0xff]
      %v2272 = vld [vmem:[#allocation3 + $0x19c] sm:$0xff]
      %v2273 = vld [vmem:[#allocation3 + $0x1a4] sm:$0xff]
      %v2274 = vld [vmem:[#allocation3 + $0x1ac] sm:$0xf]
      %v2275 = vld [vmem:[#allocation3 + $0x1b0] sm:$0xff]
      %v2276 = vld [vmem:[#allocation3 + $0x1b8] sm:$0xff]
      %v2277 = vld [vmem:[#allocation3 + $0x1c0] sm:$0xff]
      %v2278 = vld [vmem:[#allocation3 + $0x1c8] sm:$0xff]
      %v2279 = vld [vmem:[#allocation3 + $0x1d0] sm:$0xf]
      %v2280 = vld [vmem:[#allocation3 + $0x1d4] sm:$0xff]
      %v2281 = vld [vmem:[#allocation3 + $0x1dc] sm:$0xff]
      %v2282 = vld [vmem:[#allocation3 + $0x1e4] sm:$0xff]
      %v2283 = vld [vmem:[#allocation3 + $0x1ec] sm:$0xff]
      %v2284 = vld [vmem:[#allocation3 + $0x1f4] sm:$0xf]
      %v2285 = vld [vmem:[#allocation3 + $0x1f8] sm:$0xff]
      %v2286 = vld [vmem:[#allocation3 + $0x200] sm:$0xff]
      %v2287 = vld [vmem:[#allocation3 + $0x208] sm:$0xff]
      %v2288 = vld [vmem:[#allocation3 + $0x210] sm:$0xff]
      %v2289 = vld [vmem:[#allocation3 + $0x218] sm:$0xf]
      %v2290 = vld [vmem:[#allocation3 + $0x21c] sm:$0xff]
      %v2291 = vld [vmem:[#allocation3 + $0x224] sm:$0xff]
      %v2292 = vld [vmem:[#allocation3 + $0x22c] sm:$0xff]
      %v2293 = vld [vmem:[#allocation3 + $0x234] sm:$0xff]
      %v2294 = vld [vmem:[#allocation3 + $0x23c] sm:$0xf]
      %v2295 = vld [vmem:[#allocation3 + $0x240] sm:$0xff]
      %v2296 = vld [vmem:[#allocation3 + $0x248] sm:$0xff]
      %v2297 = vld [vmem:[#allocation3 + $0x250] sm:$0xff]
      %v2298 = vld [vmem:[#allocation3 + $0x258] sm:$0xff]
      %v2299 = vld [vmem:[#allocation3 + $0x260] sm:$0xf]
      %v2300 = vld [vmem:[#allocation3 + $0x264] sm:$0xff]
      %v2301 = vld [vmem:[#allocation3 + $0x26c] sm:$0xff]
      %v2302 = vld [vmem:[#allocation3 + $0x274] sm:$0xff]
      %v2303 = vld [vmem:[#allocation3 + $0x27c] sm:$0xff]
      %v2304 = vld [vmem:[#allocation3 + $0x284] sm:$0xf]
      %v2305 = vld [vmem:[#allocation3 + $0x288] sm:$0xff]
      %v2306 = vld [vmem:[#allocation3 + $0x290] sm:$0xff]
      %v2307 = vld [vmem:[#allocation3 + $0x298] sm:$0xff]
      %v2308 = vld [vmem:[#allocation3 + $0x2a0] sm:$0xff]
      %v2309 = vld [vmem:[#allocation3 + $0x2a8] sm:$0xf]
      %v2310 = vld [vmem:[#allocation3 + $0x2ac] sm:$0xff]
      %v2311 = vld [vmem:[#allocation3 + $0x2b4] sm:$0xff]
      %v2312 = vld [vmem:[#allocation3 + $0x2bc] sm:$0xff]
      %v2313 = vld [vmem:[#allocation3 + $0x2c4] sm:$0xff]
      %v2314 = vld [vmem:[#allocation3 + $0x2cc] sm:$0xf]
      %v2315 = vld [vmem:[#allocation3 + $0x2d0] sm:$0xff]
      %v2316 = vld [vmem:[#allocation3 + $0x2d8] sm:$0xff]
      %v2317 = vld [vmem:[#allocation3 + $0x2e0] sm:$0xff]
      %v2318 = vld [vmem:[#allocation3 + $0x2e8] sm:$0xff]
      %v2319 = vld [vmem:[#allocation3 + $0x2f0] sm:$0xf]
      %v2320 = vld [vmem:[#allocation3 + $0x2f4] sm:$0xff]
      %v2321 = vld [vmem:[#allocation3 + $0x2fc] sm:$0xff]
      %v2322 = vld [vmem:[#allocation3 + $0x304] sm:$0xff]
      %v2323 = vld [vmem:[#allocation3 + $0x30c] sm:$0xff]
      %v2324 = vld [vmem:[#allocation3 + $0x314] sm:$0xf]
      %v2325 = vld [vmem:[#allocation3 + $0x318] sm:$0xff]
      %v2326 = vld [vmem:[#allocation3 + $0x320] sm:$0xff]
      %v2327 = vld [vmem:[#allocation3 + $0x328] sm:$0xff]
      %v2328 = vld [vmem:[#allocation3 + $0x330] sm:$0xff]
      %v2329 = vld [vmem:[#allocation3 + $0x338] sm:$0xf]
      %v2330 = vld [vmem:[#allocation3 + $0x33c] sm:$0xff]
      %v2331 = vld [vmem:[#allocation3 + $0x344] sm:$0xff]
      %v2332 = vld [vmem:[#allocation3 + $0x34c] sm:$0xff]
      %v2333 = vld [vmem:[#allocation3 + $0x354] sm:$0xff]
      %v2334 = vld [vmem:[#allocation3 + $0x35c] sm:$0xf]
      %v2335 = vld [vmem:[#allocation3 + $0x360] sm:$0xff]
      %v2336 = vld [vmem:[#allocation3 + $0x368] sm:$0xff]
      %v2337 = vld [vmem:[#allocation3 + $0x370] sm:$0xff]
      %v2338 = vld [vmem:[#allocation3 + $0x378] sm:$0xff]
      %v2339 = vld [vmem:[#allocation3 + $0x380] sm:$0xf]
      %v2340 = vld [vmem:[#allocation3 + $0x384] sm:$0xff]
      %v2341 = vld [vmem:[#allocation3 + $0x38c] sm:$0xff]
      %v2342 = vld [vmem:[#allocation3 + $0x394] sm:$0xff]
      %v2343 = vld [vmem:[#allocation3 + $0x39c] sm:$0xff]
      %v2344 = vld [vmem:[#allocation3 + $0x3a4] sm:$0xf]
      %v2345 = vld [vmem:[#allocation3 + $0x3a8] sm:$0xff]
      %v2346 = vld [vmem:[#allocation3 + $0x3b0] sm:$0xff]
      %v2347 = vld [vmem:[#allocation3 + $0x3b8] sm:$0xff]
      %v2348 = vld [vmem:[#allocation3 + $0x3c0] sm:$0xff]
      %v2349 = vld [vmem:[#allocation3 + $0x3c8] sm:$0xf]
      %v2350 = vld [vmem:[#allocation3 + $0x3cc] sm:$0xff]
      %v2351 = vld [vmem:[#allocation3 + $0x3d4] sm:$0xff]
      %v2352 = vld [vmem:[#allocation3 + $0x3dc] sm:$0xff]
      %v2353 = vld [vmem:[#allocation3 + $0x3e4] sm:$0xff]
      %v2354 = vld [vmem:[#allocation3 + $0x3ec] sm:$0xf]
      %v2355 = vld [vmem:[#allocation3 + $0x3f0] sm:$0xff]
      %v2356 = vld [vmem:[#allocation3 + $0x3f8] sm:$0xff]
      %v2357 = vld [vmem:[#allocation3 + $0x400] sm:$0xff]
      %v2358 = vld [vmem:[#allocation3 + $0x408] sm:$0xff]
      %v2359 = vld [vmem:[#allocation3 + $0x410] sm:$0xf]
      %v2360 = vld [vmem:[#allocation3 + $0x414] sm:$0xff]
      %v2361 = vld [vmem:[#allocation3 + $0x41c] sm:$0xff]
      %v2362 = vld [vmem:[#allocation3 + $0x424] sm:$0xff]
      %v2363 = vld [vmem:[#allocation3 + $0x42c] sm:$0xff]
      %v2364 = vld [vmem:[#allocation3 + $0x434] sm:$0xf]
      %v2365 = vld [vmem:[#allocation3 + $0x438] sm:$0xff]
      %v2366 = vld [vmem:[#allocation3 + $0x440] sm:$0xff]
      %v2367 = vld [vmem:[#allocation3 + $0x448] sm:$0xff]
      %v2368 = vld [vmem:[#allocation3 + $0x450] sm:$0xff]
      %v2369 = vld [vmem:[#allocation3 + $0x458] sm:$0xf]
      %v2370 = vld [vmem:[#allocation3 + $0x45c] sm:$0xff]
      %v2371 = vld [vmem:[#allocation3 + $0x464] sm:$0xff]
      %v2372 = vld [vmem:[#allocation3 + $0x46c] sm:$0xff]
      %v2373 = vld [vmem:[#allocation3 + $0x474] sm:$0xff]
      %v2374 = vld [vmem:[#allocation3 + $0x47c] sm:$0xf]
      %v2375 = vld [vmem:[%s3] sm:$0xf]
      %v2376 = vld [vmem:[%s3 + $0x4] sm:$0xf]
      %v2377 = vld [vmem:[%s3 + $0x8] sm:$0xf]
      %v2378 = vld [vmem:[%s3 + $0xc] sm:$0xf]
      %v2379 = vld [vmem:[%s3 + $0x10] sm:$0xf]
      %v2380 = vld [vmem:[%s3 + $0x14] sm:$0xf]
      %v2381 = vld [vmem:[%s3 + $0x18] sm:$0xf]
      %v2382 = vld [vmem:[%s3 + $0x1c] sm:$0xf]
      %v2383 = vld [vmem:[%s3 + $0x20] sm:$0xf]
      %v2384 = vld [vmem:[%s3 + $0x24] sm:$0xf]
      %v2385 = vld [vmem:[%s3 + $0x28] sm:$0xf]
      %v2386 = vld [vmem:[%s3 + $0x2c] sm:$0xf]
      %v2387 = vld [vmem:[%s3 + $0x30] sm:$0xf]
      %v2388 = vld [vmem:[%s3 + $0x34] sm:$0xf]
      %v2389 = vld [vmem:[%s3 + $0x38] sm:$0xf]
      %v2390 = vld [vmem:[%s3 + $0x3c] sm:$0xf]
      %v2391 = vld [vmem:[%s3 + $0x40] sm:$0xf]
      %v2392 = vld [vmem:[%s3 + $0x44] sm:$0xf]
      %v2393 = vld [vmem:[%s3 + $0x48] sm:$0xf]
      %v2394 = vld [vmem:[%s3 + $0x4c] sm:$0xf]
      %v2395 = vld [vmem:[%s3 + $0x50] sm:$0xf]
      %v2396 = vld [vmem:[%s3 + $0x54] sm:$0xf]
      %v2397 = vld [vmem:[%s3 + $0x58] sm:$0xf]
      %v2398 = vld [vmem:[%s3 + $0x5c] sm:$0xf]
      %v2399 = vld [vmem:[%s3 + $0x60] sm:$0xf]
      %v2400 = vld [vmem:[%s3 + $0x64] sm:$0xf]
      %v2401 = vld [vmem:[%s3 + $0x68] sm:$0xf]
      %v2402 = vld [vmem:[%s3 + $0x6c] sm:$0xf]
      %v2403 = vld [vmem:[%s3 + $0x70] sm:$0xf]
      %v2404 = vld [vmem:[%s3 + $0x74] sm:$0xf]
      %v2405 = vld [vmem:[%s3 + $0x78] sm:$0xf]
      %v2406 = vld [vmem:[%s3 + $0x7c] sm:$0xf]
      %v2407 = vld [vmem:[%s3 + $0x80] sm:$0xf]
      %v2408 = vld [vmem:[%s3 + $0x84] sm:$0xf]
      %v2409 = vld [vmem:[%s3 + $0x88] sm:$0xf]
      %v2410 = vld [vmem:[%s3 + $0x8c] sm:$0xf]
      %v2411 = vld [vmem:[%s3 + $0x90] sm:$0xf]
      %v2412 = vld [vmem:[%s3 + $0x94] sm:$0xf]
      %v2413 = vld [vmem:[%s3 + $0x98] sm:$0xf]
      %v2414 = vld [vmem:[%s3 + $0x9c] sm:$0xf]
      %v2415 = vld [vmem:[%s3 + $0xa0] sm:$0xf]
      %v2416 = vld [vmem:[%s3 + $0xa4] sm:$0xf]
      %v2417 = vld [vmem:[%s3 + $0xa8] sm:$0xf]
      %v2418 = vld [vmem:[%s3 + $0xac] sm:$0xf]
      %v2419 = vld [vmem:[%s3 + $0xb0] sm:$0xf]
      %v2420 = vld [vmem:[%s3 + $0xb4] sm:$0xf]
      %v2421 = vld [vmem:[%s3 + $0xb8] sm:$0xf]
      %v2422 = vld [vmem:[%s3 + $0xbc] sm:$0xf]
      %v2423 = vld [vmem:[%s3 + $0xc0] sm:$0xf]
      %v2424 = vld [vmem:[%s3 + $0xc4] sm:$0xf]
      %v2425 = vld [vmem:[%s3 + $0xc8] sm:$0xf]
      %v2426 = vld [vmem:[%s3 + $0xcc] sm:$0xf]
      %v2427 = vld [vmem:[%s3 + $0xd0] sm:$0xf]
      %v2428 = vld [vmem:[%s3 + $0xd4] sm:$0xf]
      %v2429 = vld [vmem:[%s3 + $0xd8] sm:$0xf]
      %v2430 = vld [vmem:[%s3 + $0xdc] sm:$0xf]
      %v2431 = vld [vmem:[%s3 + $0xe0] sm:$0xf]
      %v2432 = vld [vmem:[%s3 + $0xe4] sm:$0xf]
      %v2433 = vld [vmem:[%s3 + $0xe8] sm:$0xf]
      %v2434 = vld [vmem:[%s3 + $0xec] sm:$0xf]
      %v2435 = vld [vmem:[%s3 + $0xf0] sm:$0xf]
      %v2436 = vld [vmem:[%s3 + $0xf4] sm:$0xf]
      %v2437 = vld [vmem:[%s3 + $0xf8] sm:$0xf]
      %v2438 = vld [vmem:[%s3 + $0xfc] sm:$0xf]
      %v2439 = vld [vmem:[%s3 + $0x100] sm:$0xf]
      %v2440 = vld [vmem:[%s3 + $0x104] sm:$0xf]
      %v2441 = vld [vmem:[%s3 + $0x108] sm:$0xf]
      %v2442 = vld [vmem:[%s3 + $0x10c] sm:$0xf]
      %v2443 = vld [vmem:[%s3 + $0x110] sm:$0xf]
      %v2444 = vld [vmem:[%s3 + $0x114] sm:$0xf]
      %v2445 = vld [vmem:[%s3 + $0x118] sm:$0xf]
      %v2446 = vld [vmem:[%s3 + $0x11c] sm:$0xf]
      %v2447 = vld [vmem:[%s3 + $0x120] sm:$0xf]
      %v2448 = vld [vmem:[%s3 + $0x124] sm:$0xf]
      %v2449 = vld [vmem:[%s3 + $0x128] sm:$0xf]
      %v2450 = vld [vmem:[%s3 + $0x12c] sm:$0xf]
      %v2451 = vld [vmem:[%s3 + $0x130] sm:$0xf]
      %v2452 = vld [vmem:[%s3 + $0x134] sm:$0xf]
      %v2453 = vld [vmem:[%s3 + $0x138] sm:$0xf]
      %v2454 = vld [vmem:[%s3 + $0x13c] sm:$0xf]
      %v2455 = vld [vmem:[%s3 + $0x140] sm:$0xf]
      %v2456 = vld [vmem:[%s3 + $0x144] sm:$0xf]
      %v2457 = vld [vmem:[%s3 + $0x148] sm:$0xf]
      %v2458 = vld [vmem:[%s3 + $0x14c] sm:$0xf]
      %v2459 = vld [vmem:[%s3 + $0x150] sm:$0xf]
      %v2460 = vld [vmem:[%s3 + $0x154] sm:$0xf]
      %v2461 = vld [vmem:[%s3 + $0x158] sm:$0xf]
      %v2462 = vld [vmem:[%s3 + $0x15c] sm:$0xf]
      %v2463 = vld [vmem:[%s3 + $0x160] sm:$0xf]
      %v2464 = vld [vmem:[%s3 + $0x164] sm:$0xf]
      %v2465 = vld [vmem:[%s3 + $0x168] sm:$0xf]
      %v2466 = vld [vmem:[%s3 + $0x16c] sm:$0xf]
      %v2467 = vld [vmem:[%s3 + $0x170] sm:$0xf]
      %v2468 = vld [vmem:[%s3 + $0x174] sm:$0xf]
      %v2469 = vld [vmem:[%s3 + $0x178] sm:$0xf]
      %v2470 = vld [vmem:[%s3 + $0x17c] sm:$0xf]
      %v2471 = vld [vmem:[%s3 + $0x180] sm:$0xf]
      %v2472 = vld [vmem:[%s3 + $0x184] sm:$0xf]
      %v2473 = vld [vmem:[%s3 + $0x188] sm:$0xf]
      %v2474 = vld [vmem:[%s3 + $0x18c] sm:$0xf]
      %v2475 = vld [vmem:[%s3 + $0x190] sm:$0xf]
      %v2476 = vld [vmem:[%s3 + $0x194] sm:$0xf]
      %v2477 = vld [vmem:[%s3 + $0x198] sm:$0xf]
      %v2478 = vld [vmem:[%s3 + $0x19c] sm:$0xf]
      %v2479 = vld [vmem:[%s3 + $0x1a0] sm:$0xf]
      %v2480 = vld [vmem:[%s3 + $0x1a4] sm:$0xf]
      %v2481 = vld [vmem:[%s3 + $0x1a8] sm:$0xf]
      %v2482 = vld [vmem:[%s3 + $0x1ac] sm:$0xf]
      %v2483 = vld [vmem:[%s3 + $0x1b0] sm:$0xf]
      %v2484 = vld [vmem:[%s3 + $0x1b4] sm:$0xf]
      %v2485 = vld [vmem:[%s3 + $0x1b8] sm:$0xf]
      %v2486 = vld [vmem:[%s3 + $0x1bc] sm:$0xf]
      %v2487 = vld [vmem:[%s3 + $0x1c0] sm:$0xf]
      %v2488 = vld [vmem:[%s3 + $0x1c4] sm:$0xf]
      %v2489 = vld [vmem:[%s3 + $0x1c8] sm:$0xf]
      %v2490 = vld [vmem:[%s3 + $0x1cc] sm:$0xf]
      %v2491 = vld [vmem:[%s3 + $0x1d0] sm:$0xf]
      %v2492 = vld [vmem:[%s3 + $0x1d4] sm:$0xf]
      %v2493 = vld [vmem:[%s3 + $0x1d8] sm:$0xf]
      %v2494 = vld [vmem:[%s3 + $0x1dc] sm:$0xf]
      %v2495 = vld [vmem:[%s3 + $0x1e0] sm:$0xf]
      %v2496 = vld [vmem:[%s3 + $0x1e4] sm:$0xf]
      %v2497 = vld [vmem:[%s3 + $0x1e8] sm:$0xf]
      %v2498 = vld [vmem:[%s3 + $0x1ec] sm:$0xf]
      %v2499 = vld [vmem:[%s3 + $0x1f0] sm:$0xf]
      %v2500 = vld [vmem:[%s3 + $0x1f4] sm:$0xf]
      %v2501 = vld [vmem:[%s3 + $0x1f8] sm:$0xf]
      %v2502 = vld [vmem:[%s3 + $0x1fc] sm:$0xf]
      %v2503 = vld [vmem:[%s3 + $0x200] sm:$0xf]
      %v2504 = vld [vmem:[%s3 + $0x204] sm:$0xf]
      %v2505 = vld [vmem:[%s3 + $0x208] sm:$0xf]
      %v2506 = vld [vmem:[%s3 + $0x20c] sm:$0xf]
      %v2507 = vld [vmem:[%s3 + $0x210] sm:$0xf]
      %v2508 = vld [vmem:[%s3 + $0x214] sm:$0xf]
      %v2509 = vld [vmem:[%s3 + $0x218] sm:$0xf]
      %v2510 = vld [vmem:[%s3 + $0x21c] sm:$0xf]
      %v2511 = vld [vmem:[%s3 + $0x220] sm:$0xf]
      %v2512 = vld [vmem:[%s3 + $0x224] sm:$0xf]
      %v2513 = vld [vmem:[%s3 + $0x228] sm:$0xf]
      %v2514 = vld [vmem:[%s3 + $0x22c] sm:$0xf]
      %v2515 = vld [vmem:[%s3 + $0x230] sm:$0xf]
      %v2516 = vld [vmem:[%s3 + $0x234] sm:$0xf]
      %v2517 = vld [vmem:[%s3 + $0x238] sm:$0xf]
      %v2518 = vld [vmem:[%s3 + $0x23c] sm:$0xf]
      %v2679 = vunpack.c.l.b16 %v2215
      %v2680 = vunpack.c.h.b16 %v2215
      %v2681 = vunpack.c.l.b16 %v2216
      %v2682 = vunpack.c.h.b16 %v2216
      %v2683 = vunpack.c.l.b16 %v2217
      %v2684 = vunpack.c.h.b16 %v2217
      %v2685 = vunpack.c.l.b16 %v2218
      %v2686 = vunpack.c.h.b16 %v2218
      %v2687 = vunpack.c.l.b16 %v2219
      %v2688 = vunpack.c.l.b16 %v2220
      %v2689 = vunpack.c.h.b16 %v2220
      %v2690 = vunpack.c.l.b16 %v2221
      %v2691 = vunpack.c.h.b16 %v2221
      %v2692 = vunpack.c.l.b16 %v2222
      %v2693 = vunpack.c.h.b16 %v2222
      %v2694 = vunpack.c.l.b16 %v2223
      %v2695 = vunpack.c.h.b16 %v2223
      %v2696 = vunpack.c.l.b16 %v2224
      %v2697 = vunpack.c.l.b16 %v2225
      %v2698 = vunpack.c.h.b16 %v2225
      %v2699 = vunpack.c.l.b16 %v2226
      %v2700 = vunpack.c.h.b16 %v2226
      %v2701 = vunpack.c.l.b16 %v2227
      %v2702 = vunpack.c.h.b16 %v2227
      %v2703 = vunpack.c.l.b16 %v2228
      %v2704 = vunpack.c.h.b16 %v2228
      %v2705 = vunpack.c.l.b16 %v2229
      %v2706 = vunpack.c.l.b16 %v2230
      %v2707 = vunpack.c.h.b16 %v2230
      %v2708 = vunpack.c.l.b16 %v2231
      %v2709 = vunpack.c.h.b16 %v2231
      %v2710 = vunpack.c.l.b16 %v2232
      %v2711 = vunpack.c.h.b16 %v2232
      %v2712 = vunpack.c.l.b16 %v2233
      %v2713 = vunpack.c.h.b16 %v2233
      %v2714 = vunpack.c.l.b16 %v2234
      %v2715 = vunpack.c.l.b16 %v2235
      %v2716 = vunpack.c.h.b16 %v2235
      %v2717 = vunpack.c.l.b16 %v2236
      %v2718 = vunpack.c.h.b16 %v2236
      %v2719 = vunpack.c.l.b16 %v2237
      %v2720 = vunpack.c.h.b16 %v2237
      %v2721 = vunpack.c.l.b16 %v2238
      %v2722 = vunpack.c.h.b16 %v2238
      %v2723 = vunpack.c.l.b16 %v2239
      %v2724 = vunpack.c.l.b16 %v2240
      %v2725 = vunpack.c.h.b16 %v2240
      %v2726 = vunpack.c.l.b16 %v2241
      %v2727 = vunpack.c.h.b16 %v2241
      %v2728 = vunpack.c.l.b16 %v2242
      %v2729 = vunpack.c.h.b16 %v2242
      %v2730 = vunpack.c.l.b16 %v2243
      %v2731 = vunpack.c.h.b16 %v2243
      %v2732 = vunpack.c.l.b16 %v2244
      %v2733 = vunpack.c.l.b16 %v2245
      %v2734 = vunpack.c.h.b16 %v2245
      %v2735 = vunpack.c.l.b16 %v2246
      %v2736 = vunpack.c.h.b16 %v2246
      %v2737 = vunpack.c.l.b16 %v2247
      %v2738 = vunpack.c.h.b16 %v2247
      %v2739 = vunpack.c.l.b16 %v2248
      %v2740 = vunpack.c.h.b16 %v2248
      %v2741 = vunpack.c.l.b16 %v2249
      %v2742 = vunpack.c.l.b16 %v2250
      %v2743 = vunpack.c.h.b16 %v2250
      %v2744 = vunpack.c.l.b16 %v2251
      %v2745 = vunpack.c.h.b16 %v2251
      %v2746 = vunpack.c.l.b16 %v2252
      %v2747 = vunpack.c.h.b16 %v2252
      %v2748 = vunpack.c.l.b16 %v2253
      %v2749 = vunpack.c.h.b16 %v2253
      %v2750 = vunpack.c.l.b16 %v2254
      %v2751 = vunpack.c.l.b16 %v2255
      %v2752 = vunpack.c.h.b16 %v2255
      %v2753 = vunpack.c.l.b16 %v2256
      %v2754 = vunpack.c.h.b16 %v2256
      %v2755 = vunpack.c.l.b16 %v2257
      %v2756 = vunpack.c.h.b16 %v2257
      %v2757 = vunpack.c.l.b16 %v2258
      %v2758 = vunpack.c.h.b16 %v2258
      %v2759 = vunpack.c.l.b16 %v2259
      %v2760 = vunpack.c.l.b16 %v2260
      %v2761 = vunpack.c.h.b16 %v2260
      %v2762 = vunpack.c.l.b16 %v2261
      %v2763 = vunpack.c.h.b16 %v2261
      %v2764 = vunpack.c.l.b16 %v2262
      %v2765 = vunpack.c.h.b16 %v2262
      %v2766 = vunpack.c.l.b16 %v2263
      %v2767 = vunpack.c.h.b16 %v2263
      %v2768 = vunpack.c.l.b16 %v2264
      %v2769 = vunpack.c.l.b16 %v2265
      %v2770 = vunpack.c.h.b16 %v2265
      %v2771 = vunpack.c.l.b16 %v2266
      %v2772 = vunpack.c.h.b16 %v2266
      %v2773 = vunpack.c.l.b16 %v2267
      %v2774 = vunpack.c.h.b16 %v2267
      %v2775 = vunpack.c.l.b16 %v2268
      %v2776 = vunpack.c.h.b16 %v2268
      %v2777 = vunpack.c.l.b16 %v2269
      %v2778 = vunpack.c.l.b16 %v2270
      %v2779 = vunpack.c.h.b16 %v2270
      %v2780 = vunpack.c.l.b16 %v2271
      %v2781 = vunpack.c.h.b16 %v2271
      %v2782 = vunpack.c.l.b16 %v2272
      %v2783 = vunpack.c.h.b16 %v2272
      %v2784 = vunpack.c.l.b16 %v2273
      %v2785 = vunpack.c.h.b16 %v2273
      %v2786 = vunpack.c.l.b16 %v2274
      %v2787 = vunpack.c.l.b16 %v2275
      %v2788 = vunpack.c.h.b16 %v2275
      %v2789 = vunpack.c.l.b16 %v2276
      %v2790 = vunpack.c.h.b16 %v2276
      %v2791 = vunpack.c.l.b16 %v2277
      %v2792 = vunpack.c.h.b16 %v2277
      %v2793 = vunpack.c.l.b16 %v2278
      %v2794 = vunpack.c.h.b16 %v2278
      %v2795 = vunpack.c.l.b16 %v2279
      %v2796 = vunpack.c.l.b16 %v2280
      %v2797 = vunpack.c.h.b16 %v2280
      %v2798 = vunpack.c.l.b16 %v2281
      %v2799 = vunpack.c.h.b16 %v2281
      %v2800 = vunpack.c.l.b16 %v2282
      %v2801 = vunpack.c.h.b16 %v2282
      %v2802 = vunpack.c.l.b16 %v2283
      %v2803 = vunpack.c.h.b16 %v2283
      %v2804 = vunpack.c.l.b16 %v2284
      %v2805 = vunpack.c.l.b16 %v2285
      %v2806 = vunpack.c.h.b16 %v2285
      %v2807 = vunpack.c.l.b16 %v2286
      %v2808 = vunpack.c.h.b16 %v2286
      %v2809 = vunpack.c.l.b16 %v2287
      %v2810 = vunpack.c.h.b16 %v2287
      %v2811 = vunpack.c.l.b16 %v2288
      %v2812 = vunpack.c.h.b16 %v2288
      %v2813 = vunpack.c.l.b16 %v2289
      %v2814 = vunpack.c.l.b16 %v2290
      %v2815 = vunpack.c.h.b16 %v2290
      %v2816 = vunpack.c.l.b16 %v2291
      %v2817 = vunpack.c.h.b16 %v2291
      %v2818 = vunpack.c.l.b16 %v2292
      %v2819 = vunpack.c.h.b16 %v2292
      %v2820 = vunpack.c.l.b16 %v2293
      %v2821 = vunpack.c.h.b16 %v2293
      %v2822 = vunpack.c.l.b16 %v2294
      %v2823 = vunpack.c.l.b16 %v2295
      %v2824 = vunpack.c.h.b16 %v2295
      %v2825 = vunpack.c.l.b16 %v2296
      %v2826 = vunpack.c.h.b16 %v2296
      %v2827 = vunpack.c.l.b16 %v2297
      %v2828 = vunpack.c.h.b16 %v2297
      %v2829 = vunpack.c.l.b16 %v2298
      %v2830 = vunpack.c.h.b16 %v2298
      %v2831 = vunpack.c.l.b16 %v2299
      %v2832 = vunpack.c.l.b16 %v2300
      %v2833 = vunpack.c.h.b16 %v2300
      %v2834 = vunpack.c.l.b16 %v2301
      %v2835 = vunpack.c.h.b16 %v2301
      %v2836 = vunpack.c.l.b16 %v2302
      %v2837 = vunpack.c.h.b16 %v2302
      %v2838 = vunpack.c.l.b16 %v2303
      %v2839 = vunpack.c.h.b16 %v2303
      %v2840 = vunpack.c.l.b16 %v2304
      %v2841 = vunpack.c.l.b16 %v2305
      %v2842 = vunpack.c.h.b16 %v2305
      %v2843 = vunpack.c.l.b16 %v2306
      %v2844 = vunpack.c.h.b16 %v2306
      %v2845 = vunpack.c.l.b16 %v2307
      %v2846 = vunpack.c.h.b16 %v2307
      %v2847 = vunpack.c.l.b16 %v2308
      %v2848 = vunpack.c.h.b16 %v2308
      %v2849 = vunpack.c.l.b16 %v2309
      %v2850 = vunpack.c.l.b16 %v2310
      %v2851 = vunpack.c.h.b16 %v2310
      %v2852 = vunpack.c.l.b16 %v2311
      %v2853 = vunpack.c.h.b16 %v2311
      %v2854 = vunpack.c.l.b16 %v2312
      %v2855 = vunpack.c.h.b16 %v2312
      %v2856 = vunpack.c.l.b16 %v2313
      %v2857 = vunpack.c.h.b16 %v2313
      %v2858 = vunpack.c.l.b16 %v2314
      %v2859 = vunpack.c.l.b16 %v2315
      %v2860 = vunpack.c.h.b16 %v2315
      %v2861 = vunpack.c.l.b16 %v2316
      %v2862 = vunpack.c.h.b16 %v2316
      %v2863 = vunpack.c.l.b16 %v2317
      %v2864 = vunpack.c.h.b16 %v2317
      %v2865 = vunpack.c.l.b16 %v2318
      %v2866 = vunpack.c.h.b16 %v2318
      %v2867 = vunpack.c.l.b16 %v2319
      %v2868 = vunpack.c.l.b16 %v2320
      %v2869 = vunpack.c.h.b16 %v2320
      %v2870 = vunpack.c.l.b16 %v2321
      %v2871 = vunpack.c.h.b16 %v2321
      %v2872 = vunpack.c.l.b16 %v2322
      %v2873 = vunpack.c.h.b16 %v2322
      %v2874 = vunpack.c.l.b16 %v2323
      %v2875 = vunpack.c.h.b16 %v2323
      %v2876 = vunpack.c.l.b16 %v2324
      %v2877 = vunpack.c.l.b16 %v2325
      %v2878 = vunpack.c.h.b16 %v2325
      %v2879 = vunpack.c.l.b16 %v2326
      %v2880 = vunpack.c.h.b16 %v2326
      %v2881 = vunpack.c.l.b16 %v2327
      %v2882 = vunpack.c.h.b16 %v2327
      %v2883 = vunpack.c.l.b16 %v2328
      %v2884 = vunpack.c.h.b16 %v2328
      %v2885 = vunpack.c.l.b16 %v2329
      %v2886 = vunpack.c.l.b16 %v2330
      %v2887 = vunpack.c.h.b16 %v2330
      %v2888 = vunpack.c.l.b16 %v2331
      %v2889 = vunpack.c.h.b16 %v2331
      %v2890 = vunpack.c.l.b16 %v2332
      %v2891 = vunpack.c.h.b16 %v2332
      %v2892 = vunpack.c.l.b16 %v2333
      %v2893 = vunpack.c.h.b16 %v2333
      %v2894 = vunpack.c.l.b16 %v2334
      %v2895 = vunpack.c.l.b16 %v2335
      %v2896 = vunpack.c.h.b16 %v2335
      %v2897 = vunpack.c.l.b16 %v2336
      %v2898 = vunpack.c.h.b16 %v2336
      %v2899 = vunpack.c.l.b16 %v2337
      %v2900 = vunpack.c.h.b16 %v2337
      %v2901 = vunpack.c.l.b16 %v2338
      %v2902 = vunpack.c.h.b16 %v2338
      %v2903 = vunpack.c.l.b16 %v2339
      %v2904 = vunpack.c.l.b16 %v2340
      %v2905 = vunpack.c.h.b16 %v2340
      %v2906 = vunpack.c.l.b16 %v2341
      %v2907 = vunpack.c.h.b16 %v2341
      %v2908 = vunpack.c.l.b16 %v2342
      %v2909 = vunpack.c.h.b16 %v2342
      %v2910 = vunpack.c.l.b16 %v2343
      %v2911 = vunpack.c.h.b16 %v2343
      %v2912 = vunpack.c.l.b16 %v2344
      %v2913 = vunpack.c.l.b16 %v2345
      %v2914 = vunpack.c.h.b16 %v2345
      %v2915 = vunpack.c.l.b16 %v2346
      %v2916 = vunpack.c.h.b16 %v2346
      %v2917 = vunpack.c.l.b16 %v2347
      %v2918 = vunpack.c.h.b16 %v2347
      %v2919 = vunpack.c.l.b16 %v2348
      %v2920 = vunpack.c.h.b16 %v2348
      %v2921 = vunpack.c.l.b16 %v2349
      %v2922 = vunpack.c.l.b16 %v2350
      %v2923 = vunpack.c.h.b16 %v2350
      %v2924 = vunpack.c.l.b16 %v2351
      %v2925 = vunpack.c.h.b16 %v2351
      %v2926 = vunpack.c.l.b16 %v2352
      %v2927 = vunpack.c.h.b16 %v2352
      %v2928 = vunpack.c.l.b16 %v2353
      %v2929 = vunpack.c.h.b16 %v2353
      %v2930 = vunpack.c.l.b16 %v2354
      %v2931 = vunpack.c.l.b16 %v2355
      %v2932 = vunpack.c.h.b16 %v2355
      %v2933 = vunpack.c.l.b16 %v2356
      %v2934 = vunpack.c.h.b16 %v2356
      %v2935 = vunpack.c.l.b16 %v2357
      %v2936 = vunpack.c.h.b16 %v2357
      %v2937 = vunpack.c.l.b16 %v2358
      %v2938 = vunpack.c.h.b16 %v2358
      %v2939 = vunpack.c.l.b16 %v2359
      %v2940 = vunpack.c.l.b16 %v2360
      %v2941 = vunpack.c.h.b16 %v2360
      %v2942 = vunpack.c.l.b16 %v2361
      %v2943 = vunpack.c.h.b16 %v2361
      %v2944 = vunpack.c.l.b16 %v2362
      %v2945 = vunpack.c.h.b16 %v2362
      %v2946 = vunpack.c.l.b16 %v2363
      %v2947 = vunpack.c.h.b16 %v2363
      %v2948 = vunpack.c.l.b16 %v2364
      %v2949 = vunpack.c.l.b16 %v2365
      %v2950 = vunpack.c.h.b16 %v2365
      %v2951 = vunpack.c.l.b16 %v2366
      %v2952 = vunpack.c.h.b16 %v2366
      %v2953 = vunpack.c.l.b16 %v2367
      %v2954 = vunpack.c.h.b16 %v2367
      %v2955 = vunpack.c.l.b16 %v2368
      %v2956 = vunpack.c.h.b16 %v2368
      %v2957 = vunpack.c.l.b16 %v2369
      %v2958 = vunpack.c.l.b16 %v2370
      %v2959 = vunpack.c.h.b16 %v2370
      %v2960 = vunpack.c.l.b16 %v2371
      %v2961 = vunpack.c.h.b16 %v2371
      %v2962 = vunpack.c.l.b16 %v2372
      %v2963 = vunpack.c.h.b16 %v2372
      %v2964 = vunpack.c.l.b16 %v2373
      %v2965 = vunpack.c.h.b16 %v2373
      %v2966 = vunpack.c.l.b16 %v2374
      %v2967 = vpack.c.b16 %v2688, %v2679
      %v2968 = vpack.c.b16 %v2689, %v2680
      %v2969 = vpack.c.b16 %v2690, %v2681
      %v2970 = vpack.c.b16 %v2691, %v2682
      %v2971 = vpack.c.b16 %v2692, %v2683
      %v2972 = vpack.c.b16 %v2693, %v2684
      %v2973 = vpack.c.b16 %v2694, %v2685
      %v2974 = vpack.c.b16 %v2695, %v2686
      %v2975 = vpack.c.b16 %v2696, %v2687
      %v2976 = vpack.c.b16 %v2706, %v2697
      %v2977 = vpack.c.b16 %v2707, %v2698
      %v2978 = vpack.c.b16 %v2708, %v2699
      %v2979 = vpack.c.b16 %v2709, %v2700
      %v2980 = vpack.c.b16 %v2710, %v2701
      %v2981 = vpack.c.b16 %v2711, %v2702
      %v2982 = vpack.c.b16 %v2712, %v2703
      %v2983 = vpack.c.b16 %v2713, %v2704
      %v2984 = vpack.c.b16 %v2714, %v2705
      %v2985 = vpack.c.b16 %v2724, %v2715
      %v2986 = vpack.c.b16 %v2725, %v2716
      %v2987 = vpack.c.b16 %v2726, %v2717
      %v2988 = vpack.c.b16 %v2727, %v2718
      %v2989 = vpack.c.b16 %v2728, %v2719
      %v2990 = vpack.c.b16 %v2729, %v2720
      %v2991 = vpack.c.b16 %v2730, %v2721
      %v2992 = vpack.c.b16 %v2731, %v2722
      %v2993 = vpack.c.b16 %v2732, %v2723
      %v2994 = vpack.c.b16 %v2742, %v2733
      %v2995 = vpack.c.b16 %v2743, %v2734
      %v2996 = vpack.c.b16 %v2744, %v2735
      %v2997 = vpack.c.b16 %v2745, %v2736
      %v2998 = vpack.c.b16 %v2746, %v2737
      %v2999 = vpack.c.b16 %v2747, %v2738
      %v3000 = vpack.c.b16 %v2748, %v2739
      %v3001 = vpack.c.b16 %v2749, %v2740
      %v3002 = vpack.c.b16 %v2750, %v2741
      %v3003 = vpack.c.b16 %v2760, %v2751
      %v3004 = vpack.c.b16 %v2761, %v2752
      %v3005 = vpack.c.b16 %v2762, %v2753
      %v3006 = vpack.c.b16 %v2763, %v2754
      %v3007 = vpack.c.b16 %v2764, %v2755
      %v3008 = vpack.c.b16 %v2765, %v2756
      %v3009 = vpack.c.b16 %v2766, %v2757
      %v3010 = vpack.c.b16 %v2767, %v2758
      %v3011 = vpack.c.b16 %v2768, %v2759
      %v3012 = vpack.c.b16 %v2778, %v2769
      %v3013 = vpack.c.b16 %v2779, %v2770
      %v3014 = vpack.c.b16 %v2780, %v2771
      %v3015 = vpack.c.b16 %v2781, %v2772
      %v3016 = vpack.c.b16 %v2782, %v2773
      %v3017 = vpack.c.b16 %v2783, %v2774
      %v3018 = vpack.c.b16 %v2784, %v2775
      %v3019 = vpack.c.b16 %v2785, %v2776
      %v3020 = vpack.c.b16 %v2786, %v2777
      %v3021 = vpack.c.b16 %v2796, %v2787
      %v3022 = vpack.c.b16 %v2797, %v2788
      %v3023 = vpack.c.b16 %v2798, %v2789
      %v3024 = vpack.c.b16 %v2799, %v2790
      %v3025 = vpack.c.b16 %v2800, %v2791
      %v3026 = vpack.c.b16 %v2801, %v2792
      %v3027 = vpack.c.b16 %v2802, %v2793
      %v3028 = vpack.c.b16 %v2803, %v2794
      %v3029 = vpack.c.b16 %v2804, %v2795
      %v3030 = vpack.c.b16 %v2814, %v2805
      %v3031 = vpack.c.b16 %v2815, %v2806
      %v3032 = vpack.c.b16 %v2816, %v2807
      %v3033 = vpack.c.b16 %v2817, %v2808
      %v3034 = vpack.c.b16 %v2818, %v2809
      %v3035 = vpack.c.b16 %v2819, %v2810
      %v3036 = vpack.c.b16 %v2820, %v2811
      %v3037 = vpack.c.b16 %v2821, %v2812
      %v3038 = vpack.c.b16 %v2822, %v2813
      %v3039 = vpack.c.b16 %v2832, %v2823
      %v3040 = vpack.c.b16 %v2833, %v2824
      %v3041 = vpack.c.b16 %v2834, %v2825
      %v3042 = vpack.c.b16 %v2835, %v2826
      %v3043 = vpack.c.b16 %v2836, %v2827
      %v3044 = vpack.c.b16 %v2837, %v2828
      %v3045 = vpack.c.b16 %v2838, %v2829
      %v3046 = vpack.c.b16 %v2839, %v2830
      %v3047 = vpack.c.b16 %v2840, %v2831
      %v3048 = vpack.c.b16 %v2850, %v2841
      %v3049 = vpack.c.b16 %v2851, %v2842
      %v3050 = vpack.c.b16 %v2852, %v2843
      %v3051 = vpack.c.b16 %v2853, %v2844
      %v3052 = vpack.c.b16 %v2854, %v2845
      %v3053 = vpack.c.b16 %v2855, %v2846
      %v3054 = vpack.c.b16 %v2856, %v2847
      %v3055 = vpack.c.b16 %v2857, %v2848
      %v3056 = vpack.c.b16 %v2858, %v2849
      %v3057 = vpack.c.b16 %v2868, %v2859
      %v3058 = vpack.c.b16 %v2869, %v2860
      %v3059 = vpack.c.b16 %v2870, %v2861
      %v3060 = vpack.c.b16 %v2871, %v2862
      %v3061 = vpack.c.b16 %v2872, %v2863
      %v3062 = vpack.c.b16 %v2873, %v2864
      %v3063 = vpack.c.b16 %v2874, %v2865
      %v3064 = vpack.c.b16 %v2875, %v2866
      %v3065 = vpack.c.b16 %v2876, %v2867
      %v3066 = vpack.c.b16 %v2886, %v2877
      %v3067 = vpack.c.b16 %v2887, %v2878
      %v3068 = vpack.c.b16 %v2888, %v2879
      %v3069 = vpack.c.b16 %v2889, %v2880
      %v3070 = vpack.c.b16 %v2890, %v2881
      %v3071 = vpack.c.b16 %v2891, %v2882
      %v3072 = vpack.c.b16 %v2892, %v2883
      %v3073 = vpack.c.b16 %v2893, %v2884
      %v3074 = vpack.c.b16 %v2894, %v2885
      %v3075 = vpack.c.b16 %v2904, %v2895
      %v3076 = vpack.c.b16 %v2905, %v2896
      %v3077 = vpack.c.b16 %v2906, %v2897
      %v3078 = vpack.c.b16 %v2907, %v2898
      %v3079 = vpack.c.b16 %v2908, %v2899
      %v3080 = vpack.c.b16 %v2909, %v2900
      %v3081 = vpack.c.b16 %v2910, %v2901
      %v3082 = vpack.c.b16 %v2911, %v2902
      %v3083 = vpack.c.b16 %v2912, %v2903
      %v3084 = vpack.c.b16 %v2922, %v2913
      %v3085 = vpack.c.b16 %v2923, %v2914
      %v3086 = vpack.c.b16 %v2924, %v2915
      %v3087 = vpack.c.b16 %v2925, %v2916
      %v3088 = vpack.c.b16 %v2926, %v2917
      %v3089 = vpack.c.b16 %v2927, %v2918
      %v3090 = vpack.c.b16 %v2928, %v2919
      %v3091 = vpack.c.b16 %v2929, %v2920
      %v3092 = vpack.c.b16 %v2930, %v2921
      %v3093 = vpack.c.b16 %v2940, %v2931
      %v3094 = vpack.c.b16 %v2941, %v2932
      %v3095 = vpack.c.b16 %v2942, %v2933
      %v3096 = vpack.c.b16 %v2943, %v2934
      %v3097 = vpack.c.b16 %v2944, %v2935
      %v3098 = vpack.c.b16 %v2945, %v2936
      %v3099 = vpack.c.b16 %v2946, %v2937
      %v3100 = vpack.c.b16 %v2947, %v2938
      %v3101 = vpack.c.b16 %v2948, %v2939
      %v3102 = vpack.c.b16 %v2958, %v2949
      %v3103 = vpack.c.b16 %v2959, %v2950
      %v3104 = vpack.c.b16 %v2960, %v2951
      %v3105 = vpack.c.b16 %v2961, %v2952
      %v3106 = vpack.c.b16 %v2962, %v2953
      %v3107 = vpack.c.b16 %v2963, %v2954
      %v3108 = vpack.c.b16 %v2964, %v2955
      %v3109 = vpack.c.b16 %v2965, %v2956
      %v3110 = vpack.c.b16 %v2966, %v2957
      %v3399 = vunpack.c.l.b16 %v2375
      %v3400 = vunpack.c.l.b16 %v2376
      %v3401 = vunpack.c.l.b16 %v2377
      %v3402 = vunpack.c.l.b16 %v2378
      %v3403 = vunpack.c.l.b16 %v2379
      %v3404 = vunpack.c.l.b16 %v2380
      %v3405 = vunpack.c.l.b16 %v2381
      %v3406 = vunpack.c.l.b16 %v2382
      %v3407 = vunpack.c.l.b16 %v2383
      %v3408 = vunpack.c.l.b16 %v2384
      %v3409 = vunpack.c.l.b16 %v2385
      %v3410 = vunpack.c.l.b16 %v2386
      %v3411 = vunpack.c.l.b16 %v2387
      %v3412 = vunpack.c.l.b16 %v2388
      %v3413 = vunpack.c.l.b16 %v2389
      %v3414 = vunpack.c.l.b16 %v2390
      %v3415 = vunpack.c.l.b16 %v2391
      %v3416 = vunpack.c.l.b16 %v2392
      %v3417 = vunpack.c.l.b16 %v2393
      %v3418 = vunpack.c.l.b16 %v2394
      %v3419 = vunpack.c.l.b16 %v2395
      %v3420 = vunpack.c.l.b16 %v2396
      %v3421 = vunpack.c.l.b16 %v2397
      %v3422 = vunpack.c.l.b16 %v2398
      %v3423 = vunpack.c.l.b16 %v2399
      %v3424 = vunpack.c.l.b16 %v2400
      %v3425 = vunpack.c.l.b16 %v2401
      %v3426 = vunpack.c.l.b16 %v2402
      %v3427 = vunpack.c.l.b16 %v2403
      %v3428 = vunpack.c.l.b16 %v2404
      %v3429 = vunpack.c.l.b16 %v2405
      %v3430 = vunpack.c.l.b16 %v2406
      %v3431 = vunpack.c.l.b16 %v2407
      %v3432 = vunpack.c.l.b16 %v2408
      %v3433 = vunpack.c.l.b16 %v2409
      %v3434 = vunpack.c.l.b16 %v2410
      %v3435 = vunpack.c.l.b16 %v2411
      %v3436 = vunpack.c.l.b16 %v2412
      %v3437 = vunpack.c.l.b16 %v2413
      %v3438 = vunpack.c.l.b16 %v2414
      %v3439 = vunpack.c.l.b16 %v2415
      %v3440 = vunpack.c.l.b16 %v2416
      %v3441 = vunpack.c.l.b16 %v2417
      %v3442 = vunpack.c.l.b16 %v2418
      %v3443 = vunpack.c.l.b16 %v2419
      %v3444 = vunpack.c.l.b16 %v2420
      %v3445 = vunpack.c.l.b16 %v2421
      %v3446 = vunpack.c.l.b16 %v2422
      %v3447 = vunpack.c.l.b16 %v2423
      %v3448 = vunpack.c.l.b16 %v2424
      %v3449 = vunpack.c.l.b16 %v2425
      %v3450 = vunpack.c.l.b16 %v2426
      %v3451 = vunpack.c.l.b16 %v2427
      %v3452 = vunpack.c.l.b16 %v2428
      %v3453 = vunpack.c.l.b16 %v2429
      %v3454 = vunpack.c.l.b16 %v2430
      %v3455 = vunpack.c.l.b16 %v2431
      %v3456 = vunpack.c.l.b16 %v2432
      %v3457 = vunpack.c.l.b16 %v2433
      %v3458 = vunpack.c.l.b16 %v2434
      %v3459 = vunpack.c.l.b16 %v2435
      %v3460 = vunpack.c.l.b16 %v2436
      %v3461 = vunpack.c.l.b16 %v2437
      %v3462 = vunpack.c.l.b16 %v2438
      %v3463 = vunpack.c.l.b16 %v2439
      %v3464 = vunpack.c.l.b16 %v2440
      %v3465 = vunpack.c.l.b16 %v2441
      %v3466 = vunpack.c.l.b16 %v2442
      %v3467 = vunpack.c.l.b16 %v2443
      %v3468 = vunpack.c.l.b16 %v2444
      %v3469 = vunpack.c.l.b16 %v2445
      %v3470 = vunpack.c.l.b16 %v2446
      %v3471 = vunpack.c.l.b16 %v2447
      %v3472 = vunpack.c.l.b16 %v2448
      %v3473 = vunpack.c.l.b16 %v2449
      %v3474 = vunpack.c.l.b16 %v2450
      %v3475 = vunpack.c.l.b16 %v2451
      %v3476 = vunpack.c.l.b16 %v2452
      %v3477 = vunpack.c.l.b16 %v2453
      %v3478 = vunpack.c.l.b16 %v2454
      %v3479 = vunpack.c.l.b16 %v2455
      %v3480 = vunpack.c.l.b16 %v2456
      %v3481 = vunpack.c.l.b16 %v2457
      %v3482 = vunpack.c.l.b16 %v2458
      %v3483 = vunpack.c.l.b16 %v2459
      %v3484 = vunpack.c.l.b16 %v2460
      %v3485 = vunpack.c.l.b16 %v2461
      %v3486 = vunpack.c.l.b16 %v2462
      %v3487 = vunpack.c.l.b16 %v2463
      %v3488 = vunpack.c.l.b16 %v2464
      %v3489 = vunpack.c.l.b16 %v2465
      %v3490 = vunpack.c.l.b16 %v2466
      %v3491 = vunpack.c.l.b16 %v2467
      %v3492 = vunpack.c.l.b16 %v2468
      %v3493 = vunpack.c.l.b16 %v2469
      %v3494 = vunpack.c.l.b16 %v2470
      %v3495 = vunpack.c.l.b16 %v2471
      %v3496 = vunpack.c.l.b16 %v2472
      %v3497 = vunpack.c.l.b16 %v2473
      %v3498 = vunpack.c.l.b16 %v2474
      %v3499 = vunpack.c.l.b16 %v2475
      %v3500 = vunpack.c.l.b16 %v2476
      %v3501 = vunpack.c.l.b16 %v2477
      %v3502 = vunpack.c.l.b16 %v2478
      %v3503 = vunpack.c.l.b16 %v2479
      %v3504 = vunpack.c.l.b16 %v2480
      %v3505 = vunpack.c.l.b16 %v2481
      %v3506 = vunpack.c.l.b16 %v2482
      %v3507 = vunpack.c.l.b16 %v2483
      %v3508 = vunpack.c.l.b16 %v2484
      %v3509 = vunpack.c.l.b16 %v2485
      %v3510 = vunpack.c.l.b16 %v2486
      %v3511 = vunpack.c.l.b16 %v2487
      %v3512 = vunpack.c.l.b16 %v2488
      %v3513 = vunpack.c.l.b16 %v2489
      %v3514 = vunpack.c.l.b16 %v2490
      %v3515 = vunpack.c.l.b16 %v2491
      %v3516 = vunpack.c.l.b16 %v2492
      %v3517 = vunpack.c.l.b16 %v2493
      %v3518 = vunpack.c.l.b16 %v2494
      %v3519 = vunpack.c.l.b16 %v2495
      %v3520 = vunpack.c.l.b16 %v2496
      %v3521 = vunpack.c.l.b16 %v2497
      %v3522 = vunpack.c.l.b16 %v2498
      %v3523 = vunpack.c.l.b16 %v2499
      %v3524 = vunpack.c.l.b16 %v2500
      %v3525 = vunpack.c.l.b16 %v2501
      %v3526 = vunpack.c.l.b16 %v2502
      %v3527 = vunpack.c.l.b16 %v2503
      %v3528 = vunpack.c.l.b16 %v2504
      %v3529 = vunpack.c.l.b16 %v2505
      %v3530 = vunpack.c.l.b16 %v2506
      %v3531 = vunpack.c.l.b16 %v2507
      %v3532 = vunpack.c.l.b16 %v2508
      %v3533 = vunpack.c.l.b16 %v2509
      %v3534 = vunpack.c.l.b16 %v2510
      %v3535 = vunpack.c.l.b16 %v2511
      %v3536 = vunpack.c.l.b16 %v2512
      %v3537 = vunpack.c.l.b16 %v2513
      %v3538 = vunpack.c.l.b16 %v2514
      %v3539 = vunpack.c.l.b16 %v2515
      %v3540 = vunpack.c.l.b16 %v2516
      %v3541 = vunpack.c.l.b16 %v2517
      %v3542 = vunpack.c.l.b16 %v2518
      %v3543 = vpack.c.b16 %v3400, %v3399
      %v3544 = vpack.c.b16 %v3402, %v3401
      %v3545 = vpack.c.b16 %v3404, %v3403
      %v3546 = vpack.c.b16 %v3406, %v3405
      %v3547 = vpack.c.b16 %v3408, %v3407
      %v3548 = vpack.c.b16 %v3410, %v3409
      %v3549 = vpack.c.b16 %v3412, %v3411
      %v3550 = vpack.c.b16 %v3414, %v3413
      %v3551 = vpack.c.b16 %v3416, %v3415
      %v3552 = vpack.c.b16 %v3418, %v3417
      %v3553 = vpack.c.b16 %v3420, %v3419
      %v3554 = vpack.c.b16 %v3422, %v3421
      %v3555 = vpack.c.b16 %v3424, %v3423
      %v3556 = vpack.c.b16 %v3426, %v3425
      %v3557 = vpack.c.b16 %v3428, %v3427
      %v3558 = vpack.c.b16 %v3430, %v3429
      %v3559 = vpack.c.b16 %v3432, %v3431
      %v3560 = vpack.c.b16 %v3434, %v3433
      %v3561 = vpack.c.b16 %v3436, %v3435
      %v3562 = vpack.c.b16 %v3438, %v3437
      %v3563 = vpack.c.b16 %v3440, %v3439
      %v3564 = vpack.c.b16 %v3442, %v3441
      %v3565 = vpack.c.b16 %v3444, %v3443
      %v3566 = vpack.c.b16 %v3446, %v3445
      %v3567 = vpack.c.b16 %v3448, %v3447
      %v3568 = vpack.c.b16 %v3450, %v3449
      %v3569 = vpack.c.b16 %v3452, %v3451
      %v3570 = vpack.c.b16 %v3454, %v3453
      %v3571 = vpack.c.b16 %v3456, %v3455
      %v3572 = vpack.c.b16 %v3458, %v3457
      %v3573 = vpack.c.b16 %v3460, %v3459
      %v3574 = vpack.c.b16 %v3462, %v3461
      %v3575 = vpack.c.b16 %v3464, %v3463
      %v3576 = vpack.c.b16 %v3466, %v3465
      %v3577 = vpack.c.b16 %v3468, %v3467
      %v3578 = vpack.c.b16 %v3470, %v3469
      %v3579 = vpack.c.b16 %v3472, %v3471
      %v3580 = vpack.c.b16 %v3474, %v3473
      %v3581 = vpack.c.b16 %v3476, %v3475
      %v3582 = vpack.c.b16 %v3478, %v3477
      %v3583 = vpack.c.b16 %v3480, %v3479
      %v3584 = vpack.c.b16 %v3482, %v3481
      %v3585 = vpack.c.b16 %v3484, %v3483
      %v3586 = vpack.c.b16 %v3486, %v3485
      %v3587 = vpack.c.b16 %v3488, %v3487
      %v3588 = vpack.c.b16 %v3490, %v3489
      %v3589 = vpack.c.b16 %v3492, %v3491
      %v3590 = vpack.c.b16 %v3494, %v3493
      %v3591 = vpack.c.b16 %v3496, %v3495
      %v3592 = vpack.c.b16 %v3498, %v3497
      %v3593 = vpack.c.b16 %v3500, %v3499
      %v3594 = vpack.c.b16 %v3502, %v3501
      %v3595 = vpack.c.b16 %v3504, %v3503
      %v3596 = vpack.c.b16 %v3506, %v3505
      %v3597 = vpack.c.b16 %v3508, %v3507
      %v3598 = vpack.c.b16 %v3510, %v3509
      %v3599 = vpack.c.b16 %v3512, %v3511
      %v3600 = vpack.c.b16 %v3514, %v3513
      %v3601 = vpack.c.b16 %v3516, %v3515
      %v3602 = vpack.c.b16 %v3518, %v3517
      %v3603 = vpack.c.b16 %v3520, %v3519
      %v3604 = vpack.c.b16 %v3522, %v3521
      %v3605 = vpack.c.b16 %v3524, %v3523
      %v3606 = vpack.c.b16 %v3526, %v3525
      %v3607 = vpack.c.b16 %v3528, %v3527
      %v3608 = vpack.c.b16 %v3530, %v3529
      %v3609 = vpack.c.b16 %v3532, %v3531
      %v3610 = vpack.c.b16 %v3534, %v3533
      %v3611 = vpack.c.b16 %v3536, %v3535
      %v3612 = vpack.c.b16 %v3538, %v3537
      %v3613 = vpack.c.b16 %v3540, %v3539
      %v3614 = vpack.c.b16 %v3542, %v3541
      %3687 = vmatprep.subr.bf16.mxu0 0
      %3688 = vmatpush1.bf16.msra.mxu0 %v3550
      %3689 = vmatprep.subr.bf16.mxu0 0
      %3690 = vmatpush1.bf16.msra.mxu0 %v3549
      %3691 = vmatprep.subr.bf16.mxu0 0
      %3692 = vmatpush1.bf16.msra.mxu0 %v3548
      %3693 = vmatprep.subr.bf16.mxu0 0
      %3694 = vmatpush1.bf16.msra.mxu0 %v3547
      %3695 = vmatprep.subr.bf16.mxu0 0
      %3696 = vmatpush1.bf16.msra.mxu0 %v3546
      %3697 = vmatprep.subr.bf16.mxu0 0
      %3698 = vmatpush1.bf16.msra.mxu0 %v3545
      %3699 = vmatprep.subr.bf16.mxu0 0
      %3700 = vmatpush1.bf16.msra.mxu0 %v3544
      %3701 = vmatprep.subr.bf16.mxu0 0
      %3702 = vmatpush1.bf16.msra.mxu0 %v3543
      %3703 = vmatprep.subr.bf16.mxu0 0
      %3704 = vmatpush2.bf16.msra.mxu0 %v3558
      %3705 = vmatprep.subr.bf16.mxu0 0
      %3706 = vmatpush2.bf16.msra.mxu0 %v3557
      %3707 = vmatprep.subr.bf16.mxu0 0
      %3708 = vmatpush2.bf16.msra.mxu0 %v3556
      %3709 = vmatprep.subr.bf16.mxu0 0
      %3710 = vmatpush2.bf16.msra.mxu0 %v3555
      %3711 = vmatprep.subr.bf16.mxu0 0
      %3712 = vmatpush2.bf16.msra.mxu0 %v3554
      %3713 = vmatprep.subr.bf16.mxu0 0
      %3714 = vmatpush2.bf16.msra.mxu0 %v3553
      %3715 = vmatprep.subr.bf16.mxu0 0
      %3716 = vmatpush2.bf16.msra.mxu0 %v3552
      %3717 = vmatprep.subr.bf16.mxu0 0
      %3718 = vmatpush2.bf16.msra.mxu0 %v3551
      %3719 = vmatprep.mubr.bf16.mxu0 %v2968
      %3720 = vmatmul.mubr.bf16.gmra.mxu0 %v2967
      %v3721 = vpop.f32.mrf.mxu0
      %v3722 = vadd.f32 0.0, %v3721
      %v3723 = vpop.f32.mrf.mxu0
      %v3724 = vpop.f32.mrf.mxu0
      %v3725 = vadd.f32 0.0, %v3724
      %v3726 = vpop.f32.mrf.mxu0
      %3727 = vmatprep.mubr.bf16.mxu0 %v2977
      %3728 = vmatmul.mubr.bf16.gmra.mxu0 %v2976
      %v3729 = vpop.f32.mrf.mxu0
      %v3730 = vadd.f32 0.0, %v3729
      %v3731 = vpop.f32.mrf.mxu0
      %v3732 = vpop.f32.mrf.mxu0
      %v3733 = vadd.f32 0.0, %v3732
      %v3734 = vpop.f32.mrf.mxu0
      %3735 = vmatprep.mubr.bf16.mxu0 %v2986
      %3736 = vmatmul.mubr.bf16.gmra.mxu0 %v2985
      %v3737 = vpop.f32.mrf.mxu0
      %v3738 = vadd.f32 0.0, %v3737
      %v3739 = vpop.f32.mrf.mxu0
      %v3740 = vpop.f32.mrf.mxu0
      %v3741 = vadd.f32 0.0, %v3740
      %v3742 = vpop.f32.mrf.mxu0
      %3743 = vmatprep.mubr.bf16.mxu0 %v2995
      %3744 = vmatmul.mubr.bf16.gmra.mxu0 %v2994
      %v3745 = vpop.f32.mrf.mxu0
      %v3746 = vadd.f32 0.0, %v3745
      %v3747 = vpop.f32.mrf.mxu0
      %v3748 = vpop.f32.mrf.mxu0
      %v3749 = vadd.f32 0.0, %v3748
      %v3750 = vpop.f32.mrf.mxu0
      %3751 = vmatprep.mubr.bf16.mxu0 %v3004
      %3752 = vmatmul.mubr.bf16.gmra.mxu0 %v3003
      %v3753 = vpop.f32.mrf.mxu0
      %v3754 = vadd.f32 0.0, %v3753
      %v3755 = vpop.f32.mrf.mxu0
      %v3756 = vpop.f32.mrf.mxu0
      %v3757 = vadd.f32 0.0, %v3756
      %v3758 = vpop.f32.mrf.mxu0
      %3759 = vmatprep.mubr.bf16.mxu0 %v3013
      %3760 = vmatmul.mubr.bf16.gmra.mxu0 %v3012
      %v3761 = vpop.f32.mrf.mxu0
      %v3762 = vadd.f32 0.0, %v3761
      %v3763 = vpop.f32.mrf.mxu0
      %v3764 = vpop.f32.mrf.mxu0
      %v3765 = vadd.f32 0.0, %v3764
      %v3766 = vpop.f32.mrf.mxu0
      %3767 = vmatprep.mubr.bf16.mxu0 %v3022
      %3768 = vmatmul.mubr.bf16.gmra.mxu0 %v3021
      %v3769 = vpop.f32.mrf.mxu0
      %v3770 = vadd.f32 0.0, %v3769
      %v3771 = vpop.f32.mrf.mxu0
      %v3772 = vpop.f32.mrf.mxu0
      %v3773 = vadd.f32 0.0, %v3772
      %v3774 = vpop.f32.mrf.mxu0
      %3775 = vmatprep.mubr.bf16.mxu0 %v3031
      %3776 = vmatmul.mubr.bf16.gmra.mxu0 %v3030
      %v3777 = vpop.f32.mrf.mxu0
      %v3778 = vadd.f32 0.0, %v3777
      %v3779 = vpop.f32.mrf.mxu0
      %v3780 = vpop.f32.mrf.mxu0
      %v3781 = vadd.f32 0.0, %v3780
      %v3782 = vpop.f32.mrf.mxu0
      %3783 = vmatprep.mubr.bf16.mxu0 %v3040
      %3784 = vmatmul.mubr.bf16.gmra.mxu0 %v3039
      %v3785 = vpop.f32.mrf.mxu0
      %v3786 = vadd.f32 0.0, %v3785
      %v3787 = vpop.f32.mrf.mxu0
      %v3788 = vpop.f32.mrf.mxu0
      %v3789 = vadd.f32 0.0, %v3788
      %v3790 = vpop.f32.mrf.mxu0
      %3791 = vmatprep.mubr.bf16.mxu0 %v3049
      %3792 = vmatmul.mubr.bf16.gmra.mxu0 %v3048
      %v3793 = vpop.f32.mrf.mxu0
      %v3794 = vadd.f32 0.0, %v3793
      %v3795 = vpop.f32.mrf.mxu0
      %v3796 = vpop.f32.mrf.mxu0
      %v3797 = vadd.f32 0.0, %v3796
      %v3798 = vpop.f32.mrf.mxu0
      %3799 = vmatprep.mubr.bf16.mxu0 %v3058
      %3800 = vmatmul.mubr.bf16.gmra.mxu0 %v3057
      %v3801 = vpop.f32.mrf.mxu0
      %v3802 = vadd.f32 0.0, %v3801
      %v3803 = vpop.f32.mrf.mxu0
      %v3804 = vpop.f32.mrf.mxu0
      %v3805 = vadd.f32 0.0, %v3804
      %v3806 = vpop.f32.mrf.mxu0
      %3807 = vmatprep.mubr.bf16.mxu0 %v3067
      %3808 = vmatmul.mubr.bf16.gmra.mxu0 %v3066
      %v3809 = vpop.f32.mrf.mxu0
      %v3810 = vadd.f32 0.0, %v3809
      %v3811 = vpop.f32.mrf.mxu0
      %v3812 = vpop.f32.mrf.mxu0
      %v3813 = vadd.f32 0.0, %v3812
      %v3814 = vpop.f32.mrf.mxu0
      %3815 = vmatprep.mubr.bf16.mxu0 %v3076
      %3816 = vmatmul.mubr.bf16.gmra.mxu0 %v3075
      %v3817 = vpop.f32.mrf.mxu0
      %v3818 = vadd.f32 0.0, %v3817
      %v3819 = vpop.f32.mrf.mxu0
      %v3820 = vpop.f32.mrf.mxu0
      %v3821 = vadd.f32 0.0, %v3820
      %v3822 = vpop.f32.mrf.mxu0
      %3823 = vmatprep.mubr.bf16.mxu0 %v3085
      %3824 = vmatmul.mubr.bf16.gmra.mxu0 %v3084
      %v3825 = vpop.f32.mrf.mxu0
      %v3826 = vadd.f32 0.0, %v3825
      %v3827 = vpop.f32.mrf.mxu0
      %v3828 = vpop.f32.mrf.mxu0
      %v3829 = vadd.f32 0.0, %v3828
      %v3830 = vpop.f32.mrf.mxu0
      %3831 = vmatprep.mubr.bf16.mxu0 %v3094
      %3832 = vmatmul.mubr.bf16.gmra.mxu0 %v3093
      %v3833 = vpop.f32.mrf.mxu0
      %v3834 = vadd.f32 0.0, %v3833
      %v3835 = vpop.f32.mrf.mxu0
      %v3836 = vpop.f32.mrf.mxu0
      %v3837 = vadd.f32 0.0, %v3836
      %v3838 = vpop.f32.mrf.mxu0
      %3839 = vmatprep.mubr.bf16.mxu0 %v3103
      %3840 = vmatmul.mubr.bf16.gmra.mxu0 %v3102
      %v3841 = vpop.f32.mrf.mxu0
      %v3842 = vadd.f32 0.0, %v3841
      %v3843 = vpop.f32.mrf.mxu0
      %v3844 = vpop.f32.mrf.mxu0
      %v3845 = vadd.f32 0.0, %v3844
      %v3846 = vpop.f32.mrf.mxu0
      %3847 = vdwg.mxu0
      %3848 = vmatprep.subr.bf16.mxu0 0
      %3849 = vmatpush1.bf16.msra.mxu0 %v3566
      %3850 = vmatprep.subr.bf16.mxu0 0
      %3851 = vmatpush1.bf16.msra.mxu0 %v3565
      %3852 = vmatprep.subr.bf16.mxu0 0
      %3853 = vmatpush1.bf16.msra.mxu0 %v3564
      %3854 = vmatprep.subr.bf16.mxu0 0
      %3855 = vmatpush1.bf16.msra.mxu0 %v3563
      %3856 = vmatprep.subr.bf16.mxu0 0
      %3857 = vmatpush1.bf16.msra.mxu0 %v3562
      %3858 = vmatprep.subr.bf16.mxu0 0
      %3859 = vmatpush1.bf16.msra.mxu0 %v3561
      %3860 = vmatprep.subr.bf16.mxu0 0
      %3861 = vmatpush1.bf16.msra.mxu0 %v3560
      %3862 = vmatprep.subr.bf16.mxu0 0
      %3863 = vmatpush1.bf16.msra.mxu0 %v3559
      %3864 = vmatprep.subr.bf16.mxu0 0
      %3865 = vmatpush2.bf16.msra.mxu0 %v3574
      %3866 = vmatprep.subr.bf16.mxu0 0
      %3867 = vmatpush2.bf16.msra.mxu0 %v3573
      %3868 = vmatprep.subr.bf16.mxu0 0
      %3869 = vmatpush2.bf16.msra.mxu0 %v3572
      %3870 = vmatprep.subr.bf16.mxu0 0
      %3871 = vmatpush2.bf16.msra.mxu0 %v3571
      %3872 = vmatprep.subr.bf16.mxu0 0
      %3873 = vmatpush2.bf16.msra.mxu0 %v3570
      %3874 = vmatprep.subr.bf16.mxu0 0
      %3875 = vmatpush2.bf16.msra.mxu0 %v3569
      %3876 = vmatprep.subr.bf16.mxu0 0
      %3877 = vmatpush2.bf16.msra.mxu0 %v3568
      %3878 = vmatprep.subr.bf16.mxu0 0
      %3879 = vmatpush2.bf16.msra.mxu0 %v3567
      %3880 = vmatprep.mubr.bf16.mxu0 %v2970
      %3881 = vmatmul.mubr.bf16.gmra.mxu0 %v2969
      %v3882 = vpop.f32.mrf.mxu0
      %v3883 = vadd.f32 %v3722, %v3882
      %v3884 = vpop.f32.mrf.mxu0
      %v3885 = vpop.f32.mrf.mxu0
      %v3886 = vadd.f32 %v3725, %v3885
      %v3887 = vpop.f32.mrf.mxu0
      %3888 = vmatprep.mubr.bf16.mxu0 %v2979
      %3889 = vmatmul.mubr.bf16.gmra.mxu0 %v2978
      %v3890 = vpop.f32.mrf.mxu0
      %v3891 = vadd.f32 %v3730, %v3890
      %v3892 = vpop.f32.mrf.mxu0
      %v3893 = vpop.f32.mrf.mxu0
      %v3894 = vadd.f32 %v3733, %v3893
      %v3895 = vpop.f32.mrf.mxu0
      %3896 = vmatprep.mubr.bf16.mxu0 %v2988
      %3897 = vmatmul.mubr.bf16.gmra.mxu0 %v2987
      %v3898 = vpop.f32.mrf.mxu0
      %v3899 = vadd.f32 %v3738, %v3898
      %v3900 = vpop.f32.mrf.mxu0
      %v3901 = vpop.f32.mrf.mxu0
      %v3902 = vadd.f32 %v3741, %v3901
      %v3903 = vpop.f32.mrf.mxu0
      %3904 = vmatprep.mubr.bf16.mxu0 %v2997
      %3905 = vmatmul.mubr.bf16.gmra.mxu0 %v2996
      %v3906 = vpop.f32.mrf.mxu0
      %v3907 = vadd.f32 %v3746, %v3906
      %v3908 = vpop.f32.mrf.mxu0
      %v3909 = vpop.f32.mrf.mxu0
      %v3910 = vadd.f32 %v3749, %v3909
      %v3911 = vpop.f32.mrf.mxu0
      %3912 = vmatprep.mubr.bf16.mxu0 %v3006
      %3913 = vmatmul.mubr.bf16.gmra.mxu0 %v3005
      %v3914 = vpop.f32.mrf.mxu0
      %v3915 = vadd.f32 %v3754, %v3914
      %v3916 = vpop.f32.mrf.mxu0
      %v3917 = vpop.f32.mrf.mxu0
      %v3918 = vadd.f32 %v3757, %v3917
      %v3919 = vpop.f32.mrf.mxu0
      %3920 = vmatprep.mubr.bf16.mxu0 %v3015
      %3921 = vmatmul.mubr.bf16.gmra.mxu0 %v3014
      %v3922 = vpop.f32.mrf.mxu0
      %v3923 = vadd.f32 %v3762, %v3922
      %v3924 = vpop.f32.mrf.mxu0
      %v3925 = vpop.f32.mrf.mxu0
      %v3926 = vadd.f32 %v3765, %v3925
      %v3927 = vpop.f32.mrf.mxu0
      %3928 = vmatprep.mubr.bf16.mxu0 %v3024
      %3929 = vmatmul.mubr.bf16.gmra.mxu0 %v3023
      %v3930 = vpop.f32.mrf.mxu0
      %v3931 = vadd.f32 %v3770, %v3930
      %v3932 = vpop.f32.mrf.mxu0
      %v3933 = vpop.f32.mrf.mxu0
      %v3934 = vadd.f32 %v3773, %v3933
      %v3935 = vpop.f32.mrf.mxu0
      %3936 = vmatprep.mubr.bf16.mxu0 %v3033
      %3937 = vmatmul.mubr.bf16.gmra.mxu0 %v3032
      %v3938 = vpop.f32.mrf.mxu0
      %v3939 = vadd.f32 %v3778, %v3938
      %v3940 = vpop.f32.mrf.mxu0
      %v3941 = vpop.f32.mrf.mxu0
      %v3942 = vadd.f32 %v3781, %v3941
      %v3943 = vpop.f32.mrf.mxu0
      %3944 = vmatprep.mubr.bf16.mxu0 %v3042
      %3945 = vmatmul.mubr.bf16.gmra.mxu0 %v3041
      %v3946 = vpop.f32.mrf.mxu0
      %v3947 = vadd.f32 %v3786, %v3946
      %v3948 = vpop.f32.mrf.mxu0
      %v3949 = vpop.f32.mrf.mxu0
      %v3950 = vadd.f32 %v3789, %v3949
      %v3951 = vpop.f32.mrf.mxu0
      %3952 = vmatprep.mubr.bf16.mxu0 %v3051
      %3953 = vmatmul.mubr.bf16.gmra.mxu0 %v3050
      %v3954 = vpop.f32.mrf.mxu0
      %v3955 = vadd.f32 %v3794, %v3954
      %v3956 = vpop.f32.mrf.mxu0
      %v3957 = vpop.f32.mrf.mxu0
      %v3958 = vadd.f32 %v3797, %v3957
      %v3959 = vpop.f32.mrf.mxu0
      %3960 = vmatprep.mubr.bf16.mxu0 %v3060
      %3961 = vmatmul.mubr.bf16.gmra.mxu0 %v3059
      %v3962 = vpop.f32.mrf.mxu0
      %v3963 = vadd.f32 %v3802, %v3962
      %v3964 = vpop.f32.mrf.mxu0
      %v3965 = vpop.f32.mrf.mxu0
      %v3966 = vadd.f32 %v3805, %v3965
      %v3967 = vpop.f32.mrf.mxu0
      %3968 = vmatprep.mubr.bf16.mxu0 %v3069
      %3969 = vmatmul.mubr.bf16.gmra.mxu0 %v3068
      %v3970 = vpop.f32.mrf.mxu0
      %v3971 = vadd.f32 %v3810, %v3970
      %v3972 = vpop.f32.mrf.mxu0
      %v3973 = vpop.f32.mrf.mxu0
      %v3974 = vadd.f32 %v3813, %v3973
      %v3975 = vpop.f32.mrf.mxu0
      %3976 = vmatprep.mubr.bf16.mxu0 %v3078
      %3977 = vmatmul.mubr.bf16.gmra.mxu0 %v3077
      %v3978 = vpop.f32.mrf.mxu0
      %v3979 = vadd.f32 %v3818, %v3978
      %v3980 = vpop.f32.mrf.mxu0
      %v3981 = vpop.f32.mrf.mxu0
      %v3982 = vadd.f32 %v3821, %v3981
      %v3983 = vpop.f32.mrf.mxu0
      %3984 = vmatprep.mubr.bf16.mxu0 %v3087
      %3985 = vmatmul.mubr.bf16.gmra.mxu0 %v3086
      %v3986 = vpop.f32.mrf.mxu0
      %v3987 = vadd.f32 %v3826, %v3986
      %v3988 = vpop.f32.mrf.mxu0
      %v3989 = vpop.f32.mrf.mxu0
      %v3990 = vadd.f32 %v3829, %v3989
      %v3991 = vpop.f32.mrf.mxu0
      %3992 = vmatprep.mubr.bf16.mxu0 %v3096
      %3993 = vmatmul.mubr.bf16.gmra.mxu0 %v3095
      %v3994 = vpop.f32.mrf.mxu0
      %v3995 = vadd.f32 %v3834, %v3994
      %v3996 = vpop.f32.mrf.mxu0
      %v3997 = vpop.f32.mrf.mxu0
      %v3998 = vadd.f32 %v3837, %v3997
      %v3999 = vpop.f32.mrf.mxu0
      %4000 = vmatprep.mubr.bf16.mxu0 %v3105
      %4001 = vmatmul.mubr.bf16.gmra.mxu0 %v3104
      %v4002 = vpop.f32.mrf.mxu0
      %v4003 = vadd.f32 %v3842, %v4002
      %v4004 = vpop.f32.mrf.mxu0
      %v4005 = vpop.f32.mrf.mxu0
      %v4006 = vadd.f32 %v3845, %v4005
      %v4007 = vpop.f32.mrf.mxu0
      %4008 = vdwg.mxu0
      %4009 = vmatprep.subr.bf16.mxu0 0
      %4010 = vmatpush1.bf16.msra.mxu0 %v3582
      %4011 = vmatprep.subr.bf16.mxu0 0
      %4012 = vmatpush1.bf16.msra.mxu0 %v3581
      %4013 = vmatprep.subr.bf16.mxu0 0
      %4014 = vmatpush1.bf16.msra.mxu0 %v3580
      %4015 = vmatprep.subr.bf16.mxu0 0
      %4016 = vmatpush1.bf16.msra.mxu0 %v3579
      %4017 = vmatprep.subr.bf16.mxu0 0
      %4018 = vmatpush1.bf16.msra.mxu0 %v3578
      %4019 = vmatprep.subr.bf16.mxu0 0
      %4020 = vmatpush1.bf16.msra.mxu0 %v3577
      %4021 = vmatprep.subr.bf16.mxu0 0
      %4022 = vmatpush1.bf16.msra.mxu0 %v3576
      %4023 = vmatprep.subr.bf16.mxu0 0
      %4024 = vmatpush1.bf16.msra.mxu0 %v3575
      %4025 = vmatprep.subr.bf16.mxu0 0
      %4026 = vmatpush2.bf16.msra.mxu0 %v3590
      %4027 = vmatprep.subr.bf16.mxu0 0
      %4028 = vmatpush2.bf16.msra.mxu0 %v3589
      %4029 = vmatprep.subr.bf16.mxu0 0
      %4030 = vmatpush2.bf16.msra.mxu0 %v3588
      %4031 = vmatprep.subr.bf16.mxu0 0
      %4032 = vmatpush2.bf16.msra.mxu0 %v3587
      %4033 = vmatprep.subr.bf16.mxu0 0
      %4034 = vmatpush2.bf16.msra.mxu0 %v3586
      %4035 = vmatprep.subr.bf16.mxu0 0
      %4036 = vmatpush2.bf16.msra.mxu0 %v3585
      %4037 = vmatprep.subr.bf16.mxu0 0
      %4038 = vmatpush2.bf16.msra.mxu0 %v3584
      %4039 = vmatprep.subr.bf16.mxu0 0
      %4040 = vmatpush2.bf16.msra.mxu0 %v3583
      %4041 = vmatprep.mubr.bf16.mxu0 %v2972
      %4042 = vmatmul.mubr.bf16.gmra.mxu0 %v2971
      %v4043 = vpop.f32.mrf.mxu0
      %v4044 = vadd.f32 %v3883, %v4043
      %v4045 = vpop.f32.mrf.mxu0
      %v4046 = vpop.f32.mrf.mxu0
      %v4047 = vadd.f32 %v3886, %v4046
      %v4048 = vpop.f32.mrf.mxu0
      %4049 = vmatprep.mubr.bf16.mxu0 %v2981
      %4050 = vmatmul.mubr.bf16.gmra.mxu0 %v2980
      %v4051 = vpop.f32.mrf.mxu0
      %v4052 = vadd.f32 %v3891, %v4051
      %v4053 = vpop.f32.mrf.mxu0
      %v4054 = vpop.f32.mrf.mxu0
      %v4055 = vadd.f32 %v3894, %v4054
      %v4056 = vpop.f32.mrf.mxu0
      %4057 = vmatprep.mubr.bf16.mxu0 %v2990
      %4058 = vmatmul.mubr.bf16.gmra.mxu0 %v2989
      %v4059 = vpop.f32.mrf.mxu0
      %v4060 = vadd.f32 %v3899, %v4059
      %v4061 = vpop.f32.mrf.mxu0
      %v4062 = vpop.f32.mrf.mxu0
      %v4063 = vadd.f32 %v3902, %v4062
      %v4064 = vpop.f32.mrf.mxu0
      %4065 = vmatprep.mubr.bf16.mxu0 %v2999
      %4066 = vmatmul.mubr.bf16.gmra.mxu0 %v2998
      %v4067 = vpop.f32.mrf.mxu0
      %v4068 = vadd.f32 %v3907, %v4067
      %v4069 = vpop.f32.mrf.mxu0
      %v4070 = vpop.f32.mrf.mxu0
      %v4071 = vadd.f32 %v3910, %v4070
      %v4072 = vpop.f32.mrf.mxu0
      %4073 = vmatprep.mubr.bf16.mxu0 %v3008
      %4074 = vmatmul.mubr.bf16.gmra.mxu0 %v3007
      %v4075 = vpop.f32.mrf.mxu0
      %v4076 = vadd.f32 %v3915, %v4075
      %v4077 = vpop.f32.mrf.mxu0
      %v4078 = vpop.f32.mrf.mxu0
      %v4079 = vadd.f32 %v3918, %v4078
      %v4080 = vpop.f32.mrf.mxu0
      %4081 = vmatprep.mubr.bf16.mxu0 %v3017
      %4082 = vmatmul.mubr.bf16.gmra.mxu0 %v3016
      %v4083 = vpop.f32.mrf.mxu0
      %v4084 = vadd.f32 %v3923, %v4083
      %v4085 = vpop.f32.mrf.mxu0
      %v4086 = vpop.f32.mrf.mxu0
      %v4087 = vadd.f32 %v3926, %v4086
      %v4088 = vpop.f32.mrf.mxu0
      %4089 = vmatprep.mubr.bf16.mxu0 %v3026
      %4090 = vmatmul.mubr.bf16.gmra.mxu0 %v3025
      %v4091 = vpop.f32.mrf.mxu0
      %v4092 = vadd.f32 %v3931, %v4091
      %v4093 = vpop.f32.mrf.mxu0
      %v4094 = vpop.f32.mrf.mxu0
      %v4095 = vadd.f32 %v3934, %v4094
      %v4096 = vpop.f32.mrf.mxu0
      %4097 = vmatprep.mubr.bf16.mxu0 %v3035
      %4098 = vmatmul.mubr.bf16.gmra.mxu0 %v3034
      %v4099 = vpop.f32.mrf.mxu0
      %v4100 = vadd.f32 %v3939, %v4099
      %v4101 = vpop.f32.mrf.mxu0
      %v4102 = vpop.f32.mrf.mxu0
      %v4103 = vadd.f32 %v3942, %v4102
      %v4104 = vpop.f32.mrf.mxu0
      %4105 = vmatprep.mubr.bf16.mxu0 %v3044
      %4106 = vmatmul.mubr.bf16.gmra.mxu0 %v3043
      %v4107 = vpop.f32.mrf.mxu0
      %v4108 = vadd.f32 %v3947, %v4107
      %v4109 = vpop.f32.mrf.mxu0
      %v4110 = vpop.f32.mrf.mxu0
      %v4111 = vadd.f32 %v3950, %v4110
      %v4112 = vpop.f32.mrf.mxu0
      %4113 = vmatprep.mubr.bf16.mxu0 %v3053
      %4114 = vmatmul.mubr.bf16.gmra.mxu0 %v3052
      %v4115 = vpop.f32.mrf.mxu0
      %v4116 = vadd.f32 %v3955, %v4115
      %v4117 = vpop.f32.mrf.mxu0
      %v4118 = vpop.f32.mrf.mxu0
      %v4119 = vadd.f32 %v3958, %v4118
      %v4120 = vpop.f32.mrf.mxu0
      %4121 = vmatprep.mubr.bf16.mxu0 %v3062
      %4122 = vmatmul.mubr.bf16.gmra.mxu0 %v3061
      %v4123 = vpop.f32.mrf.mxu0
      %v4124 = vadd.f32 %v3963, %v4123
      %v4125 = vpop.f32.mrf.mxu0
      %v4126 = vpop.f32.mrf.mxu0
      %v4127 = vadd.f32 %v3966, %v4126
      %v4128 = vpop.f32.mrf.mxu0
      %4129 = vmatprep.mubr.bf16.mxu0 %v3071
      %4130 = vmatmul.mubr.bf16.gmra.mxu0 %v3070
      %v4131 = vpop.f32.mrf.mxu0
      %v4132 = vadd.f32 %v3971, %v4131
      %v4133 = vpop.f32.mrf.mxu0
      %v4134 = vpop.f32.mrf.mxu0
      %v4135 = vadd.f32 %v3974, %v4134
      %v4136 = vpop.f32.mrf.mxu0
      %4137 = vmatprep.mubr.bf16.mxu0 %v3080
      %4138 = vmatmul.mubr.bf16.gmra.mxu0 %v3079
      %v4139 = vpop.f32.mrf.mxu0
      %v4140 = vadd.f32 %v3979, %v4139
      %v4141 = vpop.f32.mrf.mxu0
      %v4142 = vpop.f32.mrf.mxu0
      %v4143 = vadd.f32 %v3982, %v4142
      %v4144 = vpop.f32.mrf.mxu0
      %4145 = vmatprep.mubr.bf16.mxu0 %v3089
      %4146 = vmatmul.mubr.bf16.gmra.mxu0 %v3088
      %v4147 = vpop.f32.mrf.mxu0
      %v4148 = vadd.f32 %v3987, %v4147
      %v4149 = vpop.f32.mrf.mxu0
      %v4150 = vpop.f32.mrf.mxu0
      %v4151 = vadd.f32 %v3990, %v4150
      %v4152 = vpop.f32.mrf.mxu0
      %4153 = vmatprep.mubr.bf16.mxu0 %v3098
      %4154 = vmatmul.mubr.bf16.gmra.mxu0 %v3097
      %v4155 = vpop.f32.mrf.mxu0
      %v4156 = vadd.f32 %v3995, %v4155
      %v4157 = vpop.f32.mrf.mxu0
      %v4158 = vpop.f32.mrf.mxu0
      %v4159 = vadd.f32 %v3998, %v4158
      %v4160 = vpop.f32.mrf.mxu0
      %4161 = vmatprep.mubr.bf16.mxu0 %v3107
      %4162 = vmatmul.mubr.bf16.gmra.mxu0 %v3106
      %v4163 = vpop.f32.mrf.mxu0
      %v4164 = vadd.f32 %v4003, %v4163
      %v4165 = vpop.f32.mrf.mxu0
      %v4166 = vpop.f32.mrf.mxu0
      %v4167 = vadd.f32 %v4006, %v4166
      %v4168 = vpop.f32.mrf.mxu0
      %4169 = vdwg.mxu0
      %4170 = vmatprep.subr.bf16.mxu0 0
      %4171 = vmatpush1.bf16.msra.mxu0 %v3598
      %4172 = vmatprep.subr.bf16.mxu0 0
      %4173 = vmatpush1.bf16.msra.mxu0 %v3597
      %4174 = vmatprep.subr.bf16.mxu0 0
      %4175 = vmatpush1.bf16.msra.mxu0 %v3596
      %4176 = vmatprep.subr.bf16.mxu0 0
      %4177 = vmatpush1.bf16.msra.mxu0 %v3595
      %4178 = vmatprep.subr.bf16.mxu0 0
      %4179 = vmatpush1.bf16.msra.mxu0 %v3594
      %4180 = vmatprep.subr.bf16.mxu0 0
      %4181 = vmatpush1.bf16.msra.mxu0 %v3593
      %4182 = vmatprep.subr.bf16.mxu0 0
      %4183 = vmatpush1.bf16.msra.mxu0 %v3592
      %4184 = vmatprep.subr.bf16.mxu0 0
      %4185 = vmatpush1.bf16.msra.mxu0 %v3591
      %4186 = vmatprep.subr.bf16.mxu0 0
      %4187 = vmatpush2.bf16.msra.mxu0 %v3606
      %4188 = vmatprep.subr.bf16.mxu0 0
      %4189 = vmatpush2.bf16.msra.mxu0 %v3605
      %4190 = vmatprep.subr.bf16.mxu0 0
      %4191 = vmatpush2.bf16.msra.mxu0 %v3604
      %4192 = vmatprep.subr.bf16.mxu0 0
      %4193 = vmatpush2.bf16.msra.mxu0 %v3603
      %4194 = vmatprep.subr.bf16.mxu0 0
      %4195 = vmatpush2.bf16.msra.mxu0 %v3602
      %4196 = vmatprep.subr.bf16.mxu0 0
      %4197 = vmatpush2.bf16.msra.mxu0 %v3601
      %4198 = vmatprep.subr.bf16.mxu0 0
      %4199 = vmatpush2.bf16.msra.mxu0 %v3600
      %4200 = vmatprep.subr.bf16.mxu0 0
      %4201 = vmatpush2.bf16.msra.mxu0 %v3599
      %4202 = vmatprep.mubr.bf16.mxu0 %v2974
      %4203 = vmatmul.mubr.bf16.gmra.mxu0 %v2973
      %v4204 = vpop.f32.mrf.mxu0
      %v4205 = vadd.f32 %v4044, %v4204
      %v4206 = vpop.f32.mrf.mxu0
      %v4207 = vpop.f32.mrf.mxu0
      %v4208 = vadd.f32 %v4047, %v4207
      %v4209 = vpop.f32.mrf.mxu0
      %4210 = vmatprep.mubr.bf16.mxu0 %v2983
      %4211 = vmatmul.mubr.bf16.gmra.mxu0 %v2982
      %v4212 = vpop.f32.mrf.mxu0
      %v4213 = vadd.f32 %v4052, %v4212
      %v4214 = vpop.f32.mrf.mxu0
      %v4215 = vpop.f32.mrf.mxu0
      %v4216 = vadd.f32 %v4055, %v4215
      %v4217 = vpop.f32.mrf.mxu0
      %4218 = vmatprep.mubr.bf16.mxu0 %v2992
      %4219 = vmatmul.mubr.bf16.gmra.mxu0 %v2991
      %v4220 = vpop.f32.mrf.mxu0
      %v4221 = vadd.f32 %v4060, %v4220
      %v4222 = vpop.f32.mrf.mxu0
      %v4223 = vpop.f32.mrf.mxu0
      %v4224 = vadd.f32 %v4063, %v4223
      %v4225 = vpop.f32.mrf.mxu0
      %4226 = vmatprep.mubr.bf16.mxu0 %v3001
      %4227 = vmatmul.mubr.bf16.gmra.mxu0 %v3000
      %v4228 = vpop.f32.mrf.mxu0
      %v4229 = vadd.f32 %v4068, %v4228
      %v4230 = vpop.f32.mrf.mxu0
      %v4231 = vpop.f32.mrf.mxu0
      %v4232 = vadd.f32 %v4071, %v4231
      %v4233 = vpop.f32.mrf.mxu0
      %4234 = vmatprep.mubr.bf16.mxu0 %v3010
      %4235 = vmatmul.mubr.bf16.gmra.mxu0 %v3009
      %v4236 = vpop.f32.mrf.mxu0
      %v4237 = vadd.f32 %v4076, %v4236
      %v4238 = vpop.f32.mrf.mxu0
      %v4239 = vpop.f32.mrf.mxu0
      %v4240 = vadd.f32 %v4079, %v4239
      %v4241 = vpop.f32.mrf.mxu0
      %4242 = vmatprep.mubr.bf16.mxu0 %v3019
      %4243 = vmatmul.mubr.bf16.gmra.mxu0 %v3018
      %v4244 = vpop.f32.mrf.mxu0
      %v4245 = vadd.f32 %v4084, %v4244
      %v4246 = vpop.f32.mrf.mxu0
      %v4247 = vpop.f32.mrf.mxu0
      %v4248 = vadd.f32 %v4087, %v4247
      %v4249 = vpop.f32.mrf.mxu0
      %4250 = vmatprep.mubr.bf16.mxu0 %v3028
      %4251 = vmatmul.mubr.bf16.gmra.mxu0 %v3027
      %v4252 = vpop.f32.mrf.mxu0
      %v4253 = vadd.f32 %v4092, %v4252
      %v4254 = vpop.f32.mrf.mxu0
      %v4255 = vpop.f32.mrf.mxu0
      %v4256 = vadd.f32 %v4095, %v4255
      %v4257 = vpop.f32.mrf.mxu0
      %4258 = vmatprep.mubr.bf16.mxu0 %v3037
      %4259 = vmatmul.mubr.bf16.gmra.mxu0 %v3036
      %v4260 = vpop.f32.mrf.mxu0
      %v4261 = vadd.f32 %v4100, %v4260
      %v4262 = vpop.f32.mrf.mxu0
      %v4263 = vpop.f32.mrf.mxu0
      %v4264 = vadd.f32 %v4103, %v4263
      %v4265 = vpop.f32.mrf.mxu0
      %4266 = vmatprep.mubr.bf16.mxu0 %v3046
      %4267 = vmatmul.mubr.bf16.gmra.mxu0 %v3045
      %v4268 = vpop.f32.mrf.mxu0
      %v4269 = vadd.f32 %v4108, %v4268
      %v4270 = vpop.f32.mrf.mxu0
      %v4271 = vpop.f32.mrf.mxu0
      %v4272 = vadd.f32 %v4111, %v4271
      %v4273 = vpop.f32.mrf.mxu0
      %4274 = vmatprep.mubr.bf16.mxu0 %v3055
      %4275 = vmatmul.mubr.bf16.gmra.mxu0 %v3054
      %v4276 = vpop.f32.mrf.mxu0
      %v4277 = vadd.f32 %v4116, %v4276
      %v4278 = vpop.f32.mrf.mxu0
      %v4279 = vpop.f32.mrf.mxu0
      %v4280 = vadd.f32 %v4119, %v4279
      %v4281 = vpop.f32.mrf.mxu0
      %4282 = vmatprep.mubr.bf16.mxu0 %v3064
      %4283 = vmatmul.mubr.bf16.gmra.mxu0 %v3063
      %v4284 = vpop.f32.mrf.mxu0
      %v4285 = vadd.f32 %v4124, %v4284
      %v4286 = vpop.f32.mrf.mxu0
      %v4287 = vpop.f32.mrf.mxu0
      %v4288 = vadd.f32 %v4127, %v4287
      %v4289 = vpop.f32.mrf.mxu0
      %4290 = vmatprep.mubr.bf16.mxu0 %v3073
      %4291 = vmatmul.mubr.bf16.gmra.mxu0 %v3072
      %v4292 = vpop.f32.mrf.mxu0
      %v4293 = vadd.f32 %v4132, %v4292
      %v4294 = vpop.f32.mrf.mxu0
      %v4295 = vpop.f32.mrf.mxu0
      %v4296 = vadd.f32 %v4135, %v4295
      %v4297 = vpop.f32.mrf.mxu0
      %4298 = vmatprep.mubr.bf16.mxu0 %v3082
      %4299 = vmatmul.mubr.bf16.gmra.mxu0 %v3081
      %v4300 = vpop.f32.mrf.mxu0
      %v4301 = vadd.f32 %v4140, %v4300
      %v4302 = vpop.f32.mrf.mxu0
      %v4303 = vpop.f32.mrf.mxu0
      %v4304 = vadd.f32 %v4143, %v4303
      %v4305 = vpop.f32.mrf.mxu0
      %4306 = vmatprep.mubr.bf16.mxu0 %v3091
      %4307 = vmatmul.mubr.bf16.gmra.mxu0 %v3090
      %v4308 = vpop.f32.mrf.mxu0
      %v4309 = vadd.f32 %v4148, %v4308
      %v4310 = vpop.f32.mrf.mxu0
      %v4311 = vpop.f32.mrf.mxu0
      %v4312 = vadd.f32 %v4151, %v4311
      %v4313 = vpop.f32.mrf.mxu0
      %4314 = vmatprep.mubr.bf16.mxu0 %v3100
      %4315 = vmatmul.mubr.bf16.gmra.mxu0 %v3099
      %v4316 = vpop.f32.mrf.mxu0
      %v4317 = vadd.f32 %v4156, %v4316
      %v4318 = vpop.f32.mrf.mxu0
      %v4319 = vpop.f32.mrf.mxu0
      %v4320 = vadd.f32 %v4159, %v4319
      %v4321 = vpop.f32.mrf.mxu0
      %4322 = vmatprep.mubr.bf16.mxu0 %v3109
      %4323 = vmatmul.mubr.bf16.gmra.mxu0 %v3108
      %v4324 = vpop.f32.mrf.mxu0
      %v4325 = vadd.f32 %v4164, %v4324
      %v4326 = vpop.f32.mrf.mxu0
      %v4327 = vpop.f32.mrf.mxu0
      %v4328 = vadd.f32 %v4167, %v4327
      %v4329 = vpop.f32.mrf.mxu0
      %4330 = vdwg.mxu0
      %4331 = vmatprep.subr.bf16.mxu0 0
      %4332 = vmatpush1.bf16.msra.mxu0 %v3614
      %4333 = vmatprep.subr.bf16.mxu0 0
      %4334 = vmatpush1.bf16.msra.mxu0 %v3613
      %4335 = vmatprep.subr.bf16.mxu0 0
      %4336 = vmatpush1.bf16.msra.mxu0 %v3612
      %4337 = vmatprep.subr.bf16.mxu0 0
      %4338 = vmatpush1.bf16.msra.mxu0 %v3611
      %4339 = vmatprep.subr.bf16.mxu0 0
      %4340 = vmatpush1.bf16.msra.mxu0 %v3610
      %4341 = vmatprep.subr.bf16.mxu0 0
      %4342 = vmatpush1.bf16.msra.mxu0 %v3609
      %4343 = vmatprep.subr.bf16.mxu0 0
      %4344 = vmatpush1.bf16.msra.mxu0 %v3608
      %4345 = vmatprep.subr.bf16.mxu0 0
      %4346 = vmatpush1.bf16.msra.mxu0 %v3607
      %4347 = vmatprep.subr.bf16.mxu0 0
      %4348 = vmatpush2.bf16.msra.mxu0 0
      %4349 = vmatprep.subr.bf16.mxu0 0
      %4350 = vmatpush2.bf16.msra.mxu0 0
      %4351 = vmatprep.subr.bf16.mxu0 0
      %4352 = vmatpush2.bf16.msra.mxu0 0
      %4353 = vmatprep.subr.bf16.mxu0 0
      %4354 = vmatpush2.bf16.msra.mxu0 0
      %4355 = vmatprep.subr.bf16.mxu0 0
      %4356 = vmatpush2.bf16.msra.mxu0 0
      %4357 = vmatprep.subr.bf16.mxu0 0
      %4358 = vmatpush2.bf16.msra.mxu0 0
      %4359 = vmatprep.subr.bf16.mxu0 0
      %4360 = vmatpush2.bf16.msra.mxu0 0
      %4361 = vmatprep.subr.bf16.mxu0 0
      %4362 = vmatpush2.bf16.msra.mxu0 0
      %4363 = vmatprep.mubr.bf16.mxu0 0
      %4364 = vmatmul.mubr.bf16.gmra.mxu0 %v2975
      %v4365 = vpop.f32.mrf.mxu0
      %v4366 = vadd.f32 %v4205, %v4365
      %v4367 = vpop.f32.mrf.mxu0
      %v4368 = vpop.f32.mrf.mxu0
      %v4369 = vadd.f32 %v4208, %v4368
      %v4370 = vpop.f32.mrf.mxu0
      %4371 = vmatprep.mubr.bf16.mxu0 0
      %4372 = vmatmul.mubr.bf16.gmra.mxu0 %v2984
      %v4373 = vpop.f32.mrf.mxu0
      %v4374 = vadd.f32 %v4213, %v4373
      %v4375 = vpop.f32.mrf.mxu0
      %v4376 = vpop.f32.mrf.mxu0
      %v4377 = vadd.f32 %v4216, %v4376
      %v4378 = vpop.f32.mrf.mxu0
      %4379 = vmatprep.mubr.bf16.mxu0 0
      %4380 = vmatmul.mubr.bf16.gmra.mxu0 %v2993
      %v4381 = vpop.f32.mrf.mxu0
      %v4382 = vadd.f32 %v4221, %v4381
      %v4383 = vpop.f32.mrf.mxu0
      %v4384 = vpop.f32.mrf.mxu0
      %v4385 = vadd.f32 %v4224, %v4384
      %v4386 = vpop.f32.mrf.mxu0
      %4387 = vmatprep.mubr.bf16.mxu0 0
      %4388 = vmatmul.mubr.bf16.gmra.mxu0 %v3002
      %v4389 = vpop.f32.mrf.mxu0
      %v4390 = vadd.f32 %v4229, %v4389
      %v4391 = vpop.f32.mrf.mxu0
      %v4392 = vpop.f32.mrf.mxu0
      %v4393 = vadd.f32 %v4232, %v4392
      %v4394 = vpop.f32.mrf.mxu0
      %4395 = vmatprep.mubr.bf16.mxu0 0
      %4396 = vmatmul.mubr.bf16.gmra.mxu0 %v3011
      %v4397 = vpop.f32.mrf.mxu0
      %v4398 = vadd.f32 %v4237, %v4397
      %v4399 = vpop.f32.mrf.mxu0
      %v4400 = vpop.f32.mrf.mxu0
      %v4401 = vadd.f32 %v4240, %v4400
      %v4402 = vpop.f32.mrf.mxu0
      %4403 = vmatprep.mubr.bf16.mxu0 0
      %4404 = vmatmul.mubr.bf16.gmra.mxu0 %v3020
      %v4405 = vpop.f32.mrf.mxu0
      %v4406 = vadd.f32 %v4245, %v4405
      %v4407 = vpop.f32.mrf.mxu0
      %v4408 = vpop.f32.mrf.mxu0
      %v4409 = vadd.f32 %v4248, %v4408
      %v4410 = vpop.f32.mrf.mxu0
      %4411 = vmatprep.mubr.bf16.mxu0 0
      %4412 = vmatmul.mubr.bf16.gmra.mxu0 %v3029
      %v4413 = vpop.f32.mrf.mxu0
      %v4414 = vadd.f32 %v4253, %v4413
      %v4415 = vpop.f32.mrf.mxu0
      %v4416 = vpop.f32.mrf.mxu0
      %v4417 = vadd.f32 %v4256, %v4416
      %v4418 = vpop.f32.mrf.mxu0
      %4419 = vmatprep.mubr.bf16.mxu0 0
      %4420 = vmatmul.mubr.bf16.gmra.mxu0 %v3038
      %v4421 = vpop.f32.mrf.mxu0
      %v4422 = vadd.f32 %v4261, %v4421
      %v4423 = vpop.f32.mrf.mxu0
      %v4424 = vpop.f32.mrf.mxu0
      %v4425 = vadd.f32 %v4264, %v4424
      %v4426 = vpop.f32.mrf.mxu0
      %4427 = vmatprep.mubr.bf16.mxu0 0
      %4428 = vmatmul.mubr.bf16.gmra.mxu0 %v3047
      %v4429 = vpop.f32.mrf.mxu0
      %v4430 = vadd.f32 %v4269, %v4429
      %v4431 = vpop.f32.mrf.mxu0
      %v4432 = vpop.f32.mrf.mxu0
      %v4433 = vadd.f32 %v4272, %v4432
      %v4434 = vpop.f32.mrf.mxu0
      %4435 = vmatprep.mubr.bf16.mxu0 0
      %4436 = vmatmul.mubr.bf16.gmra.mxu0 %v3056
      %v4437 = vpop.f32.mrf.mxu0
      %v4438 = vadd.f32 %v4277, %v4437
      %v4439 = vpop.f32.mrf.mxu0
      %v4440 = vpop.f32.mrf.mxu0
      %v4441 = vadd.f32 %v4280, %v4440
      %v4442 = vpop.f32.mrf.mxu0
      %4443 = vmatprep.mubr.bf16.mxu0 0
      %4444 = vmatmul.mubr.bf16.gmra.mxu0 %v3065
      %v4445 = vpop.f32.mrf.mxu0
      %v4446 = vadd.f32 %v4285, %v4445
      %v4447 = vpop.f32.mrf.mxu0
      %v4448 = vpop.f32.mrf.mxu0
      %v4449 = vadd.f32 %v4288, %v4448
      %v4450 = vpop.f32.mrf.mxu0
      %4451 = vmatprep.mubr.bf16.mxu0 0
      %4452 = vmatmul.mubr.bf16.gmra.mxu0 %v3074
      %v4453 = vpop.f32.mrf.mxu0
      %v4454 = vadd.f32 %v4293, %v4453
      %v4455 = vpop.f32.mrf.mxu0
      %v4456 = vpop.f32.mrf.mxu0
      %v4457 = vadd.f32 %v4296, %v4456
      %v4458 = vpop.f32.mrf.mxu0
      %4459 = vmatprep.mubr.bf16.mxu0 0
      %4460 = vmatmul.mubr.bf16.gmra.mxu0 %v3083
      %v4461 = vpop.f32.mrf.mxu0
      %v4462 = vadd.f32 %v4301, %v4461
      %v4463 = vpop.f32.mrf.mxu0
      %v4464 = vpop.f32.mrf.mxu0
      %v4465 = vadd.f32 %v4304, %v4464
      %v4466 = vpop.f32.mrf.mxu0
      %4467 = vmatprep.mubr.bf16.mxu0 0
      %4468 = vmatmul.mubr.bf16.gmra.mxu0 %v3092
      %v4469 = vpop.f32.mrf.mxu0
      %v4470 = vadd.f32 %v4309, %v4469
      %v4471 = vpop.f32.mrf.mxu0
      %v4472 = vpop.f32.mrf.mxu0
      %v4473 = vadd.f32 %v4312, %v4472
      %v4474 = vpop.f32.mrf.mxu0
      %4475 = vmatprep.mubr.bf16.mxu0 0
      %4476 = vmatmul.mubr.bf16.gmra.mxu0 %v3101
      %v4477 = vpop.f32.mrf.mxu0
      %v4478 = vadd.f32 %v4317, %v4477
      %v4479 = vpop.f32.mrf.mxu0
      %v4480 = vpop.f32.mrf.mxu0
      %v4481 = vadd.f32 %v4320, %v4480
      %v4482 = vpop.f32.mrf.mxu0
      %4483 = vmatprep.mubr.bf16.mxu0 0
      %4484 = vmatmul.mubr.bf16.gmra.mxu0 %v3110
      %v4485 = vpop.f32.mrf.mxu0
      %v4486 = vadd.f32 %v4325, %v4485
      %v4487 = vpop.f32.mrf.mxu0
      %v4488 = vpop.f32.mrf.mxu0
      %v4489 = vadd.f32 %v4328, %v4488
      %v4490 = vpop.f32.mrf.mxu0
      %4491 = vdwg.mxu0
      %4492 = vst [vmem:[%s248] sm:$0xff] %v4366
      %4493 = vst [vmem:[%s248 + $0x8] sm:$0xff] %v4369
      %4494 = vst [vmem:[%s248 + $0x10] sm:$0xff] %v4374
      %4495 = vst [vmem:[%s248 + $0x18] sm:$0xff] %v4377
      %4496 = vst [vmem:[%s248 + $0x20] sm:$0xff] %v4382
      %4497 = vst [vmem:[%s248 + $0x28] sm:$0xff] %v4385
      %4498 = vst [vmem:[%s248 + $0x30] sm:$0xff] %v4390
      %4499 = vst [vmem:[%s248 + $0x38] sm:$0xff] %v4393
      %4500 = vst [vmem:[%s248 + $0x40] sm:$0xff] %v4398
      %4501 = vst [vmem:[%s248 + $0x48] sm:$0xff] %v4401
      %4502 = vst [vmem:[%s248 + $0x50] sm:$0xff] %v4406
      %4503 = vst [vmem:[%s248 + $0x58] sm:$0xff] %v4409
      %4504 = vst [vmem:[%s248 + $0x60] sm:$0xff] %v4414
      %4505 = vst [vmem:[%s248 + $0x68] sm:$0xff] %v4417
      %4506 = vst [vmem:[%s248 + $0x70] sm:$0xff] %v4422
      %4507 = vst [vmem:[%s248 + $0x78] sm:$0xff] %v4425
      %4508 = vst [vmem:[%s248 + $0x80] sm:$0xff] %v4430
      %4509 = vst [vmem:[%s248 + $0x88] sm:$0xff] %v4433
      %4510 = vst [vmem:[%s248 + $0x90] sm:$0xff] %v4438
      %4511 = vst [vmem:[%s248 + $0x98] sm:$0xff] %v4441
      %4512 = vst [vmem:[%s248 + $0xa0] sm:$0xff] %v4446
      %4513 = vst [vmem:[%s248 + $0xa8] sm:$0xff] %v4449
      %4514 = vst [vmem:[%s248 + $0xb0] sm:$0xff] %v4454
      %4515 = vst [vmem:[%s248 + $0xb8] sm:$0xff] %v4457
      %4516 = vst [vmem:[%s248 + $0xc0] sm:$0xff] %v4462
      %4517 = vst [vmem:[%s248 + $0xc8] sm:$0xff] %v4465
      %4518 = vst [vmem:[%s248 + $0xd0] sm:$0xff] %v4470
      %4519 = vst [vmem:[%s248 + $0xd8] sm:$0xff] %v4473
      %4520 = vst [vmem:[%s248 + $0xe0] sm:$0xff] %v4478
      %4521 = vst [vmem:[%s248 + $0xe8] sm:$0xff] %v4481
      %4522 = vst [vmem:[%s248 + $0xf0] sm:$0xff] %v4486
      %4523 = vst [vmem:[%s248 + $0xf8] sm:$0xff] %v4489
      %v4524 = vld [vmem:[%s5] sm:$0x1]
      %v4525 = vadd.f32 %v4366, %v4369
      %v4526 = vadd.f32 %v4525, %v4374
      %v4527 = vadd.f32 %v4526, %v4377
      %v4528 = vadd.f32 %v4527, %v4382
      %v4529 = vadd.f32 %v4528, %v4385
      %v4530 = vadd.f32 %v4529, %v4390
      %v4531 = vadd.f32 %v4530, %v4393
      %v4532 = vadd.f32 %v4531, %v4398
      %v4533 = vadd.f32 %v4532, %v4401
      %v4534 = vadd.f32 %v4533, %v4406
      %v4535 = vadd.f32 %v4534, %v4409
      %v4536 = vadd.f32 %v4535, %v4414
      %v4537 = vadd.f32 %v4536, %v4417
      %v4538 = vadd.f32 %v4537, %v4422
      %v4539 = vadd.f32 %v4538, %v4425
      %v4540 = vadd.f32 %v4539, %v4430
      %v4541 = vadd.f32 %v4540, %v4433
      %v4542 = vadd.f32 %v4541, %v4438
      %v4543 = vadd.f32 %v4542, %v4441
      %v4544 = vadd.f32 %v4543, %v4446
      %v4545 = vadd.f32 %v4544, %v4449
      %v4546 = vadd.f32 %v4545, %v4454
      %v4547 = vadd.f32 %v4546, %v4457
      %v4548 = vadd.f32 %v4547, %v4462
      %v4549 = vadd.f32 %v4548, %v4465
      %v4550 = vadd.f32 %v4549, %v4470
      %v4551 = vadd.f32 %v4550, %v4473
      %v4552 = vadd.f32 %v4551, %v4478
      %v4553 = vadd.f32 %v4552, %v4481
      %v4554 = vadd.f32 %v4553, %v4486
      %v4555 = vadd.f32 %v4554, %v4489
      %v4556 = vrot.slane %v4555, 4
      %v4557 = vadd.f32 %v4555, %v4556
      %v4558 = vrot.slane %v4557, 2
      %v4559 = vadd.f32 %v4557, %v4558
      %v4560 = vrot.slane %v4559, 1
      %v4561 = vadd.f32 %v4559, %v4560
      %v4562 = vadd.f32 %v4524, %v4561
      %4563 = vst [vmem:[%s5] sm:$0x1] %v4562
      %v4564 = vld [vmem:[%s6] sm:$0x1]
      %v4565 = vmul.f32 %v4366, %v4366
      %v4566 = vmul.f32 %v4369, %v4369
      %v4567 = vmul.f32 %v4374, %v4374
      %v4568 = vmul.f32 %v4377, %v4377
      %v4569 = vmul.f32 %v4382, %v4382
      %v4570 = vmul.f32 %v4385, %v4385
      %v4571 = vmul.f32 %v4390, %v4390
      %v4572 = vmul.f32 %v4393, %v4393
      %v4573 = vmul.f32 %v4398, %v4398
      %v4574 = vmul.f32 %v4401, %v4401
      %v4575 = vmul.f32 %v4406, %v4406
      %v4576 = vmul.f32 %v4409, %v4409
      %v4577 = vmul.f32 %v4414, %v4414
      %v4578 = vmul.f32 %v4417, %v4417
      %v4579 = vmul.f32 %v4422, %v4422
      %v4580 = vmul.f32 %v4425, %v4425
      %v4581 = vmul.f32 %v4430, %v4430
      %v4582 = vmul.f32 %v4433, %v4433
      %v4583 = vmul.f32 %v4438, %v4438
      %v4584 = vmul.f32 %v4441, %v4441
      %v4585 = vmul.f32 %v4446, %v4446
      %v4586 = vmul.f32 %v4449, %v4449
      %v4587 = vmul.f32 %v4454, %v4454
      %v4588 = vmul.f32 %v4457, %v4457
      %v4589 = vmul.f32 %v4462, %v4462
      %v4590 = vmul.f32 %v4465, %v4465
      %v4591 = vmul.f32 %v4470, %v4470
      %v4592 = vmul.f32 %v4473, %v4473
      %v4593 = vmul.f32 %v4478, %v4478
      %v4594 = vmul.f32 %v4481, %v4481
      %v4595 = vmul.f32 %v4486, %v4486
      %v4596 = vmul.f32 %v4489, %v4489
      %v4597 = vadd.f32 %v4565, %v4566
      %v4598 = vadd.f32 %v4597, %v4567
      %v4599 = vadd.f32 %v4598, %v4568
      %v4600 = vadd.f32 %v4599, %v4569
      %v4601 = vadd.f32 %v4600, %v4570
      %v4602 = vadd.f32 %v4601, %v4571
      %v4603 = vadd.f32 %v4602, %v4572
      %v4604 = vadd.f32 %v4603, %v4573
      %v4605 = vadd.f32 %v4604, %v4574
      %v4606 = vadd.f32 %v4605, %v4575
      %v4607 = vadd.f32 %v4606, %v4576
      %v4608 = vadd.f32 %v4607, %v4577
      %v4609 = vadd.f32 %v4608, %v4578
      %v4610 = vadd.f32 %v4609, %v4579
      %v4611 = vadd.f32 %v4610, %v4580
      %v4612 = vadd.f32 %v4611, %v4581
      %v4613 = vadd.f32 %v4612, %v4582
      %v4614 = vadd.f32 %v4613, %v4583
      %v4615 = vadd.f32 %v4614, %v4584
      %v4616 = vadd.f32 %v4615, %v4585
      %v4617 = vadd.f32 %v4616, %v4586
      %v4618 = vadd.f32 %v4617, %v4587
      %v4619 = vadd.f32 %v4618, %v4588
      %v4620 = vadd.f32 %v4619, %v4589
      %v4621 = vadd.f32 %v4620, %v4590
      %v4622 = vadd.f32 %v4621, %v4591
      %v4623 = vadd.f32 %v4622, %v4592
      %v4624 = vadd.f32 %v4623, %v4593
      %v4625 = vadd.f32 %v4624, %v4594
      %v4626 = vadd.f32 %v4625, %v4595
      %v4627 = vadd.f32 %v4626, %v4596
      %v4628 = vrot.slane %v4627, 4
      %v4629 = vadd.f32 %v4627, %v4628
      %v4630 = vrot.slane %v4629, 2
      %v4631 = vadd.f32 %v4629, %v4630
      %v4632 = vrot.slane %v4631, 1
      %v4633 = vadd.f32 %v4631, %v4632
      %v4634 = vadd.f32 %v4564, %v4633
      %4635 = vst [vmem:[%s6] sm:$0x1] %v4634
      %s4636 = smul.u32 32, %s18
      %p4637 = scmp.lt.s32.totalorder %s4636, 63
      %s4638 = scalar_select %p4637, %s4636, 63
      %s4639 = smul.addr %s4638, 8
      %s4640 = scalar_lea.vmem %s4, %s4639
      // Predicated region
      $region41: #{resnext_bottleneck.5} parent=35 // pred_check
        %p4641 = pneg %p125
      $region42: #{resnext_bottleneck.5} parent=35 // pred_check_branch
        %4643 = sbr.rel (%p4641) target = $region44
      $region43: #{resnext_bottleneck.5} parent=35 // pred_region
        %s4644 = smul.u32 32, %s18
      $region44: #{resnext_bottleneck.5} parent=35 // pred_fallthru
        _
      // Predicated region
      $region45: #{resnext_bottleneck.5} parent=35 // pred_check
        %p4645 = pneg %p146
      $region46: #{resnext_bottleneck.5} parent=35 // pred_check_branch
        %4647 = sbr.rel (%p4645) target = $region48
      $region47: #{resnext_bottleneck.5} parent=35 // pred_region
        _
      $region48: #{resnext_bottleneck.5} parent=35 // pred_fallthru
        _
      // Predicated region
      $region49: #{resnext_bottleneck.5} parent=35 // pred_check
        %p4648 = pneg %p167
      $region50: #{resnext_bottleneck.5} parent=35 // pred_check_branch
        %4650 = sbr.rel (%p4648) target = $region52
      $region51: #{resnext_bottleneck.5} parent=35 // pred_region
        _
      $region52: #{resnext_bottleneck.5} parent=35 // pred_fallthru
        _
      // Predicated region
      $region53: #{resnext_bottleneck.5} parent=35 // pred_check
        %p4651 = pneg %p146
      $region54: #{resnext_bottleneck.5} parent=35 // pred_check_branch
        %4653 = sbr.rel (%p4651) target = $region56
      $region55: #{resnext_bottleneck.5} parent=35 // pred_region
        _
      $region56: #{resnext_bottleneck.5} parent=35 // pred_fallthru
        _
      // Predicated region
      $region57: #{resnext_bottleneck.5} parent=35 // pred_check
        %p4654 = pneg %p167
      $region58: #{resnext_bottleneck.5} parent=35 // pred_check_branch
        %4656 = sbr.rel (%p4654) target = $region60
      $region59: #{resnext_bottleneck.5} parent=35 // pred_region
        _
      $region60: #{resnext_bottleneck.5} parent=35 // pred_fallthru
        _
    $region36: #{resnext_bottleneck.5} parent=5 // pred_fallthru
      _
    %p4657 = scmp.le.s32.totalorder 2, %s13
    // Predicated region
    $region61: #{resnext_bottleneck.5} parent=5 // pred_check
      %p4658 = pneg %p4657
    $region62: #{resnext_bottleneck.5} parent=5 // pred_check_branch
      %4660 = sbr.rel (%p4658) target = $region64
    $region63: #{resnext_bottleneck.5} parent=5 // pred_region
      %s4661 = ssub.s32 %s13, 2
      // Predicated region
      $region65: #{resnext_bottleneck.5} parent=63 // pred_check
        %p4662 = pneg %p131
      $region66: #{resnext_bottleneck.5} parent=63 // pred_check_branch
        %4664 = sbr.rel (%p4662) target = $region68
      $region67: #{resnext_bottleneck.5} parent=63 // pred_region
        %s4665 = smul.u32 32, %s19
        %p4666 = scmp.lt.s32.totalorder %s4665, 63
        %s4667 = scalar_select %p4666, %s4665, 63
        %s4668 = smul.addr %s4667, 8
        %s4669 = scalar_lea.vmem %s4, %s4668
      $region68: #{resnext_bottleneck.5} parent=63 // pred_fallthru
        _
    $region64: #{resnext_bottleneck.5} parent=5 // pred_fallthru
      _
  $region6: #{resnext_bottleneck.5} parent=0 // loop_footer
    %s17 = sadd.s32 1, %s13
  $region7: #{resnext_bottleneck.5} parent=0 // loop_footer_branch
    %12 = sbr.rel target = $region3
  $region8: #{resnext_bottleneck.5} parent=0 // loop_exit
    _

</llo_original>
